<compile_context>
chip_gen: v7x
topology: tpu7x:2x2x1
jax: 0.10.0
libtpu: 0.0.40
codegen_flags: <defaults>
</compile_context>

<pallas_src>
import math

import jax
import jax.numpy as jnp
import numpy as np
from jax.experimental import pallas as pl
from jax.experimental.pallas import tpu as pltpu

# ---- model dims (module defaults: d_model=128, n_head=8, dim_ff=256) --------
D_MODEL = 128
N_HEAD = 8
DIM_FF = 256
HEAD_DIM = D_MODEL // N_HEAD
N_HEAD2 = 2 * N_HEAD            # sa-heads + ta-heads handled as one fused MHA
LN_EPS = 1e-5


# ---- in-kernel helpers -------------------------------------------------------
def _layernorm(x, gamma, beta):
    mu = jnp.mean(x, axis=-1, keepdims=True)
    var = jnp.mean((x - mu) ** 2, axis=-1, keepdims=True)
    return (x - mu) * jax.lax.rsqrt(var + LN_EPS) * gamma + beta


# ---- Pallas kernel -----------------------------------------------------------
def dual_attention_kernel(h_ref, wqkv_ref, bqkv_ref, mask_ref, wout_ref,
                          bout_ref, n1g_ref, n1b_ref, wff1_ref, bff1_ref,
                          wff2_ref, bff2_ref, n2g_ref, n2b_ref, o_ref):
    bt, L, d = h_ref.shape
    m = bt * L
    nh2 = N_HEAD2
    seg = 2 * d                      # feature width of the dual attention
    kv_rows = nh2 * L                # rows of the head-expanded K/V slabs

    h = h_ref[...].astype(jnp.float32).reshape(m, d)

    # ---- fused QKV for BOTH attentions: bf16 operands, f32 accumulate ------
    # column layout: [q_sa | q_ta | k_sa | k_ta | v_sa | v_ta], q pre-scaled
    # by 1/sqrt(head_dim) host-side.
    qkv = jnp.dot(h.astype(jnp.bfloat16), wqkv_ref[...],
                  preferred_element_type=jnp.float32) + bqkv_ref[...]
    qkv = qkv.reshape(bt, L, 6 * d)
    q = qkv[:, :, 0 * seg:1 * seg].astype(jnp.bfloat16)       # (bt, L, 2d)
    k = qkv[:, :, 1 * seg:2 * seg].astype(jnp.bfloat16)
    v = qkv[:, :, 2 * seg:3 * seg].astype(jnp.bfloat16)

    # ---- lane-dense dual attention ------------------------------------------
    # mask[h*L + k_idx, f] = 1 iff feature f belongs to head h (f // hd == h).
    # K_big[b, h*L + k_idx, :] = k[b, k_idx, :] restricted to head h features,
    # so ONE 256-wide batched matmul produces every head's scores side by side
    # in lanes (no per-head slicing, full lane occupancy).
    mask_f32 = mask_ref[...]                                   # (kv_rows, 2d)
    mask4 = mask_f32.astype(jnp.bfloat16).reshape(nh2, L, seg)
    k_big = (k[:, None, :, :] * mask4).reshape(bt, kv_rows, seg)
    v_big = (v[:, None, :, :] * mask4).reshape(bt, kv_rows, seg)

    s = jnp.einsum("bqd,bkd->bqk", q, k_big,
                   preferred_element_type=jnp.float32)         # (bt, L, 2H*L)
    # Softmax per head segment.  Subtracting the per-(b,q) row max (over all
    # heads) is shift-invariant within every segment, keeps exp lane-dense
    # over all 2H*L lanes, and is numerically safe unless one head's scores
    # sit > ~80 below the global max (impossible at these activation scales).
    s = s - jnp.max(s, axis=-1, keepdims=True)
    p = jnp.exp(s)                                             # f32

    # Unnormalised per-head context: one more batched 256-wide MXU matmul.
    ctx_u = jnp.einsum("bqk,bkd->bqd", p.astype(jnp.bfloat16), v_big,
                       preferred_element_type=jnp.float32)     # (bt, L, 2d)
    # Per-head softmax denominator, broadcast onto that head's feature lanes
    # by the very same mask matrix (ones within a head's column block).
    denom = jnp.dot(p.reshape(m, kv_rows), mask_f32,
                    preferred_element_type=jnp.float32)        # (m, 2d)
    ctx = ctx_u.reshape(m, seg) / denom                        # exact divide

    # out_proj of both attentions + fusion Linear, folded host-side -> (2d, d).
    h_int = jnp.dot(ctx.astype(jnp.bfloat16), wout_ref[...],
                    preferred_element_type=jnp.float32) + bout_ref[...]
    h1 = _layernorm(h + h_int, n1g_ref[...], n1b_ref[...])

    ff = jnp.dot(h1.astype(jnp.bfloat16), wff1_ref[...],
                 preferred_element_type=jnp.float32) + bff1_ref[...]
    ff = jnp.maximum(ff, 0.0)
    ff = jnp.dot(ff.astype(jnp.bfloat16), wff2_ref[...],
                 preferred_element_type=jnp.float32) + bff2_ref[...]

    h2 = _layernorm(h1 + ff, n2g_ref[...], n2b_ref[...])
    o_ref[...] = h2.reshape(bt, L, d).astype(o_ref.dtype)


# ---- host-side weight fusion / pre-transposition -----------------------------
def _prepare_weights(params, L):
    d = D_MODEL
    scale = 1.0 / math.sqrt(HEAD_DIM)
    sa_w, ta_w = params["sa_in_w"], params["ta_in_w"]
    sa_b, ta_b = params["sa_in_b"], params["ta_in_b"]

    # (d, 6d): [q_sa*scale | q_ta*scale | k_sa | k_ta | v_sa | v_ta]
    w_qkv = jnp.concatenate(
        [sa_w[0:d].T * scale, ta_w[0:d].T * scale,
         sa_w[d:2 * d].T, ta_w[d:2 * d].T,
         sa_w[2 * d:3 * d].T, ta_w[2 * d:3 * d].T], axis=1)
    b_qkv = jnp.concatenate(
        [sa_b[:, 0:d] * scale, ta_b[:, 0:d] * scale,
         sa_b[:, d:2 * d], ta_b[:, d:2 * d],
         sa_b[:, 2 * d:3 * d], ta_b[:, 2 * d:3 * d]], axis=1)

    # Fold out_proj of both attentions into the fusion Linear (exact, f32):
    #   H_int = ctx_sa @ (sa_out_w.T @ lin_w[:, :d].T)
    #         + ctx_ta @ (ta_out_w.T @ lin_w[:, d:].T) + b_fused
    lin_w, lin_b = params["lin_w"], params["lin_b"]
    w_out = jnp.concatenate(
        [params["sa_out_w"].T @ lin_w[:, 0:d].T,
         params["ta_out_w"].T @ lin_w[:, d:2 * d].T], axis=0)        # (2d, d)
    b_out = (params["sa_out_b"] @ lin_w[:, 0:d].T
             + params["ta_out_b"] @ lin_w[:, d:2 * d].T + lin_b)     # (1, d)

    # Head-block mask: mask[h*L + k, f] = 1 iff f // HEAD_DIM == h.
    head_of_row = jnp.repeat(jnp.arange(N_HEAD2), L)
    head_of_col = jnp.arange(2 * d) // HEAD_DIM
    mask = (head_of_row[:, None] == head_of_col[None, :]).astype(jnp.float32)

    bf16 = jnp.bfloat16
    return [w_qkv.astype(bf16), b_qkv, mask,
            w_out.astype(bf16), b_out,
            params["n1_g"], params["n1_b"],
            params["ff1_w"].T.astype(bf16), params["ff1_b"],
            params["ff2_w"].T.astype(bf16), params["ff2_b"],
            params["n2_g"], params["n2_b"]]


# ---- VMEM-aware batch-tile selection ------------------------------------------
def _per_seq_vmem_bytes(L, d):
    seg = 2 * d
    kv_rows = N_HEAD2 * L
    return (
        4 * L * d * 4                      # double-buffered input + output blocks
        + 8 * L * d * 4                    # h / h_int / h1 / h2 / residual temps
        + L * 6 * d * (4 + 2)              # qkv f32 + bf16 q/k/v copies
        + 2 * kv_rows * seg * 2            # head-masked K / V slabs (bf16)
        + L * kv_rows * (4 + 2)            # scores f32 + probs bf16
        + 3 * L * seg * 4                  # denom + ctx f32 + bf16 ctx
        + 2 * L * DIM_FF * (4 + 2)         # ff hidden f32 + bf16
    )


_VMEM_LIMIT = 32 * 1024 * 1024             # raises v5e's 16 MiB default; <= v7x
_VMEM_BUDGET = 20 * 1024 * 1024            # live bytes per step (excl. weights)


def _pick_batch_tile(B, L, d):
    cap = max(1, min(_VMEM_BUDGET // _per_seq_vmem_bytes(L, d), 64))
    min_bt = max(1, 512 // max(L, 1))      # keep m = bt*L >= ~512 rows
    if B >= 2 * min_bt:
        return min(cap, max(min_bt, B // 2))
    return min(cap, B)


# ---- wrapper ------------------------------------------------------------------
def dual_attention_block(H, params, *, batch_tile=None):
    B, L, d = H.shape
    assert d == D_MODEL
    weights = _prepare_weights(params, L)

    if batch_tile is None:
        batch_tile = _pick_batch_tile(B, L, d)
        grid_b = pl.cdiv(B, batch_tile)
        if grid_b > 1:                      # even step count for v7x's two TCs
            grid_b = 2 * pl.cdiv(grid_b, 2)
            batch_tile = pl.cdiv(B, grid_b)
    batch_tile = max(1, min(batch_tile, B))
    grid_b = pl.cdiv(B, batch_tile)
    b_pad = grid_b * batch_tile
    Hp = H if b_pad == B else jnp.pad(H, ((0, b_pad - B), (0, 0), (0, 0)))

    in_specs = [pl.BlockSpec((batch_tile, L, d), lambda b: (b, 0, 0))]
    # TODO(synk): weights could be single-buffered (pipeline_mode=pl.Buffered(1))
    # to save ~0.8 MB of VMEM; kept default-buffered for lowering robustness.
    in_specs += [pl.BlockSpec(w.shape, lambda b: (0, 0)) for w in weights]

    out = pl.pallas_call(
        dual_attention_kernel,
        out_shape=jax.ShapeDtypeStruct((b_pad, L, d), H.dtype),
        grid=(grid_b,),
        in_specs=in_specs,
        out_specs=pl.BlockSpec((batch_tile, L, d), lambda b: (b, 0, 0)),
        compiler_params=pltpu.CompilerParams(
            dimension_semantics=("parallel",),
            vmem_limit_bytes=_VMEM_LIMIT),
    )(Hp, *weights)
    return out[:B] if b_pad != B else out


# ---- deterministic parameter init (PyTorch-style layouts) --------------------
def init_params(key):
    ks = jax.random.split(key, 8)
    s = 0.05
    return {
        # self-attention ("sa")
        "sa_in_w": jax.random.normal(ks[0], (3 * D_MODEL, D_MODEL), jnp.float32) * s,
        "sa_in_b": jax.random.normal(ks[1], (1, 3 * D_MODEL), jnp.float32) * s,
        "sa_out_w": jax.random.normal(ks[2], (D_MODEL, D_MODEL), jnp.float32) * s,
        "sa_out_b": jnp.zeros((1, D_MODEL), jnp.float32),
        # "temporal" attention ("ta")
        "ta_in_w": jax.random.normal(ks[3], (3 * D_MODEL, D_MODEL), jnp.float32) * s,
        "ta_in_b": jax.random.normal(ks[4], (1, 3 * D_MODEL), jnp.float32) * s,
        "ta_out_w": jax.random.normal(ks[5], (D_MODEL, D_MODEL), jnp.float32) * s,
        "ta_out_b": jnp.zeros((1, D_MODEL), jnp.float32),
        # fusion linear (2d -> d)
        "lin_w": jax.random.normal(ks[6], (D_MODEL, 2 * D_MODEL), jnp.float32) * s,
        "lin_b": jnp.zeros((1, D_MODEL), jnp.float32),
        # norm1
        "n1_g": jnp.ones((1, D_MODEL), jnp.float32),
        "n1_b": jnp.zeros((1, D_MODEL), jnp.float32),
        # feed-forward
        "ff1_w": jax.random.normal(ks[7], (DIM_FF, D_MODEL), jnp.float32) * s,
        "ff1_b": jnp.zeros((1, DIM_FF), jnp.float32),
        "ff2_w": jax.random.normal(jax.random.fold_in(key, 99),
                                   (D_MODEL, DIM_FF), jnp.float32) * s,
        "ff2_b": jnp.zeros((1, D_MODEL), jnp.float32),
        # norm2
        "n2_g": jnp.ones((1, D_MODEL), jnp.float32),
        "n2_b": jnp.zeros((1, D_MODEL), jnp.float32),
    }


# ---- pure-JAX f32 reference (unfused math; validates host-side fusion too) ---
def reference(H, p):
    def mha(h, in_w, in_b, out_w, out_b):
        qkv = h @ in_w.T + in_b
        q, k, v = jnp.split(qkv, 3, axis=-1)
        B, L, _ = q.shape
        q = q.reshape(B, L, N_HEAD, HEAD_DIM).transpose(0, 2, 1, 3)
        k = k.reshape(B, L, N_HEAD, HEAD_DIM).transpose(0, 2, 1, 3)
        v = v.reshape(B, L, N_HEAD, HEAD_DIM).transpose(0, 2, 1, 3)
        s = jnp.einsum("bhqd,bhkd->bhqk", q, k) / math.sqrt(HEAD_DIM)
        a = jax.nn.softmax(s, axis=-1)
        o = jnp.einsum("bhqk,bhkd->bhqd", a, v)
        o = o.transpose(0, 2, 1, 3).reshape(B, L, D_MODEL)
        return o @ out_w.T + out_b

    def ln(x, g, b):
        mu = x.mean(-1, keepdims=True)
        var = ((x - mu) ** 2).mean(-1, keepdims=True)
        return (x - mu) * jax.lax.rsqrt(var + LN_EPS) * g + b

    hs = mha(H, p["sa_in_w"], p["sa_in_b"], p["sa_out_w"], p["sa_out_b"])
    ht = mha(H, p["ta_in_w"], p["ta_in_b"], p["ta_out_w"], p["ta_out_b"])
    h_int = jnp.concatenate([hs, ht], -1) @ p["lin_w"].T + p["lin_b"]
    h1 = ln(H + h_int, p["n1_g"], p["n1_b"])
    ff = jax.nn.relu(h1 @ p["ff1_w"].T + p["ff1_b"]) @ p["ff2_w"].T + p["ff2_b"]
    return ln(h1 + ff, p["n2_g"], p["n2_b"])


if __name__ == "__main__":
    B, L = 24, 16
    key = jax.random.PRNGKey(0)
    k_x, k_p = jax.random.split(key)
    H = jax.random.normal(k_x, (B, L, D_MODEL), jnp.float32)
    params = init_params(k_p)

    ref = jax.block_until_ready(reference(H, params))

    # Default (VMEM-budgeted) tiling.
    out = jax.block_until_ready(dual_attention_block(H, params))
    # Tolerance reflects bf16 matmul operands (f32 accumulation); softmax
    # normalisation uses the exact reciprocal.
    np.testing.assert_allclose(np.asarray(out), np.asarray(ref),
                               rtol=2e-2, atol=2e-2)

    # Explicit small tile: exercises the multi-step grid and padded last step.
    out2 = jax.block_until_ready(dual_attention_block(H, params, batch_tile=5))
    np.testing.assert_allclose(np.asarray(out2), np.asarray(ref),
                               rtol=2e-2, atol=2e-2)

    print("KERNEL_OK")
</pallas_src>

<mosaic_0001>
module attributes {stable_mosaic.version = 11 : i64} {
  func.func @dual_attention_kernel(%arg0: i32, %arg1: memref<24x16x128xf32, #tpu.memory_space<vmem>>, %arg2: memref<128x768xbf16, #tpu.memory_space<vmem>>, %arg3: memref<1x768xf32, #tpu.memory_space<vmem>>, %arg4: memref<256x256xf32, #tpu.memory_space<vmem>>, %arg5: memref<256x128xbf16, #tpu.memory_space<vmem>>, %arg6: memref<1x128xf32, #tpu.memory_space<vmem>>, %arg7: memref<1x128xf32, #tpu.memory_space<vmem>>, %arg8: memref<1x128xf32, #tpu.memory_space<vmem>>, %arg9: memref<128x256xbf16, #tpu.memory_space<vmem>>, %arg10: memref<1x256xf32, #tpu.memory_space<vmem>>, %arg11: memref<256x128xbf16, #tpu.memory_space<vmem>>, %arg12: memref<1x128xf32, #tpu.memory_space<vmem>>, %arg13: memref<1x128xf32, #tpu.memory_space<vmem>>, %arg14: memref<1x128xf32, #tpu.memory_space<vmem>>, %arg15: memref<24x16x128xf32, #tpu.memory_space<vmem>>) attributes {dimension_semantics = [#tpu.dimension_semantics<parallel>], iteration_bounds = array<i64: 1>, scalar_prefetch = 0 : i64, scratch_operands = 0 : i64, tpu.core_type = #tpu.core_type<tc>, window_params = [{transform_indices = @transform_0, window_bounds = array<i64: 24, 16, 128>}, {pipeline_mode = #tpu.pipeline_mode<synchronous>, transform_indices = @transform_1, window_bounds = array<i64: 128, 768>}, {pipeline_mode = #tpu.pipeline_mode<synchronous>, transform_indices = @transform_2, window_bounds = array<i64: 1, 768>}, {pipeline_mode = #tpu.pipeline_mode<synchronous>, transform_indices = @transform_3, window_bounds = array<i64: 256, 256>}, {pipeline_mode = #tpu.pipeline_mode<synchronous>, transform_indices = @transform_4, window_bounds = array<i64: 256, 128>}, {pipeline_mode = #tpu.pipeline_mode<synchronous>, transform_indices = @transform_5, window_bounds = array<i64: 1, 128>}, {pipeline_mode = #tpu.pipeline_mode<synchronous>, transform_indices = @transform_6, window_bounds = array<i64: 1, 128>}, {pipeline_mode = #tpu.pipeline_mode<synchronous>, transform_indices = @transform_7, window_bounds = array<i64: 1, 128>}, {pipeline_mode = #tpu.pipeline_mode<synchronous>, transform_indices = @transform_8, window_bounds = array<i64: 128, 256>}, {pipeline_mode = #tpu.pipeline_mode<synchronous>, transform_indices = @transform_9, window_bounds = array<i64: 1, 256>}, {pipeline_mode = #tpu.pipeline_mode<synchronous>, transform_indices = @transform_10, window_bounds = array<i64: 256, 128>}, {pipeline_mode = #tpu.pipeline_mode<synchronous>, transform_indices = @transform_11, window_bounds = array<i64: 1, 128>}, {pipeline_mode = #tpu.pipeline_mode<synchronous>, transform_indices = @transform_12, window_bounds = array<i64: 1, 128>}, {pipeline_mode = #tpu.pipeline_mode<synchronous>, transform_indices = @transform_13, window_bounds = array<i64: 1, 128>}, {transform_indices = @transform_14, window_bounds = array<i64: 24, 16, 128>}]} {
    %c0 = arith.constant 0 : index
    %c0_0 = arith.constant 0 : index
    %c0_1 = arith.constant 0 : index
    %0 = vector.load %arg1[%c0, %c0_0, %c0_1] : memref<24x16x128xf32, #tpu.memory_space<vmem>>, vector<24x16x128xf32>
    %1 = vector.shape_cast %0 : vector<24x16x128xf32> to vector<384x128xf32>
    %2 = arith.truncf %1 : vector<384x128xf32> to vector<384x128xbf16>
    %c0_2 = arith.constant 0 : index
    %c0_3 = arith.constant 0 : index
    %3 = vector.load %arg2[%c0_2, %c0_3] : memref<128x768xbf16, #tpu.memory_space<vmem>>, vector<128x768xbf16>
    %cst = arith.constant dense<0.000000e+00> : vector<384x768xf32>
    %4 = tpu.matmul %2, %3, %cst {dimension_numbers = #tpu.dot_dimension_numbers<[1], [0], [0], [1], [0, 0, 1, 1], [], []>} : vector<384x128xbf16>, vector<128x768xbf16>, vector<384x768xf32> -> vector<384x768xf32>
    %c0_4 = arith.constant 0 : index
    %c0_5 = arith.constant 0 : index
    %5 = vector.load %arg3[%c0_4, %c0_5] : memref<1x768xf32, #tpu.memory_space<vmem>>, vector<1x768xf32>
    %6 = vector.broadcast %5 : vector<1x768xf32> to vector<384x768xf32>
    %7 = arith.addf %4, %6 : vector<384x768xf32>
    %8 = vector.shape_cast %7 : vector<384x768xf32> to vector<24x16x768xf32>
    %9 = vector.extract_strided_slice %8 {offsets = [0, 0, 0], sizes = [24, 16, 256], strides = [1, 1, 1]} : vector<24x16x768xf32> to vector<24x16x256xf32>
    %10 = arith.truncf %9 : vector<24x16x256xf32> to vector<24x16x256xbf16>
    %11 = vector.extract_strided_slice %8 {offsets = [0, 0, 256], sizes = [24, 16, 256], strides = [1, 1, 1]} : vector<24x16x768xf32> to vector<24x16x256xf32>
    %12 = arith.truncf %11 : vector<24x16x256xf32> to vector<24x16x256xbf16>
    %13 = vector.extract_strided_slice %8 {offsets = [0, 0, 512], sizes = [24, 16, 256], strides = [1, 1, 1]} : vector<24x16x768xf32> to vector<24x16x256xf32>
    %14 = arith.truncf %13 : vector<24x16x256xf32> to vector<24x16x256xbf16>
    %c0_6 = arith.constant 0 : index
    %c0_7 = arith.constant 0 : index
    %15 = vector.load %arg4[%c0_6, %c0_7] : memref<256x256xf32, #tpu.memory_space<vmem>>, vector<256x256xf32>
    %16 = arith.truncf %15 : vector<256x256xf32> to vector<256x256xbf16>
    %17 = vector.shape_cast %16 : vector<256x256xbf16> to vector<16x16x256xbf16>
    %18 = vector.shape_cast %12 : vector<24x16x256xbf16> to vector<24x1x16x256xbf16>
    %19 = vector.shape_cast %17 : vector<16x16x256xbf16> to vector<1x16x16x256xbf16>
    %20 = vector.broadcast %18 : vector<24x1x16x256xbf16> to vector<24x16x16x256xbf16>
    %21 = vector.broadcast %19 : vector<1x16x16x256xbf16> to vector<24x16x16x256xbf16>
    %22 = arith.mulf %20, %21 : vector<24x16x16x256xbf16>
    %23 = vector.shape_cast %22 : vector<24x16x16x256xbf16> to vector<24x256x256xbf16>
    %24 = vector.shape_cast %14 : vector<24x16x256xbf16> to vector<24x1x16x256xbf16>
    %25 = vector.shape_cast %17 : vector<16x16x256xbf16> to vector<1x16x16x256xbf16>
    %26 = vector.broadcast %24 : vector<24x1x16x256xbf16> to vector<24x16x16x256xbf16>
    %27 = vector.broadcast %25 : vector<1x16x16x256xbf16> to vector<24x16x16x256xbf16>
    %28 = arith.mulf %26, %27 : vector<24x16x16x256xbf16>
    %29 = vector.shape_cast %28 : vector<24x16x16x256xbf16> to vector<24x256x256xbf16>
    "tpu.trace_start"() <{level = 10 : i32, message = "bqd,bkd->bqk"}> : () -> ()
    %cst_8 = arith.constant dense<0.000000e+00> : vector<24x16x256xf32>
    %30 = tpu.matmul %10, %23, %cst_8 {dimension_numbers = #tpu.dot_dimension_numbers<[2], [2], [1], [1], [0, 0, 0, 1, 1, 1], [0], [0]>} : vector<24x16x256xbf16>, vector<24x256x256xbf16>, vector<24x16x256xf32> -> vector<24x16x256xf32>
    "tpu.trace_stop"() : () -> ()
    %cst_9 = arith.constant dense<0xFF800000> : vector<24x16xf32>
    %31 = vector.multi_reduction <maximumf>, %30, %cst_9 [2] : vector<24x16x256xf32> to vector<24x16xf32>
    %32 = vector.shape_cast %31 : vector<24x16xf32> to vector<24x16x1xf32>
    %33 = vector.broadcast %32 : vector<24x16x1xf32> to vector<24x16x256xf32>
    %34 = arith.subf %30, %33 : vector<24x16x256xf32>
    %35 = math.exp %34 : vector<24x16x256xf32>
    %36 = arith.truncf %35 : vector<24x16x256xf32> to vector<24x16x256xbf16>
    "tpu.trace_start"() <{level = 10 : i32, message = "bqk,bkd->bqd"}> : () -> ()
    %cst_10 = arith.constant dense<0.000000e+00> : vector<24x16x256xf32>
    %37 = tpu.matmul %36, %29, %cst_10 {dimension_numbers = #tpu.dot_dimension_numbers<[2], [1], [1], [2], [0, 0, 0, 1, 1, 2], [0], [0]>} : vector<24x16x256xbf16>, vector<24x256x256xbf16>, vector<24x16x256xf32> -> vector<24x16x256xf32>
    "tpu.trace_stop"() : () -> ()
    %38 = vector.shape_cast %35 : vector<24x16x256xf32> to vector<384x256xf32>
    %cst_11 = arith.constant dense<0.000000e+00> : vector<384x256xf32>
    %39 = tpu.matmul %38, %15, %cst_11 {dimension_numbers = #tpu.dot_dimension_numbers<[1], [0], [0], [1], [0, 0, 1, 1], [], []>} : vector<384x256xf32>, vector<256x256xf32>, vector<384x256xf32> -> vector<384x256xf32>
    %40 = vector.shape_cast %37 : vector<24x16x256xf32> to vector<384x256xf32>
    %41 = arith.divf %40, %39 : vector<384x256xf32>
    %42 = arith.truncf %41 : vector<384x256xf32> to vector<384x256xbf16>
    %c0_12 = arith.constant 0 : index
    %c0_13 = arith.constant 0 : index
    %43 = vector.load %arg5[%c0_12, %c0_13] : memref<256x128xbf16, #tpu.memory_space<vmem>>, vector<256x128xbf16>
    %cst_14 = arith.constant dense<0.000000e+00> : vector<384x128xf32>
    %44 = tpu.matmul %42, %43, %cst_14 {dimension_numbers = #tpu.dot_dimension_numbers<[1], [0], [0], [1], [0, 0, 1, 1], [], []>} : vector<384x256xbf16>, vector<256x128xbf16>, vector<384x128xf32> -> vector<384x128xf32>
    %c0_15 = arith.constant 0 : index
    %c0_16 = arith.constant 0 : index
    %45 = vector.load %arg6[%c0_15, %c0_16] : memref<1x128xf32, #tpu.memory_space<vmem>>, vector<1x128xf32>
    %46 = vector.broadcast %45 : vector<1x128xf32> to vector<384x128xf32>
    %47 = arith.addf %44, %46 : vector<384x128xf32>
    %48 = arith.addf %1, %47 : vector<384x128xf32>
    %c0_17 = arith.constant 0 : index
    %c0_18 = arith.constant 0 : index
    %49 = vector.load %arg7[%c0_17, %c0_18] : memref<1x128xf32, #tpu.memory_space<vmem>>, vector<1x128xf32>
    %c0_19 = arith.constant 0 : index
    %c0_20 = arith.constant 0 : index
    %50 = vector.load %arg8[%c0_19, %c0_20] : memref<1x128xf32, #tpu.memory_space<vmem>>, vector<1x128xf32>
    %cst_21 = arith.constant dense<0.000000e+00> : vector<384xf32>
    %51 = vector.multi_reduction <add>, %48, %cst_21 [1] : vector<384x128xf32> to vector<384xf32>
    %52 = vector.shape_cast %51 : vector<384xf32> to vector<384x1xf32>
    %cst_22 = arith.constant 1.280000e+02 : f32
    %53 = vector.broadcast %cst_22 : f32 to vector<384x1xf32>
    %54 = arith.divf %52, %53 : vector<384x1xf32>
    %55 = vector.broadcast %54 : vector<384x1xf32> to vector<384x128xf32>
    %56 = arith.subf %48, %55 : vector<384x128xf32>
    %57 = arith.mulf %56, %56 : vector<384x128xf32>
    %cst_23 = arith.constant dense<0.000000e+00> : vector<384xf32>
    %58 = vector.multi_reduction <add>, %57, %cst_23 [1] : vector<384x128xf32> to vector<384xf32>
    %59 = vector.shape_cast %58 : vector<384xf32> to vector<384x1xf32>
    %cst_24 = arith.constant 1.280000e+02 : f32
    %60 = vector.broadcast %cst_24 : f32 to vector<384x1xf32>
    %61 = arith.divf %59, %60 : vector<384x1xf32>
    %62 = vector.broadcast %54 : vector<384x1xf32> to vector<384x128xf32>
    %63 = arith.subf %48, %62 : vector<384x128xf32>
    %cst_25 = arith.constant 9.99999974E-6 : f32
    %64 = vector.broadcast %cst_25 : f32 to vector<384x1xf32>
    %65 = arith.addf %61, %64 : vector<384x1xf32>
    %66 = math.rsqrt %65 : vector<384x1xf32>
    %67 = vector.broadcast %66 : vector<384x1xf32> to vector<384x128xf32>
    %68 = arith.mulf %63, %67 : vector<384x128xf32>
    %69 = vector.broadcast %49 : vector<1x128xf32> to vector<384x128xf32>
    %70 = arith.mulf %68, %69 : vector<384x128xf32>
    %71 = vector.broadcast %50 : vector<1x128xf32> to vector<384x128xf32>
    %72 = arith.addf %70, %71 : vector<384x128xf32>
    %73 = arith.truncf %72 : vector<384x128xf32> to vector<384x128xbf16>
    %c0_26 = arith.constant 0 : index
    %c0_27 = arith.constant 0 : index
    %74 = vector.load %arg9[%c0_26, %c0_27] : memref<128x256xbf16, #tpu.memory_space<vmem>>, vector<128x256xbf16>
    %cst_28 = arith.constant dense<0.000000e+00> : vector<384x256xf32>
    %75 = tpu.matmul %73, %74, %cst_28 {dimension_numbers = #tpu.dot_dimension_numbers<[1], [0], [0], [1], [0, 0, 1, 1], [], []>} : vector<384x128xbf16>, vector<128x256xbf16>, vector<384x256xf32> -> vector<384x256xf32>
    %c0_29 = arith.constant 0 : index
    %c0_30 = arith.constant 0 : index
    %76 = vector.load %arg10[%c0_29, %c0_30] : memref<1x256xf32, #tpu.memory_space<vmem>>, vector<1x256xf32>
    %77 = vector.broadcast %76 : vector<1x256xf32> to vector<384x256xf32>
    %78 = arith.addf %75, %77 : vector<384x256xf32>
    %cst_31 = arith.constant 0.000000e+00 : f32
    %79 = vector.broadcast %cst_31 : f32 to vector<384x256xf32>
    %80 = arith.maximumf %78, %79 : vector<384x256xf32>
    %81 = arith.truncf %80 : vector<384x256xf32> to vector<384x256xbf16>
    %c0_32 = arith.constant 0 : index
    %c0_33 = arith.constant 0 : index
    %82 = vector.load %arg11[%c0_32, %c0_33] : memref<256x128xbf16, #tpu.memory_space<vmem>>, vector<256x128xbf16>
    %cst_34 = arith.constant dense<0.000000e+00> : vector<384x128xf32>
    %83 = tpu.matmul %81, %82, %cst_34 {dimension_numbers = #tpu.dot_dimension_numbers<[1], [0], [0], [1], [0, 0, 1, 1], [], []>} : vector<384x256xbf16>, vector<256x128xbf16>, vector<384x128xf32> -> vector<384x128xf32>
    %c0_35 = arith.constant 0 : index
    %c0_36 = arith.constant 0 : index
    %84 = vector.load %arg12[%c0_35, %c0_36] : memref<1x128xf32, #tpu.memory_space<vmem>>, vector<1x128xf32>
    %85 = vector.broadcast %84 : vector<1x128xf32> to vector<384x128xf32>
    %86 = arith.addf %83, %85 : vector<384x128xf32>
    %87 = arith.addf %72, %86 : vector<384x128xf32>
    %c0_37 = arith.constant 0 : index
    %c0_38 = arith.constant 0 : index
    %88 = vector.load %arg13[%c0_37, %c0_38] : memref<1x128xf32, #tpu.memory_space<vmem>>, vector<1x128xf32>
    %c0_39 = arith.constant 0 : index
    %c0_40 = arith.constant 0 : index
    %89 = vector.load %arg14[%c0_39, %c0_40] : memref<1x128xf32, #tpu.memory_space<vmem>>, vector<1x128xf32>
    %cst_41 = arith.constant dense<0.000000e+00> : vector<384xf32>
    %90 = vector.multi_reduction <add>, %87, %cst_41 [1] : vector<384x128xf32> to vector<384xf32>
    %91 = vector.shape_cast %90 : vector<384xf32> to vector<384x1xf32>
    %cst_42 = arith.constant 1.280000e+02 : f32
    %92 = vector.broadcast %cst_42 : f32 to vector<384x1xf32>
    %93 = arith.divf %91, %92 : vector<384x1xf32>
    %94 = vector.broadcast %93 : vector<384x1xf32> to vector<384x128xf32>
    %95 = arith.subf %87, %94 : vector<384x128xf32>
    %96 = arith.mulf %95, %95 : vector<384x128xf32>
    %cst_43 = arith.constant dense<0.000000e+00> : vector<384xf32>
    %97 = vector.multi_reduction <add>, %96, %cst_43 [1] : vector<384x128xf32> to vector<384xf32>
    %98 = vector.shape_cast %97 : vector<384xf32> to vector<384x1xf32>
    %cst_44 = arith.constant 1.280000e+02 : f32
    %99 = vector.broadcast %cst_44 : f32 to vector<384x1xf32>
    %100 = arith.divf %98, %99 : vector<384x1xf32>
    %101 = vector.broadcast %93 : vector<384x1xf32> to vector<384x128xf32>
    %102 = arith.subf %87, %101 : vector<384x128xf32>
    %cst_45 = arith.constant 9.99999974E-6 : f32
    %103 = vector.broadcast %cst_45 : f32 to vector<384x1xf32>
    %104 = arith.addf %100, %103 : vector<384x1xf32>
    %105 = math.rsqrt %104 : vector<384x1xf32>
    %106 = vector.broadcast %105 : vector<384x1xf32> to vector<384x128xf32>
    %107 = arith.mulf %102, %106 : vector<384x128xf32>
    %108 = vector.broadcast %88 : vector<1x128xf32> to vector<384x128xf32>
    %109 = arith.mulf %107, %108 : vector<384x128xf32>
    %110 = vector.broadcast %89 : vector<1x128xf32> to vector<384x128xf32>
    %111 = arith.addf %109, %110 : vector<384x128xf32>
    %112 = vector.shape_cast %111 : vector<384x128xf32> to vector<24x16x128xf32>
    %c0_46 = arith.constant 0 : index
    %c0_47 = arith.constant 0 : index
    %c0_48 = arith.constant 0 : index
    %113 = vector.load %arg15[%c0_46, %c0_47, %c0_48] : memref<24x16x128xf32, #tpu.memory_space<vmem>>, vector<24x16x128xf32>
    tpu.vector_store %arg15[%c0_46, %c0_47, %c0_48], %112 {strides = array<i32>} : memref<24x16x128xf32, #tpu.memory_space<vmem>>, vector<24x16x128xf32>,
    return
  }
  func.func @transform_0(%arg0: i32) -> (i32, i32, i32) {
    %c0_i32 = arith.constant 0 : i32
    %c0_i32_0 = arith.constant 0 : i32
    %c0_i32_1 = arith.constant 0 : i32
    return %arg0, %c0_i32, %c0_i32_0 : i32, i32, i32
  }
  func.func @transform_1(%arg0: i32) -> (i32, i32) {
    %c0_i32 = arith.constant 0 : i32
    %c0_i32_0 = arith.constant 0 : i32
    %c0_i32_1 = arith.constant 0 : i32
    return %c0_i32, %c0_i32_0 : i32, i32
  }
  func.func @transform_2(%arg0: i32) -> (i32, i32) {
    %c0_i32 = arith.constant 0 : i32
    %c0_i32_0 = arith.constant 0 : i32
    %c0_i32_1 = arith.constant 0 : i32
    return %c0_i32, %c0_i32_0 : i32, i32
  }
  func.func @transform_3(%arg0: i32) -> (i32, i32) {
    %c0_i32 = arith.constant 0 : i32
    %c0_i32_0 = arith.constant 0 : i32
    %c0_i32_1 = arith.constant 0 : i32
    return %c0_i32, %c0_i32_0 : i32, i32
  }
  func.func @transform_4(%arg0: i32) -> (i32, i32) {
    %c0_i32 = arith.constant 0 : i32
    %c0_i32_0 = arith.constant 0 : i32
    %c0_i32_1 = arith.constant 0 : i32
    return %c0_i32, %c0_i32_0 : i32, i32
  }
  func.func @transform_5(%arg0: i32) -> (i32, i32) {
    %c0_i32 = arith.constant 0 : i32
    %c0_i32_0 = arith.constant 0 : i32
    %c0_i32_1 = arith.constant 0 : i32
    return %c0_i32, %c0_i32_0 : i32, i32
  }
  func.func @transform_6(%arg0: i32) -> (i32, i32) {
    %c0_i32 = arith.constant 0 : i32
    %c0_i32_0 = arith.constant 0 : i32
    %c0_i32_1 = arith.constant 0 : i32
    return %c0_i32, %c0_i32_0 : i32, i32
  }
  func.func @transform_7(%arg0: i32) -> (i32, i32) {
    %c0_i32 = arith.constant 0 : i32
    %c0_i32_0 = arith.constant 0 : i32
    %c0_i32_1 = arith.constant 0 : i32
    return %c0_i32, %c0_i32_0 : i32, i32
  }
  func.func @transform_8(%arg0: i32) -> (i32, i32) {
    %c0_i32 = arith.constant 0 : i32
    %c0_i32_0 = arith.constant 0 : i32
    %c0_i32_1 = arith.constant 0 : i32
    return %c0_i32, %c0_i32_0 : i32, i32
  }
  func.func @transform_9(%arg0: i32) -> (i32, i32) {
    %c0_i32 = arith.constant 0 : i32
    %c0_i32_0 = arith.constant 0 : i32
    %c0_i32_1 = arith.constant 0 : i32
    return %c0_i32, %c0_i32_0 : i32, i32
  }
  func.func @transform_10(%arg0: i32) -> (i32, i32) {
    %c0_i32 = arith.constant 0 : i32
    %c0_i32_0 = arith.constant 0 : i32
    %c0_i32_1 = arith.constant 0 : i32
    return %c0_i32, %c0_i32_0 : i32, i32
  }
  func.func @transform_11(%arg0: i32) -> (i32, i32) {
    %c0_i32 = arith.constant 0 : i32
    %c0_i32_0 = arith.constant 0 : i32
    %c0_i32_1 = arith.constant 0 : i32
    return %c0_i32, %c0_i32_0 : i32, i32
  }
  func.func @transform_12(%arg0: i32) -> (i32, i32) {
    %c0_i32 = arith.constant 0 : i32
    %c0_i32_0 = arith.constant 0 : i32
    %c0_i32_1 = arith.constant 0 : i32
    return %c0_i32, %c0_i32_0 : i32, i32
  }
  func.func @transform_13(%arg0: i32) -> (i32, i32) {
    %c0_i32 = arith.constant 0 : i32
    %c0_i32_0 = arith.constant 0 : i32
    %c0_i32_1 = arith.constant 0 : i32
    return %c0_i32, %c0_i32_0 : i32, i32
  }
  func.func @transform_14(%arg0: i32) -> (i32, i32, i32) {
    %c0_i32 = arith.constant 0 : i32
    %c0_i32_0 = arith.constant 0 : i32
    %c0_i32_1 = arith.constant 0 : i32
    return %arg0, %c0_i32, %c0_i32_0 : i32, i32, i32
  }
}

</mosaic_0001>

<llo_original>
// kernel: tpu_custom_call.1
$region0: #{tpu_custom_call.1}
  #allocation0 [shape = 'u32[]', space=smem, size = 0x4, offset = 0x4, fixed_abs, tag = 'smem constant byte address 0x4 - core index']
  #allocation1 [shape = 'u32[144,128]{1,0:T(1,128)}', space=vmem, size = 0x12000, scoped, tag = 'internal scratch']
  %s0 = inlined_call_operand.hbm [shape: f32[24,16,128], index: 0, kind: input, shape index: {}]
  %s1 = inlined_call_operand.hbm [shape: bf16[128,768], index: 1, kind: input, shape index: {}]
  %s2 = inlined_call_operand.vmem [shape: f32[1,768], index: 2, kind: input, shape index: {}]
  %s3 = inlined_call_operand.hbm [shape: f32[256,256], index: 3, kind: input, shape index: {}]
  %s4 = inlined_call_operand.hbm [shape: bf16[256,128], index: 4, kind: input, shape index: {}]
  %s5 = inlined_call_operand.vmem [shape: f32[1,128], index: 5, kind: input, shape index: {}]
  %s6 = inlined_call_operand.vmem [shape: f32[1,128], index: 6, kind: input, shape index: {}]
  %s7 = inlined_call_operand.vmem [shape: f32[1,128], index: 7, kind: input, shape index: {}]
  %s8 = inlined_call_operand.hbm [shape: bf16[128,256], index: 8, kind: input, shape index: {}]
  %s9 = inlined_call_operand.vmem [shape: f32[1,256], index: 9, kind: input, shape index: {}]
  %s10 = inlined_call_operand.hbm [shape: bf16[256,128], index: 10, kind: input, shape index: {}]
  %s11 = inlined_call_operand.vmem [shape: f32[1,128], index: 11, kind: input, shape index: {}]
  %s12 = inlined_call_operand.vmem [shape: f32[1,128], index: 12, kind: input, shape index: {}]
  %s13 = inlined_call_operand.vmem [shape: f32[1,128], index: 13, kind: input, shape index: {}]
  %s14 = inlined_call_operand.hbm [shape: f32[24,16,128], index: 14, kind: output, shape index: {}]
  %s15 = sld [smem:[#allocation0]]
  $region90: #{tpu_custom_call.1} parent=0
    _
  %s17 = ssub.s32 1, %s15
  %s18 = scalar_select 0, %s17, %s15
  $region1: #{tpu_custom_call.1} parent=0
    #allocation2 [shape = 'u8[196608]{0}', space=vmem, size = 0x30000, scoped, tag = 'input window, operand 0, single buffered']
    #allocation3 [shape = 's32[1]{0}', space=sflag, size = 0x4, scoped, tag = 'scoped memory for tpu_custom_call.1']
    #allocation4 [shape = 's32[1]{0}', space=sflag, size = 0x4, scoped, tag = 'scoped memory for tpu_custom_call.1']
    #allocation5 [shape = 'u8[196608]{0}', space=vmem, size = 0x30000, scoped, tag = 'input window, operand 1, single buffered']
    #allocation6 [shape = 's32[1]{0}', space=sflag, size = 0x4, scoped, tag = 'scoped memory for tpu_custom_call.1']
    #allocation7 [shape = 'u8[262144]{0}', space=vmem, size = 0x40000, scoped, tag = 'input window, operand 3, single buffered']
    #allocation8 [shape = 'u8[65536]{0}', space=vmem, size = 0x10000, scoped, tag = 'input window, operand 4, single buffered']
    #allocation9 [shape = 's32[1]{0}', space=sflag, size = 0x4, scoped, tag = 'scoped memory for tpu_custom_call.1']
    #allocation10 [shape = 'u8[65536]{0}', space=vmem, size = 0x10000, scoped, tag = 'input window, operand 8, single buffered']
    #allocation11 [shape = 'u8[65536]{0}', space=vmem, size = 0x10000, scoped, tag = 'input window, operand 10, single buffered']
    #allocation12 [shape = 's32[1]{0}', space=sflag, size = 0x4, scoped, tag = 'scoped memory for tpu_custom_call.1']
    #allocation13 [shape = 'u8[196608]{0}', space=vmem, size = 0x30000, scoped, tag = 'output window, operand 0, single buffered']
    %19 = vsyncpa [#allocation3], 0
    %20 = vsyncpa [#allocation6], 0
    %21 = vsyncpa [#allocation9], 0
    %22 = vsyncpa [#allocation12], 0
    %23 = vsyncpa [#allocation4], 0
    // Predicated region
    $region2: #{tpu_custom_call.1} parent=1 // pred_check
      _
    $region3: #{tpu_custom_call.1} parent=1 // pred_check_branch
      %25 = sbr.rel (0) target = $region5
    $region4: #{tpu_custom_call.1} parent=1 // pred_region
      %s27 = ssub.s32 6144, 6144
      %28 = vsyncadd [#allocation3], %s27
      %s29 = sshll.u32 [#allocation2], 4
      %s30 = int_to_ptr.vmem [resolvable:$true] %s29
      %35 = dma.hbm_to_vmem [thread:$0]  %s0, 6144, %s30, [#allocation3], 128, 128, 8
    $region5: #{tpu_custom_call.1} parent=1 // pred_fallthru
      _
    // Predicated region
    $region6: #{tpu_custom_call.1} parent=1 // pred_check
      _
    $region7: #{tpu_custom_call.1} parent=1 // pred_check_branch
      %37 = sbr.rel (0) target = $region9
    $region8: #{tpu_custom_call.1} parent=1 // pred_region
      %s39 = ssub.s32 6144, 6144
      %40 = vsyncadd [#allocation6], %s39
      %s41 = sshll.u32 [#allocation5], 4
      %s42 = int_to_ptr.vmem [resolvable:$true] %s41
      %47 = dma.hbm_to_vmem [thread:$0]  %s1, 6144, %s42, [#allocation6], 384, 384, 24
    $region9: #{tpu_custom_call.1} parent=1 // pred_fallthru
      _
    // Predicated region
    $region10: #{tpu_custom_call.1} parent=1 // pred_check
      _
    $region11: #{tpu_custom_call.1} parent=1 // pred_check_branch
      %49 = sbr.rel (0) target = $region13
    $region12: #{tpu_custom_call.1} parent=1 // pred_region
      _
    $region13: #{tpu_custom_call.1} parent=1 // pred_fallthru
      _
    // Predicated region
    $region14: #{tpu_custom_call.1} parent=1 // pred_check
      _
    $region15: #{tpu_custom_call.1} parent=1 // pred_check_branch
      %51 = sbr.rel (0) target = $region17
    $region16: #{tpu_custom_call.1} parent=1 // pred_region
      %s53 = ssub.s32 8192, 8192
      %54 = vsyncadd [#allocation6], %s53
      %s55 = sshll.u32 [#allocation7], 4
      %s56 = int_to_ptr.vmem [resolvable:$true] %s55
      %61 = dma.hbm_to_vmem [thread:$0]  %s3, 8192, %s56, [#allocation6], 256, 256, 16
    $region17: #{tpu_custom_call.1} parent=1 // pred_fallthru
      _
    // Predicated region
    $region18: #{tpu_custom_call.1} parent=1 // pred_check
      _
    $region19: #{tpu_custom_call.1} parent=1 // pred_check_branch
      %63 = sbr.rel (0) target = $region21
    $region20: #{tpu_custom_call.1} parent=1 // pred_region
      %s65 = ssub.s32 2048, 2048
      %66 = vsyncadd [#allocation9], %s65
      %s67 = sshll.u32 [#allocation8], 4
      %s68 = int_to_ptr.vmem [resolvable:$true] %s67
      %73 = dma.hbm_to_vmem [thread:$0]  %s4, 2048, %s68, [#allocation9], 64, 64, 4
    $region21: #{tpu_custom_call.1} parent=1 // pred_fallthru
      _
    // Predicated region
    $region22: #{tpu_custom_call.1} parent=1 // pred_check
      _
    $region23: #{tpu_custom_call.1} parent=1 // pred_check_branch
      %75 = sbr.rel (0) target = $region25
    $region24: #{tpu_custom_call.1} parent=1 // pred_region
      _
    $region25: #{tpu_custom_call.1} parent=1 // pred_fallthru
      _
    // Predicated region
    $region26: #{tpu_custom_call.1} parent=1 // pred_check
      _
    $region27: #{tpu_custom_call.1} parent=1 // pred_check_branch
      %77 = sbr.rel (0) target = $region29
    $region28: #{tpu_custom_call.1} parent=1 // pred_region
      _
    $region29: #{tpu_custom_call.1} parent=1 // pred_fallthru
      _
    // Predicated region
    $region30: #{tpu_custom_call.1} parent=1 // pred_check
      _
    $region31: #{tpu_custom_call.1} parent=1 // pred_check_branch
      %79 = sbr.rel (0) target = $region33
    $region32: #{tpu_custom_call.1} parent=1 // pred_region
      _
    $region33: #{tpu_custom_call.1} parent=1 // pred_fallthru
      _
    // Predicated region
    $region34: #{tpu_custom_call.1} parent=1 // pred_check
      _
    $region35: #{tpu_custom_call.1} parent=1 // pred_check_branch
      %81 = sbr.rel (0) target = $region37
    $region36: #{tpu_custom_call.1} parent=1 // pred_region
      %s83 = ssub.s32 2048, 2048
      %84 = vsyncadd [#allocation9], %s83
      %s85 = sshll.u32 [#allocation10], 4
      %s86 = int_to_ptr.vmem [resolvable:$true] %s85
      %91 = dma.hbm_to_vmem [thread:$0]  %s8, 2048, %s86, [#allocation9], 128, 128, 8
    $region37: #{tpu_custom_call.1} parent=1 // pred_fallthru
      _
    // Predicated region
    $region38: #{tpu_custom_call.1} parent=1 // pred_check
      _
    $region39: #{tpu_custom_call.1} parent=1 // pred_check_branch
      %93 = sbr.rel (0) target = $region41
    $region40: #{tpu_custom_call.1} parent=1 // pred_region
      _
    $region41: #{tpu_custom_call.1} parent=1 // pred_fallthru
      _
    // Predicated region
    $region42: #{tpu_custom_call.1} parent=1 // pred_check
      _
    $region43: #{tpu_custom_call.1} parent=1 // pred_check_branch
      %95 = sbr.rel (0) target = $region45
    $region44: #{tpu_custom_call.1} parent=1 // pred_region
      %s97 = ssub.s32 2048, 2048
      %98 = vsyncadd [#allocation12], %s97
      %s99 = sshll.u32 [#allocation11], 4
      %s100 = int_to_ptr.vmem [resolvable:$true] %s99
      %105 = dma.hbm_to_vmem [thread:$0]  %s10, 2048, %s100, [#allocation12], 64, 64, 4
    $region45: #{tpu_custom_call.1} parent=1 // pred_fallthru
      _
    // Predicated region
    $region46: #{tpu_custom_call.1} parent=1 // pred_check
      _
    $region47: #{tpu_custom_call.1} parent=1 // pred_check_branch
      %107 = sbr.rel (0) target = $region49
    $region48: #{tpu_custom_call.1} parent=1 // pred_region
      _
    $region49: #{tpu_custom_call.1} parent=1 // pred_fallthru
      _
    // Predicated region
    $region50: #{tpu_custom_call.1} parent=1 // pred_check
      _
    $region51: #{tpu_custom_call.1} parent=1 // pred_check_branch
      %109 = sbr.rel (0) target = $region53
    $region52: #{tpu_custom_call.1} parent=1 // pred_region
      _
    $region53: #{tpu_custom_call.1} parent=1 // pred_fallthru
      _
    // Predicated region
    $region54: #{tpu_custom_call.1} parent=1 // pred_check
      _
    $region55: #{tpu_custom_call.1} parent=1 // pred_check_branch
      %111 = sbr.rel (0) target = $region57
    $region56: #{tpu_custom_call.1} parent=1 // pred_region
      _
    $region57: #{tpu_custom_call.1} parent=1 // pred_fallthru
      _
    // Predicated region
    $region58: #{tpu_custom_call.1} parent=1 // pred_check
      _
    $region59: #{tpu_custom_call.1} parent=1 // pred_check_branch
      %113 = sbr.rel (0) target = $region61
    $region60: #{tpu_custom_call.1} parent=1 // pred_region
      %114 = dma.done [#allocation3], 6144
    $region61: #{tpu_custom_call.1} parent=1 // pred_fallthru
      _
    // Predicated region
    $region62: #{tpu_custom_call.1} parent=1 // pred_check
      _
    $region63: #{tpu_custom_call.1} parent=1 // pred_check_branch
      %116 = sbr.rel (0) target = $region65
    $region64: #{tpu_custom_call.1} parent=1 // pred_region
      %117 = dma.done [#allocation6], 6144
    $region65: #{tpu_custom_call.1} parent=1 // pred_fallthru
      _
    // Predicated region
    $region66: #{tpu_custom_call.1} parent=1 // pred_check
      _
    $region67: #{tpu_custom_call.1} parent=1 // pred_check_branch
      %119 = sbr.rel (0) target = $region69
    $region68: #{tpu_custom_call.1} parent=1 // pred_region
      %120 = dma.done [#allocation6], 8192
    $region69: #{tpu_custom_call.1} parent=1 // pred_fallthru
      _
    // Predicated region
    $region70: #{tpu_custom_call.1} parent=1 // pred_check
      _
    $region71: #{tpu_custom_call.1} parent=1 // pred_check_branch
      %122 = sbr.rel (0) target = $region73
    $region72: #{tpu_custom_call.1} parent=1 // pred_region
      %123 = dma.done [#allocation9], 2048
    $region73: #{tpu_custom_call.1} parent=1 // pred_fallthru
      _
    // Predicated region
    $region74: #{tpu_custom_call.1} parent=1 // pred_check
      _
    $region75: #{tpu_custom_call.1} parent=1 // pred_check_branch
      %125 = sbr.rel (0) target = $region77
    $region76: #{tpu_custom_call.1} parent=1 // pred_region
      %126 = dma.done [#allocation9], 2048
    $region77: #{tpu_custom_call.1} parent=1 // pred_fallthru
      _
    // Predicated region
    $region78: #{tpu_custom_call.1} parent=1 // pred_check
      _
    $region79: #{tpu_custom_call.1} parent=1 // pred_check_branch
      %128 = sbr.rel (0) target = $region81
    $region80: #{tpu_custom_call.1} parent=1 // pred_region
      %129 = dma.done [#allocation12], 2048
    $region81: #{tpu_custom_call.1} parent=1 // pred_fallthru
      _
    %v131 = vld [vmem:[#allocation2] sm:$0xff]
    %v132 = vld [vmem:[#allocation2 + $0x8] sm:$0xff]
    %v133 = vld [vmem:[#allocation2 + $0x10] sm:$0xff]
    %v134 = vld [vmem:[#allocation2 + $0x18] sm:$0xff]
    %v135 = vld [vmem:[#allocation2 + $0x20] sm:$0xff]
    %v136 = vld [vmem:[#allocation2 + $0x28] sm:$0xff]
    %v137 = vld [vmem:[#allocation2 + $0x30] sm:$0xff]
    %v138 = vld [vmem:[#allocation2 + $0x38] sm:$0xff]
    %v139 = vld [vmem:[#allocation2 + $0x40] sm:$0xff]
    %v140 = vld [vmem:[#allocation2 + $0x48] sm:$0xff]
    %v141 = vld [vmem:[#allocation2 + $0x50] sm:$0xff]
    %v142 = vld [vmem:[#allocation2 + $0x58] sm:$0xff]
    %v143 = vld [vmem:[#allocation2 + $0x60] sm:$0xff]
    %v144 = vld [vmem:[#allocation2 + $0x68] sm:$0xff]
    %v145 = vld [vmem:[#allocation2 + $0x70] sm:$0xff]
    %v146 = vld [vmem:[#allocation2 + $0x78] sm:$0xff]
    %v147 = vld [vmem:[#allocation2 + $0x80] sm:$0xff]
    %v148 = vld [vmem:[#allocation2 + $0x88] sm:$0xff]
    %v149 = vld [vmem:[#allocation2 + $0x90] sm:$0xff]
    %v150 = vld [vmem:[#allocation2 + $0x98] sm:$0xff]
    %v151 = vld [vmem:[#allocation2 + $0xa0] sm:$0xff]
    %v152 = vld [vmem:[#allocation2 + $0xa8] sm:$0xff]
    %v153 = vld [vmem:[#allocation2 + $0xb0] sm:$0xff]
    %v154 = vld [vmem:[#allocation2 + $0xb8] sm:$0xff]
    %v155 = vld [vmem:[#allocation2 + $0xc0] sm:$0xff]
    %v156 = vld [vmem:[#allocation2 + $0xc8] sm:$0xff]
    %v157 = vld [vmem:[#allocation2 + $0xd0] sm:$0xff]
    %v158 = vld [vmem:[#allocation2 + $0xd8] sm:$0xff]
    %v159 = vld [vmem:[#allocation2 + $0xe0] sm:$0xff]
    %v160 = vld [vmem:[#allocation2 + $0xe8] sm:$0xff]
    %v161 = vld [vmem:[#allocation2 + $0xf0] sm:$0xff]
    %v162 = vld [vmem:[#allocation2 + $0xf8] sm:$0xff]
    %v163 = vld [vmem:[#allocation2 + $0x100] sm:$0xff]
    %v164 = vld [vmem:[#allocation2 + $0x108] sm:$0xff]
    %v165 = vld [vmem:[#allocation2 + $0x110] sm:$0xff]
    %v166 = vld [vmem:[#allocation2 + $0x118] sm:$0xff]
    %v167 = vld [vmem:[#allocation2 + $0x120] sm:$0xff]
    %v168 = vld [vmem:[#allocation2 + $0x128] sm:$0xff]
    %v169 = vld [vmem:[#allocation2 + $0x130] sm:$0xff]
    %v170 = vld [vmem:[#allocation2 + $0x138] sm:$0xff]
    %v171 = vld [vmem:[#allocation2 + $0x140] sm:$0xff]
    %v172 = vld [vmem:[#allocation2 + $0x148] sm:$0xff]
    %v173 = vld [vmem:[#allocation2 + $0x150] sm:$0xff]
    %v174 = vld [vmem:[#allocation2 + $0x158] sm:$0xff]
    %v175 = vld [vmem:[#allocation2 + $0x160] sm:$0xff]
    %v176 = vld [vmem:[#allocation2 + $0x168] sm:$0xff]
    %v177 = vld [vmem:[#allocation2 + $0x170] sm:$0xff]
    %v178 = vld [vmem:[#allocation2 + $0x178] sm:$0xff]
    %v179 = vpack.c.bf16 %v132, %v131
    %v180 = vpack.c.bf16 %v134, %v133
    %v181 = vpack.c.bf16 %v136, %v135
    %v182 = vpack.c.bf16 %v138, %v137
    %v183 = vpack.c.bf16 %v140, %v139
    %v184 = vpack.c.bf16 %v142, %v141
    %v185 = vpack.c.bf16 %v144, %v143
    %v186 = vpack.c.bf16 %v146, %v145
    %v187 = vpack.c.bf16 %v148, %v147
    %v188 = vpack.c.bf16 %v150, %v149
    %v189 = vpack.c.bf16 %v152, %v151
    %v190 = vpack.c.bf16 %v154, %v153
    %v191 = vpack.c.bf16 %v156, %v155
    %v192 = vpack.c.bf16 %v158, %v157
    %v193 = vpack.c.bf16 %v160, %v159
    %v194 = vpack.c.bf16 %v162, %v161
    %v195 = vpack.c.bf16 %v164, %v163
    %v196 = vpack.c.bf16 %v166, %v165
    %v197 = vpack.c.bf16 %v168, %v167
    %v198 = vpack.c.bf16 %v170, %v169
    %v199 = vpack.c.bf16 %v172, %v171
    %v200 = vpack.c.bf16 %v174, %v173
    %v201 = vpack.c.bf16 %v176, %v175
    %v202 = vpack.c.bf16 %v178, %v177
    %v203 = vld [vmem:[#allocation5] sm:$0xff]
    %v204 = vld [vmem:[#allocation5 + $0x8] sm:$0xff]
    %v205 = vld [vmem:[#allocation5 + $0x10] sm:$0xff]
    %v206 = vld [vmem:[#allocation5 + $0x18] sm:$0xff]
    %v207 = vld [vmem:[#allocation5 + $0x20] sm:$0xff]
    %v208 = vld [vmem:[#allocation5 + $0x28] sm:$0xff]
    %v209 = vld [vmem:[#allocation5 + $0x30] sm:$0xff]
    %v210 = vld [vmem:[#allocation5 + $0x38] sm:$0xff]
    %v211 = vld [vmem:[#allocation5 + $0x40] sm:$0xff]
    %v212 = vld [vmem:[#allocation5 + $0x48] sm:$0xff]
    %v213 = vld [vmem:[#allocation5 + $0x50] sm:$0xff]
    %v214 = vld [vmem:[#allocation5 + $0x58] sm:$0xff]
    %v215 = vld [vmem:[#allocation5 + $0x60] sm:$0xff]
    %v216 = vld [vmem:[#allocation5 + $0x68] sm:$0xff]
    %v217 = vld [vmem:[#allocation5 + $0x70] sm:$0xff]
    %v218 = vld [vmem:[#allocation5 + $0x78] sm:$0xff]
    %v219 = vld [vmem:[#allocation5 + $0x80] sm:$0xff]
    %v220 = vld [vmem:[#allocation5 + $0x88] sm:$0xff]
    %v221 = vld [vmem:[#allocation5 + $0x90] sm:$0xff]
    %v222 = vld [vmem:[#allocation5 + $0x98] sm:$0xff]
    %v223 = vld [vmem:[#allocation5 + $0xa0] sm:$0xff]
    %v224 = vld [vmem:[#allocation5 + $0xa8] sm:$0xff]
    %v225 = vld [vmem:[#allocation5 + $0xb0] sm:$0xff]
    %v226 = vld [vmem:[#allocation5 + $0xb8] sm:$0xff]
    %v227 = vld [vmem:[#allocation5 + $0xc0] sm:$0xff]
    %v228 = vld [vmem:[#allocation5 + $0xc8] sm:$0xff]
    %v229 = vld [vmem:[#allocation5 + $0xd0] sm:$0xff]
    %v230 = vld [vmem:[#allocation5 + $0xd8] sm:$0xff]
    %v231 = vld [vmem:[#allocation5 + $0xe0] sm:$0xff]
    %v232 = vld [vmem:[#allocation5 + $0xe8] sm:$0xff]
    %v233 = vld [vmem:[#allocation5 + $0xf0] sm:$0xff]
    %v234 = vld [vmem:[#allocation5 + $0xf8] sm:$0xff]
    %v235 = vld [vmem:[#allocation5 + $0x100] sm:$0xff]
    %v236 = vld [vmem:[#allocation5 + $0x108] sm:$0xff]
    %v237 = vld [vmem:[#allocation5 + $0x110] sm:$0xff]
    %v238 = vld [vmem:[#allocation5 + $0x118] sm:$0xff]
    %v239 = vld [vmem:[#allocation5 + $0x120] sm:$0xff]
    %v240 = vld [vmem:[#allocation5 + $0x128] sm:$0xff]
    %v241 = vld [vmem:[#allocation5 + $0x130] sm:$0xff]
    %v242 = vld [vmem:[#allocation5 + $0x138] sm:$0xff]
    %v243 = vld [vmem:[#allocation5 + $0x140] sm:$0xff]
    %v244 = vld [vmem:[#allocation5 + $0x148] sm:$0xff]
    %v245 = vld [vmem:[#allocation5 + $0x150] sm:$0xff]
    %v246 = vld [vmem:[#allocation5 + $0x158] sm:$0xff]
    %v247 = vld [vmem:[#allocation5 + $0x160] sm:$0xff]
    %v248 = vld [vmem:[#allocation5 + $0x168] sm:$0xff]
    %v249 = vld [vmem:[#allocation5 + $0x170] sm:$0xff]
    %v250 = vld [vmem:[#allocation5 + $0x178] sm:$0xff]
    %v251 = vld [vmem:[%s2] sm:$0x3f]
    %v253 = vlaneseq
    %v254 = vshrl.u32 %v253, 7
    %v255 = vsub.s32 0, %v254
    %v256 = vrot.slane %v251, %v255
    %v257 = vlaneseq
    %v258 = vshrl.u32 %v257, 7
    %v259 = vsub.s32 1, %v258
    %v260 = vrot.slane %v251, %v259
    %v261 = vlaneseq
    %v262 = vshrl.u32 %v261, 7
    %v263 = vsub.s32 2, %v262
    %v264 = vrot.slane %v251, %v263
    %v265 = vlaneseq
    %v266 = vshrl.u32 %v265, 7
    %v267 = vsub.s32 3, %v266
    %v268 = vrot.slane %v251, %v267
    %v269 = vlaneseq
    %v270 = vshrl.u32 %v269, 7
    %v271 = vsub.s32 4, %v270
    %v272 = vrot.slane %v251, %v271
    %v273 = vlaneseq
    %v274 = vshrl.u32 %v273, 7
    %v275 = vsub.s32 5, %v274
    %v276 = vrot.slane %v251, %v275
    %v331 = vunpack.c.l.b16 %v203
    %v332 = vunpack.c.h.b16 %v203
    %v333 = vunpack.c.l.b16 %v204
    %v334 = vunpack.c.h.b16 %v204
    %v335 = vunpack.c.l.b16 %v205
    %v336 = vunpack.c.h.b16 %v205
    %v337 = vunpack.c.l.b16 %v206
    %v338 = vunpack.c.h.b16 %v206
    %v339 = vunpack.c.l.b16 %v207
    %v340 = vunpack.c.h.b16 %v207
    %v341 = vunpack.c.l.b16 %v208
    %v342 = vunpack.c.h.b16 %v208
    %v343 = vunpack.c.l.b16 %v209
    %v344 = vunpack.c.h.b16 %v209
    %v345 = vunpack.c.l.b16 %v210
    %v346 = vunpack.c.h.b16 %v210
    %v347 = vunpack.c.l.b16 %v211
    %v348 = vunpack.c.h.b16 %v211
    %v349 = vunpack.c.l.b16 %v212
    %v350 = vunpack.c.h.b16 %v212
    %v351 = vunpack.c.l.b16 %v213
    %v352 = vunpack.c.h.b16 %v213
    %v353 = vunpack.c.l.b16 %v214
    %v354 = vunpack.c.h.b16 %v214
    %v355 = vunpack.c.l.b16 %v215
    %v356 = vunpack.c.h.b16 %v215
    %v357 = vunpack.c.l.b16 %v216
    %v358 = vunpack.c.h.b16 %v216
    %v359 = vunpack.c.l.b16 %v217
    %v360 = vunpack.c.h.b16 %v217
    %v361 = vunpack.c.l.b16 %v218
    %v362 = vunpack.c.h.b16 %v218
    %v363 = vunpack.c.l.b16 %v219
    %v364 = vunpack.c.h.b16 %v219
    %v365 = vunpack.c.l.b16 %v220
    %v366 = vunpack.c.h.b16 %v220
    %v367 = vunpack.c.l.b16 %v221
    %v368 = vunpack.c.h.b16 %v221
    %v369 = vunpack.c.l.b16 %v222
    %v370 = vunpack.c.h.b16 %v222
    %v371 = vunpack.c.l.b16 %v223
    %v372 = vunpack.c.h.b16 %v223
    %v373 = vunpack.c.l.b16 %v224
    %v374 = vunpack.c.h.b16 %v224
    %v375 = vunpack.c.l.b16 %v225
    %v376 = vunpack.c.h.b16 %v225
    %v377 = vunpack.c.l.b16 %v226
    %v378 = vunpack.c.h.b16 %v226
    %v379 = vunpack.c.l.b16 %v227
    %v380 = vunpack.c.h.b16 %v227
    %v381 = vunpack.c.l.b16 %v228
    %v382 = vunpack.c.h.b16 %v228
    %v383 = vunpack.c.l.b16 %v229
    %v384 = vunpack.c.h.b16 %v229
    %v385 = vunpack.c.l.b16 %v230
    %v386 = vunpack.c.h.b16 %v230
    %v387 = vunpack.c.l.b16 %v231
    %v388 = vunpack.c.h.b16 %v231
    %v389 = vunpack.c.l.b16 %v232
    %v390 = vunpack.c.h.b16 %v232
    %v391 = vunpack.c.l.b16 %v233
    %v392 = vunpack.c.h.b16 %v233
    %v393 = vunpack.c.l.b16 %v234
    %v394 = vunpack.c.h.b16 %v234
    %v395 = vunpack.c.l.b16 %v235
    %v396 = vunpack.c.h.b16 %v235
    %v397 = vunpack.c.l.b16 %v236
    %v398 = vunpack.c.h.b16 %v236
    %v399 = vunpack.c.l.b16 %v237
    %v400 = vunpack.c.h.b16 %v237
    %v401 = vunpack.c.l.b16 %v238
    %v402 = vunpack.c.h.b16 %v238
    %v403 = vunpack.c.l.b16 %v239
    %v404 = vunpack.c.h.b16 %v239
    %v405 = vunpack.c.l.b16 %v240
    %v406 = vunpack.c.h.b16 %v240
    %v407 = vunpack.c.l.b16 %v241
    %v408 = vunpack.c.h.b16 %v241
    %v409 = vunpack.c.l.b16 %v242
    %v410 = vunpack.c.h.b16 %v242
    %v411 = vunpack.c.l.b16 %v243
    %v412 = vunpack.c.h.b16 %v243
    %v413 = vunpack.c.l.b16 %v244
    %v414 = vunpack.c.h.b16 %v244
    %v415 = vunpack.c.l.b16 %v245
    %v416 = vunpack.c.h.b16 %v245
    %v417 = vunpack.c.l.b16 %v246
    %v418 = vunpack.c.h.b16 %v246
    %v419 = vunpack.c.l.b16 %v247
    %v420 = vunpack.c.h.b16 %v247
    %v421 = vunpack.c.l.b16 %v248
    %v422 = vunpack.c.h.b16 %v248
    %v423 = vunpack.c.l.b16 %v249
    %v424 = vunpack.c.h.b16 %v249
    %v425 = vunpack.c.l.b16 %v250
    %v426 = vunpack.c.h.b16 %v250
    %v427 = vpack.c.b16 %v337, %v331
    %v428 = vpack.c.b16 %v338, %v332
    %v429 = vpack.c.b16 %v339, %v333
    %v430 = vpack.c.b16 %v340, %v334
    %v431 = vpack.c.b16 %v341, %v335
    %v432 = vpack.c.b16 %v342, %v336
    %v433 = vpack.c.b16 %v349, %v343
    %v434 = vpack.c.b16 %v350, %v344
    %v435 = vpack.c.b16 %v351, %v345
    %v436 = vpack.c.b16 %v352, %v346
    %v437 = vpack.c.b16 %v353, %v347
    %v438 = vpack.c.b16 %v354, %v348
    %v439 = vpack.c.b16 %v361, %v355
    %v440 = vpack.c.b16 %v362, %v356
    %v441 = vpack.c.b16 %v363, %v357
    %v442 = vpack.c.b16 %v364, %v358
    %v443 = vpack.c.b16 %v365, %v359
    %v444 = vpack.c.b16 %v366, %v360
    %v445 = vpack.c.b16 %v373, %v367
    %v446 = vpack.c.b16 %v374, %v368
    %v447 = vpack.c.b16 %v375, %v369
    %v448 = vpack.c.b16 %v376, %v370
    %v449 = vpack.c.b16 %v377, %v371
    %v450 = vpack.c.b16 %v378, %v372
    %v451 = vpack.c.b16 %v385, %v379
    %v452 = vpack.c.b16 %v386, %v380
    %v453 = vpack.c.b16 %v387, %v381
    %v454 = vpack.c.b16 %v388, %v382
    %v455 = vpack.c.b16 %v389, %v383
    %v456 = vpack.c.b16 %v390, %v384
    %v457 = vpack.c.b16 %v397, %v391
    %v458 = vpack.c.b16 %v398, %v392
    %v459 = vpack.c.b16 %v399, %v393
    %v460 = vpack.c.b16 %v400, %v394
    %v461 = vpack.c.b16 %v401, %v395
    %v462 = vpack.c.b16 %v402, %v396
    %v463 = vpack.c.b16 %v409, %v403
    %v464 = vpack.c.b16 %v410, %v404
    %v465 = vpack.c.b16 %v411, %v405
    %v466 = vpack.c.b16 %v412, %v406
    %v467 = vpack.c.b16 %v413, %v407
    %v468 = vpack.c.b16 %v414, %v408
    %v469 = vpack.c.b16 %v421, %v415
    %v470 = vpack.c.b16 %v422, %v416
    %v471 = vpack.c.b16 %v423, %v417
    %v472 = vpack.c.b16 %v424, %v418
    %v473 = vpack.c.b16 %v425, %v419
    %v474 = vpack.c.b16 %v426, %v420
    %523 = vmatprep.subr.bf16.mxu0 %v428
    %524 = vmatpush1.bf16.msra.mxu0 %v427
    %525 = vmatprep.subr.bf16.mxu0 %v434
    %526 = vmatpush1.bf16.msra.mxu0 %v433
    %527 = vmatprep.subr.bf16.mxu0 %v440
    %528 = vmatpush1.bf16.msra.mxu0 %v439
    %529 = vmatprep.subr.bf16.mxu0 %v446
    %530 = vmatpush1.bf16.msra.mxu0 %v445
    %531 = vmatprep.subr.bf16.mxu0 %v452
    %532 = vmatpush1.bf16.msra.mxu0 %v451
    %533 = vmatprep.subr.bf16.mxu0 %v458
    %534 = vmatpush1.bf16.msra.mxu0 %v457
    %535 = vmatprep.subr.bf16.mxu0 %v464
    %536 = vmatpush1.bf16.msra.mxu0 %v463
    %537 = vmatprep.subr.bf16.mxu0 %v470
    %538 = vmatpush1.bf16.msra.mxu0 %v469
    %539 = vmatprep.subr.bf16.mxu0 0
    %540 = vmatpush1.bf16.msra.mxu0 0
    %541 = vmatprep.subr.bf16.mxu0 0
    %542 = vmatpush1.bf16.msra.mxu0 0
    %543 = vmatprep.subr.bf16.mxu0 0
    %544 = vmatpush1.bf16.msra.mxu0 0
    %545 = vmatprep.subr.bf16.mxu0 0
    %546 = vmatpush1.bf16.msra.mxu0 0
    %547 = vmatprep.subr.bf16.mxu0 0
    %548 = vmatpush1.bf16.msra.mxu0 0
    %549 = vmatprep.subr.bf16.mxu0 0
    %550 = vmatpush1.bf16.msra.mxu0 0
    %551 = vmatprep.subr.bf16.mxu0 0
    %552 = vmatpush1.bf16.msra.mxu0 0
    %553 = vmatprep.subr.bf16.mxu0 0
    %554 = vmatpush1.bf16.msra.mxu0 0
    %555 = vmatprep.mubr.bf16.mxu0 0
    %556 = vmatmul.mubr.bf16.gmra.mrb[0].mxu0 %v179
    %v557 = vpop.f32.mrb[0].mxu0
    %v558 = vadd.f32 %v256, %v557
    %v559 = vpop.f32.mrb[0].mxu0
    %v560 = vadd.f32 %v260, %v559
    %v561 = vpop.f32.mrb[0].mxu0
    %v562 = vadd.f32 %v256, %v561
    %v563 = vpop.f32.mrb[0].mxu0
    %v564 = vadd.f32 %v260, %v563
    %565 = vmatprep.mubr.bf16.mxu0 0
    %566 = vmatmul.mubr.bf16.gmra.mrb[0].mxu0 %v180
    %v567 = vpop.f32.mrb[0].mxu0
    %v568 = vadd.f32 %v256, %v567
    %v569 = vpop.f32.mrb[0].mxu0
    %v570 = vadd.f32 %v260, %v569
    %v571 = vpop.f32.mrb[0].mxu0
    %v572 = vadd.f32 %v256, %v571
    %v573 = vpop.f32.mrb[0].mxu0
    %v574 = vadd.f32 %v260, %v573
    %575 = vmatprep.mubr.bf16.mxu0 0
    %576 = vmatmul.mubr.bf16.gmra.mrb[0].mxu0 %v181
    %v577 = vpop.f32.mrb[0].mxu0
    %v578 = vadd.f32 %v256, %v577
    %v579 = vpop.f32.mrb[0].mxu0
    %v580 = vadd.f32 %v260, %v579
    %v581 = vpop.f32.mrb[0].mxu0
    %v582 = vadd.f32 %v256, %v581
    %v583 = vpop.f32.mrb[0].mxu0
    %v584 = vadd.f32 %v260, %v583
    %585 = vmatprep.mubr.bf16.mxu0 0
    %586 = vmatmul.mubr.bf16.gmra.mrb[0].mxu0 %v182
    %v587 = vpop.f32.mrb[0].mxu0
    %v588 = vadd.f32 %v256, %v587
    %v589 = vpop.f32.mrb[0].mxu0
    %v590 = vadd.f32 %v260, %v589
    %v591 = vpop.f32.mrb[0].mxu0
    %v592 = vadd.f32 %v256, %v591
    %v593 = vpop.f32.mrb[0].mxu0
    %v594 = vadd.f32 %v260, %v593
    %595 = vmatprep.mubr.bf16.mxu0 0
    %596 = vmatmul.mubr.bf16.gmra.mrb[0].mxu0 %v183
    %v597 = vpop.f32.mrb[0].mxu0
    %v598 = vadd.f32 %v256, %v597
    %v599 = vpop.f32.mrb[0].mxu0
    %v600 = vadd.f32 %v260, %v599
    %v601 = vpop.f32.mrb[0].mxu0
    %v602 = vadd.f32 %v256, %v601
    %v603 = vpop.f32.mrb[0].mxu0
    %v604 = vadd.f32 %v260, %v603
    %605 = vmatprep.mubr.bf16.mxu0 0
    %606 = vmatmul.mubr.bf16.gmra.mrb[0].mxu0 %v184
    %v607 = vpop.f32.mrb[0].mxu0
    %v608 = vadd.f32 %v256, %v607
    %v609 = vpop.f32.mrb[0].mxu0
    %v610 = vadd.f32 %v260, %v609
    %v611 = vpop.f32.mrb[0].mxu0
    %v612 = vadd.f32 %v256, %v611
    %v613 = vpop.f32.mrb[0].mxu0
    %v614 = vadd.f32 %v260, %v613
    %615 = vmatprep.mubr.bf16.mxu0 0
    %616 = vmatmul.mubr.bf16.gmra.mrb[0].mxu0 %v185
    %v617 = vpop.f32.mrb[0].mxu0
    %v618 = vadd.f32 %v256, %v617
    %v619 = vpop.f32.mrb[0].mxu0
    %v620 = vadd.f32 %v260, %v619
    %v621 = vpop.f32.mrb[0].mxu0
    %v622 = vadd.f32 %v256, %v621
    %v623 = vpop.f32.mrb[0].mxu0
    %v624 = vadd.f32 %v260, %v623
    %625 = vmatprep.mubr.bf16.mxu0 0
    %626 = vmatmul.mubr.bf16.gmra.mrb[0].mxu0 %v186
    %v627 = vpop.f32.mrb[0].mxu0
    %v628 = vadd.f32 %v256, %v627
    %v629 = vpop.f32.mrb[0].mxu0
    %v630 = vadd.f32 %v260, %v629
    %v631 = vpop.f32.mrb[0].mxu0
    %v632 = vadd.f32 %v256, %v631
    %v633 = vpop.f32.mrb[0].mxu0
    %v634 = vadd.f32 %v260, %v633
    %635 = vmatprep.mubr.bf16.mxu0 0
    %636 = vmatmul.mubr.bf16.gmra.mrb[0].mxu0 %v187
    %v637 = vpop.f32.mrb[0].mxu0
    %v638 = vadd.f32 %v256, %v637
    %v639 = vpop.f32.mrb[0].mxu0
    %v640 = vadd.f32 %v260, %v639
    %v641 = vpop.f32.mrb[0].mxu0
    %v642 = vadd.f32 %v256, %v641
    %v643 = vpop.f32.mrb[0].mxu0
    %v644 = vadd.f32 %v260, %v643
    %645 = vmatprep.mubr.bf16.mxu0 0
    %646 = vmatmul.mubr.bf16.gmra.mrb[0].mxu0 %v188
    %v647 = vpop.f32.mrb[0].mxu0
    %v648 = vadd.f32 %v256, %v647
    %v649 = vpop.f32.mrb[0].mxu0
    %v650 = vadd.f32 %v260, %v649
    %v651 = vpop.f32.mrb[0].mxu0
    %v652 = vadd.f32 %v256, %v651
    %v653 = vpop.f32.mrb[0].mxu0
    %v654 = vadd.f32 %v260, %v653
    %655 = vmatprep.mubr.bf16.mxu0 0
    %656 = vmatmul.mubr.bf16.gmra.mrb[0].mxu0 %v189
    %v657 = vpop.f32.mrb[0].mxu0
    %v658 = vadd.f32 %v256, %v657
    %v659 = vpop.f32.mrb[0].mxu0
    %v660 = vadd.f32 %v260, %v659
    %v661 = vpop.f32.mrb[0].mxu0
    %v662 = vadd.f32 %v256, %v661
    %v663 = vpop.f32.mrb[0].mxu0
    %v664 = vadd.f32 %v260, %v663
    %665 = vmatprep.mubr.bf16.mxu0 0
    %666 = vmatmul.mubr.bf16.gmra.mrb[0].mxu0 %v190
    %v667 = vpop.f32.mrb[0].mxu0
    %v668 = vadd.f32 %v256, %v667
    %v669 = vpop.f32.mrb[0].mxu0
    %v670 = vadd.f32 %v260, %v669
    %v671 = vpop.f32.mrb[0].mxu0
    %v672 = vadd.f32 %v256, %v671
    %v673 = vpop.f32.mrb[0].mxu0
    %v674 = vadd.f32 %v260, %v673
    %675 = vmatprep.mubr.bf16.mxu0 0
    %676 = vmatmul.mubr.bf16.gmra.mrb[0].mxu0 %v191
    %v677 = vpop.f32.mrb[0].mxu0
    %v678 = vadd.f32 %v256, %v677
    %v679 = vpop.f32.mrb[0].mxu0
    %v680 = vadd.f32 %v260, %v679
    %v681 = vpop.f32.mrb[0].mxu0
    %v682 = vadd.f32 %v256, %v681
    %v683 = vpop.f32.mrb[0].mxu0
    %v684 = vadd.f32 %v260, %v683
    %685 = vmatprep.mubr.bf16.mxu0 0
    %686 = vmatmul.mubr.bf16.gmra.mrb[0].mxu0 %v192
    %v687 = vpop.f32.mrb[0].mxu0
    %v688 = vadd.f32 %v256, %v687
    %v689 = vpop.f32.mrb[0].mxu0
    %v690 = vadd.f32 %v260, %v689
    %v691 = vpop.f32.mrb[0].mxu0
    %v692 = vadd.f32 %v256, %v691
    %v693 = vpop.f32.mrb[0].mxu0
    %v694 = vadd.f32 %v260, %v693
    %695 = vmatprep.mubr.bf16.mxu0 0
    %696 = vmatmul.mubr.bf16.gmra.mrb[0].mxu0 %v193
    %v697 = vpop.f32.mrb[0].mxu0
    %v698 = vadd.f32 %v256, %v697
    %v699 = vpop.f32.mrb[0].mxu0
    %v700 = vadd.f32 %v260, %v699
    %v701 = vpop.f32.mrb[0].mxu0
    %v702 = vadd.f32 %v256, %v701
    %v703 = vpop.f32.mrb[0].mxu0
    %v704 = vadd.f32 %v260, %v703
    %705 = vmatprep.mubr.bf16.mxu0 0
    %706 = vmatmul.mubr.bf16.gmra.mrb[0].mxu0 %v194
    %v707 = vpop.f32.mrb[0].mxu0
    %v708 = vadd.f32 %v256, %v707
    %v709 = vpop.f32.mrb[0].mxu0
    %v710 = vadd.f32 %v260, %v709
    %v711 = vpop.f32.mrb[0].mxu0
    %v712 = vadd.f32 %v256, %v711
    %v713 = vpop.f32.mrb[0].mxu0
    %v714 = vadd.f32 %v260, %v713
    %715 = vmatprep.mubr.bf16.mxu0 0
    %716 = vmatmul.mubr.bf16.gmra.mrb[0].mxu0 %v195
    %v717 = vpop.f32.mrb[0].mxu0
    %v718 = vadd.f32 %v256, %v717
    %v719 = vpop.f32.mrb[0].mxu0
    %v720 = vadd.f32 %v260, %v719
    %v721 = vpop.f32.mrb[0].mxu0
    %v722 = vadd.f32 %v256, %v721
    %v723 = vpop.f32.mrb[0].mxu0
    %v724 = vadd.f32 %v260, %v723
    %725 = vmatprep.mubr.bf16.mxu0 0
    %726 = vmatmul.mubr.bf16.gmra.mrb[0].mxu0 %v196
    %v727 = vpop.f32.mrb[0].mxu0
    %v728 = vadd.f32 %v256, %v727
    %v729 = vpop.f32.mrb[0].mxu0
    %v730 = vadd.f32 %v260, %v729
    %v731 = vpop.f32.mrb[0].mxu0
    %v732 = vadd.f32 %v256, %v731
    %v733 = vpop.f32.mrb[0].mxu0
    %v734 = vadd.f32 %v260, %v733
    %735 = vmatprep.mubr.bf16.mxu0 0
    %736 = vmatmul.mubr.bf16.gmra.mrb[0].mxu0 %v197
    %v737 = vpop.f32.mrb[0].mxu0
    %v738 = vadd.f32 %v256, %v737
    %v739 = vpop.f32.mrb[0].mxu0
    %v740 = vadd.f32 %v260, %v739
    %v741 = vpop.f32.mrb[0].mxu0
    %v742 = vadd.f32 %v256, %v741
    %v743 = vpop.f32.mrb[0].mxu0
    %v744 = vadd.f32 %v260, %v743
    %745 = vmatprep.mubr.bf16.mxu0 0
    %746 = vmatmul.mubr.bf16.gmra.mrb[0].mxu0 %v198
    %v747 = vpop.f32.mrb[0].mxu0
    %v748 = vadd.f32 %v256, %v747
    %v749 = vpop.f32.mrb[0].mxu0
    %v750 = vadd.f32 %v260, %v749
    %v751 = vpop.f32.mrb[0].mxu0
    %v752 = vadd.f32 %v256, %v751
    %v753 = vpop.f32.mrb[0].mxu0
    %v754 = vadd.f32 %v260, %v753
    %755 = vmatprep.mubr.bf16.mxu0 0
    %756 = vmatmul.mubr.bf16.gmra.mrb[0].mxu0 %v199
    %v757 = vpop.f32.mrb[0].mxu0
    %v758 = vadd.f32 %v256, %v757
    %v759 = vpop.f32.mrb[0].mxu0
    %v760 = vadd.f32 %v260, %v759
    %v761 = vpop.f32.mrb[0].mxu0
    %v762 = vadd.f32 %v256, %v761
    %v763 = vpop.f32.mrb[0].mxu0
    %v764 = vadd.f32 %v260, %v763
    %765 = vmatprep.mubr.bf16.mxu0 0
    %766 = vmatmul.mubr.bf16.gmra.mrb[0].mxu0 %v200
    %v767 = vpop.f32.mrb[0].mxu0
    %v768 = vadd.f32 %v256, %v767
    %v769 = vpop.f32.mrb[0].mxu0
    %v770 = vadd.f32 %v260, %v769
    %v771 = vpop.f32.mrb[0].mxu0
    %v772 = vadd.f32 %v256, %v771
    %v773 = vpop.f32.mrb[0].mxu0
    %v774 = vadd.f32 %v260, %v773
    %775 = vmatprep.mubr.bf16.mxu0 0
    %776 = vmatmul.mubr.bf16.gmra.mrb[0].mxu0 %v201
    %v777 = vpop.f32.mrb[0].mxu0
    %v778 = vadd.f32 %v256, %v777
    %v779 = vpop.f32.mrb[0].mxu0
    %v780 = vadd.f32 %v260, %v779
    %v781 = vpop.f32.mrb[0].mxu0
    %v782 = vadd.f32 %v256, %v781
    %v783 = vpop.f32.mrb[0].mxu0
    %v784 = vadd.f32 %v260, %v783
    %785 = vmatprep.mubr.bf16.mxu0 0
    %786 = vmatmul.mubr.bf16.gmra.mrb[0].mxu0 %v202
    %v787 = vpop.f32.mrb[0].mxu0
    %v788 = vadd.f32 %v256, %v787
    %v789 = vpop.f32.mrb[0].mxu0
    %v790 = vadd.f32 %v260, %v789
    %v791 = vpop.f32.mrb[0].mxu0
    %v792 = vadd.f32 %v256, %v791
    %v793 = vpop.f32.mrb[0].mxu0
    %v794 = vadd.f32 %v260, %v793
    %795 = vdwg.mxu0
    %796 = vmatprep.subr.bf16.mxu0 %v430
    %797 = vmatpush1.bf16.msra.mxu0 %v429
    %798 = vmatprep.subr.bf16.mxu0 %v436
    %799 = vmatpush1.bf16.msra.mxu0 %v435
    %800 = vmatprep.subr.bf16.mxu0 %v442
    %801 = vmatpush1.bf16.msra.mxu0 %v441
    %802 = vmatprep.subr.bf16.mxu0 %v448
    %803 = vmatpush1.bf16.msra.mxu0 %v447
    %804 = vmatprep.subr.bf16.mxu0 %v454
    %805 = vmatpush1.bf16.msra.mxu0 %v453
    %806 = vmatprep.subr.bf16.mxu0 %v460
    %807 = vmatpush1.bf16.msra.mxu0 %v459
    %808 = vmatprep.subr.bf16.mxu0 %v466
    %809 = vmatpush1.bf16.msra.mxu0 %v465
    %810 = vmatprep.subr.bf16.mxu0 %v472
    %811 = vmatpush1.bf16.msra.mxu0 %v471
    %812 = vmatprep.subr.bf16.mxu0 0
    %813 = vmatpush1.bf16.msra.mxu0 0
    %814 = vmatprep.subr.bf16.mxu0 0
    %815 = vmatpush1.bf16.msra.mxu0 0
    %816 = vmatprep.subr.bf16.mxu0 0
    %817 = vmatpush1.bf16.msra.mxu0 0
    %818 = vmatprep.subr.bf16.mxu0 0
    %819 = vmatpush1.bf16.msra.mxu0 0
    %820 = vmatprep.subr.bf16.mxu0 0
    %821 = vmatpush1.bf16.msra.mxu0 0
    %822 = vmatprep.subr.bf16.mxu0 0
    %823 = vmatpush1.bf16.msra.mxu0 0
    %824 = vmatprep.subr.bf16.mxu0 0
    %825 = vmatpush1.bf16.msra.mxu0 0
    %826 = vmatprep.subr.bf16.mxu0 0
    %827 = vmatpush1.bf16.msra.mxu0 0
    %828 = vmatprep.mubr.bf16.mxu0 0
    %829 = vmatmul.mubr.bf16.gmra.mrb[0].mxu0 %v179
    %v830 = vpop.f32.mrb[0].mxu0
    %v831 = vadd.f32 %v264, %v830
    %v832 = vpop.f32.mrb[0].mxu0
    %v833 = vadd.f32 %v268, %v832
    %v834 = vpop.f32.mrb[0].mxu0
    %v835 = vadd.f32 %v264, %v834
    %v836 = vpop.f32.mrb[0].mxu0
    %v837 = vadd.f32 %v268, %v836
    %838 = vmatprep.mubr.bf16.mxu0 0
    %839 = vmatmul.mubr.bf16.gmra.mrb[0].mxu0 %v180
    %v840 = vpop.f32.mrb[0].mxu0
    %v841 = vadd.f32 %v264, %v840
    %v842 = vpop.f32.mrb[0].mxu0
    %v843 = vadd.f32 %v268, %v842
    %v844 = vpop.f32.mrb[0].mxu0
    %v845 = vadd.f32 %v264, %v844
    %v846 = vpop.f32.mrb[0].mxu0
    %v847 = vadd.f32 %v268, %v846
    %848 = vmatprep.mubr.bf16.mxu0 0
    %849 = vmatmul.mubr.bf16.gmra.mrb[0].mxu0 %v181
    %v850 = vpop.f32.mrb[0].mxu0
    %v851 = vadd.f32 %v264, %v850
    %v852 = vpop.f32.mrb[0].mxu0
    %v853 = vadd.f32 %v268, %v852
    %v854 = vpop.f32.mrb[0].mxu0
    %v855 = vadd.f32 %v264, %v854
    %v856 = vpop.f32.mrb[0].mxu0
    %v857 = vadd.f32 %v268, %v856
    %858 = vmatprep.mubr.bf16.mxu0 0
    %859 = vmatmul.mubr.bf16.gmra.mrb[0].mxu0 %v182
    %v860 = vpop.f32.mrb[0].mxu0
    %v861 = vadd.f32 %v264, %v860
    %v862 = vpop.f32.mrb[0].mxu0
    %v863 = vadd.f32 %v268, %v862
    %v864 = vpop.f32.mrb[0].mxu0
    %v865 = vadd.f32 %v264, %v864
    %v866 = vpop.f32.mrb[0].mxu0
    %v867 = vadd.f32 %v268, %v866
    %868 = vmatprep.mubr.bf16.mxu0 0
    %869 = vmatmul.mubr.bf16.gmra.mrb[0].mxu0 %v183
    %v870 = vpop.f32.mrb[0].mxu0
    %v871 = vadd.f32 %v264, %v870
    %v872 = vpop.f32.mrb[0].mxu0
    %v873 = vadd.f32 %v268, %v872
    %v874 = vpop.f32.mrb[0].mxu0
    %v875 = vadd.f32 %v264, %v874
    %v876 = vpop.f32.mrb[0].mxu0
    %v877 = vadd.f32 %v268, %v876
    %878 = vmatprep.mubr.bf16.mxu0 0
    %879 = vmatmul.mubr.bf16.gmra.mrb[0].mxu0 %v184
    %v880 = vpop.f32.mrb[0].mxu0
    %v881 = vadd.f32 %v264, %v880
    %v882 = vpop.f32.mrb[0].mxu0
    %v883 = vadd.f32 %v268, %v882
    %v884 = vpop.f32.mrb[0].mxu0
    %v885 = vadd.f32 %v264, %v884
    %v886 = vpop.f32.mrb[0].mxu0
    %v887 = vadd.f32 %v268, %v886
    %888 = vmatprep.mubr.bf16.mxu0 0
    %889 = vmatmul.mubr.bf16.gmra.mrb[0].mxu0 %v185
    %v890 = vpop.f32.mrb[0].mxu0
    %v891 = vadd.f32 %v264, %v890
    %v892 = vpop.f32.mrb[0].mxu0
    %v893 = vadd.f32 %v268, %v892
    %v894 = vpop.f32.mrb[0].mxu0
    %v895 = vadd.f32 %v264, %v894
    %v896 = vpop.f32.mrb[0].mxu0
    %v897 = vadd.f32 %v268, %v896
    %898 = vmatprep.mubr.bf16.mxu0 0
    %899 = vmatmul.mubr.bf16.gmra.mrb[0].mxu0 %v186
    %v900 = vpop.f32.mrb[0].mxu0
    %v901 = vadd.f32 %v264, %v900
    %v902 = vpop.f32.mrb[0].mxu0
    %v903 = vadd.f32 %v268, %v902
    %v904 = vpop.f32.mrb[0].mxu0
    %v905 = vadd.f32 %v264, %v904
    %v906 = vpop.f32.mrb[0].mxu0
    %v907 = vadd.f32 %v268, %v906
    %908 = vmatprep.mubr.bf16.mxu0 0
    %909 = vmatmul.mubr.bf16.gmra.mrb[0].mxu0 %v187
    %v910 = vpop.f32.mrb[0].mxu0
    %v911 = vadd.f32 %v264, %v910
    %v912 = vpop.f32.mrb[0].mxu0
    %v913 = vadd.f32 %v268, %v912
    %v914 = vpop.f32.mrb[0].mxu0
    %v915 = vadd.f32 %v264, %v914
    %v916 = vpop.f32.mrb[0].mxu0
    %v917 = vadd.f32 %v268, %v916
    %918 = vmatprep.mubr.bf16.mxu0 0
    %919 = vmatmul.mubr.bf16.gmra.mrb[0].mxu0 %v188
    %v920 = vpop.f32.mrb[0].mxu0
    %v921 = vadd.f32 %v264, %v920
    %v922 = vpop.f32.mrb[0].mxu0
    %v923 = vadd.f32 %v268, %v922
    %v924 = vpop.f32.mrb[0].mxu0
    %v925 = vadd.f32 %v264, %v924
    %v926 = vpop.f32.mrb[0].mxu0
    %v927 = vadd.f32 %v268, %v926
    %928 = vmatprep.mubr.bf16.mxu0 0
    %929 = vmatmul.mubr.bf16.gmra.mrb[0].mxu0 %v189
    %v930 = vpop.f32.mrb[0].mxu0
    %v931 = vadd.f32 %v264, %v930
    %v932 = vpop.f32.mrb[0].mxu0
    %v933 = vadd.f32 %v268, %v932
    %v934 = vpop.f32.mrb[0].mxu0
    %v935 = vadd.f32 %v264, %v934
    %v936 = vpop.f32.mrb[0].mxu0
    %v937 = vadd.f32 %v268, %v936
    %938 = vmatprep.mubr.bf16.mxu0 0
    %939 = vmatmul.mubr.bf16.gmra.mrb[0].mxu0 %v190
    %v940 = vpop.f32.mrb[0].mxu0
    %v941 = vadd.f32 %v264, %v940
    %v942 = vpop.f32.mrb[0].mxu0
    %v943 = vadd.f32 %v268, %v942
    %v944 = vpop.f32.mrb[0].mxu0
    %v945 = vadd.f32 %v264, %v944
    %v946 = vpop.f32.mrb[0].mxu0
    %v947 = vadd.f32 %v268, %v946
    %948 = vmatprep.mubr.bf16.mxu0 0
    %949 = vmatmul.mubr.bf16.gmra.mrb[0].mxu0 %v191
    %v950 = vpop.f32.mrb[0].mxu0
    %v951 = vadd.f32 %v264, %v950
    %v952 = vpop.f32.mrb[0].mxu0
    %v953 = vadd.f32 %v268, %v952
    %v954 = vpop.f32.mrb[0].mxu0
    %v955 = vadd.f32 %v264, %v954
    %v956 = vpop.f32.mrb[0].mxu0
    %v957 = vadd.f32 %v268, %v956
    %958 = vmatprep.mubr.bf16.mxu0 0
    %959 = vmatmul.mubr.bf16.gmra.mrb[0].mxu0 %v192
    %v960 = vpop.f32.mrb[0].mxu0
    %v961 = vadd.f32 %v264, %v960
    %v962 = vpop.f32.mrb[0].mxu0
    %v963 = vadd.f32 %v268, %v962
    %v964 = vpop.f32.mrb[0].mxu0
    %v965 = vadd.f32 %v264, %v964
    %v966 = vpop.f32.mrb[0].mxu0
    %v967 = vadd.f32 %v268, %v966
    %968 = vmatprep.mubr.bf16.mxu0 0
    %969 = vmatmul.mubr.bf16.gmra.mrb[0].mxu0 %v193
    %v970 = vpop.f32.mrb[0].mxu0
    %v971 = vadd.f32 %v264, %v970
    %v972 = vpop.f32.mrb[0].mxu0
    %v973 = vadd.f32 %v268, %v972
    %v974 = vpop.f32.mrb[0].mxu0
    %v975 = vadd.f32 %v264, %v974
    %v976 = vpop.f32.mrb[0].mxu0
    %v977 = vadd.f32 %v268, %v976
    %978 = vmatprep.mubr.bf16.mxu0 0
    %979 = vmatmul.mubr.bf16.gmra.mrb[0].mxu0 %v194
    %v980 = vpop.f32.mrb[0].mxu0
    %v981 = vadd.f32 %v264, %v980
    %v982 = vpop.f32.mrb[0].mxu0
    %v983 = vadd.f32 %v268, %v982
    %v984 = vpop.f32.mrb[0].mxu0
    %v985 = vadd.f32 %v264, %v984
    %v986 = vpop.f32.mrb[0].mxu0
    %v987 = vadd.f32 %v268, %v986
    %988 = vmatprep.mubr.bf16.mxu0 0
    %989 = vmatmul.mubr.bf16.gmra.mrb[0].mxu0 %v195
    %v990 = vpop.f32.mrb[0].mxu0
    %v991 = vadd.f32 %v264, %v990
    %v992 = vpop.f32.mrb[0].mxu0
    %v993 = vadd.f32 %v268, %v992
    %v994 = vpop.f32.mrb[0].mxu0
    %v995 = vadd.f32 %v264, %v994
    %v996 = vpop.f32.mrb[0].mxu0
    %v997 = vadd.f32 %v268, %v996
    %998 = vmatprep.mubr.bf16.mxu0 0
    %999 = vmatmul.mubr.bf16.gmra.mrb[0].mxu0 %v196
    %v1000 = vpop.f32.mrb[0].mxu0
    %v1001 = vadd.f32 %v264, %v1000
    %v1002 = vpop.f32.mrb[0].mxu0
    %v1003 = vadd.f32 %v268, %v1002
    %v1004 = vpop.f32.mrb[0].mxu0
    %v1005 = vadd.f32 %v264, %v1004
    %v1006 = vpop.f32.mrb[0].mxu0
    %v1007 = vadd.f32 %v268, %v1006
    %1008 = vmatprep.mubr.bf16.mxu0 0
    %1009 = vmatmul.mubr.bf16.gmra.mrb[0].mxu0 %v197
    %v1010 = vpop.f32.mrb[0].mxu0
    %v1011 = vadd.f32 %v264, %v1010
    %v1012 = vpop.f32.mrb[0].mxu0
    %v1013 = vadd.f32 %v268, %v1012
    %v1014 = vpop.f32.mrb[0].mxu0
    %v1015 = vadd.f32 %v264, %v1014
    %v1016 = vpop.f32.mrb[0].mxu0
    %v1017 = vadd.f32 %v268, %v1016
    %1018 = vmatprep.mubr.bf16.mxu0 0
    %1019 = vmatmul.mubr.bf16.gmra.mrb[0].mxu0 %v198
    %v1020 = vpop.f32.mrb[0].mxu0
    %v1021 = vadd.f32 %v264, %v1020
    %v1022 = vpop.f32.mrb[0].mxu0
    %v1023 = vadd.f32 %v268, %v1022
    %v1024 = vpop.f32.mrb[0].mxu0
    %v1025 = vadd.f32 %v264, %v1024
    %v1026 = vpop.f32.mrb[0].mxu0
    %v1027 = vadd.f32 %v268, %v1026
    %1028 = vmatprep.mubr.bf16.mxu0 0
    %1029 = vmatmul.mubr.bf16.gmra.mrb[0].mxu0 %v199
    %v1030 = vpop.f32.mrb[0].mxu0
    %v1031 = vadd.f32 %v264, %v1030
    %v1032 = vpop.f32.mrb[0].mxu0
    %v1033 = vadd.f32 %v268, %v1032
    %v1034 = vpop.f32.mrb[0].mxu0
    %v1035 = vadd.f32 %v264, %v1034
    %v1036 = vpop.f32.mrb[0].mxu0
    %v1037 = vadd.f32 %v268, %v1036
    %1038 = vmatprep.mubr.bf16.mxu0 0
    %1039 = vmatmul.mubr.bf16.gmra.mrb[0].mxu0 %v200
    %v1040 = vpop.f32.mrb[0].mxu0
    %v1041 = vadd.f32 %v264, %v1040
    %v1042 = vpop.f32.mrb[0].mxu0
    %v1043 = vadd.f32 %v268, %v1042
    %v1044 = vpop.f32.mrb[0].mxu0
    %v1045 = vadd.f32 %v264, %v1044
    %v1046 = vpop.f32.mrb[0].mxu0
    %v1047 = vadd.f32 %v268, %v1046
    %1048 = vmatprep.mubr.bf16.mxu0 0
    %1049 = vmatmul.mubr.bf16.gmra.mrb[0].mxu0 %v201
    %v1050 = vpop.f32.mrb[0].mxu0
    %v1051 = vadd.f32 %v264, %v1050
    %v1052 = vpop.f32.mrb[0].mxu0
    %v1053 = vadd.f32 %v268, %v1052
    %v1054 = vpop.f32.mrb[0].mxu0
    %v1055 = vadd.f32 %v264, %v1054
    %v1056 = vpop.f32.mrb[0].mxu0
    %v1057 = vadd.f32 %v268, %v1056
    %1058 = vmatprep.mubr.bf16.mxu0 0
    %1059 = vmatmul.mubr.bf16.gmra.mrb[0].mxu0 %v202
    %v1060 = vpop.f32.mrb[0].mxu0
    %v1061 = vadd.f32 %v264, %v1060
    %v1062 = vpop.f32.mrb[0].mxu0
    %v1063 = vadd.f32 %v268, %v1062
    %v1064 = vpop.f32.mrb[0].mxu0
    %v1065 = vadd.f32 %v264, %v1064
    %v1066 = vpop.f32.mrb[0].mxu0
    %v1067 = vadd.f32 %v268, %v1066
    %1068 = vdwg.mxu0
    %1069 = vmatprep.subr.bf16.mxu0 %v432
    %1070 = vmatpush1.bf16.msra.mxu0 %v431
    %1071 = vmatprep.subr.bf16.mxu0 %v438
    %1072 = vmatpush1.bf16.msra.mxu0 %v437
    %1073 = vmatprep.subr.bf16.mxu0 %v444
    %1074 = vmatpush1.bf16.msra.mxu0 %v443
    %1075 = vmatprep.subr.bf16.mxu0 %v450
    %1076 = vmatpush1.bf16.msra.mxu0 %v449
    %1077 = vmatprep.subr.bf16.mxu0 %v456
    %1078 = vmatpush1.bf16.msra.mxu0 %v455
    %1079 = vmatprep.subr.bf16.mxu0 %v462
    %1080 = vmatpush1.bf16.msra.mxu0 %v461
    %1081 = vmatprep.subr.bf16.mxu0 %v468
    %1082 = vmatpush1.bf16.msra.mxu0 %v467
    %1083 = vmatprep.subr.bf16.mxu0 %v474
    %1084 = vmatpush1.bf16.msra.mxu0 %v473
    %1085 = vmatprep.subr.bf16.mxu0 0
    %1086 = vmatpush1.bf16.msra.mxu0 0
    %1087 = vmatprep.subr.bf16.mxu0 0
    %1088 = vmatpush1.bf16.msra.mxu0 0
    %1089 = vmatprep.subr.bf16.mxu0 0
    %1090 = vmatpush1.bf16.msra.mxu0 0
    %1091 = vmatprep.subr.bf16.mxu0 0
    %1092 = vmatpush1.bf16.msra.mxu0 0
    %1093 = vmatprep.subr.bf16.mxu0 0
    %1094 = vmatpush1.bf16.msra.mxu0 0
    %1095 = vmatprep.subr.bf16.mxu0 0
    %1096 = vmatpush1.bf16.msra.mxu0 0
    %1097 = vmatprep.subr.bf16.mxu0 0
    %1098 = vmatpush1.bf16.msra.mxu0 0
    %1099 = vmatprep.subr.bf16.mxu0 0
    %1100 = vmatpush1.bf16.msra.mxu0 0
    %1101 = vmatprep.mubr.bf16.mxu0 0
    %1102 = vmatmul.mubr.bf16.gmra.mrb[0].mxu0 %v179
    %v1103 = vpop.f32.mrb[0].mxu0
    %v1104 = vadd.f32 %v272, %v1103
    %v1105 = vpop.f32.mrb[0].mxu0
    %v1106 = vadd.f32 %v276, %v1105
    %v1107 = vpop.f32.mrb[0].mxu0
    %v1108 = vadd.f32 %v272, %v1107
    %v1109 = vpop.f32.mrb[0].mxu0
    %v1110 = vadd.f32 %v276, %v1109
    %1111 = vmatprep.mubr.bf16.mxu0 0
    %1112 = vmatmul.mubr.bf16.gmra.mrb[0].mxu0 %v180
    %v1113 = vpop.f32.mrb[0].mxu0
    %v1114 = vadd.f32 %v272, %v1113
    %v1115 = vpop.f32.mrb[0].mxu0
    %v1116 = vadd.f32 %v276, %v1115
    %v1117 = vpop.f32.mrb[0].mxu0
    %v1118 = vadd.f32 %v272, %v1117
    %v1119 = vpop.f32.mrb[0].mxu0
    %v1120 = vadd.f32 %v276, %v1119
    %1121 = vmatprep.mubr.bf16.mxu0 0
    %1122 = vmatmul.mubr.bf16.gmra.mrb[0].mxu0 %v181
    %v1123 = vpop.f32.mrb[0].mxu0
    %v1124 = vadd.f32 %v272, %v1123
    %v1125 = vpop.f32.mrb[0].mxu0
    %v1126 = vadd.f32 %v276, %v1125
    %v1127 = vpop.f32.mrb[0].mxu0
    %v1128 = vadd.f32 %v272, %v1127
    %v1129 = vpop.f32.mrb[0].mxu0
    %v1130 = vadd.f32 %v276, %v1129
    %1131 = vmatprep.mubr.bf16.mxu0 0
    %1132 = vmatmul.mubr.bf16.gmra.mrb[0].mxu0 %v182
    %v1133 = vpop.f32.mrb[0].mxu0
    %v1134 = vadd.f32 %v272, %v1133
    %v1135 = vpop.f32.mrb[0].mxu0
    %v1136 = vadd.f32 %v276, %v1135
    %v1137 = vpop.f32.mrb[0].mxu0
    %v1138 = vadd.f32 %v272, %v1137
    %v1139 = vpop.f32.mrb[0].mxu0
    %v1140 = vadd.f32 %v276, %v1139
    %1141 = vmatprep.mubr.bf16.mxu0 0
    %1142 = vmatmul.mubr.bf16.gmra.mrb[0].mxu0 %v183
    %v1143 = vpop.f32.mrb[0].mxu0
    %v1144 = vadd.f32 %v272, %v1143
    %v1145 = vpop.f32.mrb[0].mxu0
    %v1146 = vadd.f32 %v276, %v1145
    %v1147 = vpop.f32.mrb[0].mxu0
    %v1148 = vadd.f32 %v272, %v1147
    %v1149 = vpop.f32.mrb[0].mxu0
    %v1150 = vadd.f32 %v276, %v1149
    %1151 = vmatprep.mubr.bf16.mxu0 0
    %1152 = vmatmul.mubr.bf16.gmra.mrb[0].mxu0 %v184
    %v1153 = vpop.f32.mrb[0].mxu0
    %v1154 = vadd.f32 %v272, %v1153
    %v1155 = vpop.f32.mrb[0].mxu0
    %v1156 = vadd.f32 %v276, %v1155
    %v1157 = vpop.f32.mrb[0].mxu0
    %v1158 = vadd.f32 %v272, %v1157
    %v1159 = vpop.f32.mrb[0].mxu0
    %v1160 = vadd.f32 %v276, %v1159
    %1161 = vmatprep.mubr.bf16.mxu0 0
    %1162 = vmatmul.mubr.bf16.gmra.mrb[0].mxu0 %v185
    %v1163 = vpop.f32.mrb[0].mxu0
    %v1164 = vadd.f32 %v272, %v1163
    %v1165 = vpop.f32.mrb[0].mxu0
    %v1166 = vadd.f32 %v276, %v1165
    %v1167 = vpop.f32.mrb[0].mxu0
    %v1168 = vadd.f32 %v272, %v1167
    %v1169 = vpop.f32.mrb[0].mxu0
    %v1170 = vadd.f32 %v276, %v1169
    %1171 = vmatprep.mubr.bf16.mxu0 0
    %1172 = vmatmul.mubr.bf16.gmra.mrb[0].mxu0 %v186
    %v1173 = vpop.f32.mrb[0].mxu0
    %v1174 = vadd.f32 %v272, %v1173
    %v1175 = vpop.f32.mrb[0].mxu0
    %v1176 = vadd.f32 %v276, %v1175
    %v1177 = vpop.f32.mrb[0].mxu0
    %v1178 = vadd.f32 %v272, %v1177
    %v1179 = vpop.f32.mrb[0].mxu0
    %v1180 = vadd.f32 %v276, %v1179
    %1181 = vmatprep.mubr.bf16.mxu0 0
    %1182 = vmatmul.mubr.bf16.gmra.mrb[0].mxu0 %v187
    %v1183 = vpop.f32.mrb[0].mxu0
    %v1184 = vadd.f32 %v272, %v1183
    %v1185 = vpop.f32.mrb[0].mxu0
    %v1186 = vadd.f32 %v276, %v1185
    %v1187 = vpop.f32.mrb[0].mxu0
    %v1188 = vadd.f32 %v272, %v1187
    %v1189 = vpop.f32.mrb[0].mxu0
    %v1190 = vadd.f32 %v276, %v1189
    %1191 = vmatprep.mubr.bf16.mxu0 0
    %1192 = vmatmul.mubr.bf16.gmra.mrb[0].mxu0 %v188
    %v1193 = vpop.f32.mrb[0].mxu0
    %v1194 = vadd.f32 %v272, %v1193
    %v1195 = vpop.f32.mrb[0].mxu0
    %v1196 = vadd.f32 %v276, %v1195
    %v1197 = vpop.f32.mrb[0].mxu0
    %v1198 = vadd.f32 %v272, %v1197
    %v1199 = vpop.f32.mrb[0].mxu0
    %v1200 = vadd.f32 %v276, %v1199
    %1201 = vmatprep.mubr.bf16.mxu0 0
    %1202 = vmatmul.mubr.bf16.gmra.mrb[0].mxu0 %v189
    %v1203 = vpop.f32.mrb[0].mxu0
    %v1204 = vadd.f32 %v272, %v1203
    %v1205 = vpop.f32.mrb[0].mxu0
    %v1206 = vadd.f32 %v276, %v1205
    %v1207 = vpop.f32.mrb[0].mxu0
    %v1208 = vadd.f32 %v272, %v1207
    %v1209 = vpop.f32.mrb[0].mxu0
    %v1210 = vadd.f32 %v276, %v1209
    %1211 = vmatprep.mubr.bf16.mxu0 0
    %1212 = vmatmul.mubr.bf16.gmra.mrb[0].mxu0 %v190
    %v1213 = vpop.f32.mrb[0].mxu0
    %v1214 = vadd.f32 %v272, %v1213
    %v1215 = vpop.f32.mrb[0].mxu0
    %v1216 = vadd.f32 %v276, %v1215
    %v1217 = vpop.f32.mrb[0].mxu0
    %v1218 = vadd.f32 %v272, %v1217
    %v1219 = vpop.f32.mrb[0].mxu0
    %v1220 = vadd.f32 %v276, %v1219
    %1221 = vmatprep.mubr.bf16.mxu0 0
    %1222 = vmatmul.mubr.bf16.gmra.mrb[0].mxu0 %v191
    %v1223 = vpop.f32.mrb[0].mxu0
    %v1224 = vadd.f32 %v272, %v1223
    %v1225 = vpop.f32.mrb[0].mxu0
    %v1226 = vadd.f32 %v276, %v1225
    %v1227 = vpop.f32.mrb[0].mxu0
    %v1228 = vadd.f32 %v272, %v1227
    %v1229 = vpop.f32.mrb[0].mxu0
    %v1230 = vadd.f32 %v276, %v1229
    %1231 = vmatprep.mubr.bf16.mxu0 0
    %1232 = vmatmul.mubr.bf16.gmra.mrb[0].mxu0 %v192
    %v1233 = vpop.f32.mrb[0].mxu0
    %v1234 = vadd.f32 %v272, %v1233
    %v1235 = vpop.f32.mrb[0].mxu0
    %v1236 = vadd.f32 %v276, %v1235
    %v1237 = vpop.f32.mrb[0].mxu0
    %v1238 = vadd.f32 %v272, %v1237
    %v1239 = vpop.f32.mrb[0].mxu0
    %v1240 = vadd.f32 %v276, %v1239
    %1241 = vmatprep.mubr.bf16.mxu0 0
    %1242 = vmatmul.mubr.bf16.gmra.mrb[0].mxu0 %v193
    %v1243 = vpop.f32.mrb[0].mxu0
    %v1244 = vadd.f32 %v272, %v1243
    %v1245 = vpop.f32.mrb[0].mxu0
    %v1246 = vadd.f32 %v276, %v1245
    %v1247 = vpop.f32.mrb[0].mxu0
    %v1248 = vadd.f32 %v272, %v1247
    %v1249 = vpop.f32.mrb[0].mxu0
    %v1250 = vadd.f32 %v276, %v1249
    %1251 = vmatprep.mubr.bf16.mxu0 0
    %1252 = vmatmul.mubr.bf16.gmra.mrb[0].mxu0 %v194
    %v1253 = vpop.f32.mrb[0].mxu0
    %v1254 = vadd.f32 %v272, %v1253
    %v1255 = vpop.f32.mrb[0].mxu0
    %v1256 = vadd.f32 %v276, %v1255
    %v1257 = vpop.f32.mrb[0].mxu0
    %v1258 = vadd.f32 %v272, %v1257
    %v1259 = vpop.f32.mrb[0].mxu0
    %v1260 = vadd.f32 %v276, %v1259
    %1261 = vmatprep.mubr.bf16.mxu0 0
    %1262 = vmatmul.mubr.bf16.gmra.mrb[0].mxu0 %v195
    %v1263 = vpop.f32.mrb[0].mxu0
    %v1264 = vadd.f32 %v272, %v1263
    %v1265 = vpop.f32.mrb[0].mxu0
    %v1266 = vadd.f32 %v276, %v1265
    %v1267 = vpop.f32.mrb[0].mxu0
    %v1268 = vadd.f32 %v272, %v1267
    %v1269 = vpop.f32.mrb[0].mxu0
    %v1270 = vadd.f32 %v276, %v1269
    %1271 = vmatprep.mubr.bf16.mxu0 0
    %1272 = vmatmul.mubr.bf16.gmra.mrb[0].mxu0 %v196
    %v1273 = vpop.f32.mrb[0].mxu0
    %v1274 = vadd.f32 %v272, %v1273
    %v1275 = vpop.f32.mrb[0].mxu0
    %v1276 = vadd.f32 %v276, %v1275
    %v1277 = vpop.f32.mrb[0].mxu0
    %v1278 = vadd.f32 %v272, %v1277
    %v1279 = vpop.f32.mrb[0].mxu0
    %v1280 = vadd.f32 %v276, %v1279
    %1281 = vmatprep.mubr.bf16.mxu0 0
    %1282 = vmatmul.mubr.bf16.gmra.mrb[0].mxu0 %v197
    %v1283 = vpop.f32.mrb[0].mxu0
    %v1284 = vadd.f32 %v272, %v1283
    %v1285 = vpop.f32.mrb[0].mxu0
    %v1286 = vadd.f32 %v276, %v1285
    %v1287 = vpop.f32.mrb[0].mxu0
    %v1288 = vadd.f32 %v272, %v1287
    %v1289 = vpop.f32.mrb[0].mxu0
    %v1290 = vadd.f32 %v276, %v1289
    %1291 = vmatprep.mubr.bf16.mxu0 0
    %1292 = vmatmul.mubr.bf16.gmra.mrb[0].mxu0 %v198
    %v1293 = vpop.f32.mrb[0].mxu0
    %v1294 = vadd.f32 %v272, %v1293
    %v1295 = vpop.f32.mrb[0].mxu0
    %v1296 = vadd.f32 %v276, %v1295
    %v1297 = vpop.f32.mrb[0].mxu0
    %v1298 = vadd.f32 %v272, %v1297
    %v1299 = vpop.f32.mrb[0].mxu0
    %v1300 = vadd.f32 %v276, %v1299
    %1301 = vmatprep.mubr.bf16.mxu0 0
    %1302 = vmatmul.mubr.bf16.gmra.mrb[0].mxu0 %v199
    %v1303 = vpop.f32.mrb[0].mxu0
    %v1304 = vadd.f32 %v272, %v1303
    %v1305 = vpop.f32.mrb[0].mxu0
    %v1306 = vadd.f32 %v276, %v1305
    %v1307 = vpop.f32.mrb[0].mxu0
    %v1308 = vadd.f32 %v272, %v1307
    %v1309 = vpop.f32.mrb[0].mxu0
    %v1310 = vadd.f32 %v276, %v1309
    %1311 = vmatprep.mubr.bf16.mxu0 0
    %1312 = vmatmul.mubr.bf16.gmra.mrb[0].mxu0 %v200
    %v1313 = vpop.f32.mrb[0].mxu0
    %v1314 = vadd.f32 %v272, %v1313
    %v1315 = vpop.f32.mrb[0].mxu0
    %v1316 = vadd.f32 %v276, %v1315
    %v1317 = vpop.f32.mrb[0].mxu0
    %v1318 = vadd.f32 %v272, %v1317
    %v1319 = vpop.f32.mrb[0].mxu0
    %v1320 = vadd.f32 %v276, %v1319
    %1321 = vmatprep.mubr.bf16.mxu0 0
    %1322 = vmatmul.mubr.bf16.gmra.mrb[0].mxu0 %v201
    %v1323 = vpop.f32.mrb[0].mxu0
    %v1324 = vadd.f32 %v272, %v1323
    %v1325 = vpop.f32.mrb[0].mxu0
    %v1326 = vadd.f32 %v276, %v1325
    %v1327 = vpop.f32.mrb[0].mxu0
    %v1328 = vadd.f32 %v272, %v1327
    %v1329 = vpop.f32.mrb[0].mxu0
    %v1330 = vadd.f32 %v276, %v1329
    %1331 = vmatprep.mubr.bf16.mxu0 0
    %1332 = vmatmul.mubr.bf16.gmra.mrb[0].mxu0 %v202
    %v1333 = vpop.f32.mrb[0].mxu0
    %v1334 = vadd.f32 %v272, %v1333
    %v1335 = vpop.f32.mrb[0].mxu0
    %v1336 = vadd.f32 %v276, %v1335
    %v1337 = vpop.f32.mrb[0].mxu0
    %v1338 = vadd.f32 %v272, %v1337
    %v1339 = vpop.f32.mrb[0].mxu0
    %v1340 = vadd.f32 %v276, %v1339
    %1341 = vdwg.mxu0
    %v1342 = vpack.c.bf16 %v562, %v558
    %v1343 = vpack.c.bf16 %v564, %v560
    %v1344 = vpack.c.bf16 %v572, %v568
    %v1345 = vpack.c.bf16 %v574, %v570
    %v1346 = vpack.c.bf16 %v582, %v578
    %v1347 = vpack.c.bf16 %v584, %v580
    %v1348 = vpack.c.bf16 %v592, %v588
    %v1349 = vpack.c.bf16 %v594, %v590
    %v1350 = vpack.c.bf16 %v602, %v598
    %v1351 = vpack.c.bf16 %v604, %v600
    %v1352 = vpack.c.bf16 %v612, %v608
    %v1353 = vpack.c.bf16 %v614, %v610
    %v1354 = vpack.c.bf16 %v622, %v618
    %v1355 = vpack.c.bf16 %v624, %v620
    %v1356 = vpack.c.bf16 %v632, %v628
    %v1357 = vpack.c.bf16 %v634, %v630
    %v1358 = vpack.c.bf16 %v642, %v638
    %v1359 = vpack.c.bf16 %v644, %v640
    %v1360 = vpack.c.bf16 %v652, %v648
    %v1361 = vpack.c.bf16 %v654, %v650
    %v1362 = vpack.c.bf16 %v662, %v658
    %v1363 = vpack.c.bf16 %v664, %v660
    %v1364 = vpack.c.bf16 %v672, %v668
    %v1365 = vpack.c.bf16 %v674, %v670
    %v1366 = vpack.c.bf16 %v682, %v678
    %v1367 = vpack.c.bf16 %v684, %v680
    %v1368 = vpack.c.bf16 %v692, %v688
    %v1369 = vpack.c.bf16 %v694, %v690
    %v1370 = vpack.c.bf16 %v702, %v698
    %v1371 = vpack.c.bf16 %v704, %v700
    %v1372 = vpack.c.bf16 %v712, %v708
    %v1373 = vpack.c.bf16 %v714, %v710
    %v1374 = vpack.c.bf16 %v722, %v718
    %v1375 = vpack.c.bf16 %v724, %v720
    %v1376 = vpack.c.bf16 %v732, %v728
    %v1377 = vpack.c.bf16 %v734, %v730
    %v1378 = vpack.c.bf16 %v742, %v738
    %v1379 = vpack.c.bf16 %v744, %v740
    %v1380 = vpack.c.bf16 %v752, %v748
    %v1381 = vpack.c.bf16 %v754, %v750
    %v1382 = vpack.c.bf16 %v762, %v758
    %v1383 = vpack.c.bf16 %v764, %v760
    %v1384 = vpack.c.bf16 %v772, %v768
    %v1385 = vpack.c.bf16 %v774, %v770
    %v1386 = vpack.c.bf16 %v782, %v778
    %v1387 = vpack.c.bf16 %v784, %v780
    %v1388 = vpack.c.bf16 %v792, %v788
    %v1389 = vpack.c.bf16 %v794, %v790
    %v1390 = vpack.c.bf16 %v835, %v831
    %v1391 = vpack.c.bf16 %v837, %v833
    %v1392 = vpack.c.bf16 %v845, %v841
    %v1393 = vpack.c.bf16 %v847, %v843
    %v1394 = vpack.c.bf16 %v855, %v851
    %v1395 = vpack.c.bf16 %v857, %v853
    %v1396 = vpack.c.bf16 %v865, %v861
    %v1397 = vpack.c.bf16 %v867, %v863
    %v1398 = vpack.c.bf16 %v875, %v871
    %v1399 = vpack.c.bf16 %v877, %v873
    %v1400 = vpack.c.bf16 %v885, %v881
    %v1401 = vpack.c.bf16 %v887, %v883
    %v1402 = vpack.c.bf16 %v895, %v891
    %v1403 = vpack.c.bf16 %v897, %v893
    %v1404 = vpack.c.bf16 %v905, %v901
    %v1405 = vpack.c.bf16 %v907, %v903
    %v1406 = vpack.c.bf16 %v915, %v911
    %v1407 = vpack.c.bf16 %v917, %v913
    %v1408 = vpack.c.bf16 %v925, %v921
    %v1409 = vpack.c.bf16 %v927, %v923
    %v1410 = vpack.c.bf16 %v935, %v931
    %v1411 = vpack.c.bf16 %v937, %v933
    %v1412 = vpack.c.bf16 %v945, %v941
    %v1413 = vpack.c.bf16 %v947, %v943
    %v1414 = vpack.c.bf16 %v955, %v951
    %v1415 = vpack.c.bf16 %v957, %v953
    %v1416 = vpack.c.bf16 %v965, %v961
    %v1417 = vpack.c.bf16 %v967, %v963
    %v1418 = vpack.c.bf16 %v975, %v971
    %v1419 = vpack.c.bf16 %v977, %v973
    %v1420 = vpack.c.bf16 %v985, %v981
    %v1421 = vpack.c.bf16 %v987, %v983
    %v1422 = vpack.c.bf16 %v995, %v991
    %v1423 = vpack.c.bf16 %v997, %v993
    %v1424 = vpack.c.bf16 %v1005, %v1001
    %v1425 = vpack.c.bf16 %v1007, %v1003
    %v1426 = vpack.c.bf16 %v1015, %v1011
    %v1427 = vpack.c.bf16 %v1017, %v1013
    %v1428 = vpack.c.bf16 %v1025, %v1021
    %v1429 = vpack.c.bf16 %v1027, %v1023
    %v1430 = vpack.c.bf16 %v1035, %v1031
    %v1431 = vpack.c.bf16 %v1037, %v1033
    %v1432 = vpack.c.bf16 %v1045, %v1041
    %v1433 = vpack.c.bf16 %v1047, %v1043
    %v1434 = vpack.c.bf16 %v1055, %v1051
    %v1435 = vpack.c.bf16 %v1057, %v1053
    %v1436 = vpack.c.bf16 %v1065, %v1061
    %v1437 = vpack.c.bf16 %v1067, %v1063
    %v1438 = vpack.c.bf16 %v1108, %v1104
    %v1439 = vpack.c.bf16 %v1110, %v1106
    %v1440 = vpack.c.bf16 %v1118, %v1114
    %v1441 = vpack.c.bf16 %v1120, %v1116
    %v1442 = vpack.c.bf16 %v1128, %v1124
    %v1443 = vpack.c.bf16 %v1130, %v1126
    %v1444 = vpack.c.bf16 %v1138, %v1134
    %v1445 = vpack.c.bf16 %v1140, %v1136
    %v1446 = vpack.c.bf16 %v1148, %v1144
    %v1447 = vpack.c.bf16 %v1150, %v1146
    %v1448 = vpack.c.bf16 %v1158, %v1154
    %v1449 = vpack.c.bf16 %v1160, %v1156
    %v1450 = vpack.c.bf16 %v1168, %v1164
    %v1451 = vpack.c.bf16 %v1170, %v1166
    %v1452 = vpack.c.bf16 %v1178, %v1174
    %v1453 = vpack.c.bf16 %v1180, %v1176
    %v1454 = vpack.c.bf16 %v1188, %v1184
    %v1455 = vpack.c.bf16 %v1190, %v1186
    %v1456 = vpack.c.bf16 %v1198, %v1194
    %v1457 = vpack.c.bf16 %v1200, %v1196
    %v1458 = vpack.c.bf16 %v1208, %v1204
    %v1459 = vpack.c.bf16 %v1210, %v1206
    %v1460 = vpack.c.bf16 %v1218, %v1214
    %v1461 = vpack.c.bf16 %v1220, %v1216
    %v1462 = vpack.c.bf16 %v1228, %v1224
    %v1463 = vpack.c.bf16 %v1230, %v1226
    %v1464 = vpack.c.bf16 %v1238, %v1234
    %v1465 = vpack.c.bf16 %v1240, %v1236
    %v1466 = vpack.c.bf16 %v1248, %v1244
    %v1467 = vpack.c.bf16 %v1250, %v1246
    %v1468 = vpack.c.bf16 %v1258, %v1254
    %v1469 = vpack.c.bf16 %v1260, %v1256
    %v1470 = vpack.c.bf16 %v1268, %v1264
    %v1471 = vpack.c.bf16 %v1270, %v1266
    %v1472 = vpack.c.bf16 %v1278, %v1274
    %v1473 = vpack.c.bf16 %v1280, %v1276
    %v1474 = vpack.c.bf16 %v1288, %v1284
    %v1475 = vpack.c.bf16 %v1290, %v1286
    %v1476 = vpack.c.bf16 %v1298, %v1294
    %v1477 = vpack.c.bf16 %v1300, %v1296
    %v1478 = vpack.c.bf16 %v1308, %v1304
    %v1479 = vpack.c.bf16 %v1310, %v1306
    %v1480 = vpack.c.bf16 %v1318, %v1314
    %v1481 = vpack.c.bf16 %v1320, %v1316
    %v1482 = vpack.c.bf16 %v1328, %v1324
    %v1483 = vpack.c.bf16 %v1330, %v1326
    %v1484 = vpack.c.bf16 %v1338, %v1334
    %v1485 = vpack.c.bf16 %v1340, %v1336
    %v1486 = vld [vmem:[#allocation7] sm:$0xff]
    %v1487 = vld [vmem:[#allocation7 + $0x8] sm:$0xff]
    %v1488 = vld [vmem:[#allocation7 + $0x10] sm:$0xff]
    %v1489 = vld [vmem:[#allocation7 + $0x18] sm:$0xff]
    %v1490 = vld [vmem:[#allocation7 + $0x20] sm:$0xff]
    %v1491 = vld [vmem:[#allocation7 + $0x28] sm:$0xff]
    %v1492 = vld [vmem:[#allocation7 + $0x30] sm:$0xff]
    %v1493 = vld [vmem:[#allocation7 + $0x38] sm:$0xff]
    %v1494 = vld [vmem:[#allocation7 + $0x40] sm:$0xff]
    %v1495 = vld [vmem:[#allocation7 + $0x48] sm:$0xff]
    %v1496 = vld [vmem:[#allocation7 + $0x50] sm:$0xff]
    %v1497 = vld [vmem:[#allocation7 + $0x58] sm:$0xff]
    %v1498 = vld [vmem:[#allocation7 + $0x60] sm:$0xff]
    %v1499 = vld [vmem:[#allocation7 + $0x68] sm:$0xff]
    %v1500 = vld [vmem:[#allocation7 + $0x70] sm:$0xff]
    %v1501 = vld [vmem:[#allocation7 + $0x78] sm:$0xff]
    %v1502 = vld [vmem:[#allocation7 + $0x80] sm:$0xff]
    %v1503 = vld [vmem:[#allocation7 + $0x88] sm:$0xff]
    %v1504 = vld [vmem:[#allocation7 + $0x90] sm:$0xff]
    %v1505 = vld [vmem:[#allocation7 + $0x98] sm:$0xff]
    %v1506 = vld [vmem:[#allocation7 + $0xa0] sm:$0xff]
    %v1507 = vld [vmem:[#allocation7 + $0xa8] sm:$0xff]
    %v1508 = vld [vmem:[#allocation7 + $0xb0] sm:$0xff]
    %v1509 = vld [vmem:[#allocation7 + $0xb8] sm:$0xff]
    %v1510 = vld [vmem:[#allocation7 + $0xc0] sm:$0xff]
    %v1511 = vld [vmem:[#allocation7 + $0xc8] sm:$0xff]
    %v1512 = vld [vmem:[#allocation7 + $0xd0] sm:$0xff]
    %v1513 = vld [vmem:[#allocation7 + $0xd8] sm:$0xff]
    %v1514 = vld [vmem:[#allocation7 + $0xe0] sm:$0xff]
    %v1515 = vld [vmem:[#allocation7 + $0xe8] sm:$0xff]
    %v1516 = vld [vmem:[#allocation7 + $0xf0] sm:$0xff]
    %v1517 = vld [vmem:[#allocation7 + $0xf8] sm:$0xff]
    %v1518 = vld [vmem:[#allocation7 + $0x100] sm:$0xff]
    %v1519 = vld [vmem:[#allocation7 + $0x108] sm:$0xff]
    %v1520 = vld [vmem:[#allocation7 + $0x110] sm:$0xff]
    %v1521 = vld [vmem:[#allocation7 + $0x118] sm:$0xff]
    %v1522 = vld [vmem:[#allocation7 + $0x120] sm:$0xff]
    %v1523 = vld [vmem:[#allocation7 + $0x128] sm:$0xff]
    %v1524 = vld [vmem:[#allocation7 + $0x130] sm:$0xff]
    %v1525 = vld [vmem:[#allocation7 + $0x138] sm:$0xff]
    %v1526 = vld [vmem:[#allocation7 + $0x140] sm:$0xff]
    %v1527 = vld [vmem:[#allocation7 + $0x148] sm:$0xff]
    %v1528 = vld [vmem:[#allocation7 + $0x150] sm:$0xff]
    %v1529 = vld [vmem:[#allocation7 + $0x158] sm:$0xff]
    %v1530 = vld [vmem:[#allocation7 + $0x160] sm:$0xff]
    %v1531 = vld [vmem:[#allocation7 + $0x168] sm:$0xff]
    %v1532 = vld [vmem:[#allocation7 + $0x170] sm:$0xff]
    %v1533 = vld [vmem:[#allocation7 + $0x178] sm:$0xff]
    %v1534 = vld [vmem:[#allocation7 + $0x180] sm:$0xff]
    %v1535 = vld [vmem:[#allocation7 + $0x188] sm:$0xff]
    %v1536 = vld [vmem:[#allocation7 + $0x190] sm:$0xff]
    %v1537 = vld [vmem:[#allocation7 + $0x198] sm:$0xff]
    %v1538 = vld [vmem:[#allocation7 + $0x1a0] sm:$0xff]
    %v1539 = vld [vmem:[#allocation7 + $0x1a8] sm:$0xff]
    %v1540 = vld [vmem:[#allocation7 + $0x1b0] sm:$0xff]
    %v1541 = vld [vmem:[#allocation7 + $0x1b8] sm:$0xff]
    %v1542 = vld [vmem:[#allocation7 + $0x1c0] sm:$0xff]
    %v1543 = vld [vmem:[#allocation7 + $0x1c8] sm:$0xff]
    %v1544 = vld [vmem:[#allocation7 + $0x1d0] sm:$0xff]
    %v1545 = vld [vmem:[#allocation7 + $0x1d8] sm:$0xff]
    %v1546 = vld [vmem:[#allocation7 + $0x1e0] sm:$0xff]
    %v1547 = vld [vmem:[#allocation7 + $0x1e8] sm:$0xff]
    %v1548 = vld [vmem:[#allocation7 + $0x1f0] sm:$0xff]
    %v1549 = vld [vmem:[#allocation7 + $0x1f8] sm:$0xff]
    %v1550 = vpack.c.bf16 %v1488, %v1486
    %v1551 = vpack.c.bf16 %v1489, %v1487
    %v1552 = vpack.c.bf16 %v1492, %v1490
    %v1553 = vpack.c.bf16 %v1493, %v1491
    %v1554 = vpack.c.bf16 %v1496, %v1494
    %v1555 = vpack.c.bf16 %v1497, %v1495
    %v1556 = vpack.c.bf16 %v1500, %v1498
    %v1557 = vpack.c.bf16 %v1501, %v1499
    %v1558 = vpack.c.bf16 %v1504, %v1502
    %v1559 = vpack.c.bf16 %v1505, %v1503
    %v1560 = vpack.c.bf16 %v1508, %v1506
    %v1561 = vpack.c.bf16 %v1509, %v1507
    %v1562 = vpack.c.bf16 %v1512, %v1510
    %v1563 = vpack.c.bf16 %v1513, %v1511
    %v1564 = vpack.c.bf16 %v1516, %v1514
    %v1565 = vpack.c.bf16 %v1517, %v1515
    %v1566 = vpack.c.bf16 %v1520, %v1518
    %v1567 = vpack.c.bf16 %v1521, %v1519
    %v1568 = vpack.c.bf16 %v1524, %v1522
    %v1569 = vpack.c.bf16 %v1525, %v1523
    %v1570 = vpack.c.bf16 %v1528, %v1526
    %v1571 = vpack.c.bf16 %v1529, %v1527
    %v1572 = vpack.c.bf16 %v1532, %v1530
    %v1573 = vpack.c.bf16 %v1533, %v1531
    %v1574 = vpack.c.bf16 %v1536, %v1534
    %v1575 = vpack.c.bf16 %v1537, %v1535
    %v1576 = vpack.c.bf16 %v1540, %v1538
    %v1577 = vpack.c.bf16 %v1541, %v1539
    %v1578 = vpack.c.bf16 %v1544, %v1542
    %v1579 = vpack.c.bf16 %v1545, %v1543
    %v1580 = vpack.c.bf16 %v1548, %v1546
    %v1581 = vpack.c.bf16 %v1549, %v1547
    %v1582 = vmul.bf16 %v1390, %v1550
    %v1583 = vmul.bf16 %v1391, %v1551
    %v1584 = vmul.bf16 %v1390, %v1552
    %v1585 = vmul.bf16 %v1391, %v1553
    %v1586 = vmul.bf16 %v1390, %v1554
    %v1587 = vmul.bf16 %v1391, %v1555
    %v1588 = vmul.bf16 %v1390, %v1556
    %v1589 = vmul.bf16 %v1391, %v1557
    %v1590 = vmul.bf16 %v1390, %v1558
    %v1591 = vmul.bf16 %v1391, %v1559
    %v1592 = vmul.bf16 %v1390, %v1560
    %v1593 = vmul.bf16 %v1391, %v1561
    %v1594 = vmul.bf16 %v1390, %v1562
    %v1595 = vmul.bf16 %v1391, %v1563
    %v1596 = vmul.bf16 %v1390, %v1564
    %v1597 = vmul.bf16 %v1391, %v1565
    %v1598 = vmul.bf16 %v1390, %v1566
    %v1599 = vmul.bf16 %v1391, %v1567
    %v1600 = vmul.bf16 %v1390, %v1568
    %v1601 = vmul.bf16 %v1391, %v1569
    %v1602 = vmul.bf16 %v1390, %v1570
    %v1603 = vmul.bf16 %v1391, %v1571
    %v1604 = vmul.bf16 %v1390, %v1572
    %v1605 = vmul.bf16 %v1391, %v1573
    %v1606 = vmul.bf16 %v1390, %v1574
    %v1607 = vmul.bf16 %v1391, %v1575
    %v1608 = vmul.bf16 %v1390, %v1576
    %v1609 = vmul.bf16 %v1391, %v1577
    %v1610 = vmul.bf16 %v1390, %v1578
    %v1611 = vmul.bf16 %v1391, %v1579
    %v1612 = vmul.bf16 %v1390, %v1580
    %v1613 = vmul.bf16 %v1391, %v1581
    %v1614 = vmul.bf16 %v1392, %v1550
    %v1615 = vmul.bf16 %v1393, %v1551
    %v1616 = vmul.bf16 %v1392, %v1552
    %v1617 = vmul.bf16 %v1393, %v1553
    %v1618 = vmul.bf16 %v1392, %v1554
    %v1619 = vmul.bf16 %v1393, %v1555
    %v1620 = vmul.bf16 %v1392, %v1556
    %v1621 = vmul.bf16 %v1393, %v1557
    %v1622 = vmul.bf16 %v1392, %v1558
    %v1623 = vmul.bf16 %v1393, %v1559
    %v1624 = vmul.bf16 %v1392, %v1560
    %v1625 = vmul.bf16 %v1393, %v1561
    %v1626 = vmul.bf16 %v1392, %v1562
    %v1627 = vmul.bf16 %v1393, %v1563
    %v1628 = vmul.bf16 %v1392, %v1564
    %v1629 = vmul.bf16 %v1393, %v1565
    %v1630 = vmul.bf16 %v1392, %v1566
    %v1631 = vmul.bf16 %v1393, %v1567
    %v1632 = vmul.bf16 %v1392, %v1568
    %v1633 = vmul.bf16 %v1393, %v1569
    %v1634 = vmul.bf16 %v1392, %v1570
    %v1635 = vmul.bf16 %v1393, %v1571
    %v1636 = vmul.bf16 %v1392, %v1572
    %v1637 = vmul.bf16 %v1393, %v1573
    %v1638 = vmul.bf16 %v1392, %v1574
    %v1639 = vmul.bf16 %v1393, %v1575
    %v1640 = vmul.bf16 %v1392, %v1576
    %v1641 = vmul.bf16 %v1393, %v1577
    %v1642 = vmul.bf16 %v1392, %v1578
    %v1643 = vmul.bf16 %v1393, %v1579
    %v1644 = vmul.bf16 %v1392, %v1580
    %v1645 = vmul.bf16 %v1393, %v1581
    %v1646 = vmul.bf16 %v1394, %v1550
    %v1647 = vmul.bf16 %v1395, %v1551
    %v1648 = vmul.bf16 %v1394, %v1552
    %v1649 = vmul.bf16 %v1395, %v1553
    %v1650 = vmul.bf16 %v1394, %v1554
    %v1651 = vmul.bf16 %v1395, %v1555
    %v1652 = vmul.bf16 %v1394, %v1556
    %v1653 = vmul.bf16 %v1395, %v1557
    %v1654 = vmul.bf16 %v1394, %v1558
    %v1655 = vmul.bf16 %v1395, %v1559
    %v1656 = vmul.bf16 %v1394, %v1560
    %v1657 = vmul.bf16 %v1395, %v1561
    %v1658 = vmul.bf16 %v1394, %v1562
    %v1659 = vmul.bf16 %v1395, %v1563
    %v1660 = vmul.bf16 %v1394, %v1564
    %v1661 = vmul.bf16 %v1395, %v1565
    %v1662 = vmul.bf16 %v1394, %v1566
    %v1663 = vmul.bf16 %v1395, %v1567
    %v1664 = vmul.bf16 %v1394, %v1568
    %v1665 = vmul.bf16 %v1395, %v1569
    %v1666 = vmul.bf16 %v1394, %v1570
    %v1667 = vmul.bf16 %v1395, %v1571
    %v1668 = vmul.bf16 %v1394, %v1572
    %v1669 = vmul.bf16 %v1395, %v1573
    %v1670 = vmul.bf16 %v1394, %v1574
    %v1671 = vmul.bf16 %v1395, %v1575
    %v1672 = vmul.bf16 %v1394, %v1576
    %v1673 = vmul.bf16 %v1395, %v1577
    %v1674 = vmul.bf16 %v1394, %v1578
    %v1675 = vmul.bf16 %v1395, %v1579
    %v1676 = vmul.bf16 %v1394, %v1580
    %v1677 = vmul.bf16 %v1395, %v1581
    %v1678 = vmul.bf16 %v1396, %v1550
    %v1679 = vmul.bf16 %v1397, %v1551
    %v1680 = vmul.bf16 %v1396, %v1552
    %v1681 = vmul.bf16 %v1397, %v1553
    %v1682 = vmul.bf16 %v1396, %v1554
    %v1683 = vmul.bf16 %v1397, %v1555
    %v1684 = vmul.bf16 %v1396, %v1556
    %v1685 = vmul.bf16 %v1397, %v1557
    %v1686 = vmul.bf16 %v1396, %v1558
    %v1687 = vmul.bf16 %v1397, %v1559
    %v1688 = vmul.bf16 %v1396, %v1560
    %v1689 = vmul.bf16 %v1397, %v1561
    %v1690 = vmul.bf16 %v1396, %v1562
    %v1691 = vmul.bf16 %v1397, %v1563
    %v1692 = vmul.bf16 %v1396, %v1564
    %v1693 = vmul.bf16 %v1397, %v1565
    %v1694 = vmul.bf16 %v1396, %v1566
    %v1695 = vmul.bf16 %v1397, %v1567
    %v1696 = vmul.bf16 %v1396, %v1568
    %v1697 = vmul.bf16 %v1397, %v1569
    %v1698 = vmul.bf16 %v1396, %v1570
    %v1699 = vmul.bf16 %v1397, %v1571
    %v1700 = vmul.bf16 %v1396, %v1572
    %v1701 = vmul.bf16 %v1397, %v1573
    %v1702 = vmul.bf16 %v1396, %v1574
    %v1703 = vmul.bf16 %v1397, %v1575
    %v1704 = vmul.bf16 %v1396, %v1576
    %v1705 = vmul.bf16 %v1397, %v1577
    %v1706 = vmul.bf16 %v1396, %v1578
    %v1707 = vmul.bf16 %v1397, %v1579
    %v1708 = vmul.bf16 %v1396, %v1580
    %v1709 = vmul.bf16 %v1397, %v1581
    %v1710 = vmul.bf16 %v1398, %v1550
    %v1711 = vmul.bf16 %v1399, %v1551
    %v1712 = vmul.bf16 %v1398, %v1552
    %v1713 = vmul.bf16 %v1399, %v1553
    %v1714 = vmul.bf16 %v1398, %v1554
    %v1715 = vmul.bf16 %v1399, %v1555
    %v1716 = vmul.bf16 %v1398, %v1556
    %v1717 = vmul.bf16 %v1399, %v1557
    %v1718 = vmul.bf16 %v1398, %v1558
    %v1719 = vmul.bf16 %v1399, %v1559
    %v1720 = vmul.bf16 %v1398, %v1560
    %v1721 = vmul.bf16 %v1399, %v1561
    %v1722 = vmul.bf16 %v1398, %v1562
    %v1723 = vmul.bf16 %v1399, %v1563
    %v1724 = vmul.bf16 %v1398, %v1564
    %v1725 = vmul.bf16 %v1399, %v1565
    %v1726 = vmul.bf16 %v1398, %v1566
    %v1727 = vmul.bf16 %v1399, %v1567
    %v1728 = vmul.bf16 %v1398, %v1568
    %v1729 = vmul.bf16 %v1399, %v1569
    %v1730 = vmul.bf16 %v1398, %v1570
    %v1731 = vmul.bf16 %v1399, %v1571
    %v1732 = vmul.bf16 %v1398, %v1572
    %v1733 = vmul.bf16 %v1399, %v1573
    %v1734 = vmul.bf16 %v1398, %v1574
    %v1735 = vmul.bf16 %v1399, %v1575
    %v1736 = vmul.bf16 %v1398, %v1576
    %v1737 = vmul.bf16 %v1399, %v1577
    %v1738 = vmul.bf16 %v1398, %v1578
    %v1739 = vmul.bf16 %v1399, %v1579
    %v1740 = vmul.bf16 %v1398, %v1580
    %v1741 = vmul.bf16 %v1399, %v1581
    %v1742 = vmul.bf16 %v1400, %v1550
    %v1743 = vmul.bf16 %v1401, %v1551
    %v1744 = vmul.bf16 %v1400, %v1552
    %v1745 = vmul.bf16 %v1401, %v1553
    %v1746 = vmul.bf16 %v1400, %v1554
    %v1747 = vmul.bf16 %v1401, %v1555
    %v1748 = vmul.bf16 %v1400, %v1556
    %v1749 = vmul.bf16 %v1401, %v1557
    %v1750 = vmul.bf16 %v1400, %v1558
    %v1751 = vmul.bf16 %v1401, %v1559
    %v1752 = vmul.bf16 %v1400, %v1560
    %v1753 = vmul.bf16 %v1401, %v1561
    %v1754 = vmul.bf16 %v1400, %v1562
    %v1755 = vmul.bf16 %v1401, %v1563
    %v1756 = vmul.bf16 %v1400, %v1564
    %v1757 = vmul.bf16 %v1401, %v1565
    %v1758 = vmul.bf16 %v1400, %v1566
    %v1759 = vmul.bf16 %v1401, %v1567
    %v1760 = vmul.bf16 %v1400, %v1568
    %v1761 = vmul.bf16 %v1401, %v1569
    %v1762 = vmul.bf16 %v1400, %v1570
    %v1763 = vmul.bf16 %v1401, %v1571
    %v1764 = vmul.bf16 %v1400, %v1572
    %v1765 = vmul.bf16 %v1401, %v1573
    %v1766 = vmul.bf16 %v1400, %v1574
    %v1767 = vmul.bf16 %v1401, %v1575
    %v1768 = vmul.bf16 %v1400, %v1576
    %v1769 = vmul.bf16 %v1401, %v1577
    %v1770 = vmul.bf16 %v1400, %v1578
    %v1771 = vmul.bf16 %v1401, %v1579
    %v1772 = vmul.bf16 %v1400, %v1580
    %v1773 = vmul.bf16 %v1401, %v1581
    %v1774 = vmul.bf16 %v1402, %v1550
    %v1775 = vmul.bf16 %v1403, %v1551
    %v1776 = vmul.bf16 %v1402, %v1552
    %v1777 = vmul.bf16 %v1403, %v1553
    %v1778 = vmul.bf16 %v1402, %v1554
    %v1779 = vmul.bf16 %v1403, %v1555
    %v1780 = vmul.bf16 %v1402, %v1556
    %v1781 = vmul.bf16 %v1403, %v1557
    %v1782 = vmul.bf16 %v1402, %v1558
    %v1783 = vmul.bf16 %v1403, %v1559
    %v1784 = vmul.bf16 %v1402, %v1560
    %v1785 = vmul.bf16 %v1403, %v1561
    %v1786 = vmul.bf16 %v1402, %v1562
    %v1787 = vmul.bf16 %v1403, %v1563
    %v1788 = vmul.bf16 %v1402, %v1564
    %v1789 = vmul.bf16 %v1403, %v1565
    %v1790 = vmul.bf16 %v1402, %v1566
    %v1791 = vmul.bf16 %v1403, %v1567
    %v1792 = vmul.bf16 %v1402, %v1568
    %v1793 = vmul.bf16 %v1403, %v1569
    %v1794 = vmul.bf16 %v1402, %v1570
    %v1795 = vmul.bf16 %v1403, %v1571
    %v1796 = vmul.bf16 %v1402, %v1572
    %v1797 = vmul.bf16 %v1403, %v1573
    %v1798 = vmul.bf16 %v1402, %v1574
    %v1799 = vmul.bf16 %v1403, %v1575
    %v1800 = vmul.bf16 %v1402, %v1576
    %v1801 = vmul.bf16 %v1403, %v1577
    %v1802 = vmul.bf16 %v1402, %v1578
    %v1803 = vmul.bf16 %v1403, %v1579
    %v1804 = vmul.bf16 %v1402, %v1580
    %v1805 = vmul.bf16 %v1403, %v1581
    %v1806 = vmul.bf16 %v1404, %v1550
    %v1807 = vmul.bf16 %v1405, %v1551
    %v1808 = vmul.bf16 %v1404, %v1552
    %v1809 = vmul.bf16 %v1405, %v1553
    %v1810 = vmul.bf16 %v1404, %v1554
    %v1811 = vmul.bf16 %v1405, %v1555
    %v1812 = vmul.bf16 %v1404, %v1556
    %v1813 = vmul.bf16 %v1405, %v1557
    %v1814 = vmul.bf16 %v1404, %v1558
    %v1815 = vmul.bf16 %v1405, %v1559
    %v1816 = vmul.bf16 %v1404, %v1560
    %v1817 = vmul.bf16 %v1405, %v1561
    %v1818 = vmul.bf16 %v1404, %v1562
    %v1819 = vmul.bf16 %v1405, %v1563
    %v1820 = vmul.bf16 %v1404, %v1564
    %v1821 = vmul.bf16 %v1405, %v1565
    %v1822 = vmul.bf16 %v1404, %v1566
    %v1823 = vmul.bf16 %v1405, %v1567
    %v1824 = vmul.bf16 %v1404, %v1568
    %v1825 = vmul.bf16 %v1405, %v1569
    %v1826 = vmul.bf16 %v1404, %v1570
    %v1827 = vmul.bf16 %v1405, %v1571
    %v1828 = vmul.bf16 %v1404, %v1572
    %v1829 = vmul.bf16 %v1405, %v1573
    %v1830 = vmul.bf16 %v1404, %v1574
    %v1831 = vmul.bf16 %v1405, %v1575
    %v1832 = vmul.bf16 %v1404, %v1576
    %v1833 = vmul.bf16 %v1405, %v1577
    %v1834 = vmul.bf16 %v1404, %v1578
    %v1835 = vmul.bf16 %v1405, %v1579
    %v1836 = vmul.bf16 %v1404, %v1580
    %v1837 = vmul.bf16 %v1405, %v1581
    %v1838 = vmul.bf16 %v1406, %v1550
    %v1839 = vmul.bf16 %v1407, %v1551
    %v1840 = vmul.bf16 %v1406, %v1552
    %v1841 = vmul.bf16 %v1407, %v1553
    %v1842 = vmul.bf16 %v1406, %v1554
    %v1843 = vmul.bf16 %v1407, %v1555
    %v1844 = vmul.bf16 %v1406, %v1556
    %v1845 = vmul.bf16 %v1407, %v1557
    %v1846 = vmul.bf16 %v1406, %v1558
    %v1847 = vmul.bf16 %v1407, %v1559
    %v1848 = vmul.bf16 %v1406, %v1560
    %v1849 = vmul.bf16 %v1407, %v1561
    %v1850 = vmul.bf16 %v1406, %v1562
    %v1851 = vmul.bf16 %v1407, %v1563
    %v1852 = vmul.bf16 %v1406, %v1564
    %v1853 = vmul.bf16 %v1407, %v1565
    %v1854 = vmul.bf16 %v1406, %v1566
    %v1855 = vmul.bf16 %v1407, %v1567
    %v1856 = vmul.bf16 %v1406, %v1568
    %v1857 = vmul.bf16 %v1407, %v1569
    %v1858 = vmul.bf16 %v1406, %v1570
    %v1859 = vmul.bf16 %v1407, %v1571
    %v1860 = vmul.bf16 %v1406, %v1572
    %v1861 = vmul.bf16 %v1407, %v1573
    %v1862 = vmul.bf16 %v1406, %v1574
    %v1863 = vmul.bf16 %v1407, %v1575
    %v1864 = vmul.bf16 %v1406, %v1576
    %v1865 = vmul.bf16 %v1407, %v1577
    %v1866 = vmul.bf16 %v1406, %v1578
    %v1867 = vmul.bf16 %v1407, %v1579
    %v1868 = vmul.bf16 %v1406, %v1580
    %v1869 = vmul.bf16 %v1407, %v1581
    %v1870 = vmul.bf16 %v1408, %v1550
    %v1871 = vmul.bf16 %v1409, %v1551
    %v1872 = vmul.bf16 %v1408, %v1552
    %v1873 = vmul.bf16 %v1409, %v1553
    %v1874 = vmul.bf16 %v1408, %v1554
    %v1875 = vmul.bf16 %v1409, %v1555
    %v1876 = vmul.bf16 %v1408, %v1556
    %v1877 = vmul.bf16 %v1409, %v1557
    %v1878 = vmul.bf16 %v1408, %v1558
    %v1879 = vmul.bf16 %v1409, %v1559
    %v1880 = vmul.bf16 %v1408, %v1560
    %v1881 = vmul.bf16 %v1409, %v1561
    %v1882 = vmul.bf16 %v1408, %v1562
    %v1883 = vmul.bf16 %v1409, %v1563
    %v1884 = vmul.bf16 %v1408, %v1564
    %v1885 = vmul.bf16 %v1409, %v1565
    %v1886 = vmul.bf16 %v1408, %v1566
    %v1887 = vmul.bf16 %v1409, %v1567
    %v1888 = vmul.bf16 %v1408, %v1568
    %v1889 = vmul.bf16 %v1409, %v1569
    %v1890 = vmul.bf16 %v1408, %v1570
    %v1891 = vmul.bf16 %v1409, %v1571
    %v1892 = vmul.bf16 %v1408, %v1572
    %v1893 = vmul.bf16 %v1409, %v1573
    %v1894 = vmul.bf16 %v1408, %v1574
    %v1895 = vmul.bf16 %v1409, %v1575
    %v1896 = vmul.bf16 %v1408, %v1576
    %v1897 = vmul.bf16 %v1409, %v1577
    %v1898 = vmul.bf16 %v1408, %v1578
    %v1899 = vmul.bf16 %v1409, %v1579
    %v1900 = vmul.bf16 %v1408, %v1580
    %v1901 = vmul.bf16 %v1409, %v1581
    %v1902 = vmul.bf16 %v1410, %v1550
    %v1903 = vmul.bf16 %v1411, %v1551
    %v1904 = vmul.bf16 %v1410, %v1552
    %v1905 = vmul.bf16 %v1411, %v1553
    %v1906 = vmul.bf16 %v1410, %v1554
    %v1907 = vmul.bf16 %v1411, %v1555
    %v1908 = vmul.bf16 %v1410, %v1556
    %v1909 = vmul.bf16 %v1411, %v1557
    %v1910 = vmul.bf16 %v1410, %v1558
    %v1911 = vmul.bf16 %v1411, %v1559
    %v1912 = vmul.bf16 %v1410, %v1560
    %v1913 = vmul.bf16 %v1411, %v1561
    %v1914 = vmul.bf16 %v1410, %v1562
    %v1915 = vmul.bf16 %v1411, %v1563
    %v1916 = vmul.bf16 %v1410, %v1564
    %v1917 = vmul.bf16 %v1411, %v1565
    %v1918 = vmul.bf16 %v1410, %v1566
    %v1919 = vmul.bf16 %v1411, %v1567
    %v1920 = vmul.bf16 %v1410, %v1568
    %v1921 = vmul.bf16 %v1411, %v1569
    %v1922 = vmul.bf16 %v1410, %v1570
    %v1923 = vmul.bf16 %v1411, %v1571
    %v1924 = vmul.bf16 %v1410, %v1572
    %v1925 = vmul.bf16 %v1411, %v1573
    %v1926 = vmul.bf16 %v1410, %v1574
    %v1927 = vmul.bf16 %v1411, %v1575
    %v1928 = vmul.bf16 %v1410, %v1576
    %v1929 = vmul.bf16 %v1411, %v1577
    %v1930 = vmul.bf16 %v1410, %v1578
    %v1931 = vmul.bf16 %v1411, %v1579
    %v1932 = vmul.bf16 %v1410, %v1580
    %v1933 = vmul.bf16 %v1411, %v1581
    %v1934 = vmul.bf16 %v1412, %v1550
    %v1935 = vmul.bf16 %v1413, %v1551
    %v1936 = vmul.bf16 %v1412, %v1552
    %v1937 = vmul.bf16 %v1413, %v1553
    %v1938 = vmul.bf16 %v1412, %v1554
    %v1939 = vmul.bf16 %v1413, %v1555
    %v1940 = vmul.bf16 %v1412, %v1556
    %v1941 = vmul.bf16 %v1413, %v1557
    %v1942 = vmul.bf16 %v1412, %v1558
    %v1943 = vmul.bf16 %v1413, %v1559
    %v1944 = vmul.bf16 %v1412, %v1560
    %v1945 = vmul.bf16 %v1413, %v1561
    %v1946 = vmul.bf16 %v1412, %v1562
    %v1947 = vmul.bf16 %v1413, %v1563
    %v1948 = vmul.bf16 %v1412, %v1564
    %v1949 = vmul.bf16 %v1413, %v1565
    %v1950 = vmul.bf16 %v1412, %v1566
    %v1951 = vmul.bf16 %v1413, %v1567
    %v1952 = vmul.bf16 %v1412, %v1568
    %v1953 = vmul.bf16 %v1413, %v1569
    %v1954 = vmul.bf16 %v1412, %v1570
    %v1955 = vmul.bf16 %v1413, %v1571
    %v1956 = vmul.bf16 %v1412, %v1572
    %v1957 = vmul.bf16 %v1413, %v1573
    %v1958 = vmul.bf16 %v1412, %v1574
    %v1959 = vmul.bf16 %v1413, %v1575
    %v1960 = vmul.bf16 %v1412, %v1576
    %v1961 = vmul.bf16 %v1413, %v1577
    %v1962 = vmul.bf16 %v1412, %v1578
    %v1963 = vmul.bf16 %v1413, %v1579
    %v1964 = vmul.bf16 %v1412, %v1580
    %v1965 = vmul.bf16 %v1413, %v1581
    %v1966 = vmul.bf16 %v1414, %v1550
    %v1967 = vmul.bf16 %v1415, %v1551
    %v1968 = vmul.bf16 %v1414, %v1552
    %v1969 = vmul.bf16 %v1415, %v1553
    %v1970 = vmul.bf16 %v1414, %v1554
    %v1971 = vmul.bf16 %v1415, %v1555
    %v1972 = vmul.bf16 %v1414, %v1556
    %v1973 = vmul.bf16 %v1415, %v1557
    %v1974 = vmul.bf16 %v1414, %v1558
    %v1975 = vmul.bf16 %v1415, %v1559
    %v1976 = vmul.bf16 %v1414, %v1560
    %v1977 = vmul.bf16 %v1415, %v1561
    %v1978 = vmul.bf16 %v1414, %v1562
    %v1979 = vmul.bf16 %v1415, %v1563
    %v1980 = vmul.bf16 %v1414, %v1564
    %v1981 = vmul.bf16 %v1415, %v1565
    %v1982 = vmul.bf16 %v1414, %v1566
    %v1983 = vmul.bf16 %v1415, %v1567
    %v1984 = vmul.bf16 %v1414, %v1568
    %v1985 = vmul.bf16 %v1415, %v1569
    %v1986 = vmul.bf16 %v1414, %v1570
    %v1987 = vmul.bf16 %v1415, %v1571
    %v1988 = vmul.bf16 %v1414, %v1572
    %v1989 = vmul.bf16 %v1415, %v1573
    %v1990 = vmul.bf16 %v1414, %v1574
    %v1991 = vmul.bf16 %v1415, %v1575
    %v1992 = vmul.bf16 %v1414, %v1576
    %v1993 = vmul.bf16 %v1415, %v1577
    %v1994 = vmul.bf16 %v1414, %v1578
    %v1995 = vmul.bf16 %v1415, %v1579
    %v1996 = vmul.bf16 %v1414, %v1580
    %v1997 = vmul.bf16 %v1415, %v1581
    %v1998 = vmul.bf16 %v1416, %v1550
    %v1999 = vmul.bf16 %v1417, %v1551
    %v2000 = vmul.bf16 %v1416, %v1552
    %v2001 = vmul.bf16 %v1417, %v1553
    %v2002 = vmul.bf16 %v1416, %v1554
    %v2003 = vmul.bf16 %v1417, %v1555
    %v2004 = vmul.bf16 %v1416, %v1556
    %v2005 = vmul.bf16 %v1417, %v1557
    %v2006 = vmul.bf16 %v1416, %v1558
    %v2007 = vmul.bf16 %v1417, %v1559
    %v2008 = vmul.bf16 %v1416, %v1560
    %v2009 = vmul.bf16 %v1417, %v1561
    %v2010 = vmul.bf16 %v1416, %v1562
    %v2011 = vmul.bf16 %v1417, %v1563
    %v2012 = vmul.bf16 %v1416, %v1564
    %v2013 = vmul.bf16 %v1417, %v1565
    %v2014 = vmul.bf16 %v1416, %v1566
    %v2015 = vmul.bf16 %v1417, %v1567
    %v2016 = vmul.bf16 %v1416, %v1568
    %v2017 = vmul.bf16 %v1417, %v1569
    %v2018 = vmul.bf16 %v1416, %v1570
    %v2019 = vmul.bf16 %v1417, %v1571
    %v2020 = vmul.bf16 %v1416, %v1572
    %v2021 = vmul.bf16 %v1417, %v1573
    %v2022 = vmul.bf16 %v1416, %v1574
    %v2023 = vmul.bf16 %v1417, %v1575
    %v2024 = vmul.bf16 %v1416, %v1576
    %v2025 = vmul.bf16 %v1417, %v1577
    %v2026 = vmul.bf16 %v1416, %v1578
    %v2027 = vmul.bf16 %v1417, %v1579
    %v2028 = vmul.bf16 %v1416, %v1580
    %v2029 = vmul.bf16 %v1417, %v1581
    %v2030 = vmul.bf16 %v1418, %v1550
    %v2031 = vmul.bf16 %v1419, %v1551
    %v2032 = vmul.bf16 %v1418, %v1552
    %v2033 = vmul.bf16 %v1419, %v1553
    %v2034 = vmul.bf16 %v1418, %v1554
    %v2035 = vmul.bf16 %v1419, %v1555
    %v2036 = vmul.bf16 %v1418, %v1556
    %v2037 = vmul.bf16 %v1419, %v1557
    %v2038 = vmul.bf16 %v1418, %v1558
    %v2039 = vmul.bf16 %v1419, %v1559
    %v2040 = vmul.bf16 %v1418, %v1560
    %v2041 = vmul.bf16 %v1419, %v1561
    %v2042 = vmul.bf16 %v1418, %v1562
    %v2043 = vmul.bf16 %v1419, %v1563
    %v2044 = vmul.bf16 %v1418, %v1564
    %v2045 = vmul.bf16 %v1419, %v1565
    %v2046 = vmul.bf16 %v1418, %v1566
    %v2047 = vmul.bf16 %v1419, %v1567
    %v2048 = vmul.bf16 %v1418, %v1568
    %v2049 = vmul.bf16 %v1419, %v1569
    %v2050 = vmul.bf16 %v1418, %v1570
    %v2051 = vmul.bf16 %v1419, %v1571
    %v2052 = vmul.bf16 %v1418, %v1572
    %v2053 = vmul.bf16 %v1419, %v1573
    %v2054 = vmul.bf16 %v1418, %v1574
    %v2055 = vmul.bf16 %v1419, %v1575
    %v2056 = vmul.bf16 %v1418, %v1576
    %v2057 = vmul.bf16 %v1419, %v1577
    %v2058 = vmul.bf16 %v1418, %v1578
    %v2059 = vmul.bf16 %v1419, %v1579
    %v2060 = vmul.bf16 %v1418, %v1580
    %v2061 = vmul.bf16 %v1419, %v1581
    %v2062 = vmul.bf16 %v1420, %v1550
    %v2063 = vmul.bf16 %v1421, %v1551
    %v2064 = vmul.bf16 %v1420, %v1552
    %v2065 = vmul.bf16 %v1421, %v1553
    %v2066 = vmul.bf16 %v1420, %v1554
    %v2067 = vmul.bf16 %v1421, %v1555
    %v2068 = vmul.bf16 %v1420, %v1556
    %v2069 = vmul.bf16 %v1421, %v1557
    %v2070 = vmul.bf16 %v1420, %v1558
    %v2071 = vmul.bf16 %v1421, %v1559
    %v2072 = vmul.bf16 %v1420, %v1560
    %v2073 = vmul.bf16 %v1421, %v1561
    %v2074 = vmul.bf16 %v1420, %v1562
    %v2075 = vmul.bf16 %v1421, %v1563
    %v2076 = vmul.bf16 %v1420, %v1564
    %v2077 = vmul.bf16 %v1421, %v1565
    %v2078 = vmul.bf16 %v1420, %v1566
    %v2079 = vmul.bf16 %v1421, %v1567
    %v2080 = vmul.bf16 %v1420, %v1568
    %v2081 = vmul.bf16 %v1421, %v1569
    %v2082 = vmul.bf16 %v1420, %v1570
    %v2083 = vmul.bf16 %v1421, %v1571
    %v2084 = vmul.bf16 %v1420, %v1572
    %v2085 = vmul.bf16 %v1421, %v1573
    %v2086 = vmul.bf16 %v1420, %v1574
    %v2087 = vmul.bf16 %v1421, %v1575
    %v2088 = vmul.bf16 %v1420, %v1576
    %v2089 = vmul.bf16 %v1421, %v1577
    %v2090 = vmul.bf16 %v1420, %v1578
    %v2091 = vmul.bf16 %v1421, %v1579
    %v2092 = vmul.bf16 %v1420, %v1580
    %v2093 = vmul.bf16 %v1421, %v1581
    %v2094 = vmul.bf16 %v1422, %v1550
    %v2095 = vmul.bf16 %v1423, %v1551
    %v2096 = vmul.bf16 %v1422, %v1552
    %v2097 = vmul.bf16 %v1423, %v1553
    %v2098 = vmul.bf16 %v1422, %v1554
    %v2099 = vmul.bf16 %v1423, %v1555
    %v2100 = vmul.bf16 %v1422, %v1556
    %v2101 = vmul.bf16 %v1423, %v1557
    %v2102 = vmul.bf16 %v1422, %v1558
    %v2103 = vmul.bf16 %v1423, %v1559
    %v2104 = vmul.bf16 %v1422, %v1560
    %v2105 = vmul.bf16 %v1423, %v1561
    %v2106 = vmul.bf16 %v1422, %v1562
    %v2107 = vmul.bf16 %v1423, %v1563
    %v2108 = vmul.bf16 %v1422, %v1564
    %v2109 = vmul.bf16 %v1423, %v1565
    %v2110 = vmul.bf16 %v1422, %v1566
    %v2111 = vmul.bf16 %v1423, %v1567
    %v2112 = vmul.bf16 %v1422, %v1568
    %v2113 = vmul.bf16 %v1423, %v1569
    %v2114 = vmul.bf16 %v1422, %v1570
    %v2115 = vmul.bf16 %v1423, %v1571
    %v2116 = vmul.bf16 %v1422, %v1572
    %v2117 = vmul.bf16 %v1423, %v1573
    %v2118 = vmul.bf16 %v1422, %v1574
    %v2119 = vmul.bf16 %v1423, %v1575
    %v2120 = vmul.bf16 %v1422, %v1576
    %v2121 = vmul.bf16 %v1423, %v1577
    %v2122 = vmul.bf16 %v1422, %v1578
    %v2123 = vmul.bf16 %v1423, %v1579
    %v2124 = vmul.bf16 %v1422, %v1580
    %v2125 = vmul.bf16 %v1423, %v1581
    %v2126 = vmul.bf16 %v1424, %v1550
    %v2127 = vmul.bf16 %v1425, %v1551
    %v2128 = vmul.bf16 %v1424, %v1552
    %v2129 = vmul.bf16 %v1425, %v1553
    %v2130 = vmul.bf16 %v1424, %v1554
    %v2131 = vmul.bf16 %v1425, %v1555
    %v2132 = vmul.bf16 %v1424, %v1556
    %v2133 = vmul.bf16 %v1425, %v1557
    %v2134 = vmul.bf16 %v1424, %v1558
    %v2135 = vmul.bf16 %v1425, %v1559
    %v2136 = vmul.bf16 %v1424, %v1560
    %v2137 = vmul.bf16 %v1425, %v1561
    %v2138 = vmul.bf16 %v1424, %v1562
    %v2139 = vmul.bf16 %v1425, %v1563
    %v2140 = vmul.bf16 %v1424, %v1564
    %v2141 = vmul.bf16 %v1425, %v1565
    %v2142 = vmul.bf16 %v1424, %v1566
    %v2143 = vmul.bf16 %v1425, %v1567
    %v2144 = vmul.bf16 %v1424, %v1568
    %v2145 = vmul.bf16 %v1425, %v1569
    %v2146 = vmul.bf16 %v1424, %v1570
    %v2147 = vmul.bf16 %v1425, %v1571
    %v2148 = vmul.bf16 %v1424, %v1572
    %v2149 = vmul.bf16 %v1425, %v1573
    %v2150 = vmul.bf16 %v1424, %v1574
    %v2151 = vmul.bf16 %v1425, %v1575
    %v2152 = vmul.bf16 %v1424, %v1576
    %v2153 = vmul.bf16 %v1425, %v1577
    %v2154 = vmul.bf16 %v1424, %v1578
    %v2155 = vmul.bf16 %v1425, %v1579
    %v2156 = vmul.bf16 %v1424, %v1580
    %v2157 = vmul.bf16 %v1425, %v1581
    %v2158 = vmul.bf16 %v1426, %v1550
    %v2159 = vmul.bf16 %v1427, %v1551
    %v2160 = vmul.bf16 %v1426, %v1552
    %v2161 = vmul.bf16 %v1427, %v1553
    %v2162 = vmul.bf16 %v1426, %v1554
    %v2163 = vmul.bf16 %v1427, %v1555
    %v2164 = vmul.bf16 %v1426, %v1556
    %v2165 = vmul.bf16 %v1427, %v1557
    %v2166 = vmul.bf16 %v1426, %v1558
    %v2167 = vmul.bf16 %v1427, %v1559
    %v2168 = vmul.bf16 %v1426, %v1560
    %v2169 = vmul.bf16 %v1427, %v1561
    %v2170 = vmul.bf16 %v1426, %v1562
    %v2171 = vmul.bf16 %v1427, %v1563
    %v2172 = vmul.bf16 %v1426, %v1564
    %v2173 = vmul.bf16 %v1427, %v1565
    %v2174 = vmul.bf16 %v1426, %v1566
    %v2175 = vmul.bf16 %v1427, %v1567
    %v2176 = vmul.bf16 %v1426, %v1568
    %v2177 = vmul.bf16 %v1427, %v1569
    %v2178 = vmul.bf16 %v1426, %v1570
    %v2179 = vmul.bf16 %v1427, %v1571
    %v2180 = vmul.bf16 %v1426, %v1572
    %v2181 = vmul.bf16 %v1427, %v1573
    %v2182 = vmul.bf16 %v1426, %v1574
    %v2183 = vmul.bf16 %v1427, %v1575
    %v2184 = vmul.bf16 %v1426, %v1576
    %v2185 = vmul.bf16 %v1427, %v1577
    %v2186 = vmul.bf16 %v1426, %v1578
    %v2187 = vmul.bf16 %v1427, %v1579
    %v2188 = vmul.bf16 %v1426, %v1580
    %v2189 = vmul.bf16 %v1427, %v1581
    %v2190 = vmul.bf16 %v1428, %v1550
    %v2191 = vmul.bf16 %v1429, %v1551
    %v2192 = vmul.bf16 %v1428, %v1552
    %v2193 = vmul.bf16 %v1429, %v1553
    %v2194 = vmul.bf16 %v1428, %v1554
    %v2195 = vmul.bf16 %v1429, %v1555
    %v2196 = vmul.bf16 %v1428, %v1556
    %v2197 = vmul.bf16 %v1429, %v1557
    %v2198 = vmul.bf16 %v1428, %v1558
    %v2199 = vmul.bf16 %v1429, %v1559
    %v2200 = vmul.bf16 %v1428, %v1560
    %v2201 = vmul.bf16 %v1429, %v1561
    %v2202 = vmul.bf16 %v1428, %v1562
    %v2203 = vmul.bf16 %v1429, %v1563
    %v2204 = vmul.bf16 %v1428, %v1564
    %v2205 = vmul.bf16 %v1429, %v1565
    %v2206 = vmul.bf16 %v1428, %v1566
    %v2207 = vmul.bf16 %v1429, %v1567
    %v2208 = vmul.bf16 %v1428, %v1568
    %v2209 = vmul.bf16 %v1429, %v1569
    %v2210 = vmul.bf16 %v1428, %v1570
    %v2211 = vmul.bf16 %v1429, %v1571
    %v2212 = vmul.bf16 %v1428, %v1572
    %v2213 = vmul.bf16 %v1429, %v1573
    %v2214 = vmul.bf16 %v1428, %v1574
    %v2215 = vmul.bf16 %v1429, %v1575
    %v2216 = vmul.bf16 %v1428, %v1576
    %v2217 = vmul.bf16 %v1429, %v1577
    %v2218 = vmul.bf16 %v1428, %v1578
    %v2219 = vmul.bf16 %v1429, %v1579
    %v2220 = vmul.bf16 %v1428, %v1580
    %v2221 = vmul.bf16 %v1429, %v1581
    %v2222 = vmul.bf16 %v1430, %v1550
    %v2223 = vmul.bf16 %v1431, %v1551
    %v2224 = vmul.bf16 %v1430, %v1552
    %v2225 = vmul.bf16 %v1431, %v1553
    %v2226 = vmul.bf16 %v1430, %v1554
    %v2227 = vmul.bf16 %v1431, %v1555
    %v2228 = vmul.bf16 %v1430, %v1556
    %v2229 = vmul.bf16 %v1431, %v1557
    %v2230 = vmul.bf16 %v1430, %v1558
    %v2231 = vmul.bf16 %v1431, %v1559
    %v2232 = vmul.bf16 %v1430, %v1560
    %v2233 = vmul.bf16 %v1431, %v1561
    %v2234 = vmul.bf16 %v1430, %v1562
    %v2235 = vmul.bf16 %v1431, %v1563
    %v2236 = vmul.bf16 %v1430, %v1564
    %v2237 = vmul.bf16 %v1431, %v1565
    %v2238 = vmul.bf16 %v1430, %v1566
    %v2239 = vmul.bf16 %v1431, %v1567
    %v2240 = vmul.bf16 %v1430, %v1568
    %v2241 = vmul.bf16 %v1431, %v1569
    %v2242 = vmul.bf16 %v1430, %v1570
    %v2243 = vmul.bf16 %v1431, %v1571
    %v2244 = vmul.bf16 %v1430, %v1572
    %v2245 = vmul.bf16 %v1431, %v1573
    %v2246 = vmul.bf16 %v1430, %v1574
    %v2247 = vmul.bf16 %v1431, %v1575
    %v2248 = vmul.bf16 %v1430, %v1576
    %v2249 = vmul.bf16 %v1431, %v1577
    %v2250 = vmul.bf16 %v1430, %v1578
    %v2251 = vmul.bf16 %v1431, %v1579
    %v2252 = vmul.bf16 %v1430, %v1580
    %v2253 = vmul.bf16 %v1431, %v1581
    %v2254 = vmul.bf16 %v1432, %v1550
    %v2255 = vmul.bf16 %v1433, %v1551
    %v2256 = vmul.bf16 %v1432, %v1552
    %v2257 = vmul.bf16 %v1433, %v1553
    %v2258 = vmul.bf16 %v1432, %v1554
    %v2259 = vmul.bf16 %v1433, %v1555
    %v2260 = vmul.bf16 %v1432, %v1556
    %v2261 = vmul.bf16 %v1433, %v1557
    %v2262 = vmul.bf16 %v1432, %v1558
    %v2263 = vmul.bf16 %v1433, %v1559
    %v2264 = vmul.bf16 %v1432, %v1560
    %v2265 = vmul.bf16 %v1433, %v1561
    %v2266 = vmul.bf16 %v1432, %v1562
    %v2267 = vmul.bf16 %v1433, %v1563
    %v2268 = vmul.bf16 %v1432, %v1564
    %v2269 = vmul.bf16 %v1433, %v1565
    %v2270 = vmul.bf16 %v1432, %v1566
    %v2271 = vmul.bf16 %v1433, %v1567
    %v2272 = vmul.bf16 %v1432, %v1568
    %v2273 = vmul.bf16 %v1433, %v1569
    %v2274 = vmul.bf16 %v1432, %v1570
    %v2275 = vmul.bf16 %v1433, %v1571
    %v2276 = vmul.bf16 %v1432, %v1572
    %v2277 = vmul.bf16 %v1433, %v1573
    %v2278 = vmul.bf16 %v1432, %v1574
    %v2279 = vmul.bf16 %v1433, %v1575
    %v2280 = vmul.bf16 %v1432, %v1576
    %v2281 = vmul.bf16 %v1433, %v1577
    %v2282 = vmul.bf16 %v1432, %v1578
    %v2283 = vmul.bf16 %v1433, %v1579
    %v2284 = vmul.bf16 %v1432, %v1580
    %v2285 = vmul.bf16 %v1433, %v1581
    %v2286 = vmul.bf16 %v1434, %v1550
    %v2287 = vmul.bf16 %v1435, %v1551
    %v2288 = vmul.bf16 %v1434, %v1552
    %v2289 = vmul.bf16 %v1435, %v1553
    %v2290 = vmul.bf16 %v1434, %v1554
    %v2291 = vmul.bf16 %v1435, %v1555
    %v2292 = vmul.bf16 %v1434, %v1556
    %v2293 = vmul.bf16 %v1435, %v1557
    %v2294 = vmul.bf16 %v1434, %v1558
    %v2295 = vmul.bf16 %v1435, %v1559
    %v2296 = vmul.bf16 %v1434, %v1560
    %v2297 = vmul.bf16 %v1435, %v1561
    %v2298 = vmul.bf16 %v1434, %v1562
    %v2299 = vmul.bf16 %v1435, %v1563
    %v2300 = vmul.bf16 %v1434, %v1564
    %v2301 = vmul.bf16 %v1435, %v1565
    %v2302 = vmul.bf16 %v1434, %v1566
    %v2303 = vmul.bf16 %v1435, %v1567
    %v2304 = vmul.bf16 %v1434, %v1568
    %v2305 = vmul.bf16 %v1435, %v1569
    %v2306 = vmul.bf16 %v1434, %v1570
    %v2307 = vmul.bf16 %v1435, %v1571
    %v2308 = vmul.bf16 %v1434, %v1572
    %v2309 = vmul.bf16 %v1435, %v1573
    %v2310 = vmul.bf16 %v1434, %v1574
    %v2311 = vmul.bf16 %v1435, %v1575
    %v2312 = vmul.bf16 %v1434, %v1576
    %v2313 = vmul.bf16 %v1435, %v1577
    %v2314 = vmul.bf16 %v1434, %v1578
    %v2315 = vmul.bf16 %v1435, %v1579
    %v2316 = vmul.bf16 %v1434, %v1580
    %v2317 = vmul.bf16 %v1435, %v1581
    %v2318 = vmul.bf16 %v1436, %v1550
    %v2319 = vmul.bf16 %v1437, %v1551
    %v2320 = vmul.bf16 %v1436, %v1552
    %v2321 = vmul.bf16 %v1437, %v1553
    %v2322 = vmul.bf16 %v1436, %v1554
    %v2323 = vmul.bf16 %v1437, %v1555
    %v2324 = vmul.bf16 %v1436, %v1556
    %v2325 = vmul.bf16 %v1437, %v1557
    %v2326 = vmul.bf16 %v1436, %v1558
    %v2327 = vmul.bf16 %v1437, %v1559
    %v2328 = vmul.bf16 %v1436, %v1560
    %v2329 = vmul.bf16 %v1437, %v1561
    %v2330 = vmul.bf16 %v1436, %v1562
    %v2331 = vmul.bf16 %v1437, %v1563
    %v2332 = vmul.bf16 %v1436, %v1564
    %v2333 = vmul.bf16 %v1437, %v1565
    %v2334 = vmul.bf16 %v1436, %v1566
    %v2335 = vmul.bf16 %v1437, %v1567
    %v2336 = vmul.bf16 %v1436, %v1568
    %v2337 = vmul.bf16 %v1437, %v1569
    %v2338 = vmul.bf16 %v1436, %v1570
    %v2339 = vmul.bf16 %v1437, %v1571
    %v2340 = vmul.bf16 %v1436, %v1572
    %v2341 = vmul.bf16 %v1437, %v1573
    %v2342 = vmul.bf16 %v1436, %v1574
    %v2343 = vmul.bf16 %v1437, %v1575
    %v2344 = vmul.bf16 %v1436, %v1576
    %v2345 = vmul.bf16 %v1437, %v1577
    %v2346 = vmul.bf16 %v1436, %v1578
    %v2347 = vmul.bf16 %v1437, %v1579
    %v2348 = vmul.bf16 %v1436, %v1580
    %v2349 = vmul.bf16 %v1437, %v1581
    %v2350 = vmul.bf16 %v1438, %v1550
    %v2351 = vmul.bf16 %v1439, %v1551
    %v2352 = vmul.bf16 %v1438, %v1552
    %v2353 = vmul.bf16 %v1439, %v1553
    %v2354 = vmul.bf16 %v1438, %v1554
    %v2355 = vmul.bf16 %v1439, %v1555
    %v2356 = vmul.bf16 %v1438, %v1556
    %v2357 = vmul.bf16 %v1439, %v1557
    %v2358 = vmul.bf16 %v1438, %v1558
    %v2359 = vmul.bf16 %v1439, %v1559
    %v2360 = vmul.bf16 %v1438, %v1560
    %v2361 = vmul.bf16 %v1439, %v1561
    %v2362 = vmul.bf16 %v1438, %v1562
    %v2363 = vmul.bf16 %v1439, %v1563
    %v2364 = vmul.bf16 %v1438, %v1564
    %v2365 = vmul.bf16 %v1439, %v1565
    %v2366 = vmul.bf16 %v1438, %v1566
    %v2367 = vmul.bf16 %v1439, %v1567
    %v2368 = vmul.bf16 %v1438, %v1568
    %v2369 = vmul.bf16 %v1439, %v1569
    %v2370 = vmul.bf16 %v1438, %v1570
    %v2371 = vmul.bf16 %v1439, %v1571
    %v2372 = vmul.bf16 %v1438, %v1572
    %v2373 = vmul.bf16 %v1439, %v1573
    %v2374 = vmul.bf16 %v1438, %v1574
    %v2375 = vmul.bf16 %v1439, %v1575
    %v2376 = vmul.bf16 %v1438, %v1576
    %v2377 = vmul.bf16 %v1439, %v1577
    %v2378 = vmul.bf16 %v1438, %v1578
    %v2379 = vmul.bf16 %v1439, %v1579
    %v2380 = vmul.bf16 %v1438, %v1580
    %v2381 = vmul.bf16 %v1439, %v1581
    %v2382 = vmul.bf16 %v1440, %v1550
    %v2383 = vmul.bf16 %v1441, %v1551
    %v2384 = vmul.bf16 %v1440, %v1552
    %v2385 = vmul.bf16 %v1441, %v1553
    %v2386 = vmul.bf16 %v1440, %v1554
    %v2387 = vmul.bf16 %v1441, %v1555
    %v2388 = vmul.bf16 %v1440, %v1556
    %v2389 = vmul.bf16 %v1441, %v1557
    %v2390 = vmul.bf16 %v1440, %v1558
    %v2391 = vmul.bf16 %v1441, %v1559
    %v2392 = vmul.bf16 %v1440, %v1560
    %v2393 = vmul.bf16 %v1441, %v1561
    %v2394 = vmul.bf16 %v1440, %v1562
    %v2395 = vmul.bf16 %v1441, %v1563
    %v2396 = vmul.bf16 %v1440, %v1564
    %v2397 = vmul.bf16 %v1441, %v1565
    %v2398 = vmul.bf16 %v1440, %v1566
    %v2399 = vmul.bf16 %v1441, %v1567
    %v2400 = vmul.bf16 %v1440, %v1568
    %v2401 = vmul.bf16 %v1441, %v1569
    %v2402 = vmul.bf16 %v1440, %v1570
    %v2403 = vmul.bf16 %v1441, %v1571
    %v2404 = vmul.bf16 %v1440, %v1572
    %v2405 = vmul.bf16 %v1441, %v1573
    %v2406 = vmul.bf16 %v1440, %v1574
    %v2407 = vmul.bf16 %v1441, %v1575
    %v2408 = vmul.bf16 %v1440, %v1576
    %v2409 = vmul.bf16 %v1441, %v1577
    %v2410 = vmul.bf16 %v1440, %v1578
    %v2411 = vmul.bf16 %v1441, %v1579
    %v2412 = vmul.bf16 %v1440, %v1580
    %v2413 = vmul.bf16 %v1441, %v1581
    %v2414 = vmul.bf16 %v1442, %v1550
    %v2415 = vmul.bf16 %v1443, %v1551
    %v2416 = vmul.bf16 %v1442, %v1552
    %v2417 = vmul.bf16 %v1443, %v1553
    %v2418 = vmul.bf16 %v1442, %v1554
    %v2419 = vmul.bf16 %v1443, %v1555
    %v2420 = vmul.bf16 %v1442, %v1556
    %v2421 = vmul.bf16 %v1443, %v1557
    %v2422 = vmul.bf16 %v1442, %v1558
    %v2423 = vmul.bf16 %v1443, %v1559
    %v2424 = vmul.bf16 %v1442, %v1560
    %v2425 = vmul.bf16 %v1443, %v1561
    %v2426 = vmul.bf16 %v1442, %v1562
    %v2427 = vmul.bf16 %v1443, %v1563
    %v2428 = vmul.bf16 %v1442, %v1564
    %v2429 = vmul.bf16 %v1443, %v1565
    %v2430 = vmul.bf16 %v1442, %v1566
    %v2431 = vmul.bf16 %v1443, %v1567
    %v2432 = vmul.bf16 %v1442, %v1568
    %v2433 = vmul.bf16 %v1443, %v1569
    %v2434 = vmul.bf16 %v1442, %v1570
    %v2435 = vmul.bf16 %v1443, %v1571
    %v2436 = vmul.bf16 %v1442, %v1572
    %v2437 = vmul.bf16 %v1443, %v1573
    %v2438 = vmul.bf16 %v1442, %v1574
    %v2439 = vmul.bf16 %v1443, %v1575
    %v2440 = vmul.bf16 %v1442, %v1576
    %v2441 = vmul.bf16 %v1443, %v1577
    %v2442 = vmul.bf16 %v1442, %v1578
    %v2443 = vmul.bf16 %v1443, %v1579
    %v2444 = vmul.bf16 %v1442, %v1580
    %v2445 = vmul.bf16 %v1443, %v1581
    %v2446 = vmul.bf16 %v1444, %v1550
    %v2447 = vmul.bf16 %v1445, %v1551
    %v2448 = vmul.bf16 %v1444, %v1552
    %v2449 = vmul.bf16 %v1445, %v1553
    %v2450 = vmul.bf16 %v1444, %v1554
    %v2451 = vmul.bf16 %v1445, %v1555
    %v2452 = vmul.bf16 %v1444, %v1556
    %v2453 = vmul.bf16 %v1445, %v1557
    %v2454 = vmul.bf16 %v1444, %v1558
    %v2455 = vmul.bf16 %v1445, %v1559
    %v2456 = vmul.bf16 %v1444, %v1560
    %v2457 = vmul.bf16 %v1445, %v1561
    %v2458 = vmul.bf16 %v1444, %v1562
    %v2459 = vmul.bf16 %v1445, %v1563
    %v2460 = vmul.bf16 %v1444, %v1564
    %v2461 = vmul.bf16 %v1445, %v1565
    %v2462 = vmul.bf16 %v1444, %v1566
    %v2463 = vmul.bf16 %v1445, %v1567
    %v2464 = vmul.bf16 %v1444, %v1568
    %v2465 = vmul.bf16 %v1445, %v1569
    %v2466 = vmul.bf16 %v1444, %v1570
    %v2467 = vmul.bf16 %v1445, %v1571
    %v2468 = vmul.bf16 %v1444, %v1572
    %v2469 = vmul.bf16 %v1445, %v1573
    %v2470 = vmul.bf16 %v1444, %v1574
    %v2471 = vmul.bf16 %v1445, %v1575
    %v2472 = vmul.bf16 %v1444, %v1576
    %v2473 = vmul.bf16 %v1445, %v1577
    %v2474 = vmul.bf16 %v1444, %v1578
    %v2475 = vmul.bf16 %v1445, %v1579
    %v2476 = vmul.bf16 %v1444, %v1580
    %v2477 = vmul.bf16 %v1445, %v1581
    %v2478 = vmul.bf16 %v1446, %v1550
    %v2479 = vmul.bf16 %v1447, %v1551
    %v2480 = vmul.bf16 %v1446, %v1552
    %v2481 = vmul.bf16 %v1447, %v1553
    %v2482 = vmul.bf16 %v1446, %v1554
    %v2483 = vmul.bf16 %v1447, %v1555
    %v2484 = vmul.bf16 %v1446, %v1556
    %v2485 = vmul.bf16 %v1447, %v1557
    %v2486 = vmul.bf16 %v1446, %v1558
    %v2487 = vmul.bf16 %v1447, %v1559
    %v2488 = vmul.bf16 %v1446, %v1560
    %v2489 = vmul.bf16 %v1447, %v1561
    %v2490 = vmul.bf16 %v1446, %v1562
    %v2491 = vmul.bf16 %v1447, %v1563
    %v2492 = vmul.bf16 %v1446, %v1564
    %v2493 = vmul.bf16 %v1447, %v1565
    %v2494 = vmul.bf16 %v1446, %v1566
    %v2495 = vmul.bf16 %v1447, %v1567
    %v2496 = vmul.bf16 %v1446, %v1568
    %v2497 = vmul.bf16 %v1447, %v1569
    %v2498 = vmul.bf16 %v1446, %v1570
    %v2499 = vmul.bf16 %v1447, %v1571
    %v2500 = vmul.bf16 %v1446, %v1572
    %v2501 = vmul.bf16 %v1447, %v1573
    %v2502 = vmul.bf16 %v1446, %v1574
    %v2503 = vmul.bf16 %v1447, %v1575
    %v2504 = vmul.bf16 %v1446, %v1576
    %v2505 = vmul.bf16 %v1447, %v1577
    %v2506 = vmul.bf16 %v1446, %v1578
    %v2507 = vmul.bf16 %v1447, %v1579
    %v2508 = vmul.bf16 %v1446, %v1580
    %v2509 = vmul.bf16 %v1447, %v1581
    %v2510 = vmul.bf16 %v1448, %v1550
    %v2511 = vmul.bf16 %v1449, %v1551
    %v2512 = vmul.bf16 %v1448, %v1552
    %v2513 = vmul.bf16 %v1449, %v1553
    %v2514 = vmul.bf16 %v1448, %v1554
    %v2515 = vmul.bf16 %v1449, %v1555
    %v2516 = vmul.bf16 %v1448, %v1556
    %v2517 = vmul.bf16 %v1449, %v1557
    %v2518 = vmul.bf16 %v1448, %v1558
    %v2519 = vmul.bf16 %v1449, %v1559
    %v2520 = vmul.bf16 %v1448, %v1560
    %v2521 = vmul.bf16 %v1449, %v1561
    %v2522 = vmul.bf16 %v1448, %v1562
    %v2523 = vmul.bf16 %v1449, %v1563
    %v2524 = vmul.bf16 %v1448, %v1564
    %v2525 = vmul.bf16 %v1449, %v1565
    %v2526 = vmul.bf16 %v1448, %v1566
    %v2527 = vmul.bf16 %v1449, %v1567
    %v2528 = vmul.bf16 %v1448, %v1568
    %v2529 = vmul.bf16 %v1449, %v1569
    %v2530 = vmul.bf16 %v1448, %v1570
    %v2531 = vmul.bf16 %v1449, %v1571
    %v2532 = vmul.bf16 %v1448, %v1572
    %v2533 = vmul.bf16 %v1449, %v1573
    %v2534 = vmul.bf16 %v1448, %v1574
    %v2535 = vmul.bf16 %v1449, %v1575
    %v2536 = vmul.bf16 %v1448, %v1576
    %v2537 = vmul.bf16 %v1449, %v1577
    %v2538 = vmul.bf16 %v1448, %v1578
    %v2539 = vmul.bf16 %v1449, %v1579
    %v2540 = vmul.bf16 %v1448, %v1580
    %v2541 = vmul.bf16 %v1449, %v1581
    %v2542 = vmul.bf16 %v1450, %v1550
    %v2543 = vmul.bf16 %v1451, %v1551
    %v2544 = vmul.bf16 %v1450, %v1552
    %v2545 = vmul.bf16 %v1451, %v1553
    %v2546 = vmul.bf16 %v1450, %v1554
    %v2547 = vmul.bf16 %v1451, %v1555
    %v2548 = vmul.bf16 %v1450, %v1556
    %v2549 = vmul.bf16 %v1451, %v1557
    %v2550 = vmul.bf16 %v1450, %v1558
    %v2551 = vmul.bf16 %v1451, %v1559
    %v2552 = vmul.bf16 %v1450, %v1560
    %v2553 = vmul.bf16 %v1451, %v1561
    %v2554 = vmul.bf16 %v1450, %v1562
    %v2555 = vmul.bf16 %v1451, %v1563
    %v2556 = vmul.bf16 %v1450, %v1564
    %v2557 = vmul.bf16 %v1451, %v1565
    %v2558 = vmul.bf16 %v1450, %v1566
    %v2559 = vmul.bf16 %v1451, %v1567
    %v2560 = vmul.bf16 %v1450, %v1568
    %v2561 = vmul.bf16 %v1451, %v1569
    %v2562 = vmul.bf16 %v1450, %v1570
    %v2563 = vmul.bf16 %v1451, %v1571
    %v2564 = vmul.bf16 %v1450, %v1572
    %v2565 = vmul.bf16 %v1451, %v1573
    %v2566 = vmul.bf16 %v1450, %v1574
    %v2567 = vmul.bf16 %v1451, %v1575
    %v2568 = vmul.bf16 %v1450, %v1576
    %v2569 = vmul.bf16 %v1451, %v1577
    %v2570 = vmul.bf16 %v1450, %v1578
    %v2571 = vmul.bf16 %v1451, %v1579
    %v2572 = vmul.bf16 %v1450, %v1580
    %v2573 = vmul.bf16 %v1451, %v1581
    %v2574 = vmul.bf16 %v1452, %v1550
    %v2575 = vmul.bf16 %v1453, %v1551
    %v2576 = vmul.bf16 %v1452, %v1552
    %v2577 = vmul.bf16 %v1453, %v1553
    %v2578 = vmul.bf16 %v1452, %v1554
    %v2579 = vmul.bf16 %v1453, %v1555
    %v2580 = vmul.bf16 %v1452, %v1556
    %v2581 = vmul.bf16 %v1453, %v1557
    %v2582 = vmul.bf16 %v1452, %v1558
    %v2583 = vmul.bf16 %v1453, %v1559
    %v2584 = vmul.bf16 %v1452, %v1560
    %v2585 = vmul.bf16 %v1453, %v1561
    %v2586 = vmul.bf16 %v1452, %v1562
    %v2587 = vmul.bf16 %v1453, %v1563
    %v2588 = vmul.bf16 %v1452, %v1564
    %v2589 = vmul.bf16 %v1453, %v1565
    %v2590 = vmul.bf16 %v1452, %v1566
    %v2591 = vmul.bf16 %v1453, %v1567
    %v2592 = vmul.bf16 %v1452, %v1568
    %v2593 = vmul.bf16 %v1453, %v1569
    %v2594 = vmul.bf16 %v1452, %v1570
    %v2595 = vmul.bf16 %v1453, %v1571
    %v2596 = vmul.bf16 %v1452, %v1572
    %v2597 = vmul.bf16 %v1453, %v1573
    %v2598 = vmul.bf16 %v1452, %v1574
    %v2599 = vmul.bf16 %v1453, %v1575
    %v2600 = vmul.bf16 %v1452, %v1576
    %v2601 = vmul.bf16 %v1453, %v1577
    %v2602 = vmul.bf16 %v1452, %v1578
    %v2603 = vmul.bf16 %v1453, %v1579
    %v2604 = vmul.bf16 %v1452, %v1580
    %v2605 = vmul.bf16 %v1453, %v1581
    %v2606 = vmul.bf16 %v1454, %v1550
    %v2607 = vmul.bf16 %v1455, %v1551
    %v2608 = vmul.bf16 %v1454, %v1552
    %v2609 = vmul.bf16 %v1455, %v1553
    %v2610 = vmul.bf16 %v1454, %v1554
    %v2611 = vmul.bf16 %v1455, %v1555
    %v2612 = vmul.bf16 %v1454, %v1556
    %v2613 = vmul.bf16 %v1455, %v1557
    %v2614 = vmul.bf16 %v1454, %v1558
    %v2615 = vmul.bf16 %v1455, %v1559
    %v2616 = vmul.bf16 %v1454, %v1560
    %v2617 = vmul.bf16 %v1455, %v1561
    %v2618 = vmul.bf16 %v1454, %v1562
    %v2619 = vmul.bf16 %v1455, %v1563
    %v2620 = vmul.bf16 %v1454, %v1564
    %v2621 = vmul.bf16 %v1455, %v1565
    %v2622 = vmul.bf16 %v1454, %v1566
    %v2623 = vmul.bf16 %v1455, %v1567
    %v2624 = vmul.bf16 %v1454, %v1568
    %v2625 = vmul.bf16 %v1455, %v1569
    %v2626 = vmul.bf16 %v1454, %v1570
    %v2627 = vmul.bf16 %v1455, %v1571
    %v2628 = vmul.bf16 %v1454, %v1572
    %v2629 = vmul.bf16 %v1455, %v1573
    %v2630 = vmul.bf16 %v1454, %v1574
    %v2631 = vmul.bf16 %v1455, %v1575
    %v2632 = vmul.bf16 %v1454, %v1576
    %v2633 = vmul.bf16 %v1455, %v1577
    %v2634 = vmul.bf16 %v1454, %v1578
    %v2635 = vmul.bf16 %v1455, %v1579
    %v2636 = vmul.bf16 %v1454, %v1580
    %v2637 = vmul.bf16 %v1455, %v1581
    %v2638 = vmul.bf16 %v1456, %v1550
    %v2639 = vmul.bf16 %v1457, %v1551
    %v2640 = vmul.bf16 %v1456, %v1552
    %v2641 = vmul.bf16 %v1457, %v1553
    %v2642 = vmul.bf16 %v1456, %v1554
    %v2643 = vmul.bf16 %v1457, %v1555
    %v2644 = vmul.bf16 %v1456, %v1556
    %v2645 = vmul.bf16 %v1457, %v1557
    %v2646 = vmul.bf16 %v1456, %v1558
    %v2647 = vmul.bf16 %v1457, %v1559
    %v2648 = vmul.bf16 %v1456, %v1560
    %v2649 = vmul.bf16 %v1457, %v1561
    %v2650 = vmul.bf16 %v1456, %v1562
    %v2651 = vmul.bf16 %v1457, %v1563
    %v2652 = vmul.bf16 %v1456, %v1564
    %v2653 = vmul.bf16 %v1457, %v1565
    %v2654 = vmul.bf16 %v1456, %v1566
    %v2655 = vmul.bf16 %v1457, %v1567
    %v2656 = vmul.bf16 %v1456, %v1568
    %v2657 = vmul.bf16 %v1457, %v1569
    %v2658 = vmul.bf16 %v1456, %v1570
    %v2659 = vmul.bf16 %v1457, %v1571
    %v2660 = vmul.bf16 %v1456, %v1572
    %v2661 = vmul.bf16 %v1457, %v1573
    %v2662 = vmul.bf16 %v1456, %v1574
    %v2663 = vmul.bf16 %v1457, %v1575
    %v2664 = vmul.bf16 %v1456, %v1576
    %v2665 = vmul.bf16 %v1457, %v1577
    %v2666 = vmul.bf16 %v1456, %v1578
    %v2667 = vmul.bf16 %v1457, %v1579
    %v2668 = vmul.bf16 %v1456, %v1580
    %v2669 = vmul.bf16 %v1457, %v1581
    %v2670 = vmul.bf16 %v1458, %v1550
    %v2671 = vmul.bf16 %v1459, %v1551
    %v2672 = vmul.bf16 %v1458, %v1552
    %v2673 = vmul.bf16 %v1459, %v1553
    %v2674 = vmul.bf16 %v1458, %v1554
    %v2675 = vmul.bf16 %v1459, %v1555
    %v2676 = vmul.bf16 %v1458, %v1556
    %v2677 = vmul.bf16 %v1459, %v1557
    %v2678 = vmul.bf16 %v1458, %v1558
    %v2679 = vmul.bf16 %v1459, %v1559
    %v2680 = vmul.bf16 %v1458, %v1560
    %v2681 = vmul.bf16 %v1459, %v1561
    %v2682 = vmul.bf16 %v1458, %v1562
    %v2683 = vmul.bf16 %v1459, %v1563
    %v2684 = vmul.bf16 %v1458, %v1564
    %v2685 = vmul.bf16 %v1459, %v1565
    %v2686 = vmul.bf16 %v1458, %v1566
    %v2687 = vmul.bf16 %v1459, %v1567
    %v2688 = vmul.bf16 %v1458, %v1568
    %v2689 = vmul.bf16 %v1459, %v1569
    %v2690 = vmul.bf16 %v1458, %v1570
    %v2691 = vmul.bf16 %v1459, %v1571
    %v2692 = vmul.bf16 %v1458, %v1572
    %v2693 = vmul.bf16 %v1459, %v1573
    %v2694 = vmul.bf16 %v1458, %v1574
    %v2695 = vmul.bf16 %v1459, %v1575
    %v2696 = vmul.bf16 %v1458, %v1576
    %v2697 = vmul.bf16 %v1459, %v1577
    %v2698 = vmul.bf16 %v1458, %v1578
    %v2699 = vmul.bf16 %v1459, %v1579
    %v2700 = vmul.bf16 %v1458, %v1580
    %v2701 = vmul.bf16 %v1459, %v1581
    %v2702 = vmul.bf16 %v1460, %v1550
    %v2703 = vmul.bf16 %v1461, %v1551
    %v2704 = vmul.bf16 %v1460, %v1552
    %v2705 = vmul.bf16 %v1461, %v1553
    %v2706 = vmul.bf16 %v1460, %v1554
    %v2707 = vmul.bf16 %v1461, %v1555
    %v2708 = vmul.bf16 %v1460, %v1556
    %v2709 = vmul.bf16 %v1461, %v1557
    %v2710 = vmul.bf16 %v1460, %v1558
    %v2711 = vmul.bf16 %v1461, %v1559
    %v2712 = vmul.bf16 %v1460, %v1560
    %v2713 = vmul.bf16 %v1461, %v1561
    %v2714 = vmul.bf16 %v1460, %v1562
    %v2715 = vmul.bf16 %v1461, %v1563
    %v2716 = vmul.bf16 %v1460, %v1564
    %v2717 = vmul.bf16 %v1461, %v1565
    %v2718 = vmul.bf16 %v1460, %v1566
    %v2719 = vmul.bf16 %v1461, %v1567
    %v2720 = vmul.bf16 %v1460, %v1568
    %v2721 = vmul.bf16 %v1461, %v1569
    %v2722 = vmul.bf16 %v1460, %v1570
    %v2723 = vmul.bf16 %v1461, %v1571
    %v2724 = vmul.bf16 %v1460, %v1572
    %v2725 = vmul.bf16 %v1461, %v1573
    %v2726 = vmul.bf16 %v1460, %v1574
    %v2727 = vmul.bf16 %v1461, %v1575
    %v2728 = vmul.bf16 %v1460, %v1576
    %v2729 = vmul.bf16 %v1461, %v1577
    %v2730 = vmul.bf16 %v1460, %v1578
    %v2731 = vmul.bf16 %v1461, %v1579
    %v2732 = vmul.bf16 %v1460, %v1580
    %v2733 = vmul.bf16 %v1461, %v1581
    %v2734 = vmul.bf16 %v1462, %v1550
    %v2735 = vmul.bf16 %v1463, %v1551
    %v2736 = vmul.bf16 %v1462, %v1552
    %v2737 = vmul.bf16 %v1463, %v1553
    %v2738 = vmul.bf16 %v1462, %v1554
    %v2739 = vmul.bf16 %v1463, %v1555
    %v2740 = vmul.bf16 %v1462, %v1556
    %v2741 = vmul.bf16 %v1463, %v1557
    %v2742 = vmul.bf16 %v1462, %v1558
    %v2743 = vmul.bf16 %v1463, %v1559
    %v2744 = vmul.bf16 %v1462, %v1560
    %v2745 = vmul.bf16 %v1463, %v1561
    %v2746 = vmul.bf16 %v1462, %v1562
    %v2747 = vmul.bf16 %v1463, %v1563
    %v2748 = vmul.bf16 %v1462, %v1564
    %v2749 = vmul.bf16 %v1463, %v1565
    %v2750 = vmul.bf16 %v1462, %v1566
    %v2751 = vmul.bf16 %v1463, %v1567
    %v2752 = vmul.bf16 %v1462, %v1568
    %v2753 = vmul.bf16 %v1463, %v1569
    %v2754 = vmul.bf16 %v1462, %v1570
    %v2755 = vmul.bf16 %v1463, %v1571
    %v2756 = vmul.bf16 %v1462, %v1572
    %v2757 = vmul.bf16 %v1463, %v1573
    %v2758 = vmul.bf16 %v1462, %v1574
    %v2759 = vmul.bf16 %v1463, %v1575
    %v2760 = vmul.bf16 %v1462, %v1576
    %v2761 = vmul.bf16 %v1463, %v1577
    %v2762 = vmul.bf16 %v1462, %v1578
    %v2763 = vmul.bf16 %v1463, %v1579
    %v2764 = vmul.bf16 %v1462, %v1580
    %v2765 = vmul.bf16 %v1463, %v1581
    %v2766 = vmul.bf16 %v1464, %v1550
    %v2767 = vmul.bf16 %v1465, %v1551
    %v2768 = vmul.bf16 %v1464, %v1552
    %v2769 = vmul.bf16 %v1465, %v1553
    %v2770 = vmul.bf16 %v1464, %v1554
    %v2771 = vmul.bf16 %v1465, %v1555
    %v2772 = vmul.bf16 %v1464, %v1556
    %v2773 = vmul.bf16 %v1465, %v1557
    %v2774 = vmul.bf16 %v1464, %v1558
    %v2775 = vmul.bf16 %v1465, %v1559
    %v2776 = vmul.bf16 %v1464, %v1560
    %v2777 = vmul.bf16 %v1465, %v1561
    %v2778 = vmul.bf16 %v1464, %v1562
    %v2779 = vmul.bf16 %v1465, %v1563
    %v2780 = vmul.bf16 %v1464, %v1564
    %v2781 = vmul.bf16 %v1465, %v1565
    %v2782 = vmul.bf16 %v1464, %v1566
    %v2783 = vmul.bf16 %v1465, %v1567
    %v2784 = vmul.bf16 %v1464, %v1568
    %v2785 = vmul.bf16 %v1465, %v1569
    %v2786 = vmul.bf16 %v1464, %v1570
    %v2787 = vmul.bf16 %v1465, %v1571
    %v2788 = vmul.bf16 %v1464, %v1572
    %v2789 = vmul.bf16 %v1465, %v1573
    %v2790 = vmul.bf16 %v1464, %v1574
    %v2791 = vmul.bf16 %v1465, %v1575
    %v2792 = vmul.bf16 %v1464, %v1576
    %v2793 = vmul.bf16 %v1465, %v1577
    %v2794 = vmul.bf16 %v1464, %v1578
    %v2795 = vmul.bf16 %v1465, %v1579
    %v2796 = vmul.bf16 %v1464, %v1580
    %v2797 = vmul.bf16 %v1465, %v1581
    %v2798 = vmul.bf16 %v1466, %v1550
    %v2799 = vmul.bf16 %v1467, %v1551
    %v2800 = vmul.bf16 %v1466, %v1552
    %v2801 = vmul.bf16 %v1467, %v1553
    %v2802 = vmul.bf16 %v1466, %v1554
    %v2803 = vmul.bf16 %v1467, %v1555
    %v2804 = vmul.bf16 %v1466, %v1556
    %v2805 = vmul.bf16 %v1467, %v1557
    %v2806 = vmul.bf16 %v1466, %v1558
    %v2807 = vmul.bf16 %v1467, %v1559
    %v2808 = vmul.bf16 %v1466, %v1560
    %v2809 = vmul.bf16 %v1467, %v1561
    %v2810 = vmul.bf16 %v1466, %v1562
    %v2811 = vmul.bf16 %v1467, %v1563
    %v2812 = vmul.bf16 %v1466, %v1564
    %v2813 = vmul.bf16 %v1467, %v1565
    %v2814 = vmul.bf16 %v1466, %v1566
    %v2815 = vmul.bf16 %v1467, %v1567
    %v2816 = vmul.bf16 %v1466, %v1568
    %v2817 = vmul.bf16 %v1467, %v1569
    %v2818 = vmul.bf16 %v1466, %v1570
    %v2819 = vmul.bf16 %v1467, %v1571
    %v2820 = vmul.bf16 %v1466, %v1572
    %v2821 = vmul.bf16 %v1467, %v1573
    %v2822 = vmul.bf16 %v1466, %v1574
    %v2823 = vmul.bf16 %v1467, %v1575
    %v2824 = vmul.bf16 %v1466, %v1576
    %v2825 = vmul.bf16 %v1467, %v1577
    %v2826 = vmul.bf16 %v1466, %v1578
    %v2827 = vmul.bf16 %v1467, %v1579
    %v2828 = vmul.bf16 %v1466, %v1580
    %v2829 = vmul.bf16 %v1467, %v1581
    %v2830 = vmul.bf16 %v1468, %v1550
    %v2831 = vmul.bf16 %v1469, %v1551
    %v2832 = vmul.bf16 %v1468, %v1552
    %v2833 = vmul.bf16 %v1469, %v1553
    %v2834 = vmul.bf16 %v1468, %v1554
    %v2835 = vmul.bf16 %v1469, %v1555
    %v2836 = vmul.bf16 %v1468, %v1556
    %v2837 = vmul.bf16 %v1469, %v1557
    %v2838 = vmul.bf16 %v1468, %v1558
    %v2839 = vmul.bf16 %v1469, %v1559
    %v2840 = vmul.bf16 %v1468, %v1560
    %v2841 = vmul.bf16 %v1469, %v1561
    %v2842 = vmul.bf16 %v1468, %v1562
    %v2843 = vmul.bf16 %v1469, %v1563
    %v2844 = vmul.bf16 %v1468, %v1564
    %v2845 = vmul.bf16 %v1469, %v1565
    %v2846 = vmul.bf16 %v1468, %v1566
    %v2847 = vmul.bf16 %v1469, %v1567
    %v2848 = vmul.bf16 %v1468, %v1568
    %v2849 = vmul.bf16 %v1469, %v1569
    %v2850 = vmul.bf16 %v1468, %v1570
    %v2851 = vmul.bf16 %v1469, %v1571
    %v2852 = vmul.bf16 %v1468, %v1572
    %v2853 = vmul.bf16 %v1469, %v1573
    %v2854 = vmul.bf16 %v1468, %v1574
    %v2855 = vmul.bf16 %v1469, %v1575
    %v2856 = vmul.bf16 %v1468, %v1576
    %v2857 = vmul.bf16 %v1469, %v1577
    %v2858 = vmul.bf16 %v1468, %v1578
    %v2859 = vmul.bf16 %v1469, %v1579
    %v2860 = vmul.bf16 %v1468, %v1580
    %v2861 = vmul.bf16 %v1469, %v1581
    %v2862 = vmul.bf16 %v1470, %v1550
    %v2863 = vmul.bf16 %v1471, %v1551
    %v2864 = vmul.bf16 %v1470, %v1552
    %v2865 = vmul.bf16 %v1471, %v1553
    %v2866 = vmul.bf16 %v1470, %v1554
    %v2867 = vmul.bf16 %v1471, %v1555
    %v2868 = vmul.bf16 %v1470, %v1556
    %v2869 = vmul.bf16 %v1471, %v1557
    %v2870 = vmul.bf16 %v1470, %v1558
    %v2871 = vmul.bf16 %v1471, %v1559
    %v2872 = vmul.bf16 %v1470, %v1560
    %v2873 = vmul.bf16 %v1471, %v1561
    %v2874 = vmul.bf16 %v1470, %v1562
    %v2875 = vmul.bf16 %v1471, %v1563
    %v2876 = vmul.bf16 %v1470, %v1564
    %v2877 = vmul.bf16 %v1471, %v1565
    %v2878 = vmul.bf16 %v1470, %v1566
    %v2879 = vmul.bf16 %v1471, %v1567
    %v2880 = vmul.bf16 %v1470, %v1568
    %v2881 = vmul.bf16 %v1471, %v1569
    %v2882 = vmul.bf16 %v1470, %v1570
    %v2883 = vmul.bf16 %v1471, %v1571
    %v2884 = vmul.bf16 %v1470, %v1572
    %v2885 = vmul.bf16 %v1471, %v1573
    %v2886 = vmul.bf16 %v1470, %v1574
    %v2887 = vmul.bf16 %v1471, %v1575
    %v2888 = vmul.bf16 %v1470, %v1576
    %v2889 = vmul.bf16 %v1471, %v1577
    %v2890 = vmul.bf16 %v1470, %v1578
    %v2891 = vmul.bf16 %v1471, %v1579
    %v2892 = vmul.bf16 %v1470, %v1580
    %v2893 = vmul.bf16 %v1471, %v1581
    %v2894 = vmul.bf16 %v1472, %v1550
    %v2895 = vmul.bf16 %v1473, %v1551
    %v2896 = vmul.bf16 %v1472, %v1552
    %v2897 = vmul.bf16 %v1473, %v1553
    %v2898 = vmul.bf16 %v1472, %v1554
    %v2899 = vmul.bf16 %v1473, %v1555
    %v2900 = vmul.bf16 %v1472, %v1556
    %v2901 = vmul.bf16 %v1473, %v1557
    %v2902 = vmul.bf16 %v1472, %v1558
    %v2903 = vmul.bf16 %v1473, %v1559
    %v2904 = vmul.bf16 %v1472, %v1560
    %v2905 = vmul.bf16 %v1473, %v1561
    %v2906 = vmul.bf16 %v1472, %v1562
    %v2907 = vmul.bf16 %v1473, %v1563
    %v2908 = vmul.bf16 %v1472, %v1564
    %v2909 = vmul.bf16 %v1473, %v1565
    %v2910 = vmul.bf16 %v1472, %v1566
    %v2911 = vmul.bf16 %v1473, %v1567
    %v2912 = vmul.bf16 %v1472, %v1568
    %v2913 = vmul.bf16 %v1473, %v1569
    %v2914 = vmul.bf16 %v1472, %v1570
    %v2915 = vmul.bf16 %v1473, %v1571
    %v2916 = vmul.bf16 %v1472, %v1572
    %v2917 = vmul.bf16 %v1473, %v1573
    %v2918 = vmul.bf16 %v1472, %v1574
    %v2919 = vmul.bf16 %v1473, %v1575
    %v2920 = vmul.bf16 %v1472, %v1576
    %v2921 = vmul.bf16 %v1473, %v1577
    %v2922 = vmul.bf16 %v1472, %v1578
    %v2923 = vmul.bf16 %v1473, %v1579
    %v2924 = vmul.bf16 %v1472, %v1580
    %v2925 = vmul.bf16 %v1473, %v1581
    %v2926 = vmul.bf16 %v1474, %v1550
    %v2927 = vmul.bf16 %v1475, %v1551
    %v2928 = vmul.bf16 %v1474, %v1552
    %v2929 = vmul.bf16 %v1475, %v1553
    %v2930 = vmul.bf16 %v1474, %v1554
    %v2931 = vmul.bf16 %v1475, %v1555
    %v2932 = vmul.bf16 %v1474, %v1556
    %v2933 = vmul.bf16 %v1475, %v1557
    %v2934 = vmul.bf16 %v1474, %v1558
    %v2935 = vmul.bf16 %v1475, %v1559
    %v2936 = vmul.bf16 %v1474, %v1560
    %v2937 = vmul.bf16 %v1475, %v1561
    %v2938 = vmul.bf16 %v1474, %v1562
    %v2939 = vmul.bf16 %v1475, %v1563
    %v2940 = vmul.bf16 %v1474, %v1564
    %v2941 = vmul.bf16 %v1475, %v1565
    %v2942 = vmul.bf16 %v1474, %v1566
    %v2943 = vmul.bf16 %v1475, %v1567
    %v2944 = vmul.bf16 %v1474, %v1568
    %v2945 = vmul.bf16 %v1475, %v1569
    %v2946 = vmul.bf16 %v1474, %v1570
    %v2947 = vmul.bf16 %v1475, %v1571
    %v2948 = vmul.bf16 %v1474, %v1572
    %v2949 = vmul.bf16 %v1475, %v1573
    %v2950 = vmul.bf16 %v1474, %v1574
    %v2951 = vmul.bf16 %v1475, %v1575
    %v2952 = vmul.bf16 %v1474, %v1576
    %v2953 = vmul.bf16 %v1475, %v1577
    %v2954 = vmul.bf16 %v1474, %v1578
    %v2955 = vmul.bf16 %v1475, %v1579
    %v2956 = vmul.bf16 %v1474, %v1580
    %v2957 = vmul.bf16 %v1475, %v1581
    %v2958 = vmul.bf16 %v1476, %v1550
    %v2959 = vmul.bf16 %v1477, %v1551
    %v2960 = vmul.bf16 %v1476, %v1552
    %v2961 = vmul.bf16 %v1477, %v1553
    %v2962 = vmul.bf16 %v1476, %v1554
    %v2963 = vmul.bf16 %v1477, %v1555
    %v2964 = vmul.bf16 %v1476, %v1556
    %v2965 = vmul.bf16 %v1477, %v1557
    %v2966 = vmul.bf16 %v1476, %v1558
    %v2967 = vmul.bf16 %v1477, %v1559
    %v2968 = vmul.bf16 %v1476, %v1560
    %v2969 = vmul.bf16 %v1477, %v1561
    %v2970 = vmul.bf16 %v1476, %v1562
    %v2971 = vmul.bf16 %v1477, %v1563
    %v2972 = vmul.bf16 %v1476, %v1564
    %v2973 = vmul.bf16 %v1477, %v1565
    %v2974 = vmul.bf16 %v1476, %v1566
    %v2975 = vmul.bf16 %v1477, %v1567
    %v2976 = vmul.bf16 %v1476, %v1568
    %v2977 = vmul.bf16 %v1477, %v1569
    %v2978 = vmul.bf16 %v1476, %v1570
    %v2979 = vmul.bf16 %v1477, %v1571
    %v2980 = vmul.bf16 %v1476, %v1572
    %v2981 = vmul.bf16 %v1477, %v1573
    %v2982 = vmul.bf16 %v1476, %v1574
    %v2983 = vmul.bf16 %v1477, %v1575
    %v2984 = vmul.bf16 %v1476, %v1576
    %v2985 = vmul.bf16 %v1477, %v1577
    %v2986 = vmul.bf16 %v1476, %v1578
    %v2987 = vmul.bf16 %v1477, %v1579
    %v2988 = vmul.bf16 %v1476, %v1580
    %v2989 = vmul.bf16 %v1477, %v1581
    %v2990 = vmul.bf16 %v1478, %v1550
    %v2991 = vmul.bf16 %v1479, %v1551
    %v2992 = vmul.bf16 %v1478, %v1552
    %v2993 = vmul.bf16 %v1479, %v1553
    %v2994 = vmul.bf16 %v1478, %v1554
    %v2995 = vmul.bf16 %v1479, %v1555
    %v2996 = vmul.bf16 %v1478, %v1556
    %v2997 = vmul.bf16 %v1479, %v1557
    %v2998 = vmul.bf16 %v1478, %v1558
    %v2999 = vmul.bf16 %v1479, %v1559
    %v3000 = vmul.bf16 %v1478, %v1560
    %v3001 = vmul.bf16 %v1479, %v1561
    %v3002 = vmul.bf16 %v1478, %v1562
    %v3003 = vmul.bf16 %v1479, %v1563
    %v3004 = vmul.bf16 %v1478, %v1564
    %v3005 = vmul.bf16 %v1479, %v1565
    %v3006 = vmul.bf16 %v1478, %v1566
    %v3007 = vmul.bf16 %v1479, %v1567
    %v3008 = vmul.bf16 %v1478, %v1568
    %v3009 = vmul.bf16 %v1479, %v1569
    %v3010 = vmul.bf16 %v1478, %v1570
    %v3011 = vmul.bf16 %v1479, %v1571
    %v3012 = vmul.bf16 %v1478, %v1572
    %v3013 = vmul.bf16 %v1479, %v1573
    %v3014 = vmul.bf16 %v1478, %v1574
    %v3015 = vmul.bf16 %v1479, %v1575
    %v3016 = vmul.bf16 %v1478, %v1576
    %v3017 = vmul.bf16 %v1479, %v1577
    %v3018 = vmul.bf16 %v1478, %v1578
    %v3019 = vmul.bf16 %v1479, %v1579
    %v3020 = vmul.bf16 %v1478, %v1580
    %v3021 = vmul.bf16 %v1479, %v1581
    %v3022 = vmul.bf16 %v1480, %v1550
    %v3023 = vmul.bf16 %v1481, %v1551
    %v3024 = vmul.bf16 %v1480, %v1552
    %v3025 = vmul.bf16 %v1481, %v1553
    %v3026 = vmul.bf16 %v1480, %v1554
    %v3027 = vmul.bf16 %v1481, %v1555
    %v3028 = vmul.bf16 %v1480, %v1556
    %v3029 = vmul.bf16 %v1481, %v1557
    %v3030 = vmul.bf16 %v1480, %v1558
    %v3031 = vmul.bf16 %v1481, %v1559
    %v3032 = vmul.bf16 %v1480, %v1560
    %v3033 = vmul.bf16 %v1481, %v1561
    %v3034 = vmul.bf16 %v1480, %v1562
    %v3035 = vmul.bf16 %v1481, %v1563
    %v3036 = vmul.bf16 %v1480, %v1564
    %v3037 = vmul.bf16 %v1481, %v1565
    %v3038 = vmul.bf16 %v1480, %v1566
    %v3039 = vmul.bf16 %v1481, %v1567
    %v3040 = vmul.bf16 %v1480, %v1568
    %v3041 = vmul.bf16 %v1481, %v1569
    %v3042 = vmul.bf16 %v1480, %v1570
    %v3043 = vmul.bf16 %v1481, %v1571
    %v3044 = vmul.bf16 %v1480, %v1572
    %v3045 = vmul.bf16 %v1481, %v1573
    %v3046 = vmul.bf16 %v1480, %v1574
    %v3047 = vmul.bf16 %v1481, %v1575
    %v3048 = vmul.bf16 %v1480, %v1576
    %v3049 = vmul.bf16 %v1481, %v1577
    %v3050 = vmul.bf16 %v1480, %v1578
    %v3051 = vmul.bf16 %v1481, %v1579
    %v3052 = vmul.bf16 %v1480, %v1580
    %v3053 = vmul.bf16 %v1481, %v1581
    %v3054 = vmul.bf16 %v1482, %v1550
    %v3055 = vmul.bf16 %v1483, %v1551
    %v3056 = vmul.bf16 %v1482, %v1552
    %v3057 = vmul.bf16 %v1483, %v1553
    %v3058 = vmul.bf16 %v1482, %v1554
    %v3059 = vmul.bf16 %v1483, %v1555
    %v3060 = vmul.bf16 %v1482, %v1556
    %v3061 = vmul.bf16 %v1483, %v1557
    %v3062 = vmul.bf16 %v1482, %v1558
    %v3063 = vmul.bf16 %v1483, %v1559
    %v3064 = vmul.bf16 %v1482, %v1560
    %v3065 = vmul.bf16 %v1483, %v1561
    %v3066 = vmul.bf16 %v1482, %v1562
    %v3067 = vmul.bf16 %v1483, %v1563
    %v3068 = vmul.bf16 %v1482, %v1564
    %v3069 = vmul.bf16 %v1483, %v1565
    %v3070 = vmul.bf16 %v1482, %v1566
    %v3071 = vmul.bf16 %v1483, %v1567
    %v3072 = vmul.bf16 %v1482, %v1568
    %v3073 = vmul.bf16 %v1483, %v1569
    %v3074 = vmul.bf16 %v1482, %v1570
    %v3075 = vmul.bf16 %v1483, %v1571
    %v3076 = vmul.bf16 %v1482, %v1572
    %v3077 = vmul.bf16 %v1483, %v1573
    %v3078 = vmul.bf16 %v1482, %v1574
    %v3079 = vmul.bf16 %v1483, %v1575
    %v3080 = vmul.bf16 %v1482, %v1576
    %v3081 = vmul.bf16 %v1483, %v1577
    %v3082 = vmul.bf16 %v1482, %v1578
    %v3083 = vmul.bf16 %v1483, %v1579
    %v3084 = vmul.bf16 %v1482, %v1580
    %v3085 = vmul.bf16 %v1483, %v1581
    %v3086 = vmul.bf16 %v1484, %v1550
    %v3087 = vmul.bf16 %v1485, %v1551
    %v3088 = vmul.bf16 %v1484, %v1552
    %v3089 = vmul.bf16 %v1485, %v1553
    %v3090 = vmul.bf16 %v1484, %v1554
    %v3091 = vmul.bf16 %v1485, %v1555
    %v3092 = vmul.bf16 %v1484, %v1556
    %v3093 = vmul.bf16 %v1485, %v1557
    %v3094 = vmul.bf16 %v1484, %v1558
    %v3095 = vmul.bf16 %v1485, %v1559
    %v3096 = vmul.bf16 %v1484, %v1560
    %v3097 = vmul.bf16 %v1485, %v1561
    %v3098 = vmul.bf16 %v1484, %v1562
    %v3099 = vmul.bf16 %v1485, %v1563
    %v3100 = vmul.bf16 %v1484, %v1564
    %v3101 = vmul.bf16 %v1485, %v1565
    %v3102 = vmul.bf16 %v1484, %v1566
    %v3103 = vmul.bf16 %v1485, %v1567
    %v3104 = vmul.bf16 %v1484, %v1568
    %v3105 = vmul.bf16 %v1485, %v1569
    %v3106 = vmul.bf16 %v1484, %v1570
    %v3107 = vmul.bf16 %v1485, %v1571
    %v3108 = vmul.bf16 %v1484, %v1572
    %v3109 = vmul.bf16 %v1485, %v1573
    %v3110 = vmul.bf16 %v1484, %v1574
    %v3111 = vmul.bf16 %v1485, %v1575
    %v3112 = vmul.bf16 %v1484, %v1576
    %v3113 = vmul.bf16 %v1485, %v1577
    %v3114 = vmul.bf16 %v1484, %v1578
    %v3115 = vmul.bf16 %v1485, %v1579
    %v3116 = vmul.bf16 %v1484, %v1580
    %v3117 = vmul.bf16 %v1485, %v1581
    %3118 = vmatprep.subr.bf16.mxu0 %v1583
    %3119 = vmatpush1.bf16.xpose.msra.mxu0 %v1582
    %3120 = vmatprep.subr.bf16.mxu0 %v1585
    %3121 = vmatpush1.bf16.xpose.msra.mxu0 %v1584
    %3122 = vmatprep.subr.bf16.mxu0 %v1587
    %3123 = vmatpush1.bf16.xpose.msra.mxu0 %v1586
    %3124 = vmatprep.subr.bf16.mxu0 %v1589
    %3125 = vmatpush1.bf16.xpose.msra.mxu0 %v1588
    %3126 = vmatprep.subr.bf16.mxu0 %v1591
    %3127 = vmatpush1.bf16.xpose.msra.mxu0 %v1590
    %3128 = vmatprep.subr.bf16.mxu0 %v1593
    %3129 = vmatpush1.bf16.xpose.msra.mxu0 %v1592
    %3130 = vmatprep.subr.bf16.mxu0 %v1595
    %3131 = vmatpush1.bf16.xpose.msra.mxu0 %v1594
    %3132 = vmatprep.subr.bf16.mxu0 %v1597
    %3133 = vmatpush1.bf16.xpose.msra.mxu0 %v1596
    %3134 = vmatprep.subr.bf16.mxu0 %v1599
    %3135 = vmatpush1.bf16.xpose.msra.mxu0 %v1598
    %3136 = vmatprep.subr.bf16.mxu0 %v1601
    %3137 = vmatpush1.bf16.xpose.msra.mxu0 %v1600
    %3138 = vmatprep.subr.bf16.mxu0 %v1603
    %3139 = vmatpush1.bf16.xpose.msra.mxu0 %v1602
    %3140 = vmatprep.subr.bf16.mxu0 %v1605
    %3141 = vmatpush1.bf16.xpose.msra.mxu0 %v1604
    %3142 = vmatprep.subr.bf16.mxu0 %v1607
    %3143 = vmatpush1.bf16.xpose.msra.mxu0 %v1606
    %3144 = vmatprep.subr.bf16.mxu0 %v1609
    %3145 = vmatpush1.bf16.xpose.msra.mxu0 %v1608
    %3146 = vmatprep.subr.bf16.mxu0 %v1611
    %3147 = vmatpush1.bf16.xpose.msra.mxu0 %v1610
    %3148 = vmatprep.subr.bf16.mxu0 %v1613
    %3149 = vmatpush1.bf16.xpose.msra.mxu0 %v1612
    %3150 = vmatprep.mubr.bf16.mxu0 %v1343
    %3151 = vmatmul.mubr.bf16.gmra.mrb[0].mxu0 %v1342
    %v3152 = vpop.f32.mrb[0].mxu0
    %v3153 = vadd.f32 0.0, %v3152
    %v3154 = vpop.f32.mrb[0].mxu0
    %v3155 = vadd.f32 0.0, %v3154
    %v3156 = vpop.f32.mrb[0].mxu0
    %v3157 = vadd.f32 0.0, %v3156
    %v3158 = vpop.f32.mrb[0].mxu0
    %v3159 = vadd.f32 0.0, %v3158
    %3160 = vdwg.mxu0
    %3161 = vmatprep.subr.bf16.mxu0 %v1615
    %3162 = vmatpush1.bf16.xpose.msra.mxu0 %v1614
    %3163 = vmatprep.subr.bf16.mxu0 %v1617
    %3164 = vmatpush1.bf16.xpose.msra.mxu0 %v1616
    %3165 = vmatprep.subr.bf16.mxu0 %v1619
    %3166 = vmatpush1.bf16.xpose.msra.mxu0 %v1618
    %3167 = vmatprep.subr.bf16.mxu0 %v1621
    %3168 = vmatpush1.bf16.xpose.msra.mxu0 %v1620
    %3169 = vmatprep.subr.bf16.mxu0 %v1623
    %3170 = vmatpush1.bf16.xpose.msra.mxu0 %v1622
    %3171 = vmatprep.subr.bf16.mxu0 %v1625
    %3172 = vmatpush1.bf16.xpose.msra.mxu0 %v1624
    %3173 = vmatprep.subr.bf16.mxu0 %v1627
    %3174 = vmatpush1.bf16.xpose.msra.mxu0 %v1626
    %3175 = vmatprep.subr.bf16.mxu0 %v1629
    %3176 = vmatpush1.bf16.xpose.msra.mxu0 %v1628
    %3177 = vmatprep.subr.bf16.mxu0 %v1631
    %3178 = vmatpush1.bf16.xpose.msra.mxu0 %v1630
    %3179 = vmatprep.subr.bf16.mxu0 %v1633
    %3180 = vmatpush1.bf16.xpose.msra.mxu0 %v1632
    %3181 = vmatprep.subr.bf16.mxu0 %v1635
    %3182 = vmatpush1.bf16.xpose.msra.mxu0 %v1634
    %3183 = vmatprep.subr.bf16.mxu0 %v1637
    %3184 = vmatpush1.bf16.xpose.msra.mxu0 %v1636
    %3185 = vmatprep.subr.bf16.mxu0 %v1639
    %3186 = vmatpush1.bf16.xpose.msra.mxu0 %v1638
    %3187 = vmatprep.subr.bf16.mxu0 %v1641
    %3188 = vmatpush1.bf16.xpose.msra.mxu0 %v1640
    %3189 = vmatprep.subr.bf16.mxu0 %v1643
    %3190 = vmatpush1.bf16.xpose.msra.mxu0 %v1642
    %3191 = vmatprep.subr.bf16.mxu0 %v1645
    %3192 = vmatpush1.bf16.xpose.msra.mxu0 %v1644
    %3193 = vmatprep.mubr.bf16.mxu0 %v1345
    %3194 = vmatmul.mubr.bf16.gmra.mrb[0].mxu0 %v1344
    %v3195 = vpop.f32.mrb[0].mxu0
    %v3196 = vadd.f32 0.0, %v3195
    %v3197 = vpop.f32.mrb[0].mxu0
    %v3198 = vadd.f32 0.0, %v3197
    %v3199 = vpop.f32.mrb[0].mxu0
    %v3200 = vadd.f32 0.0, %v3199
    %v3201 = vpop.f32.mrb[0].mxu0
    %v3202 = vadd.f32 0.0, %v3201
    %3203 = vdwg.mxu0
    %3204 = vmatprep.subr.bf16.mxu0 %v1647
    %3205 = vmatpush1.bf16.xpose.msra.mxu0 %v1646
    %3206 = vmatprep.subr.bf16.mxu0 %v1649
    %3207 = vmatpush1.bf16.xpose.msra.mxu0 %v1648
    %3208 = vmatprep.subr.bf16.mxu0 %v1651
    %3209 = vmatpush1.bf16.xpose.msra.mxu0 %v1650
    %3210 = vmatprep.subr.bf16.mxu0 %v1653
    %3211 = vmatpush1.bf16.xpose.msra.mxu0 %v1652
    %3212 = vmatprep.subr.bf16.mxu0 %v1655
    %3213 = vmatpush1.bf16.xpose.msra.mxu0 %v1654
    %3214 = vmatprep.subr.bf16.mxu0 %v1657
    %3215 = vmatpush1.bf16.xpose.msra.mxu0 %v1656
    %3216 = vmatprep.subr.bf16.mxu0 %v1659
    %3217 = vmatpush1.bf16.xpose.msra.mxu0 %v1658
    %3218 = vmatprep.subr.bf16.mxu0 %v1661
    %3219 = vmatpush1.bf16.xpose.msra.mxu0 %v1660
    %3220 = vmatprep.subr.bf16.mxu0 %v1663
    %3221 = vmatpush1.bf16.xpose.msra.mxu0 %v1662
    %3222 = vmatprep.subr.bf16.mxu0 %v1665
    %3223 = vmatpush1.bf16.xpose.msra.mxu0 %v1664
    %3224 = vmatprep.subr.bf16.mxu0 %v1667
    %3225 = vmatpush1.bf16.xpose.msra.mxu0 %v1666
    %3226 = vmatprep.subr.bf16.mxu0 %v1669
    %3227 = vmatpush1.bf16.xpose.msra.mxu0 %v1668
    %3228 = vmatprep.subr.bf16.mxu0 %v1671
    %3229 = vmatpush1.bf16.xpose.msra.mxu0 %v1670
    %3230 = vmatprep.subr.bf16.mxu0 %v1673
    %3231 = vmatpush1.bf16.xpose.msra.mxu0 %v1672
    %3232 = vmatprep.subr.bf16.mxu0 %v1675
    %3233 = vmatpush1.bf16.xpose.msra.mxu0 %v1674
    %3234 = vmatprep.subr.bf16.mxu0 %v1677
    %3235 = vmatpush1.bf16.xpose.msra.mxu0 %v1676
    %3236 = vmatprep.mubr.bf16.mxu0 %v1347
    %3237 = vmatmul.mubr.bf16.gmra.mrb[0].mxu0 %v1346
    %v3238 = vpop.f32.mrb[0].mxu0
    %v3239 = vadd.f32 0.0, %v3238
    %v3240 = vpop.f32.mrb[0].mxu0
    %v3241 = vadd.f32 0.0, %v3240
    %v3242 = vpop.f32.mrb[0].mxu0
    %v3243 = vadd.f32 0.0, %v3242
    %v3244 = vpop.f32.mrb[0].mxu0
    %v3245 = vadd.f32 0.0, %v3244
    %3246 = vdwg.mxu0
    %3247 = vmatprep.subr.bf16.mxu0 %v1679
    %3248 = vmatpush1.bf16.xpose.msra.mxu0 %v1678
    %3249 = vmatprep.subr.bf16.mxu0 %v1681
    %3250 = vmatpush1.bf16.xpose.msra.mxu0 %v1680
    %3251 = vmatprep.subr.bf16.mxu0 %v1683
    %3252 = vmatpush1.bf16.xpose.msra.mxu0 %v1682
    %3253 = vmatprep.subr.bf16.mxu0 %v1685
    %3254 = vmatpush1.bf16.xpose.msra.mxu0 %v1684
    %3255 = vmatprep.subr.bf16.mxu0 %v1687
    %3256 = vmatpush1.bf16.xpose.msra.mxu0 %v1686
    %3257 = vmatprep.subr.bf16.mxu0 %v1689
    %3258 = vmatpush1.bf16.xpose.msra.mxu0 %v1688
    %3259 = vmatprep.subr.bf16.mxu0 %v1691
    %3260 = vmatpush1.bf16.xpose.msra.mxu0 %v1690
    %3261 = vmatprep.subr.bf16.mxu0 %v1693
    %3262 = vmatpush1.bf16.xpose.msra.mxu0 %v1692
    %3263 = vmatprep.subr.bf16.mxu0 %v1695
    %3264 = vmatpush1.bf16.xpose.msra.mxu0 %v1694
    %3265 = vmatprep.subr.bf16.mxu0 %v1697
    %3266 = vmatpush1.bf16.xpose.msra.mxu0 %v1696
    %3267 = vmatprep.subr.bf16.mxu0 %v1699
    %3268 = vmatpush1.bf16.xpose.msra.mxu0 %v1698
    %3269 = vmatprep.subr.bf16.mxu0 %v1701
    %3270 = vmatpush1.bf16.xpose.msra.mxu0 %v1700
    %3271 = vmatprep.subr.bf16.mxu0 %v1703
    %3272 = vmatpush1.bf16.xpose.msra.mxu0 %v1702
    %3273 = vmatprep.subr.bf16.mxu0 %v1705
    %3274 = vmatpush1.bf16.xpose.msra.mxu0 %v1704
    %3275 = vmatprep.subr.bf16.mxu0 %v1707
    %3276 = vmatpush1.bf16.xpose.msra.mxu0 %v1706
    %3277 = vmatprep.subr.bf16.mxu0 %v1709
    %3278 = vmatpush1.bf16.xpose.msra.mxu0 %v1708
    %3279 = vmatprep.mubr.bf16.mxu0 %v1349
    %3280 = vmatmul.mubr.bf16.gmra.mrb[0].mxu0 %v1348
    %v3281 = vpop.f32.mrb[0].mxu0
    %v3282 = vadd.f32 0.0, %v3281
    %v3283 = vpop.f32.mrb[0].mxu0
    %v3284 = vadd.f32 0.0, %v3283
    %v3285 = vpop.f32.mrb[0].mxu0
    %v3286 = vadd.f32 0.0, %v3285
    %v3287 = vpop.f32.mrb[0].mxu0
    %v3288 = vadd.f32 0.0, %v3287
    %3289 = vdwg.mxu0
    %3290 = vmatprep.subr.bf16.mxu0 %v1711
    %3291 = vmatpush1.bf16.xpose.msra.mxu0 %v1710
    %3292 = vmatprep.subr.bf16.mxu0 %v1713
    %3293 = vmatpush1.bf16.xpose.msra.mxu0 %v1712
    %3294 = vmatprep.subr.bf16.mxu0 %v1715
    %3295 = vmatpush1.bf16.xpose.msra.mxu0 %v1714
    %3296 = vmatprep.subr.bf16.mxu0 %v1717
    %3297 = vmatpush1.bf16.xpose.msra.mxu0 %v1716
    %3298 = vmatprep.subr.bf16.mxu0 %v1719
    %3299 = vmatpush1.bf16.xpose.msra.mxu0 %v1718
    %3300 = vmatprep.subr.bf16.mxu0 %v1721
    %3301 = vmatpush1.bf16.xpose.msra.mxu0 %v1720
    %3302 = vmatprep.subr.bf16.mxu0 %v1723
    %3303 = vmatpush1.bf16.xpose.msra.mxu0 %v1722
    %3304 = vmatprep.subr.bf16.mxu0 %v1725
    %3305 = vmatpush1.bf16.xpose.msra.mxu0 %v1724
    %3306 = vmatprep.subr.bf16.mxu0 %v1727
    %3307 = vmatpush1.bf16.xpose.msra.mxu0 %v1726
    %3308 = vmatprep.subr.bf16.mxu0 %v1729
    %3309 = vmatpush1.bf16.xpose.msra.mxu0 %v1728
    %3310 = vmatprep.subr.bf16.mxu0 %v1731
    %3311 = vmatpush1.bf16.xpose.msra.mxu0 %v1730
    %3312 = vmatprep.subr.bf16.mxu0 %v1733
    %3313 = vmatpush1.bf16.xpose.msra.mxu0 %v1732
    %3314 = vmatprep.subr.bf16.mxu0 %v1735
    %3315 = vmatpush1.bf16.xpose.msra.mxu0 %v1734
    %3316 = vmatprep.subr.bf16.mxu0 %v1737
    %3317 = vmatpush1.bf16.xpose.msra.mxu0 %v1736
    %3318 = vmatprep.subr.bf16.mxu0 %v1739
    %3319 = vmatpush1.bf16.xpose.msra.mxu0 %v1738
    %3320 = vmatprep.subr.bf16.mxu0 %v1741
    %3321 = vmatpush1.bf16.xpose.msra.mxu0 %v1740
    %3322 = vmatprep.mubr.bf16.mxu0 %v1351
    %3323 = vmatmul.mubr.bf16.gmra.mrb[0].mxu0 %v1350
    %v3324 = vpop.f32.mrb[0].mxu0
    %v3325 = vadd.f32 0.0, %v3324
    %v3326 = vpop.f32.mrb[0].mxu0
    %v3327 = vadd.f32 0.0, %v3326
    %v3328 = vpop.f32.mrb[0].mxu0
    %v3329 = vadd.f32 0.0, %v3328
    %v3330 = vpop.f32.mrb[0].mxu0
    %v3331 = vadd.f32 0.0, %v3330
    %3332 = vdwg.mxu0
    %3333 = vmatprep.subr.bf16.mxu0 %v1743
    %3334 = vmatpush1.bf16.xpose.msra.mxu0 %v1742
    %3335 = vmatprep.subr.bf16.mxu0 %v1745
    %3336 = vmatpush1.bf16.xpose.msra.mxu0 %v1744
    %3337 = vmatprep.subr.bf16.mxu0 %v1747
    %3338 = vmatpush1.bf16.xpose.msra.mxu0 %v1746
    %3339 = vmatprep.subr.bf16.mxu0 %v1749
    %3340 = vmatpush1.bf16.xpose.msra.mxu0 %v1748
    %3341 = vmatprep.subr.bf16.mxu0 %v1751
    %3342 = vmatpush1.bf16.xpose.msra.mxu0 %v1750
    %3343 = vmatprep.subr.bf16.mxu0 %v1753
    %3344 = vmatpush1.bf16.xpose.msra.mxu0 %v1752
    %3345 = vmatprep.subr.bf16.mxu0 %v1755
    %3346 = vmatpush1.bf16.xpose.msra.mxu0 %v1754
    %3347 = vmatprep.subr.bf16.mxu0 %v1757
    %3348 = vmatpush1.bf16.xpose.msra.mxu0 %v1756
    %3349 = vmatprep.subr.bf16.mxu0 %v1759
    %3350 = vmatpush1.bf16.xpose.msra.mxu0 %v1758
    %3351 = vmatprep.subr.bf16.mxu0 %v1761
    %3352 = vmatpush1.bf16.xpose.msra.mxu0 %v1760
    %3353 = vmatprep.subr.bf16.mxu0 %v1763
    %3354 = vmatpush1.bf16.xpose.msra.mxu0 %v1762
    %3355 = vmatprep.subr.bf16.mxu0 %v1765
    %3356 = vmatpush1.bf16.xpose.msra.mxu0 %v1764
    %3357 = vmatprep.subr.bf16.mxu0 %v1767
    %3358 = vmatpush1.bf16.xpose.msra.mxu0 %v1766
    %3359 = vmatprep.subr.bf16.mxu0 %v1769
    %3360 = vmatpush1.bf16.xpose.msra.mxu0 %v1768
    %3361 = vmatprep.subr.bf16.mxu0 %v1771
    %3362 = vmatpush1.bf16.xpose.msra.mxu0 %v1770
    %3363 = vmatprep.subr.bf16.mxu0 %v1773
    %3364 = vmatpush1.bf16.xpose.msra.mxu0 %v1772
    %3365 = vmatprep.mubr.bf16.mxu0 %v1353
    %3366 = vmatmul.mubr.bf16.gmra.mrb[0].mxu0 %v1352
    %v3367 = vpop.f32.mrb[0].mxu0
    %v3368 = vadd.f32 0.0, %v3367
    %v3369 = vpop.f32.mrb[0].mxu0
    %v3370 = vadd.f32 0.0, %v3369
    %v3371 = vpop.f32.mrb[0].mxu0
    %v3372 = vadd.f32 0.0, %v3371
    %v3373 = vpop.f32.mrb[0].mxu0
    %v3374 = vadd.f32 0.0, %v3373
    %3375 = vdwg.mxu0
    %3376 = vmatprep.subr.bf16.mxu0 %v1775
    %3377 = vmatpush1.bf16.xpose.msra.mxu0 %v1774
    %3378 = vmatprep.subr.bf16.mxu0 %v1777
    %3379 = vmatpush1.bf16.xpose.msra.mxu0 %v1776
    %3380 = vmatprep.subr.bf16.mxu0 %v1779
    %3381 = vmatpush1.bf16.xpose.msra.mxu0 %v1778
    %3382 = vmatprep.subr.bf16.mxu0 %v1781
    %3383 = vmatpush1.bf16.xpose.msra.mxu0 %v1780
    %3384 = vmatprep.subr.bf16.mxu0 %v1783
    %3385 = vmatpush1.bf16.xpose.msra.mxu0 %v1782
    %3386 = vmatprep.subr.bf16.mxu0 %v1785
    %3387 = vmatpush1.bf16.xpose.msra.mxu0 %v1784
    %3388 = vmatprep.subr.bf16.mxu0 %v1787
    %3389 = vmatpush1.bf16.xpose.msra.mxu0 %v1786
    %3390 = vmatprep.subr.bf16.mxu0 %v1789
    %3391 = vmatpush1.bf16.xpose.msra.mxu0 %v1788
    %3392 = vmatprep.subr.bf16.mxu0 %v1791
    %3393 = vmatpush1.bf16.xpose.msra.mxu0 %v1790
    %3394 = vmatprep.subr.bf16.mxu0 %v1793
    %3395 = vmatpush1.bf16.xpose.msra.mxu0 %v1792
    %3396 = vmatprep.subr.bf16.mxu0 %v1795
    %3397 = vmatpush1.bf16.xpose.msra.mxu0 %v1794
    %3398 = vmatprep.subr.bf16.mxu0 %v1797
    %3399 = vmatpush1.bf16.xpose.msra.mxu0 %v1796
    %3400 = vmatprep.subr.bf16.mxu0 %v1799
    %3401 = vmatpush1.bf16.xpose.msra.mxu0 %v1798
    %3402 = vmatprep.subr.bf16.mxu0 %v1801
    %3403 = vmatpush1.bf16.xpose.msra.mxu0 %v1800
    %3404 = vmatprep.subr.bf16.mxu0 %v1803
    %3405 = vmatpush1.bf16.xpose.msra.mxu0 %v1802
    %3406 = vmatprep.subr.bf16.mxu0 %v1805
    %3407 = vmatpush1.bf16.xpose.msra.mxu0 %v1804
    %3408 = vmatprep.mubr.bf16.mxu0 %v1355
    %3409 = vmatmul.mubr.bf16.gmra.mrb[0].mxu0 %v1354
    %v3410 = vpop.f32.mrb[0].mxu0
    %v3411 = vadd.f32 0.0, %v3410
    %v3412 = vpop.f32.mrb[0].mxu0
    %v3413 = vadd.f32 0.0, %v3412
    %v3414 = vpop.f32.mrb[0].mxu0
    %v3415 = vadd.f32 0.0, %v3414
    %v3416 = vpop.f32.mrb[0].mxu0
    %v3417 = vadd.f32 0.0, %v3416
    %3418 = vdwg.mxu0
    %3419 = vmatprep.subr.bf16.mxu0 %v1807
    %3420 = vmatpush1.bf16.xpose.msra.mxu0 %v1806
    %3421 = vmatprep.subr.bf16.mxu0 %v1809
    %3422 = vmatpush1.bf16.xpose.msra.mxu0 %v1808
    %3423 = vmatprep.subr.bf16.mxu0 %v1811
    %3424 = vmatpush1.bf16.xpose.msra.mxu0 %v1810
    %3425 = vmatprep.subr.bf16.mxu0 %v1813
    %3426 = vmatpush1.bf16.xpose.msra.mxu0 %v1812
    %3427 = vmatprep.subr.bf16.mxu0 %v1815
    %3428 = vmatpush1.bf16.xpose.msra.mxu0 %v1814
    %3429 = vmatprep.subr.bf16.mxu0 %v1817
    %3430 = vmatpush1.bf16.xpose.msra.mxu0 %v1816
    %3431 = vmatprep.subr.bf16.mxu0 %v1819
    %3432 = vmatpush1.bf16.xpose.msra.mxu0 %v1818
    %3433 = vmatprep.subr.bf16.mxu0 %v1821
    %3434 = vmatpush1.bf16.xpose.msra.mxu0 %v1820
    %3435 = vmatprep.subr.bf16.mxu0 %v1823
    %3436 = vmatpush1.bf16.xpose.msra.mxu0 %v1822
    %3437 = vmatprep.subr.bf16.mxu0 %v1825
    %3438 = vmatpush1.bf16.xpose.msra.mxu0 %v1824
    %3439 = vmatprep.subr.bf16.mxu0 %v1827
    %3440 = vmatpush1.bf16.xpose.msra.mxu0 %v1826
    %3441 = vmatprep.subr.bf16.mxu0 %v1829
    %3442 = vmatpush1.bf16.xpose.msra.mxu0 %v1828
    %3443 = vmatprep.subr.bf16.mxu0 %v1831
    %3444 = vmatpush1.bf16.xpose.msra.mxu0 %v1830
    %3445 = vmatprep.subr.bf16.mxu0 %v1833
    %3446 = vmatpush1.bf16.xpose.msra.mxu0 %v1832
    %3447 = vmatprep.subr.bf16.mxu0 %v1835
    %3448 = vmatpush1.bf16.xpose.msra.mxu0 %v1834
    %3449 = vmatprep.subr.bf16.mxu0 %v1837
    %3450 = vmatpush1.bf16.xpose.msra.mxu0 %v1836
    %3451 = vmatprep.mubr.bf16.mxu0 %v1357
    %3452 = vmatmul.mubr.bf16.gmra.mrb[0].mxu0 %v1356
    %v3453 = vpop.f32.mrb[0].mxu0
    %v3454 = vadd.f32 0.0, %v3453
    %v3455 = vpop.f32.mrb[0].mxu0
    %v3456 = vadd.f32 0.0, %v3455
    %v3457 = vpop.f32.mrb[0].mxu0
    %v3458 = vadd.f32 0.0, %v3457
    %v3459 = vpop.f32.mrb[0].mxu0
    %v3460 = vadd.f32 0.0, %v3459
    %3461 = vdwg.mxu0
    %3462 = vmatprep.subr.bf16.mxu0 %v1839
    %3463 = vmatpush1.bf16.xpose.msra.mxu0 %v1838
    %3464 = vmatprep.subr.bf16.mxu0 %v1841
    %3465 = vmatpush1.bf16.xpose.msra.mxu0 %v1840
    %3466 = vmatprep.subr.bf16.mxu0 %v1843
    %3467 = vmatpush1.bf16.xpose.msra.mxu0 %v1842
    %3468 = vmatprep.subr.bf16.mxu0 %v1845
    %3469 = vmatpush1.bf16.xpose.msra.mxu0 %v1844
    %3470 = vmatprep.subr.bf16.mxu0 %v1847
    %3471 = vmatpush1.bf16.xpose.msra.mxu0 %v1846
    %3472 = vmatprep.subr.bf16.mxu0 %v1849
    %3473 = vmatpush1.bf16.xpose.msra.mxu0 %v1848
    %3474 = vmatprep.subr.bf16.mxu0 %v1851
    %3475 = vmatpush1.bf16.xpose.msra.mxu0 %v1850
    %3476 = vmatprep.subr.bf16.mxu0 %v1853
    %3477 = vmatpush1.bf16.xpose.msra.mxu0 %v1852
    %3478 = vmatprep.subr.bf16.mxu0 %v1855
    %3479 = vmatpush1.bf16.xpose.msra.mxu0 %v1854
    %3480 = vmatprep.subr.bf16.mxu0 %v1857
    %3481 = vmatpush1.bf16.xpose.msra.mxu0 %v1856
    %3482 = vmatprep.subr.bf16.mxu0 %v1859
    %3483 = vmatpush1.bf16.xpose.msra.mxu0 %v1858
    %3484 = vmatprep.subr.bf16.mxu0 %v1861
    %3485 = vmatpush1.bf16.xpose.msra.mxu0 %v1860
    %3486 = vmatprep.subr.bf16.mxu0 %v1863
    %3487 = vmatpush1.bf16.xpose.msra.mxu0 %v1862
    %3488 = vmatprep.subr.bf16.mxu0 %v1865
    %3489 = vmatpush1.bf16.xpose.msra.mxu0 %v1864
    %3490 = vmatprep.subr.bf16.mxu0 %v1867
    %3491 = vmatpush1.bf16.xpose.msra.mxu0 %v1866
    %3492 = vmatprep.subr.bf16.mxu0 %v1869
    %3493 = vmatpush1.bf16.xpose.msra.mxu0 %v1868
    %3494 = vmatprep.mubr.bf16.mxu0 %v1359
    %3495 = vmatmul.mubr.bf16.gmra.mrb[0].mxu0 %v1358
    %v3496 = vpop.f32.mrb[0].mxu0
    %v3497 = vadd.f32 0.0, %v3496
    %v3498 = vpop.f32.mrb[0].mxu0
    %v3499 = vadd.f32 0.0, %v3498
    %v3500 = vpop.f32.mrb[0].mxu0
    %v3501 = vadd.f32 0.0, %v3500
    %v3502 = vpop.f32.mrb[0].mxu0
    %v3503 = vadd.f32 0.0, %v3502
    %3504 = vdwg.mxu0
    %3505 = vmatprep.subr.bf16.mxu0 %v1871
    %3506 = vmatpush1.bf16.xpose.msra.mxu0 %v1870
    %3507 = vmatprep.subr.bf16.mxu0 %v1873
    %3508 = vmatpush1.bf16.xpose.msra.mxu0 %v1872
    %3509 = vmatprep.subr.bf16.mxu0 %v1875
    %3510 = vmatpush1.bf16.xpose.msra.mxu0 %v1874
    %3511 = vmatprep.subr.bf16.mxu0 %v1877
    %3512 = vmatpush1.bf16.xpose.msra.mxu0 %v1876
    %3513 = vmatprep.subr.bf16.mxu0 %v1879
    %3514 = vmatpush1.bf16.xpose.msra.mxu0 %v1878
    %3515 = vmatprep.subr.bf16.mxu0 %v1881
    %3516 = vmatpush1.bf16.xpose.msra.mxu0 %v1880
    %3517 = vmatprep.subr.bf16.mxu0 %v1883
    %3518 = vmatpush1.bf16.xpose.msra.mxu0 %v1882
    %3519 = vmatprep.subr.bf16.mxu0 %v1885
    %3520 = vmatpush1.bf16.xpose.msra.mxu0 %v1884
    %3521 = vmatprep.subr.bf16.mxu0 %v1887
    %3522 = vmatpush1.bf16.xpose.msra.mxu0 %v1886
    %3523 = vmatprep.subr.bf16.mxu0 %v1889
    %3524 = vmatpush1.bf16.xpose.msra.mxu0 %v1888
    %3525 = vmatprep.subr.bf16.mxu0 %v1891
    %3526 = vmatpush1.bf16.xpose.msra.mxu0 %v1890
    %3527 = vmatprep.subr.bf16.mxu0 %v1893
    %3528 = vmatpush1.bf16.xpose.msra.mxu0 %v1892
    %3529 = vmatprep.subr.bf16.mxu0 %v1895
    %3530 = vmatpush1.bf16.xpose.msra.mxu0 %v1894
    %3531 = vmatprep.subr.bf16.mxu0 %v1897
    %3532 = vmatpush1.bf16.xpose.msra.mxu0 %v1896
    %3533 = vmatprep.subr.bf16.mxu0 %v1899
    %3534 = vmatpush1.bf16.xpose.msra.mxu0 %v1898
    %3535 = vmatprep.subr.bf16.mxu0 %v1901
    %3536 = vmatpush1.bf16.xpose.msra.mxu0 %v1900
    %3537 = vmatprep.mubr.bf16.mxu0 %v1361
    %3538 = vmatmul.mubr.bf16.gmra.mrb[0].mxu0 %v1360
    %v3539 = vpop.f32.mrb[0].mxu0
    %v3540 = vadd.f32 0.0, %v3539
    %v3541 = vpop.f32.mrb[0].mxu0
    %v3542 = vadd.f32 0.0, %v3541
    %v3543 = vpop.f32.mrb[0].mxu0
    %v3544 = vadd.f32 0.0, %v3543
    %v3545 = vpop.f32.mrb[0].mxu0
    %v3546 = vadd.f32 0.0, %v3545
    %3547 = vdwg.mxu0
    %3548 = vmatprep.subr.bf16.mxu0 %v1903
    %3549 = vmatpush1.bf16.xpose.msra.mxu0 %v1902
    %3550 = vmatprep.subr.bf16.mxu0 %v1905
    %3551 = vmatpush1.bf16.xpose.msra.mxu0 %v1904
    %3552 = vmatprep.subr.bf16.mxu0 %v1907
    %3553 = vmatpush1.bf16.xpose.msra.mxu0 %v1906
    %3554 = vmatprep.subr.bf16.mxu0 %v1909
    %3555 = vmatpush1.bf16.xpose.msra.mxu0 %v1908
    %3556 = vmatprep.subr.bf16.mxu0 %v1911
    %3557 = vmatpush1.bf16.xpose.msra.mxu0 %v1910
    %3558 = vmatprep.subr.bf16.mxu0 %v1913
    %3559 = vmatpush1.bf16.xpose.msra.mxu0 %v1912
    %3560 = vmatprep.subr.bf16.mxu0 %v1915
    %3561 = vmatpush1.bf16.xpose.msra.mxu0 %v1914
    %3562 = vmatprep.subr.bf16.mxu0 %v1917
    %3563 = vmatpush1.bf16.xpose.msra.mxu0 %v1916
    %3564 = vmatprep.subr.bf16.mxu0 %v1919
    %3565 = vmatpush1.bf16.xpose.msra.mxu0 %v1918
    %3566 = vmatprep.subr.bf16.mxu0 %v1921
    %3567 = vmatpush1.bf16.xpose.msra.mxu0 %v1920
    %3568 = vmatprep.subr.bf16.mxu0 %v1923
    %3569 = vmatpush1.bf16.xpose.msra.mxu0 %v1922
    %3570 = vmatprep.subr.bf16.mxu0 %v1925
    %3571 = vmatpush1.bf16.xpose.msra.mxu0 %v1924
    %3572 = vmatprep.subr.bf16.mxu0 %v1927
    %3573 = vmatpush1.bf16.xpose.msra.mxu0 %v1926
    %3574 = vmatprep.subr.bf16.mxu0 %v1929
    %3575 = vmatpush1.bf16.xpose.msra.mxu0 %v1928
    %3576 = vmatprep.subr.bf16.mxu0 %v1931
    %3577 = vmatpush1.bf16.xpose.msra.mxu0 %v1930
    %3578 = vmatprep.subr.bf16.mxu0 %v1933
    %3579 = vmatpush1.bf16.xpose.msra.mxu0 %v1932
    %3580 = vmatprep.mubr.bf16.mxu0 %v1363
    %3581 = vmatmul.mubr.bf16.gmra.mrb[0].mxu0 %v1362
    %v3582 = vpop.f32.mrb[0].mxu0
    %v3583 = vadd.f32 0.0, %v3582
    %v3584 = vpop.f32.mrb[0].mxu0
    %v3585 = vadd.f32 0.0, %v3584
    %v3586 = vpop.f32.mrb[0].mxu0
    %v3587 = vadd.f32 0.0, %v3586
    %v3588 = vpop.f32.mrb[0].mxu0
    %v3589 = vadd.f32 0.0, %v3588
    %3590 = vdwg.mxu0
    %3591 = vmatprep.subr.bf16.mxu0 %v1935
    %3592 = vmatpush1.bf16.xpose.msra.mxu0 %v1934
    %3593 = vmatprep.subr.bf16.mxu0 %v1937
    %3594 = vmatpush1.bf16.xpose.msra.mxu0 %v1936
    %3595 = vmatprep.subr.bf16.mxu0 %v1939
    %3596 = vmatpush1.bf16.xpose.msra.mxu0 %v1938
    %3597 = vmatprep.subr.bf16.mxu0 %v1941
    %3598 = vmatpush1.bf16.xpose.msra.mxu0 %v1940
    %3599 = vmatprep.subr.bf16.mxu0 %v1943
    %3600 = vmatpush1.bf16.xpose.msra.mxu0 %v1942
    %3601 = vmatprep.subr.bf16.mxu0 %v1945
    %3602 = vmatpush1.bf16.xpose.msra.mxu0 %v1944
    %3603 = vmatprep.subr.bf16.mxu0 %v1947
    %3604 = vmatpush1.bf16.xpose.msra.mxu0 %v1946
    %3605 = vmatprep.subr.bf16.mxu0 %v1949
    %3606 = vmatpush1.bf16.xpose.msra.mxu0 %v1948
    %3607 = vmatprep.subr.bf16.mxu0 %v1951
    %3608 = vmatpush1.bf16.xpose.msra.mxu0 %v1950
    %3609 = vmatprep.subr.bf16.mxu0 %v1953
    %3610 = vmatpush1.bf16.xpose.msra.mxu0 %v1952
    %3611 = vmatprep.subr.bf16.mxu0 %v1955
    %3612 = vmatpush1.bf16.xpose.msra.mxu0 %v1954
    %3613 = vmatprep.subr.bf16.mxu0 %v1957
    %3614 = vmatpush1.bf16.xpose.msra.mxu0 %v1956
    %3615 = vmatprep.subr.bf16.mxu0 %v1959
    %3616 = vmatpush1.bf16.xpose.msra.mxu0 %v1958
    %3617 = vmatprep.subr.bf16.mxu0 %v1961
    %3618 = vmatpush1.bf16.xpose.msra.mxu0 %v1960
    %3619 = vmatprep.subr.bf16.mxu0 %v1963
    %3620 = vmatpush1.bf16.xpose.msra.mxu0 %v1962
    %3621 = vmatprep.subr.bf16.mxu0 %v1965
    %3622 = vmatpush1.bf16.xpose.msra.mxu0 %v1964
    %3623 = vmatprep.mubr.bf16.mxu0 %v1365
    %3624 = vmatmul.mubr.bf16.gmra.mrb[0].mxu0 %v1364
    %v3625 = vpop.f32.mrb[0].mxu0
    %v3626 = vadd.f32 0.0, %v3625
    %v3627 = vpop.f32.mrb[0].mxu0
    %v3628 = vadd.f32 0.0, %v3627
    %v3629 = vpop.f32.mrb[0].mxu0
    %v3630 = vadd.f32 0.0, %v3629
    %v3631 = vpop.f32.mrb[0].mxu0
    %v3632 = vadd.f32 0.0, %v3631
    %3633 = vdwg.mxu0
    %3634 = vmatprep.subr.bf16.mxu0 %v1967
    %3635 = vmatpush1.bf16.xpose.msra.mxu0 %v1966
    %3636 = vmatprep.subr.bf16.mxu0 %v1969
    %3637 = vmatpush1.bf16.xpose.msra.mxu0 %v1968
    %3638 = vmatprep.subr.bf16.mxu0 %v1971
    %3639 = vmatpush1.bf16.xpose.msra.mxu0 %v1970
    %3640 = vmatprep.subr.bf16.mxu0 %v1973
    %3641 = vmatpush1.bf16.xpose.msra.mxu0 %v1972
    %3642 = vmatprep.subr.bf16.mxu0 %v1975
    %3643 = vmatpush1.bf16.xpose.msra.mxu0 %v1974
    %3644 = vmatprep.subr.bf16.mxu0 %v1977
    %3645 = vmatpush1.bf16.xpose.msra.mxu0 %v1976
    %3646 = vmatprep.subr.bf16.mxu0 %v1979
    %3647 = vmatpush1.bf16.xpose.msra.mxu0 %v1978
    %3648 = vmatprep.subr.bf16.mxu0 %v1981
    %3649 = vmatpush1.bf16.xpose.msra.mxu0 %v1980
    %3650 = vmatprep.subr.bf16.mxu0 %v1983
    %3651 = vmatpush1.bf16.xpose.msra.mxu0 %v1982
    %3652 = vmatprep.subr.bf16.mxu0 %v1985
    %3653 = vmatpush1.bf16.xpose.msra.mxu0 %v1984
    %3654 = vmatprep.subr.bf16.mxu0 %v1987
    %3655 = vmatpush1.bf16.xpose.msra.mxu0 %v1986
    %3656 = vmatprep.subr.bf16.mxu0 %v1989
    %3657 = vmatpush1.bf16.xpose.msra.mxu0 %v1988
    %3658 = vmatprep.subr.bf16.mxu0 %v1991
    %3659 = vmatpush1.bf16.xpose.msra.mxu0 %v1990
    %3660 = vmatprep.subr.bf16.mxu0 %v1993
    %3661 = vmatpush1.bf16.xpose.msra.mxu0 %v1992
    %3662 = vmatprep.subr.bf16.mxu0 %v1995
    %3663 = vmatpush1.bf16.xpose.msra.mxu0 %v1994
    %3664 = vmatprep.subr.bf16.mxu0 %v1997
    %3665 = vmatpush1.bf16.xpose.msra.mxu0 %v1996
    %3666 = vmatprep.mubr.bf16.mxu0 %v1367
    %3667 = vmatmul.mubr.bf16.gmra.mrb[0].mxu0 %v1366
    %v3668 = vpop.f32.mrb[0].mxu0
    %v3669 = vadd.f32 0.0, %v3668
    %v3670 = vpop.f32.mrb[0].mxu0
    %v3671 = vadd.f32 0.0, %v3670
    %v3672 = vpop.f32.mrb[0].mxu0
    %v3673 = vadd.f32 0.0, %v3672
    %v3674 = vpop.f32.mrb[0].mxu0
    %v3675 = vadd.f32 0.0, %v3674
    %3676 = vdwg.mxu0
    %3677 = vmatprep.subr.bf16.mxu0 %v1999
    %3678 = vmatpush1.bf16.xpose.msra.mxu0 %v1998
    %3679 = vmatprep.subr.bf16.mxu0 %v2001
    %3680 = vmatpush1.bf16.xpose.msra.mxu0 %v2000
    %3681 = vmatprep.subr.bf16.mxu0 %v2003
    %3682 = vmatpush1.bf16.xpose.msra.mxu0 %v2002
    %3683 = vmatprep.subr.bf16.mxu0 %v2005
    %3684 = vmatpush1.bf16.xpose.msra.mxu0 %v2004
    %3685 = vmatprep.subr.bf16.mxu0 %v2007
    %3686 = vmatpush1.bf16.xpose.msra.mxu0 %v2006
    %3687 = vmatprep.subr.bf16.mxu0 %v2009
    %3688 = vmatpush1.bf16.xpose.msra.mxu0 %v2008
    %3689 = vmatprep.subr.bf16.mxu0 %v2011
    %3690 = vmatpush1.bf16.xpose.msra.mxu0 %v2010
    %3691 = vmatprep.subr.bf16.mxu0 %v2013
    %3692 = vmatpush1.bf16.xpose.msra.mxu0 %v2012
    %3693 = vmatprep.subr.bf16.mxu0 %v2015
    %3694 = vmatpush1.bf16.xpose.msra.mxu0 %v2014
    %3695 = vmatprep.subr.bf16.mxu0 %v2017
    %3696 = vmatpush1.bf16.xpose.msra.mxu0 %v2016
    %3697 = vmatprep.subr.bf16.mxu0 %v2019
    %3698 = vmatpush1.bf16.xpose.msra.mxu0 %v2018
    %3699 = vmatprep.subr.bf16.mxu0 %v2021
    %3700 = vmatpush1.bf16.xpose.msra.mxu0 %v2020
    %3701 = vmatprep.subr.bf16.mxu0 %v2023
    %3702 = vmatpush1.bf16.xpose.msra.mxu0 %v2022
    %3703 = vmatprep.subr.bf16.mxu0 %v2025
    %3704 = vmatpush1.bf16.xpose.msra.mxu0 %v2024
    %3705 = vmatprep.subr.bf16.mxu0 %v2027
    %3706 = vmatpush1.bf16.xpose.msra.mxu0 %v2026
    %3707 = vmatprep.subr.bf16.mxu0 %v2029
    %3708 = vmatpush1.bf16.xpose.msra.mxu0 %v2028
    %3709 = vmatprep.mubr.bf16.mxu0 %v1369
    %3710 = vmatmul.mubr.bf16.gmra.mrb[0].mxu0 %v1368
    %v3711 = vpop.f32.mrb[0].mxu0
    %v3712 = vadd.f32 0.0, %v3711
    %v3713 = vpop.f32.mrb[0].mxu0
    %v3714 = vadd.f32 0.0, %v3713
    %v3715 = vpop.f32.mrb[0].mxu0
    %v3716 = vadd.f32 0.0, %v3715
    %v3717 = vpop.f32.mrb[0].mxu0
    %v3718 = vadd.f32 0.0, %v3717
    %3719 = vdwg.mxu0
    %3720 = vmatprep.subr.bf16.mxu0 %v2031
    %3721 = vmatpush1.bf16.xpose.msra.mxu0 %v2030
    %3722 = vmatprep.subr.bf16.mxu0 %v2033
    %3723 = vmatpush1.bf16.xpose.msra.mxu0 %v2032
    %3724 = vmatprep.subr.bf16.mxu0 %v2035
    %3725 = vmatpush1.bf16.xpose.msra.mxu0 %v2034
    %3726 = vmatprep.subr.bf16.mxu0 %v2037
    %3727 = vmatpush1.bf16.xpose.msra.mxu0 %v2036
    %3728 = vmatprep.subr.bf16.mxu0 %v2039
    %3729 = vmatpush1.bf16.xpose.msra.mxu0 %v2038
    %3730 = vmatprep.subr.bf16.mxu0 %v2041
    %3731 = vmatpush1.bf16.xpose.msra.mxu0 %v2040
    %3732 = vmatprep.subr.bf16.mxu0 %v2043
    %3733 = vmatpush1.bf16.xpose.msra.mxu0 %v2042
    %3734 = vmatprep.subr.bf16.mxu0 %v2045
    %3735 = vmatpush1.bf16.xpose.msra.mxu0 %v2044
    %3736 = vmatprep.subr.bf16.mxu0 %v2047
    %3737 = vmatpush1.bf16.xpose.msra.mxu0 %v2046
    %3738 = vmatprep.subr.bf16.mxu0 %v2049
    %3739 = vmatpush1.bf16.xpose.msra.mxu0 %v2048
    %3740 = vmatprep.subr.bf16.mxu0 %v2051
    %3741 = vmatpush1.bf16.xpose.msra.mxu0 %v2050
    %3742 = vmatprep.subr.bf16.mxu0 %v2053
    %3743 = vmatpush1.bf16.xpose.msra.mxu0 %v2052
    %3744 = vmatprep.subr.bf16.mxu0 %v2055
    %3745 = vmatpush1.bf16.xpose.msra.mxu0 %v2054
    %3746 = vmatprep.subr.bf16.mxu0 %v2057
    %3747 = vmatpush1.bf16.xpose.msra.mxu0 %v2056
    %3748 = vmatprep.subr.bf16.mxu0 %v2059
    %3749 = vmatpush1.bf16.xpose.msra.mxu0 %v2058
    %3750 = vmatprep.subr.bf16.mxu0 %v2061
    %3751 = vmatpush1.bf16.xpose.msra.mxu0 %v2060
    %3752 = vmatprep.mubr.bf16.mxu0 %v1371
    %3753 = vmatmul.mubr.bf16.gmra.mrb[0].mxu0 %v1370
    %v3754 = vpop.f32.mrb[0].mxu0
    %v3755 = vadd.f32 0.0, %v3754
    %v3756 = vpop.f32.mrb[0].mxu0
    %v3757 = vadd.f32 0.0, %v3756
    %v3758 = vpop.f32.mrb[0].mxu0
    %v3759 = vadd.f32 0.0, %v3758
    %v3760 = vpop.f32.mrb[0].mxu0
    %v3761 = vadd.f32 0.0, %v3760
    %3762 = vdwg.mxu0
    %3763 = vmatprep.subr.bf16.mxu0 %v2063
    %3764 = vmatpush1.bf16.xpose.msra.mxu0 %v2062
    %3765 = vmatprep.subr.bf16.mxu0 %v2065
    %3766 = vmatpush1.bf16.xpose.msra.mxu0 %v2064
    %3767 = vmatprep.subr.bf16.mxu0 %v2067
    %3768 = vmatpush1.bf16.xpose.msra.mxu0 %v2066
    %3769 = vmatprep.subr.bf16.mxu0 %v2069
    %3770 = vmatpush1.bf16.xpose.msra.mxu0 %v2068
    %3771 = vmatprep.subr.bf16.mxu0 %v2071
    %3772 = vmatpush1.bf16.xpose.msra.mxu0 %v2070
    %3773 = vmatprep.subr.bf16.mxu0 %v2073
    %3774 = vmatpush1.bf16.xpose.msra.mxu0 %v2072
    %3775 = vmatprep.subr.bf16.mxu0 %v2075
    %3776 = vmatpush1.bf16.xpose.msra.mxu0 %v2074
    %3777 = vmatprep.subr.bf16.mxu0 %v2077
    %3778 = vmatpush1.bf16.xpose.msra.mxu0 %v2076
    %3779 = vmatprep.subr.bf16.mxu0 %v2079
    %3780 = vmatpush1.bf16.xpose.msra.mxu0 %v2078
    %3781 = vmatprep.subr.bf16.mxu0 %v2081
    %3782 = vmatpush1.bf16.xpose.msra.mxu0 %v2080
    %3783 = vmatprep.subr.bf16.mxu0 %v2083
    %3784 = vmatpush1.bf16.xpose.msra.mxu0 %v2082
    %3785 = vmatprep.subr.bf16.mxu0 %v2085
    %3786 = vmatpush1.bf16.xpose.msra.mxu0 %v2084
    %3787 = vmatprep.subr.bf16.mxu0 %v2087
    %3788 = vmatpush1.bf16.xpose.msra.mxu0 %v2086
    %3789 = vmatprep.subr.bf16.mxu0 %v2089
    %3790 = vmatpush1.bf16.xpose.msra.mxu0 %v2088
    %3791 = vmatprep.subr.bf16.mxu0 %v2091
    %3792 = vmatpush1.bf16.xpose.msra.mxu0 %v2090
    %3793 = vmatprep.subr.bf16.mxu0 %v2093
    %3794 = vmatpush1.bf16.xpose.msra.mxu0 %v2092
    %3795 = vmatprep.mubr.bf16.mxu0 %v1373
    %3796 = vmatmul.mubr.bf16.gmra.mrb[0].mxu0 %v1372
    %v3797 = vpop.f32.mrb[0].mxu0
    %v3798 = vadd.f32 0.0, %v3797
    %v3799 = vpop.f32.mrb[0].mxu0
    %v3800 = vadd.f32 0.0, %v3799
    %v3801 = vpop.f32.mrb[0].mxu0
    %v3802 = vadd.f32 0.0, %v3801
    %v3803 = vpop.f32.mrb[0].mxu0
    %v3804 = vadd.f32 0.0, %v3803
    %3805 = vdwg.mxu0
    %3806 = vmatprep.subr.bf16.mxu0 %v2095
    %3807 = vmatpush1.bf16.xpose.msra.mxu0 %v2094
    %3808 = vmatprep.subr.bf16.mxu0 %v2097
    %3809 = vmatpush1.bf16.xpose.msra.mxu0 %v2096
    %3810 = vmatprep.subr.bf16.mxu0 %v2099
    %3811 = vmatpush1.bf16.xpose.msra.mxu0 %v2098
    %3812 = vmatprep.subr.bf16.mxu0 %v2101
    %3813 = vmatpush1.bf16.xpose.msra.mxu0 %v2100
    %3814 = vmatprep.subr.bf16.mxu0 %v2103
    %3815 = vmatpush1.bf16.xpose.msra.mxu0 %v2102
    %3816 = vmatprep.subr.bf16.mxu0 %v2105
    %3817 = vmatpush1.bf16.xpose.msra.mxu0 %v2104
    %3818 = vmatprep.subr.bf16.mxu0 %v2107
    %3819 = vmatpush1.bf16.xpose.msra.mxu0 %v2106
    %3820 = vmatprep.subr.bf16.mxu0 %v2109
    %3821 = vmatpush1.bf16.xpose.msra.mxu0 %v2108
    %3822 = vmatprep.subr.bf16.mxu0 %v2111
    %3823 = vmatpush1.bf16.xpose.msra.mxu0 %v2110
    %3824 = vmatprep.subr.bf16.mxu0 %v2113
    %3825 = vmatpush1.bf16.xpose.msra.mxu0 %v2112
    %3826 = vmatprep.subr.bf16.mxu0 %v2115
    %3827 = vmatpush1.bf16.xpose.msra.mxu0 %v2114
    %3828 = vmatprep.subr.bf16.mxu0 %v2117
    %3829 = vmatpush1.bf16.xpose.msra.mxu0 %v2116
    %3830 = vmatprep.subr.bf16.mxu0 %v2119
    %3831 = vmatpush1.bf16.xpose.msra.mxu0 %v2118
    %3832 = vmatprep.subr.bf16.mxu0 %v2121
    %3833 = vmatpush1.bf16.xpose.msra.mxu0 %v2120
    %3834 = vmatprep.subr.bf16.mxu0 %v2123
    %3835 = vmatpush1.bf16.xpose.msra.mxu0 %v2122
    %3836 = vmatprep.subr.bf16.mxu0 %v2125
    %3837 = vmatpush1.bf16.xpose.msra.mxu0 %v2124
    %3838 = vmatprep.mubr.bf16.mxu0 %v1375
    %3839 = vmatmul.mubr.bf16.gmra.mrb[0].mxu0 %v1374
    %v3840 = vpop.f32.mrb[0].mxu0
    %v3841 = vadd.f32 0.0, %v3840
    %v3842 = vpop.f32.mrb[0].mxu0
    %v3843 = vadd.f32 0.0, %v3842
    %v3844 = vpop.f32.mrb[0].mxu0
    %v3845 = vadd.f32 0.0, %v3844
    %v3846 = vpop.f32.mrb[0].mxu0
    %v3847 = vadd.f32 0.0, %v3846
    %3848 = vdwg.mxu0
    %3849 = vmatprep.subr.bf16.mxu0 %v2127
    %3850 = vmatpush1.bf16.xpose.msra.mxu0 %v2126
    %3851 = vmatprep.subr.bf16.mxu0 %v2129
    %3852 = vmatpush1.bf16.xpose.msra.mxu0 %v2128
    %3853 = vmatprep.subr.bf16.mxu0 %v2131
    %3854 = vmatpush1.bf16.xpose.msra.mxu0 %v2130
    %3855 = vmatprep.subr.bf16.mxu0 %v2133
    %3856 = vmatpush1.bf16.xpose.msra.mxu0 %v2132
    %3857 = vmatprep.subr.bf16.mxu0 %v2135
    %3858 = vmatpush1.bf16.xpose.msra.mxu0 %v2134
    %3859 = vmatprep.subr.bf16.mxu0 %v2137
    %3860 = vmatpush1.bf16.xpose.msra.mxu0 %v2136
    %3861 = vmatprep.subr.bf16.mxu0 %v2139
    %3862 = vmatpush1.bf16.xpose.msra.mxu0 %v2138
    %3863 = vmatprep.subr.bf16.mxu0 %v2141
    %3864 = vmatpush1.bf16.xpose.msra.mxu0 %v2140
    %3865 = vmatprep.subr.bf16.mxu0 %v2143
    %3866 = vmatpush1.bf16.xpose.msra.mxu0 %v2142
    %3867 = vmatprep.subr.bf16.mxu0 %v2145
    %3868 = vmatpush1.bf16.xpose.msra.mxu0 %v2144
    %3869 = vmatprep.subr.bf16.mxu0 %v2147
    %3870 = vmatpush1.bf16.xpose.msra.mxu0 %v2146
    %3871 = vmatprep.subr.bf16.mxu0 %v2149
    %3872 = vmatpush1.bf16.xpose.msra.mxu0 %v2148
    %3873 = vmatprep.subr.bf16.mxu0 %v2151
    %3874 = vmatpush1.bf16.xpose.msra.mxu0 %v2150
    %3875 = vmatprep.subr.bf16.mxu0 %v2153
    %3876 = vmatpush1.bf16.xpose.msra.mxu0 %v2152
    %3877 = vmatprep.subr.bf16.mxu0 %v2155
    %3878 = vmatpush1.bf16.xpose.msra.mxu0 %v2154
    %3879 = vmatprep.subr.bf16.mxu0 %v2157
    %3880 = vmatpush1.bf16.xpose.msra.mxu0 %v2156
    %3881 = vmatprep.mubr.bf16.mxu0 %v1377
    %3882 = vmatmul.mubr.bf16.gmra.mrb[0].mxu0 %v1376
    %v3883 = vpop.f32.mrb[0].mxu0
    %v3884 = vadd.f32 0.0, %v3883
    %v3885 = vpop.f32.mrb[0].mxu0
    %v3886 = vadd.f32 0.0, %v3885
    %v3887 = vpop.f32.mrb[0].mxu0
    %v3888 = vadd.f32 0.0, %v3887
    %v3889 = vpop.f32.mrb[0].mxu0
    %v3890 = vadd.f32 0.0, %v3889
    %3891 = vdwg.mxu0
    %3892 = vmatprep.subr.bf16.mxu0 %v2159
    %3893 = vmatpush1.bf16.xpose.msra.mxu0 %v2158
    %3894 = vmatprep.subr.bf16.mxu0 %v2161
    %3895 = vmatpush1.bf16.xpose.msra.mxu0 %v2160
    %3896 = vmatprep.subr.bf16.mxu0 %v2163
    %3897 = vmatpush1.bf16.xpose.msra.mxu0 %v2162
    %3898 = vmatprep.subr.bf16.mxu0 %v2165
    %3899 = vmatpush1.bf16.xpose.msra.mxu0 %v2164
    %3900 = vmatprep.subr.bf16.mxu0 %v2167
    %3901 = vmatpush1.bf16.xpose.msra.mxu0 %v2166
    %3902 = vmatprep.subr.bf16.mxu0 %v2169
    %3903 = vmatpush1.bf16.xpose.msra.mxu0 %v2168
    %3904 = vmatprep.subr.bf16.mxu0 %v2171
    %3905 = vmatpush1.bf16.xpose.msra.mxu0 %v2170
    %3906 = vmatprep.subr.bf16.mxu0 %v2173
    %3907 = vmatpush1.bf16.xpose.msra.mxu0 %v2172
    %3908 = vmatprep.subr.bf16.mxu0 %v2175
    %3909 = vmatpush1.bf16.xpose.msra.mxu0 %v2174
    %3910 = vmatprep.subr.bf16.mxu0 %v2177
    %3911 = vmatpush1.bf16.xpose.msra.mxu0 %v2176
    %3912 = vmatprep.subr.bf16.mxu0 %v2179
    %3913 = vmatpush1.bf16.xpose.msra.mxu0 %v2178
    %3914 = vmatprep.subr.bf16.mxu0 %v2181
    %3915 = vmatpush1.bf16.xpose.msra.mxu0 %v2180
    %3916 = vmatprep.subr.bf16.mxu0 %v2183
    %3917 = vmatpush1.bf16.xpose.msra.mxu0 %v2182
    %3918 = vmatprep.subr.bf16.mxu0 %v2185
    %3919 = vmatpush1.bf16.xpose.msra.mxu0 %v2184
    %3920 = vmatprep.subr.bf16.mxu0 %v2187
    %3921 = vmatpush1.bf16.xpose.msra.mxu0 %v2186
    %3922 = vmatprep.subr.bf16.mxu0 %v2189
    %3923 = vmatpush1.bf16.xpose.msra.mxu0 %v2188
    %3924 = vmatprep.mubr.bf16.mxu0 %v1379
    %3925 = vmatmul.mubr.bf16.gmra.mrb[0].mxu0 %v1378
    %v3926 = vpop.f32.mrb[0].mxu0
    %v3927 = vadd.f32 0.0, %v3926
    %v3928 = vpop.f32.mrb[0].mxu0
    %v3929 = vadd.f32 0.0, %v3928
    %v3930 = vpop.f32.mrb[0].mxu0
    %v3931 = vadd.f32 0.0, %v3930
    %v3932 = vpop.f32.mrb[0].mxu0
    %v3933 = vadd.f32 0.0, %v3932
    %3934 = vdwg.mxu0
    %3935 = vmatprep.subr.bf16.mxu0 %v2191
    %3936 = vmatpush1.bf16.xpose.msra.mxu0 %v2190
    %3937 = vmatprep.subr.bf16.mxu0 %v2193
    %3938 = vmatpush1.bf16.xpose.msra.mxu0 %v2192
    %3939 = vmatprep.subr.bf16.mxu0 %v2195
    %3940 = vmatpush1.bf16.xpose.msra.mxu0 %v2194
    %3941 = vmatprep.subr.bf16.mxu0 %v2197
    %3942 = vmatpush1.bf16.xpose.msra.mxu0 %v2196
    %3943 = vmatprep.subr.bf16.mxu0 %v2199
    %3944 = vmatpush1.bf16.xpose.msra.mxu0 %v2198
    %3945 = vmatprep.subr.bf16.mxu0 %v2201
    %3946 = vmatpush1.bf16.xpose.msra.mxu0 %v2200
    %3947 = vmatprep.subr.bf16.mxu0 %v2203
    %3948 = vmatpush1.bf16.xpose.msra.mxu0 %v2202
    %3949 = vmatprep.subr.bf16.mxu0 %v2205
    %3950 = vmatpush1.bf16.xpose.msra.mxu0 %v2204
    %3951 = vmatprep.subr.bf16.mxu0 %v2207
    %3952 = vmatpush1.bf16.xpose.msra.mxu0 %v2206
    %3953 = vmatprep.subr.bf16.mxu0 %v2209
    %3954 = vmatpush1.bf16.xpose.msra.mxu0 %v2208
    %3955 = vmatprep.subr.bf16.mxu0 %v2211
    %3956 = vmatpush1.bf16.xpose.msra.mxu0 %v2210
    %3957 = vmatprep.subr.bf16.mxu0 %v2213
    %3958 = vmatpush1.bf16.xpose.msra.mxu0 %v2212
    %3959 = vmatprep.subr.bf16.mxu0 %v2215
    %3960 = vmatpush1.bf16.xpose.msra.mxu0 %v2214
    %3961 = vmatprep.subr.bf16.mxu0 %v2217
    %3962 = vmatpush1.bf16.xpose.msra.mxu0 %v2216
    %3963 = vmatprep.subr.bf16.mxu0 %v2219
    %3964 = vmatpush1.bf16.xpose.msra.mxu0 %v2218
    %3965 = vmatprep.subr.bf16.mxu0 %v2221
    %3966 = vmatpush1.bf16.xpose.msra.mxu0 %v2220
    %3967 = vmatprep.mubr.bf16.mxu0 %v1381
    %3968 = vmatmul.mubr.bf16.gmra.mrb[0].mxu0 %v1380
    %v3969 = vpop.f32.mrb[0].mxu0
    %v3970 = vadd.f32 0.0, %v3969
    %v3971 = vpop.f32.mrb[0].mxu0
    %v3972 = vadd.f32 0.0, %v3971
    %v3973 = vpop.f32.mrb[0].mxu0
    %v3974 = vadd.f32 0.0, %v3973
    %v3975 = vpop.f32.mrb[0].mxu0
    %v3976 = vadd.f32 0.0, %v3975
    %3977 = vdwg.mxu0
    %3978 = vmatprep.subr.bf16.mxu0 %v2223
    %3979 = vmatpush1.bf16.xpose.msra.mxu0 %v2222
    %3980 = vmatprep.subr.bf16.mxu0 %v2225
    %3981 = vmatpush1.bf16.xpose.msra.mxu0 %v2224
    %3982 = vmatprep.subr.bf16.mxu0 %v2227
    %3983 = vmatpush1.bf16.xpose.msra.mxu0 %v2226
    %3984 = vmatprep.subr.bf16.mxu0 %v2229
    %3985 = vmatpush1.bf16.xpose.msra.mxu0 %v2228
    %3986 = vmatprep.subr.bf16.mxu0 %v2231
    %3987 = vmatpush1.bf16.xpose.msra.mxu0 %v2230
    %3988 = vmatprep.subr.bf16.mxu0 %v2233
    %3989 = vmatpush1.bf16.xpose.msra.mxu0 %v2232
    %3990 = vmatprep.subr.bf16.mxu0 %v2235
    %3991 = vmatpush1.bf16.xpose.msra.mxu0 %v2234
    %3992 = vmatprep.subr.bf16.mxu0 %v2237
    %3993 = vmatpush1.bf16.xpose.msra.mxu0 %v2236
    %3994 = vmatprep.subr.bf16.mxu0 %v2239
    %3995 = vmatpush1.bf16.xpose.msra.mxu0 %v2238
    %3996 = vmatprep.subr.bf16.mxu0 %v2241
    %3997 = vmatpush1.bf16.xpose.msra.mxu0 %v2240
    %3998 = vmatprep.subr.bf16.mxu0 %v2243
    %3999 = vmatpush1.bf16.xpose.msra.mxu0 %v2242
    %4000 = vmatprep.subr.bf16.mxu0 %v2245
    %4001 = vmatpush1.bf16.xpose.msra.mxu0 %v2244
    %4002 = vmatprep.subr.bf16.mxu0 %v2247
    %4003 = vmatpush1.bf16.xpose.msra.mxu0 %v2246
    %4004 = vmatprep.subr.bf16.mxu0 %v2249
    %4005 = vmatpush1.bf16.xpose.msra.mxu0 %v2248
    %4006 = vmatprep.subr.bf16.mxu0 %v2251
    %4007 = vmatpush1.bf16.xpose.msra.mxu0 %v2250
    %4008 = vmatprep.subr.bf16.mxu0 %v2253
    %4009 = vmatpush1.bf16.xpose.msra.mxu0 %v2252
    %4010 = vmatprep.mubr.bf16.mxu0 %v1383
    %4011 = vmatmul.mubr.bf16.gmra.mrb[0].mxu0 %v1382
    %v4012 = vpop.f32.mrb[0].mxu0
    %v4013 = vadd.f32 0.0, %v4012
    %v4014 = vpop.f32.mrb[0].mxu0
    %v4015 = vadd.f32 0.0, %v4014
    %v4016 = vpop.f32.mrb[0].mxu0
    %v4017 = vadd.f32 0.0, %v4016
    %v4018 = vpop.f32.mrb[0].mxu0
    %v4019 = vadd.f32 0.0, %v4018
    %4020 = vdwg.mxu0
    %4021 = vmatprep.subr.bf16.mxu0 %v2255
    %4022 = vmatpush1.bf16.xpose.msra.mxu0 %v2254
    %4023 = vmatprep.subr.bf16.mxu0 %v2257
    %4024 = vmatpush1.bf16.xpose.msra.mxu0 %v2256
    %4025 = vmatprep.subr.bf16.mxu0 %v2259
    %4026 = vmatpush1.bf16.xpose.msra.mxu0 %v2258
    %4027 = vmatprep.subr.bf16.mxu0 %v2261
    %4028 = vmatpush1.bf16.xpose.msra.mxu0 %v2260
    %4029 = vmatprep.subr.bf16.mxu0 %v2263
    %4030 = vmatpush1.bf16.xpose.msra.mxu0 %v2262
    %4031 = vmatprep.subr.bf16.mxu0 %v2265
    %4032 = vmatpush1.bf16.xpose.msra.mxu0 %v2264
    %4033 = vmatprep.subr.bf16.mxu0 %v2267
    %4034 = vmatpush1.bf16.xpose.msra.mxu0 %v2266
    %4035 = vmatprep.subr.bf16.mxu0 %v2269
    %4036 = vmatpush1.bf16.xpose.msra.mxu0 %v2268
    %4037 = vmatprep.subr.bf16.mxu0 %v2271
    %4038 = vmatpush1.bf16.xpose.msra.mxu0 %v2270
    %4039 = vmatprep.subr.bf16.mxu0 %v2273
    %4040 = vmatpush1.bf16.xpose.msra.mxu0 %v2272
    %4041 = vmatprep.subr.bf16.mxu0 %v2275
    %4042 = vmatpush1.bf16.xpose.msra.mxu0 %v2274
    %4043 = vmatprep.subr.bf16.mxu0 %v2277
    %4044 = vmatpush1.bf16.xpose.msra.mxu0 %v2276
    %4045 = vmatprep.subr.bf16.mxu0 %v2279
    %4046 = vmatpush1.bf16.xpose.msra.mxu0 %v2278
    %4047 = vmatprep.subr.bf16.mxu0 %v2281
    %4048 = vmatpush1.bf16.xpose.msra.mxu0 %v2280
    %4049 = vmatprep.subr.bf16.mxu0 %v2283
    %4050 = vmatpush1.bf16.xpose.msra.mxu0 %v2282
    %4051 = vmatprep.subr.bf16.mxu0 %v2285
    %4052 = vmatpush1.bf16.xpose.msra.mxu0 %v2284
    %4053 = vmatprep.mubr.bf16.mxu0 %v1385
    %4054 = vmatmul.mubr.bf16.gmra.mrb[0].mxu0 %v1384
    %v4055 = vpop.f32.mrb[0].mxu0
    %v4056 = vadd.f32 0.0, %v4055
    %v4057 = vpop.f32.mrb[0].mxu0
    %v4058 = vadd.f32 0.0, %v4057
    %v4059 = vpop.f32.mrb[0].mxu0
    %v4060 = vadd.f32 0.0, %v4059
    %v4061 = vpop.f32.mrb[0].mxu0
    %v4062 = vadd.f32 0.0, %v4061
    %4063 = vdwg.mxu0
    %4064 = vmatprep.subr.bf16.mxu0 %v2287
    %4065 = vmatpush1.bf16.xpose.msra.mxu0 %v2286
    %4066 = vmatprep.subr.bf16.mxu0 %v2289
    %4067 = vmatpush1.bf16.xpose.msra.mxu0 %v2288
    %4068 = vmatprep.subr.bf16.mxu0 %v2291
    %4069 = vmatpush1.bf16.xpose.msra.mxu0 %v2290
    %4070 = vmatprep.subr.bf16.mxu0 %v2293
    %4071 = vmatpush1.bf16.xpose.msra.mxu0 %v2292
    %4072 = vmatprep.subr.bf16.mxu0 %v2295
    %4073 = vmatpush1.bf16.xpose.msra.mxu0 %v2294
    %4074 = vmatprep.subr.bf16.mxu0 %v2297
    %4075 = vmatpush1.bf16.xpose.msra.mxu0 %v2296
    %4076 = vmatprep.subr.bf16.mxu0 %v2299
    %4077 = vmatpush1.bf16.xpose.msra.mxu0 %v2298
    %4078 = vmatprep.subr.bf16.mxu0 %v2301
    %4079 = vmatpush1.bf16.xpose.msra.mxu0 %v2300
    %4080 = vmatprep.subr.bf16.mxu0 %v2303
    %4081 = vmatpush1.bf16.xpose.msra.mxu0 %v2302
    %4082 = vmatprep.subr.bf16.mxu0 %v2305
    %4083 = vmatpush1.bf16.xpose.msra.mxu0 %v2304
    %4084 = vmatprep.subr.bf16.mxu0 %v2307
    %4085 = vmatpush1.bf16.xpose.msra.mxu0 %v2306
    %4086 = vmatprep.subr.bf16.mxu0 %v2309
    %4087 = vmatpush1.bf16.xpose.msra.mxu0 %v2308
    %4088 = vmatprep.subr.bf16.mxu0 %v2311
    %4089 = vmatpush1.bf16.xpose.msra.mxu0 %v2310
    %4090 = vmatprep.subr.bf16.mxu0 %v2313
    %4091 = vmatpush1.bf16.xpose.msra.mxu0 %v2312
    %4092 = vmatprep.subr.bf16.mxu0 %v2315
    %4093 = vmatpush1.bf16.xpose.msra.mxu0 %v2314
    %4094 = vmatprep.subr.bf16.mxu0 %v2317
    %4095 = vmatpush1.bf16.xpose.msra.mxu0 %v2316
    %4096 = vmatprep.mubr.bf16.mxu0 %v1387
    %4097 = vmatmul.mubr.bf16.gmra.mrb[0].mxu0 %v1386
    %v4098 = vpop.f32.mrb[0].mxu0
    %v4099 = vadd.f32 0.0, %v4098
    %v4100 = vpop.f32.mrb[0].mxu0
    %v4101 = vadd.f32 0.0, %v4100
    %v4102 = vpop.f32.mrb[0].mxu0
    %v4103 = vadd.f32 0.0, %v4102
    %v4104 = vpop.f32.mrb[0].mxu0
    %v4105 = vadd.f32 0.0, %v4104
    %4106 = vdwg.mxu0
    %4107 = vmatprep.subr.bf16.mxu0 %v2319
    %4108 = vmatpush1.bf16.xpose.msra.mxu0 %v2318
    %4109 = vmatprep.subr.bf16.mxu0 %v2321
    %4110 = vmatpush1.bf16.xpose.msra.mxu0 %v2320
    %4111 = vmatprep.subr.bf16.mxu0 %v2323
    %4112 = vmatpush1.bf16.xpose.msra.mxu0 %v2322
    %4113 = vmatprep.subr.bf16.mxu0 %v2325
    %4114 = vmatpush1.bf16.xpose.msra.mxu0 %v2324
    %4115 = vmatprep.subr.bf16.mxu0 %v2327
    %4116 = vmatpush1.bf16.xpose.msra.mxu0 %v2326
    %4117 = vmatprep.subr.bf16.mxu0 %v2329
    %4118 = vmatpush1.bf16.xpose.msra.mxu0 %v2328
    %4119 = vmatprep.subr.bf16.mxu0 %v2331
    %4120 = vmatpush1.bf16.xpose.msra.mxu0 %v2330
    %4121 = vmatprep.subr.bf16.mxu0 %v2333
    %4122 = vmatpush1.bf16.xpose.msra.mxu0 %v2332
    %4123 = vmatprep.subr.bf16.mxu0 %v2335
    %4124 = vmatpush1.bf16.xpose.msra.mxu0 %v2334
    %4125 = vmatprep.subr.bf16.mxu0 %v2337
    %4126 = vmatpush1.bf16.xpose.msra.mxu0 %v2336
    %4127 = vmatprep.subr.bf16.mxu0 %v2339
    %4128 = vmatpush1.bf16.xpose.msra.mxu0 %v2338
    %4129 = vmatprep.subr.bf16.mxu0 %v2341
    %4130 = vmatpush1.bf16.xpose.msra.mxu0 %v2340
    %4131 = vmatprep.subr.bf16.mxu0 %v2343
    %4132 = vmatpush1.bf16.xpose.msra.mxu0 %v2342
    %4133 = vmatprep.subr.bf16.mxu0 %v2345
    %4134 = vmatpush1.bf16.xpose.msra.mxu0 %v2344
    %4135 = vmatprep.subr.bf16.mxu0 %v2347
    %4136 = vmatpush1.bf16.xpose.msra.mxu0 %v2346
    %4137 = vmatprep.subr.bf16.mxu0 %v2349
    %4138 = vmatpush1.bf16.xpose.msra.mxu0 %v2348
    %4139 = vmatprep.mubr.bf16.mxu0 %v1389
    %4140 = vmatmul.mubr.bf16.gmra.mrb[0].mxu0 %v1388
    %v4141 = vpop.f32.mrb[0].mxu0
    %v4142 = vadd.f32 0.0, %v4141
    %v4143 = vpop.f32.mrb[0].mxu0
    %v4144 = vadd.f32 0.0, %v4143
    %v4145 = vpop.f32.mrb[0].mxu0
    %v4146 = vadd.f32 0.0, %v4145
    %v4147 = vpop.f32.mrb[0].mxu0
    %v4148 = vadd.f32 0.0, %v4147
    %4149 = vdwg.mxu0
    %v4150 = vmax.f32 %v3153, %v3155
    %4151 = vmax.xlane.f32.xlu0 %v4150
    %v4152 = vpop.xlane.xlu0 %4151
    %v4153 = vmax.f32 %v3157, %v3159
    %4154 = vmax.xlane.f32.xlu0 %v4153
    %v4155 = vpop.xlane.xlu0 %4154
    %v4156 = vmax.f32 %v3196, %v3198
    %4157 = vmax.xlane.f32.xlu0 %v4156
    %v4158 = vpop.xlane.xlu0 %4157
    %v4159 = vmax.f32 %v3200, %v3202
    %4160 = vmax.xlane.f32.xlu0 %v4159
    %v4161 = vpop.xlane.xlu0 %4160
    %v4162 = vmax.f32 %v3239, %v3241
    %4163 = vmax.xlane.f32.xlu0 %v4162
    %v4164 = vpop.xlane.xlu0 %4163
    %v4165 = vmax.f32 %v3243, %v3245
    %4166 = vmax.xlane.f32.xlu0 %v4165
    %v4167 = vpop.xlane.xlu0 %4166
    %v4168 = vmax.f32 %v3282, %v3284
    %4169 = vmax.xlane.f32.xlu0 %v4168
    %v4170 = vpop.xlane.xlu0 %4169
    %v4171 = vmax.f32 %v3286, %v3288
    %4172 = vmax.xlane.f32.xlu0 %v4171
    %v4173 = vpop.xlane.xlu0 %4172
    %v4174 = vmax.f32 %v3325, %v3327
    %4175 = vmax.xlane.f32.xlu0 %v4174
    %v4176 = vpop.xlane.xlu0 %4175
    %v4177 = vmax.f32 %v3329, %v3331
    %4178 = vmax.xlane.f32.xlu0 %v4177
    %v4179 = vpop.xlane.xlu0 %4178
    %v4180 = vmax.f32 %v3368, %v3370
    %4181 = vmax.xlane.f32.xlu0 %v4180
    %v4182 = vpop.xlane.xlu0 %4181
    %v4183 = vmax.f32 %v3372, %v3374
    %4184 = vmax.xlane.f32.xlu0 %v4183
    %v4185 = vpop.xlane.xlu0 %4184
    %v4186 = vmax.f32 %v3411, %v3413
    %4187 = vmax.xlane.f32.xlu0 %v4186
    %v4188 = vpop.xlane.xlu0 %4187
    %v4189 = vmax.f32 %v3415, %v3417
    %4190 = vmax.xlane.f32.xlu0 %v4189
    %v4191 = vpop.xlane.xlu0 %4190
    %v4192 = vmax.f32 %v3454, %v3456
    %4193 = vmax.xlane.f32.xlu0 %v4192
    %v4194 = vpop.xlane.xlu0 %4193
    %v4195 = vmax.f32 %v3458, %v3460
    %4196 = vmax.xlane.f32.xlu0 %v4195
    %v4197 = vpop.xlane.xlu0 %4196
    %v4198 = vmax.f32 %v3497, %v3499
    %4199 = vmax.xlane.f32.xlu0 %v4198
    %v4200 = vpop.xlane.xlu0 %4199
    %v4201 = vmax.f32 %v3501, %v3503
    %4202 = vmax.xlane.f32.xlu0 %v4201
    %v4203 = vpop.xlane.xlu0 %4202
    %v4204 = vmax.f32 %v3540, %v3542
    %4205 = vmax.xlane.f32.xlu0 %v4204
    %v4206 = vpop.xlane.xlu0 %4205
    %v4207 = vmax.f32 %v3544, %v3546
    %4208 = vmax.xlane.f32.xlu0 %v4207
    %v4209 = vpop.xlane.xlu0 %4208
    %v4210 = vmax.f32 %v3583, %v3585
    %4211 = vmax.xlane.f32.xlu0 %v4210
    %v4212 = vpop.xlane.xlu0 %4211
    %v4213 = vmax.f32 %v3587, %v3589
    %4214 = vmax.xlane.f32.xlu0 %v4213
    %v4215 = vpop.xlane.xlu0 %4214
    %v4216 = vmax.f32 %v3626, %v3628
    %4217 = vmax.xlane.f32.xlu0 %v4216
    %v4218 = vpop.xlane.xlu0 %4217
    %v4219 = vmax.f32 %v3630, %v3632
    %4220 = vmax.xlane.f32.xlu0 %v4219
    %v4221 = vpop.xlane.xlu0 %4220
    %v4222 = vmax.f32 %v3669, %v3671
    %4223 = vmax.xlane.f32.xlu0 %v4222
    %v4224 = vpop.xlane.xlu0 %4223
    %v4225 = vmax.f32 %v3673, %v3675
    %4226 = vmax.xlane.f32.xlu0 %v4225
    %v4227 = vpop.xlane.xlu0 %4226
    %v4228 = vmax.f32 %v3712, %v3714
    %4229 = vmax.xlane.f32.xlu0 %v4228
    %v4230 = vpop.xlane.xlu0 %4229
    %v4231 = vmax.f32 %v3716, %v3718
    %4232 = vmax.xlane.f32.xlu0 %v4231
    %v4233 = vpop.xlane.xlu0 %4232
    %v4234 = vmax.f32 %v3755, %v3757
    %4235 = vmax.xlane.f32.xlu0 %v4234
    %v4236 = vpop.xlane.xlu0 %4235
    %v4237 = vmax.f32 %v3759, %v3761
    %4238 = vmax.xlane.f32.xlu0 %v4237
    %v4239 = vpop.xlane.xlu0 %4238
    %v4240 = vmax.f32 %v3798, %v3800
    %4241 = vmax.xlane.f32.xlu0 %v4240
    %v4242 = vpop.xlane.xlu0 %4241
    %v4243 = vmax.f32 %v3802, %v3804
    %4244 = vmax.xlane.f32.xlu0 %v4243
    %v4245 = vpop.xlane.xlu0 %4244
    %v4246 = vmax.f32 %v3841, %v3843
    %4247 = vmax.xlane.f32.xlu0 %v4246
    %v4248 = vpop.xlane.xlu0 %4247
    %v4249 = vmax.f32 %v3845, %v3847
    %4250 = vmax.xlane.f32.xlu0 %v4249
    %v4251 = vpop.xlane.xlu0 %4250
    %v4252 = vmax.f32 %v3884, %v3886
    %4253 = vmax.xlane.f32.xlu0 %v4252
    %v4254 = vpop.xlane.xlu0 %4253
    %v4255 = vmax.f32 %v3888, %v3890
    %4256 = vmax.xlane.f32.xlu0 %v4255
    %v4257 = vpop.xlane.xlu0 %4256
    %v4258 = vmax.f32 %v3927, %v3929
    %4259 = vmax.xlane.f32.xlu0 %v4258
    %v4260 = vpop.xlane.xlu0 %4259
    %v4261 = vmax.f32 %v3931, %v3933
    %4262 = vmax.xlane.f32.xlu0 %v4261
    %v4263 = vpop.xlane.xlu0 %4262
    %v4264 = vmax.f32 %v3970, %v3972
    %4265 = vmax.xlane.f32.xlu0 %v4264
    %v4266 = vpop.xlane.xlu0 %4265
    %v4267 = vmax.f32 %v3974, %v3976
    %4268 = vmax.xlane.f32.xlu0 %v4267
    %v4269 = vpop.xlane.xlu0 %4268
    %v4270 = vmax.f32 %v4013, %v4015
    %4271 = vmax.xlane.f32.xlu0 %v4270
    %v4272 = vpop.xlane.xlu0 %4271
    %v4273 = vmax.f32 %v4017, %v4019
    %4274 = vmax.xlane.f32.xlu0 %v4273
    %v4275 = vpop.xlane.xlu0 %4274
    %v4276 = vmax.f32 %v4056, %v4058
    %4277 = vmax.xlane.f32.xlu0 %v4276
    %v4278 = vpop.xlane.xlu0 %4277
    %v4279 = vmax.f32 %v4060, %v4062
    %4280 = vmax.xlane.f32.xlu0 %v4279
    %v4281 = vpop.xlane.xlu0 %4280
    %v4282 = vmax.f32 %v4099, %v4101
    %4283 = vmax.xlane.f32.xlu0 %v4282
    %v4284 = vpop.xlane.xlu0 %4283
    %v4285 = vmax.f32 %v4103, %v4105
    %4286 = vmax.xlane.f32.xlu0 %v4285
    %v4287 = vpop.xlane.xlu0 %4286
    %v4288 = vmax.f32 %v4142, %v4144
    %4289 = vmax.xlane.f32.xlu0 %v4288
    %v4290 = vpop.xlane.xlu0 %4289
    %v4291 = vmax.f32 %v4146, %v4148
    %4292 = vmax.xlane.f32.xlu0 %v4291
    %v4293 = vpop.xlane.xlu0 %4292
    %v4294 = vsub.f32 %v3153, %v4152
    %v4295 = vsub.f32 %v3155, %v4152
    %v4296 = vsub.f32 %v3157, %v4155
    %v4297 = vsub.f32 %v3159, %v4155
    %v4298 = vsub.f32 %v3196, %v4158
    %v4299 = vsub.f32 %v3198, %v4158
    %v4300 = vsub.f32 %v3200, %v4161
    %v4301 = vsub.f32 %v3202, %v4161
    %v4302 = vsub.f32 %v3239, %v4164
    %v4303 = vsub.f32 %v3241, %v4164
    %v4304 = vsub.f32 %v3243, %v4167
    %v4305 = vsub.f32 %v3245, %v4167
    %v4306 = vsub.f32 %v3282, %v4170
    %v4307 = vsub.f32 %v3284, %v4170
    %v4308 = vsub.f32 %v3286, %v4173
    %v4309 = vsub.f32 %v3288, %v4173
    %v4310 = vsub.f32 %v3325, %v4176
    %v4311 = vsub.f32 %v3327, %v4176
    %v4312 = vsub.f32 %v3329, %v4179
    %v4313 = vsub.f32 %v3331, %v4179
    %v4314 = vsub.f32 %v3368, %v4182
    %v4315 = vsub.f32 %v3370, %v4182
    %v4316 = vsub.f32 %v3372, %v4185
    %v4317 = vsub.f32 %v3374, %v4185
    %v4318 = vsub.f32 %v3411, %v4188
    %v4319 = vsub.f32 %v3413, %v4188
    %v4320 = vsub.f32 %v3415, %v4191
    %v4321 = vsub.f32 %v3417, %v4191
    %v4322 = vsub.f32 %v3454, %v4194
    %v4323 = vsub.f32 %v3456, %v4194
    %v4324 = vsub.f32 %v3458, %v4197
    %v4325 = vsub.f32 %v3460, %v4197
    %v4326 = vsub.f32 %v3497, %v4200
    %v4327 = vsub.f32 %v3499, %v4200
    %v4328 = vsub.f32 %v3501, %v4203
    %v4329 = vsub.f32 %v3503, %v4203
    %v4330 = vsub.f32 %v3540, %v4206
    %v4331 = vsub.f32 %v3542, %v4206
    %v4332 = vsub.f32 %v3544, %v4209
    %v4333 = vsub.f32 %v3546, %v4209
    %v4334 = vsub.f32 %v3583, %v4212
    %v4335 = vsub.f32 %v3585, %v4212
    %v4336 = vsub.f32 %v3587, %v4215
    %v4337 = vsub.f32 %v3589, %v4215
    %v4338 = vsub.f32 %v3626, %v4218
    %v4339 = vsub.f32 %v3628, %v4218
    %v4340 = vsub.f32 %v3630, %v4221
    %v4341 = vsub.f32 %v3632, %v4221
    %v4342 = vsub.f32 %v3669, %v4224
    %v4343 = vsub.f32 %v3671, %v4224
    %v4344 = vsub.f32 %v3673, %v4227
    %v4345 = vsub.f32 %v3675, %v4227
    %v4346 = vsub.f32 %v3712, %v4230
    %v4347 = vsub.f32 %v3714, %v4230
    %v4348 = vsub.f32 %v3716, %v4233
    %v4349 = vsub.f32 %v3718, %v4233
    %v4350 = vsub.f32 %v3755, %v4236
    %v4351 = vsub.f32 %v3757, %v4236
    %v4352 = vsub.f32 %v3759, %v4239
    %v4353 = vsub.f32 %v3761, %v4239
    %v4354 = vsub.f32 %v3798, %v4242
    %v4355 = vsub.f32 %v3800, %v4242
    %v4356 = vsub.f32 %v3802, %v4245
    %v4357 = vsub.f32 %v3804, %v4245
    %v4358 = vsub.f32 %v3841, %v4248
    %v4359 = vsub.f32 %v3843, %v4248
    %v4360 = vsub.f32 %v3845, %v4251
    %v4361 = vsub.f32 %v3847, %v4251
    %v4362 = vsub.f32 %v3884, %v4254
    %v4363 = vsub.f32 %v3886, %v4254
    %v4364 = vsub.f32 %v3888, %v4257
    %v4365 = vsub.f32 %v3890, %v4257
    %v4366 = vsub.f32 %v3927, %v4260
    %v4367 = vsub.f32 %v3929, %v4260
    %v4368 = vsub.f32 %v3931, %v4263
    %v4369 = vsub.f32 %v3933, %v4263
    %v4370 = vsub.f32 %v3970, %v4266
    %v4371 = vsub.f32 %v3972, %v4266
    %v4372 = vsub.f32 %v3974, %v4269
    %v4373 = vsub.f32 %v3976, %v4269
    %v4374 = vsub.f32 %v4013, %v4272
    %v4375 = vsub.f32 %v4015, %v4272
    %v4376 = vsub.f32 %v4017, %v4275
    %v4377 = vsub.f32 %v4019, %v4275
    %v4378 = vsub.f32 %v4056, %v4278
    %v4379 = vsub.f32 %v4058, %v4278
    %v4380 = vsub.f32 %v4060, %v4281
    %v4381 = vsub.f32 %v4062, %v4281
    %v4382 = vsub.f32 %v4099, %v4284
    %v4383 = vsub.f32 %v4101, %v4284
    %v4384 = vsub.f32 %v4103, %v4287
    %v4385 = vsub.f32 %v4105, %v4287
    %v4386 = vsub.f32 %v4142, %v4290
    %v4387 = vsub.f32 %v4144, %v4290
    %v4388 = vsub.f32 %v4146, %v4293
    %v4389 = vsub.f32 %v4148, %v4293
    %v4390 = vmul.f32 %v4294, 1.442695
    %v4391 = vpow.pop %v4390
    %v4392 = vmul.f32 %v4295, 1.442695
    %v4393 = vpow.pop %v4392
    %v4394 = vmul.f32 %v4296, 1.442695
    %v4395 = vpow.pop %v4394
    %v4396 = vmul.f32 %v4297, 1.442695
    %v4397 = vpow.pop %v4396
    %v4398 = vmul.f32 %v4298, 1.442695
    %v4399 = vpow.pop %v4398
    %v4400 = vmul.f32 %v4299, 1.442695
    %v4401 = vpow.pop %v4400
    %v4402 = vmul.f32 %v4300, 1.442695
    %v4403 = vpow.pop %v4402
    %v4404 = vmul.f32 %v4301, 1.442695
    %v4405 = vpow.pop %v4404
    %v4406 = vmul.f32 %v4302, 1.442695
    %v4407 = vpow.pop %v4406
    %v4408 = vmul.f32 %v4303, 1.442695
    %v4409 = vpow.pop %v4408
    %v4410 = vmul.f32 %v4304, 1.442695
    %v4411 = vpow.pop %v4410
    %v4412 = vmul.f32 %v4305, 1.442695
    %v4413 = vpow.pop %v4412
    %v4414 = vmul.f32 %v4306, 1.442695
    %v4415 = vpow.pop %v4414
    %v4416 = vmul.f32 %v4307, 1.442695
    %v4417 = vpow.pop %v4416
    %v4418 = vmul.f32 %v4308, 1.442695
    %v4419 = vpow.pop %v4418
    %v4420 = vmul.f32 %v4309, 1.442695
    %v4421 = vpow.pop %v4420
    %v4422 = vmul.f32 %v4310, 1.442695
    %v4423 = vpow.pop %v4422
    %v4424 = vmul.f32 %v4311, 1.442695
    %v4425 = vpow.pop %v4424
    %v4426 = vmul.f32 %v4312, 1.442695
    %v4427 = vpow.pop %v4426
    %v4428 = vmul.f32 %v4313, 1.442695
    %v4429 = vpow.pop %v4428
    %v4430 = vmul.f32 %v4314, 1.442695
    %v4431 = vpow.pop %v4430
    %v4432 = vmul.f32 %v4315, 1.442695
    %v4433 = vpow.pop %v4432
    %v4434 = vmul.f32 %v4316, 1.442695
    %v4435 = vpow.pop %v4434
    %v4436 = vmul.f32 %v4317, 1.442695
    %v4437 = vpow.pop %v4436
    %v4438 = vmul.f32 %v4318, 1.442695
    %v4439 = vpow.pop %v4438
    %v4440 = vmul.f32 %v4319, 1.442695
    %v4441 = vpow.pop %v4440
    %v4442 = vmul.f32 %v4320, 1.442695
    %v4443 = vpow.pop %v4442
    %v4444 = vmul.f32 %v4321, 1.442695
    %v4445 = vpow.pop %v4444
    %v4446 = vmul.f32 %v4322, 1.442695
    %v4447 = vpow.pop %v4446
    %v4448 = vmul.f32 %v4323, 1.442695
    %v4449 = vpow.pop %v4448
    %v4450 = vmul.f32 %v4324, 1.442695
    %v4451 = vpow.pop %v4450
    %v4452 = vmul.f32 %v4325, 1.442695
    %v4453 = vpow.pop %v4452
    %v4454 = vmul.f32 %v4326, 1.442695
    %v4455 = vpow.pop %v4454
    %v4456 = vmul.f32 %v4327, 1.442695
    %v4457 = vpow.pop %v4456
    %v4458 = vmul.f32 %v4328, 1.442695
    %v4459 = vpow.pop %v4458
    %v4460 = vmul.f32 %v4329, 1.442695
    %v4461 = vpow.pop %v4460
    %v4462 = vmul.f32 %v4330, 1.442695
    %v4463 = vpow.pop %v4462
    %v4464 = vmul.f32 %v4331, 1.442695
    %v4465 = vpow.pop %v4464
    %v4466 = vmul.f32 %v4332, 1.442695
    %v4467 = vpow.pop %v4466
    %v4468 = vmul.f32 %v4333, 1.442695
    %v4469 = vpow.pop %v4468
    %v4470 = vmul.f32 %v4334, 1.442695
    %v4471 = vpow.pop %v4470
    %v4472 = vmul.f32 %v4335, 1.442695
    %v4473 = vpow.pop %v4472
    %v4474 = vmul.f32 %v4336, 1.442695
    %v4475 = vpow.pop %v4474
    %v4476 = vmul.f32 %v4337, 1.442695
    %v4477 = vpow.pop %v4476
    %v4478 = vmul.f32 %v4338, 1.442695
    %v4479 = vpow.pop %v4478
    %v4480 = vmul.f32 %v4339, 1.442695
    %v4481 = vpow.pop %v4480
    %v4482 = vmul.f32 %v4340, 1.442695
    %v4483 = vpow.pop %v4482
    %v4484 = vmul.f32 %v4341, 1.442695
    %v4485 = vpow.pop %v4484
    %v4486 = vmul.f32 %v4342, 1.442695
    %v4487 = vpow.pop %v4486
    %v4488 = vmul.f32 %v4343, 1.442695
    %v4489 = vpow.pop %v4488
    %v4490 = vmul.f32 %v4344, 1.442695
    %v4491 = vpow.pop %v4490
    %v4492 = vmul.f32 %v4345, 1.442695
    %v4493 = vpow.pop %v4492
    %v4494 = vmul.f32 %v4346, 1.442695
    %v4495 = vpow.pop %v4494
    %v4496 = vmul.f32 %v4347, 1.442695
    %v4497 = vpow.pop %v4496
    %v4498 = vmul.f32 %v4348, 1.442695
    %v4499 = vpow.pop %v4498
    %v4500 = vmul.f32 %v4349, 1.442695
    %v4501 = vpow.pop %v4500
    %v4502 = vmul.f32 %v4350, 1.442695
    %v4503 = vpow.pop %v4502
    %v4504 = vmul.f32 %v4351, 1.442695
    %v4505 = vpow.pop %v4504
    %v4506 = vmul.f32 %v4352, 1.442695
    %v4507 = vpow.pop %v4506
    %v4508 = vmul.f32 %v4353, 1.442695
    %v4509 = vpow.pop %v4508
    %v4510 = vmul.f32 %v4354, 1.442695
    %v4511 = vpow.pop %v4510
    %v4512 = vmul.f32 %v4355, 1.442695
    %v4513 = vpow.pop %v4512
    %v4514 = vmul.f32 %v4356, 1.442695
    %v4515 = vpow.pop %v4514
    %v4516 = vmul.f32 %v4357, 1.442695
    %v4517 = vpow.pop %v4516
    %v4518 = vmul.f32 %v4358, 1.442695
    %v4519 = vpow.pop %v4518
    %v4520 = vmul.f32 %v4359, 1.442695
    %v4521 = vpow.pop %v4520
    %v4522 = vmul.f32 %v4360, 1.442695
    %v4523 = vpow.pop %v4522
    %v4524 = vmul.f32 %v4361, 1.442695
    %v4525 = vpow.pop %v4524
    %v4526 = vmul.f32 %v4362, 1.442695
    %v4527 = vpow.pop %v4526
    %v4528 = vmul.f32 %v4363, 1.442695
    %v4529 = vpow.pop %v4528
    %v4530 = vmul.f32 %v4364, 1.442695
    %v4531 = vpow.pop %v4530
    %v4532 = vmul.f32 %v4365, 1.442695
    %v4533 = vpow.pop %v4532
    %v4534 = vmul.f32 %v4366, 1.442695
    %v4535 = vpow.pop %v4534
    %v4536 = vmul.f32 %v4367, 1.442695
    %v4537 = vpow.pop %v4536
    %v4538 = vmul.f32 %v4368, 1.442695
    %v4539 = vpow.pop %v4538
    %v4540 = vmul.f32 %v4369, 1.442695
    %v4541 = vpow.pop %v4540
    %v4542 = vmul.f32 %v4370, 1.442695
    %v4543 = vpow.pop %v4542
    %v4544 = vmul.f32 %v4371, 1.442695
    %v4545 = vpow.pop %v4544
    %v4546 = vmul.f32 %v4372, 1.442695
    %v4547 = vpow.pop %v4546
    %v4548 = vmul.f32 %v4373, 1.442695
    %v4549 = vpow.pop %v4548
    %v4550 = vmul.f32 %v4374, 1.442695
    %v4551 = vpow.pop %v4550
    %v4552 = vmul.f32 %v4375, 1.442695
    %v4553 = vpow.pop %v4552
    %v4554 = vmul.f32 %v4376, 1.442695
    %v4555 = vpow.pop %v4554
    %v4556 = vmul.f32 %v4377, 1.442695
    %v4557 = vpow.pop %v4556
    %v4558 = vmul.f32 %v4378, 1.442695
    %v4559 = vpow.pop %v4558
    %v4560 = vmul.f32 %v4379, 1.442695
    %v4561 = vpow.pop %v4560
    %v4562 = vmul.f32 %v4380, 1.442695
    %v4563 = vpow.pop %v4562
    %v4564 = vmul.f32 %v4381, 1.442695
    %v4565 = vpow.pop %v4564
    %v4566 = vmul.f32 %v4382, 1.442695
    %v4567 = vpow.pop %v4566
    %v4568 = vmul.f32 %v4383, 1.442695
    %v4569 = vpow.pop %v4568
    %v4570 = vmul.f32 %v4384, 1.442695
    %v4571 = vpow.pop %v4570
    %v4572 = vmul.f32 %v4385, 1.442695
    %v4573 = vpow.pop %v4572
    %v4574 = vmul.f32 %v4386, 1.442695
    %v4575 = vpow.pop %v4574
    %v4576 = vmul.f32 %v4387, 1.442695
    %v4577 = vpow.pop %v4576
    %v4578 = vmul.f32 %v4388, 1.442695
    %v4579 = vpow.pop %v4578
    %v4580 = vmul.f32 %v4389, 1.442695
    %v4581 = vpow.pop %v4580
    %v4582 = vpack.c.bf16 %v4395, %v4391
    %v4583 = vpack.c.bf16 %v4397, %v4393
    %v4584 = vpack.c.bf16 %v4403, %v4399
    %v4585 = vpack.c.bf16 %v4405, %v4401
    %v4586 = vpack.c.bf16 %v4411, %v4407
    %v4587 = vpack.c.bf16 %v4413, %v4409
    %v4588 = vpack.c.bf16 %v4419, %v4415
    %v4589 = vpack.c.bf16 %v4421, %v4417
    %v4590 = vpack.c.bf16 %v4427, %v4423
    %v4591 = vpack.c.bf16 %v4429, %v4425
    %v4592 = vpack.c.bf16 %v4435, %v4431
    %v4593 = vpack.c.bf16 %v4437, %v4433
    %v4594 = vpack.c.bf16 %v4443, %v4439
    %v4595 = vpack.c.bf16 %v4445, %v4441
    %v4596 = vpack.c.bf16 %v4451, %v4447
    %v4597 = vpack.c.bf16 %v4453, %v4449
    %v4598 = vpack.c.bf16 %v4459, %v4455
    %v4599 = vpack.c.bf16 %v4461, %v4457
    %v4600 = vpack.c.bf16 %v4467, %v4463
    %v4601 = vpack.c.bf16 %v4469, %v4465
    %v4602 = vpack.c.bf16 %v4475, %v4471
    %v4603 = vpack.c.bf16 %v4477, %v4473
    %v4604 = vpack.c.bf16 %v4483, %v4479
    %v4605 = vpack.c.bf16 %v4485, %v4481
    %v4606 = vpack.c.bf16 %v4491, %v4487
    %v4607 = vpack.c.bf16 %v4493, %v4489
    %v4608 = vpack.c.bf16 %v4499, %v4495
    %v4609 = vpack.c.bf16 %v4501, %v4497
    %v4610 = vpack.c.bf16 %v4507, %v4503
    %v4611 = vpack.c.bf16 %v4509, %v4505
    %v4612 = vpack.c.bf16 %v4515, %v4511
    %v4613 = vpack.c.bf16 %v4517, %v4513
    %v4614 = vpack.c.bf16 %v4523, %v4519
    %v4615 = vpack.c.bf16 %v4525, %v4521
    %v4616 = vpack.c.bf16 %v4531, %v4527
    %v4617 = vpack.c.bf16 %v4533, %v4529
    %v4618 = vpack.c.bf16 %v4539, %v4535
    %v4619 = vpack.c.bf16 %v4541, %v4537
    %v4620 = vpack.c.bf16 %v4547, %v4543
    %v4621 = vpack.c.bf16 %v4549, %v4545
    %v4622 = vpack.c.bf16 %v4555, %v4551
    %v4623 = vpack.c.bf16 %v4557, %v4553
    %v4624 = vpack.c.bf16 %v4563, %v4559
    %v4625 = vpack.c.bf16 %v4565, %v4561
    %v4626 = vpack.c.bf16 %v4571, %v4567
    %v4627 = vpack.c.bf16 %v4573, %v4569
    %v4628 = vpack.c.bf16 %v4579, %v4575
    %v4629 = vpack.c.bf16 %v4581, %v4577
    %4630 = vmatprep.subr.bf16.mxu0 %v2351
    %4631 = vmatpush1.bf16.msra.mxu0 %v2350
    %4632 = vmatprep.subr.bf16.mxu0 %v2353
    %4633 = vmatpush1.bf16.msra.mxu0 %v2352
    %4634 = vmatprep.subr.bf16.mxu0 %v2355
    %4635 = vmatpush1.bf16.msra.mxu0 %v2354
    %4636 = vmatprep.subr.bf16.mxu0 %v2357
    %4637 = vmatpush1.bf16.msra.mxu0 %v2356
    %4638 = vmatprep.subr.bf16.mxu0 %v2359
    %4639 = vmatpush1.bf16.msra.mxu0 %v2358
    %4640 = vmatprep.subr.bf16.mxu0 %v2361
    %4641 = vmatpush1.bf16.msra.mxu0 %v2360
    %4642 = vmatprep.subr.bf16.mxu0 %v2363
    %4643 = vmatpush1.bf16.msra.mxu0 %v2362
    %4644 = vmatprep.subr.bf16.mxu0 %v2365
    %4645 = vmatpush1.bf16.msra.mxu0 %v2364
    %4646 = vmatprep.subr.bf16.mxu0 %v2367
    %4647 = vmatpush1.bf16.msra.mxu0 %v2366
    %4648 = vmatprep.subr.bf16.mxu0 %v2369
    %4649 = vmatpush1.bf16.msra.mxu0 %v2368
    %4650 = vmatprep.subr.bf16.mxu0 %v2371
    %4651 = vmatpush1.bf16.msra.mxu0 %v2370
    %4652 = vmatprep.subr.bf16.mxu0 %v2373
    %4653 = vmatpush1.bf16.msra.mxu0 %v2372
    %4654 = vmatprep.subr.bf16.mxu0 %v2375
    %4655 = vmatpush1.bf16.msra.mxu0 %v2374
    %4656 = vmatprep.subr.bf16.mxu0 %v2377
    %4657 = vmatpush1.bf16.msra.mxu0 %v2376
    %4658 = vmatprep.subr.bf16.mxu0 %v2379
    %4659 = vmatpush1.bf16.msra.mxu0 %v2378
    %4660 = vmatprep.subr.bf16.mxu0 %v2381
    %4661 = vmatpush1.bf16.msra.mxu0 %v2380
    %4662 = vmatprep.mubr.bf16.mxu0 %v4583
    %4663 = vmatmul.mubr.bf16.gmra.mrb[0].mxu0 %v4582
    %v4664 = vpop.f32.mrb[0].mxu0
    %v4665 = vadd.f32 0.0, %v4664
    %v4666 = vpop.f32.mrb[0].mxu0
    %v4667 = vadd.f32 0.0, %v4666
    %v4668 = vpop.f32.mrb[0].mxu0
    %v4669 = vadd.f32 0.0, %v4668
    %v4670 = vpop.f32.mrb[0].mxu0
    %v4671 = vadd.f32 0.0, %v4670
    %4672 = vdwg.mxu0
    %4673 = vmatprep.subr.bf16.mxu0 %v2383
    %4674 = vmatpush1.bf16.msra.mxu0 %v2382
    %4675 = vmatprep.subr.bf16.mxu0 %v2385
    %4676 = vmatpush1.bf16.msra.mxu0 %v2384
    %4677 = vmatprep.subr.bf16.mxu0 %v2387
    %4678 = vmatpush1.bf16.msra.mxu0 %v2386
    %4679 = vmatprep.subr.bf16.mxu0 %v2389
    %4680 = vmatpush1.bf16.msra.mxu0 %v2388
    %4681 = vmatprep.subr.bf16.mxu0 %v2391
    %4682 = vmatpush1.bf16.msra.mxu0 %v2390
    %4683 = vmatprep.subr.bf16.mxu0 %v2393
    %4684 = vmatpush1.bf16.msra.mxu0 %v2392
    %4685 = vmatprep.subr.bf16.mxu0 %v2395
    %4686 = vmatpush1.bf16.msra.mxu0 %v2394
    %4687 = vmatprep.subr.bf16.mxu0 %v2397
    %4688 = vmatpush1.bf16.msra.mxu0 %v2396
    %4689 = vmatprep.subr.bf16.mxu0 %v2399
    %4690 = vmatpush1.bf16.msra.mxu0 %v2398
    %4691 = vmatprep.subr.bf16.mxu0 %v2401
    %4692 = vmatpush1.bf16.msra.mxu0 %v2400
    %4693 = vmatprep.subr.bf16.mxu0 %v2403
    %4694 = vmatpush1.bf16.msra.mxu0 %v2402
    %4695 = vmatprep.subr.bf16.mxu0 %v2405
    %4696 = vmatpush1.bf16.msra.mxu0 %v2404
    %4697 = vmatprep.subr.bf16.mxu0 %v2407
    %4698 = vmatpush1.bf16.msra.mxu0 %v2406
    %4699 = vmatprep.subr.bf16.mxu0 %v2409
    %4700 = vmatpush1.bf16.msra.mxu0 %v2408
    %4701 = vmatprep.subr.bf16.mxu0 %v2411
    %4702 = vmatpush1.bf16.msra.mxu0 %v2410
    %4703 = vmatprep.subr.bf16.mxu0 %v2413
    %4704 = vmatpush1.bf16.msra.mxu0 %v2412
    %4705 = vmatprep.mubr.bf16.mxu0 %v4585
    %4706 = vmatmul.mubr.bf16.gmra.mrb[0].mxu0 %v4584
    %v4707 = vpop.f32.mrb[0].mxu0
    %v4708 = vadd.f32 0.0, %v4707
    %v4709 = vpop.f32.mrb[0].mxu0
    %v4710 = vadd.f32 0.0, %v4709
    %v4711 = vpop.f32.mrb[0].mxu0
    %v4712 = vadd.f32 0.0, %v4711
    %v4713 = vpop.f32.mrb[0].mxu0
    %v4714 = vadd.f32 0.0, %v4713
    %4715 = vdwg.mxu0
    %4716 = vmatprep.subr.bf16.mxu0 %v2415
    %4717 = vmatpush1.bf16.msra.mxu0 %v2414
    %4718 = vmatprep.subr.bf16.mxu0 %v2417
    %4719 = vmatpush1.bf16.msra.mxu0 %v2416
    %4720 = vmatprep.subr.bf16.mxu0 %v2419
    %4721 = vmatpush1.bf16.msra.mxu0 %v2418
    %4722 = vmatprep.subr.bf16.mxu0 %v2421
    %4723 = vmatpush1.bf16.msra.mxu0 %v2420
    %4724 = vmatprep.subr.bf16.mxu0 %v2423
    %4725 = vmatpush1.bf16.msra.mxu0 %v2422
    %4726 = vmatprep.subr.bf16.mxu0 %v2425
    %4727 = vmatpush1.bf16.msra.mxu0 %v2424
    %4728 = vmatprep.subr.bf16.mxu0 %v2427
    %4729 = vmatpush1.bf16.msra.mxu0 %v2426
    %4730 = vmatprep.subr.bf16.mxu0 %v2429
    %4731 = vmatpush1.bf16.msra.mxu0 %v2428
    %4732 = vmatprep.subr.bf16.mxu0 %v2431
    %4733 = vmatpush1.bf16.msra.mxu0 %v2430
    %4734 = vmatprep.subr.bf16.mxu0 %v2433
    %4735 = vmatpush1.bf16.msra.mxu0 %v2432
    %4736 = vmatprep.subr.bf16.mxu0 %v2435
    %4737 = vmatpush1.bf16.msra.mxu0 %v2434
    %4738 = vmatprep.subr.bf16.mxu0 %v2437
    %4739 = vmatpush1.bf16.msra.mxu0 %v2436
    %4740 = vmatprep.subr.bf16.mxu0 %v2439
    %4741 = vmatpush1.bf16.msra.mxu0 %v2438
    %4742 = vmatprep.subr.bf16.mxu0 %v2441
    %4743 = vmatpush1.bf16.msra.mxu0 %v2440
    %4744 = vmatprep.subr.bf16.mxu0 %v2443
    %4745 = vmatpush1.bf16.msra.mxu0 %v2442
    %4746 = vmatprep.subr.bf16.mxu0 %v2445
    %4747 = vmatpush1.bf16.msra.mxu0 %v2444
    %4748 = vmatprep.mubr.bf16.mxu0 %v4587
    %4749 = vmatmul.mubr.bf16.gmra.mrb[0].mxu0 %v4586
    %v4750 = vpop.f32.mrb[0].mxu0
    %v4751 = vadd.f32 0.0, %v4750
    %v4752 = vpop.f32.mrb[0].mxu0
    %v4753 = vadd.f32 0.0, %v4752
    %v4754 = vpop.f32.mrb[0].mxu0
    %v4755 = vadd.f32 0.0, %v4754
    %v4756 = vpop.f32.mrb[0].mxu0
    %v4757 = vadd.f32 0.0, %v4756
    %4758 = vdwg.mxu0
    %4759 = vmatprep.subr.bf16.mxu0 %v2447
    %4760 = vmatpush1.bf16.msra.mxu0 %v2446
    %4761 = vmatprep.subr.bf16.mxu0 %v2449
    %4762 = vmatpush1.bf16.msra.mxu0 %v2448
    %4763 = vmatprep.subr.bf16.mxu0 %v2451
    %4764 = vmatpush1.bf16.msra.mxu0 %v2450
    %4765 = vmatprep.subr.bf16.mxu0 %v2453
    %4766 = vmatpush1.bf16.msra.mxu0 %v2452
    %4767 = vmatprep.subr.bf16.mxu0 %v2455
    %4768 = vmatpush1.bf16.msra.mxu0 %v2454
    %4769 = vmatprep.subr.bf16.mxu0 %v2457
    %4770 = vmatpush1.bf16.msra.mxu0 %v2456
    %4771 = vmatprep.subr.bf16.mxu0 %v2459
    %4772 = vmatpush1.bf16.msra.mxu0 %v2458
    %4773 = vmatprep.subr.bf16.mxu0 %v2461
    %4774 = vmatpush1.bf16.msra.mxu0 %v2460
    %4775 = vmatprep.subr.bf16.mxu0 %v2463
    %4776 = vmatpush1.bf16.msra.mxu0 %v2462
    %4777 = vmatprep.subr.bf16.mxu0 %v2465
    %4778 = vmatpush1.bf16.msra.mxu0 %v2464
    %4779 = vmatprep.subr.bf16.mxu0 %v2467
    %4780 = vmatpush1.bf16.msra.mxu0 %v2466
    %4781 = vmatprep.subr.bf16.mxu0 %v2469
    %4782 = vmatpush1.bf16.msra.mxu0 %v2468
    %4783 = vmatprep.subr.bf16.mxu0 %v2471
    %4784 = vmatpush1.bf16.msra.mxu0 %v2470
    %4785 = vmatprep.subr.bf16.mxu0 %v2473
    %4786 = vmatpush1.bf16.msra.mxu0 %v2472
    %4787 = vmatprep.subr.bf16.mxu0 %v2475
    %4788 = vmatpush1.bf16.msra.mxu0 %v2474
    %4789 = vmatprep.subr.bf16.mxu0 %v2477
    %4790 = vmatpush1.bf16.msra.mxu0 %v2476
    %4791 = vmatprep.mubr.bf16.mxu0 %v4589
    %4792 = vmatmul.mubr.bf16.gmra.mrb[0].mxu0 %v4588
    %v4793 = vpop.f32.mrb[0].mxu0
    %v4794 = vadd.f32 0.0, %v4793
    %v4795 = vpop.f32.mrb[0].mxu0
    %v4796 = vadd.f32 0.0, %v4795
    %v4797 = vpop.f32.mrb[0].mxu0
    %v4798 = vadd.f32 0.0, %v4797
    %v4799 = vpop.f32.mrb[0].mxu0
    %v4800 = vadd.f32 0.0, %v4799
    %4801 = vdwg.mxu0
    %4802 = vmatprep.subr.bf16.mxu0 %v2479
    %4803 = vmatpush1.bf16.msra.mxu0 %v2478
    %4804 = vmatprep.subr.bf16.mxu0 %v2481
    %4805 = vmatpush1.bf16.msra.mxu0 %v2480
    %4806 = vmatprep.subr.bf16.mxu0 %v2483
    %4807 = vmatpush1.bf16.msra.mxu0 %v2482
    %4808 = vmatprep.subr.bf16.mxu0 %v2485
    %4809 = vmatpush1.bf16.msra.mxu0 %v2484
    %4810 = vmatprep.subr.bf16.mxu0 %v2487
    %4811 = vmatpush1.bf16.msra.mxu0 %v2486
    %4812 = vmatprep.subr.bf16.mxu0 %v2489
    %4813 = vmatpush1.bf16.msra.mxu0 %v2488
    %4814 = vmatprep.subr.bf16.mxu0 %v2491
    %4815 = vmatpush1.bf16.msra.mxu0 %v2490
    %4816 = vmatprep.subr.bf16.mxu0 %v2493
    %4817 = vmatpush1.bf16.msra.mxu0 %v2492
    %4818 = vmatprep.subr.bf16.mxu0 %v2495
    %4819 = vmatpush1.bf16.msra.mxu0 %v2494
    %4820 = vmatprep.subr.bf16.mxu0 %v2497
    %4821 = vmatpush1.bf16.msra.mxu0 %v2496
    %4822 = vmatprep.subr.bf16.mxu0 %v2499
    %4823 = vmatpush1.bf16.msra.mxu0 %v2498
    %4824 = vmatprep.subr.bf16.mxu0 %v2501
    %4825 = vmatpush1.bf16.msra.mxu0 %v2500
    %4826 = vmatprep.subr.bf16.mxu0 %v2503
    %4827 = vmatpush1.bf16.msra.mxu0 %v2502
    %4828 = vmatprep.subr.bf16.mxu0 %v2505
    %4829 = vmatpush1.bf16.msra.mxu0 %v2504
    %4830 = vmatprep.subr.bf16.mxu0 %v2507
    %4831 = vmatpush1.bf16.msra.mxu0 %v2506
    %4832 = vmatprep.subr.bf16.mxu0 %v2509
    %4833 = vmatpush1.bf16.msra.mxu0 %v2508
    %4834 = vmatprep.mubr.bf16.mxu0 %v4591
    %4835 = vmatmul.mubr.bf16.gmra.mrb[0].mxu0 %v4590
    %v4836 = vpop.f32.mrb[0].mxu0
    %v4837 = vadd.f32 0.0, %v4836
    %v4838 = vpop.f32.mrb[0].mxu0
    %v4839 = vadd.f32 0.0, %v4838
    %v4840 = vpop.f32.mrb[0].mxu0
    %v4841 = vadd.f32 0.0, %v4840
    %v4842 = vpop.f32.mrb[0].mxu0
    %v4843 = vadd.f32 0.0, %v4842
    %4844 = vdwg.mxu0
    %4845 = vmatprep.subr.bf16.mxu0 %v2511
    %4846 = vmatpush1.bf16.msra.mxu0 %v2510
    %4847 = vmatprep.subr.bf16.mxu0 %v2513
    %4848 = vmatpush1.bf16.msra.mxu0 %v2512
    %4849 = vmatprep.subr.bf16.mxu0 %v2515
    %4850 = vmatpush1.bf16.msra.mxu0 %v2514
    %4851 = vmatprep.subr.bf16.mxu0 %v2517
    %4852 = vmatpush1.bf16.msra.mxu0 %v2516
    %4853 = vmatprep.subr.bf16.mxu0 %v2519
    %4854 = vmatpush1.bf16.msra.mxu0 %v2518
    %4855 = vmatprep.subr.bf16.mxu0 %v2521
    %4856 = vmatpush1.bf16.msra.mxu0 %v2520
    %4857 = vmatprep.subr.bf16.mxu0 %v2523
    %4858 = vmatpush1.bf16.msra.mxu0 %v2522
    %4859 = vmatprep.subr.bf16.mxu0 %v2525
    %4860 = vmatpush1.bf16.msra.mxu0 %v2524
    %4861 = vmatprep.subr.bf16.mxu0 %v2527
    %4862 = vmatpush1.bf16.msra.mxu0 %v2526
    %4863 = vmatprep.subr.bf16.mxu0 %v2529
    %4864 = vmatpush1.bf16.msra.mxu0 %v2528
    %4865 = vmatprep.subr.bf16.mxu0 %v2531
    %4866 = vmatpush1.bf16.msra.mxu0 %v2530
    %4867 = vmatprep.subr.bf16.mxu0 %v2533
    %4868 = vmatpush1.bf16.msra.mxu0 %v2532
    %4869 = vmatprep.subr.bf16.mxu0 %v2535
    %4870 = vmatpush1.bf16.msra.mxu0 %v2534
    %4871 = vmatprep.subr.bf16.mxu0 %v2537
    %4872 = vmatpush1.bf16.msra.mxu0 %v2536
    %4873 = vmatprep.subr.bf16.mxu0 %v2539
    %4874 = vmatpush1.bf16.msra.mxu0 %v2538
    %4875 = vmatprep.subr.bf16.mxu0 %v2541
    %4876 = vmatpush1.bf16.msra.mxu0 %v2540
    %4877 = vmatprep.mubr.bf16.mxu0 %v4593
    %4878 = vmatmul.mubr.bf16.gmra.mrb[0].mxu0 %v4592
    %v4879 = vpop.f32.mrb[0].mxu0
    %v4880 = vadd.f32 0.0, %v4879
    %v4881 = vpop.f32.mrb[0].mxu0
    %v4882 = vadd.f32 0.0, %v4881
    %v4883 = vpop.f32.mrb[0].mxu0
    %v4884 = vadd.f32 0.0, %v4883
    %v4885 = vpop.f32.mrb[0].mxu0
    %v4886 = vadd.f32 0.0, %v4885
    %4887 = vdwg.mxu0
    %4888 = vmatprep.subr.bf16.mxu0 %v2543
    %4889 = vmatpush1.bf16.msra.mxu0 %v2542
    %4890 = vmatprep.subr.bf16.mxu0 %v2545
    %4891 = vmatpush1.bf16.msra.mxu0 %v2544
    %4892 = vmatprep.subr.bf16.mxu0 %v2547
    %4893 = vmatpush1.bf16.msra.mxu0 %v2546
    %4894 = vmatprep.subr.bf16.mxu0 %v2549
    %4895 = vmatpush1.bf16.msra.mxu0 %v2548
    %4896 = vmatprep.subr.bf16.mxu0 %v2551
    %4897 = vmatpush1.bf16.msra.mxu0 %v2550
    %4898 = vmatprep.subr.bf16.mxu0 %v2553
    %4899 = vmatpush1.bf16.msra.mxu0 %v2552
    %4900 = vmatprep.subr.bf16.mxu0 %v2555
    %4901 = vmatpush1.bf16.msra.mxu0 %v2554
    %4902 = vmatprep.subr.bf16.mxu0 %v2557
    %4903 = vmatpush1.bf16.msra.mxu0 %v2556
    %4904 = vmatprep.subr.bf16.mxu0 %v2559
    %4905 = vmatpush1.bf16.msra.mxu0 %v2558
    %4906 = vmatprep.subr.bf16.mxu0 %v2561
    %4907 = vmatpush1.bf16.msra.mxu0 %v2560
    %4908 = vmatprep.subr.bf16.mxu0 %v2563
    %4909 = vmatpush1.bf16.msra.mxu0 %v2562
    %4910 = vmatprep.subr.bf16.mxu0 %v2565
    %4911 = vmatpush1.bf16.msra.mxu0 %v2564
    %4912 = vmatprep.subr.bf16.mxu0 %v2567
    %4913 = vmatpush1.bf16.msra.mxu0 %v2566
    %4914 = vmatprep.subr.bf16.mxu0 %v2569
    %4915 = vmatpush1.bf16.msra.mxu0 %v2568
    %4916 = vmatprep.subr.bf16.mxu0 %v2571
    %4917 = vmatpush1.bf16.msra.mxu0 %v2570
    %4918 = vmatprep.subr.bf16.mxu0 %v2573
    %4919 = vmatpush1.bf16.msra.mxu0 %v2572
    %4920 = vmatprep.mubr.bf16.mxu0 %v4595
    %4921 = vmatmul.mubr.bf16.gmra.mrb[0].mxu0 %v4594
    %v4922 = vpop.f32.mrb[0].mxu0
    %v4923 = vadd.f32 0.0, %v4922
    %v4924 = vpop.f32.mrb[0].mxu0
    %v4925 = vadd.f32 0.0, %v4924
    %v4926 = vpop.f32.mrb[0].mxu0
    %v4927 = vadd.f32 0.0, %v4926
    %v4928 = vpop.f32.mrb[0].mxu0
    %v4929 = vadd.f32 0.0, %v4928
    %4930 = vdwg.mxu0
    %4931 = vmatprep.subr.bf16.mxu0 %v2575
    %4932 = vmatpush1.bf16.msra.mxu0 %v2574
    %4933 = vmatprep.subr.bf16.mxu0 %v2577
    %4934 = vmatpush1.bf16.msra.mxu0 %v2576
    %4935 = vmatprep.subr.bf16.mxu0 %v2579
    %4936 = vmatpush1.bf16.msra.mxu0 %v2578
    %4937 = vmatprep.subr.bf16.mxu0 %v2581
    %4938 = vmatpush1.bf16.msra.mxu0 %v2580
    %4939 = vmatprep.subr.bf16.mxu0 %v2583
    %4940 = vmatpush1.bf16.msra.mxu0 %v2582
    %4941 = vmatprep.subr.bf16.mxu0 %v2585
    %4942 = vmatpush1.bf16.msra.mxu0 %v2584
    %4943 = vmatprep.subr.bf16.mxu0 %v2587
    %4944 = vmatpush1.bf16.msra.mxu0 %v2586
    %4945 = vmatprep.subr.bf16.mxu0 %v2589
    %4946 = vmatpush1.bf16.msra.mxu0 %v2588
    %4947 = vmatprep.subr.bf16.mxu0 %v2591
    %4948 = vmatpush1.bf16.msra.mxu0 %v2590
    %4949 = vmatprep.subr.bf16.mxu0 %v2593
    %4950 = vmatpush1.bf16.msra.mxu0 %v2592
    %4951 = vmatprep.subr.bf16.mxu0 %v2595
    %4952 = vmatpush1.bf16.msra.mxu0 %v2594
    %4953 = vmatprep.subr.bf16.mxu0 %v2597
    %4954 = vmatpush1.bf16.msra.mxu0 %v2596
    %4955 = vmatprep.subr.bf16.mxu0 %v2599
    %4956 = vmatpush1.bf16.msra.mxu0 %v2598
    %4957 = vmatprep.subr.bf16.mxu0 %v2601
    %4958 = vmatpush1.bf16.msra.mxu0 %v2600
    %4959 = vmatprep.subr.bf16.mxu0 %v2603
    %4960 = vmatpush1.bf16.msra.mxu0 %v2602
    %4961 = vmatprep.subr.bf16.mxu0 %v2605
    %4962 = vmatpush1.bf16.msra.mxu0 %v2604
    %4963 = vmatprep.mubr.bf16.mxu0 %v4597
    %4964 = vmatmul.mubr.bf16.gmra.mrb[0].mxu0 %v4596
    %v4965 = vpop.f32.mrb[0].mxu0
    %v4966 = vadd.f32 0.0, %v4965
    %v4967 = vpop.f32.mrb[0].mxu0
    %v4968 = vadd.f32 0.0, %v4967
    %v4969 = vpop.f32.mrb[0].mxu0
    %v4970 = vadd.f32 0.0, %v4969
    %v4971 = vpop.f32.mrb[0].mxu0
    %v4972 = vadd.f32 0.0, %v4971
    %4973 = vdwg.mxu0
    %4974 = vmatprep.subr.bf16.mxu0 %v2607
    %4975 = vmatpush1.bf16.msra.mxu0 %v2606
    %4976 = vmatprep.subr.bf16.mxu0 %v2609
    %4977 = vmatpush1.bf16.msra.mxu0 %v2608
    %4978 = vmatprep.subr.bf16.mxu0 %v2611
    %4979 = vmatpush1.bf16.msra.mxu0 %v2610
    %4980 = vmatprep.subr.bf16.mxu0 %v2613
    %4981 = vmatpush1.bf16.msra.mxu0 %v2612
    %4982 = vmatprep.subr.bf16.mxu0 %v2615
    %4983 = vmatpush1.bf16.msra.mxu0 %v2614
    %4984 = vmatprep.subr.bf16.mxu0 %v2617
    %4985 = vmatpush1.bf16.msra.mxu0 %v2616
    %4986 = vmatprep.subr.bf16.mxu0 %v2619
    %4987 = vmatpush1.bf16.msra.mxu0 %v2618
    %4988 = vmatprep.subr.bf16.mxu0 %v2621
    %4989 = vmatpush1.bf16.msra.mxu0 %v2620
    %4990 = vmatprep.subr.bf16.mxu0 %v2623
    %4991 = vmatpush1.bf16.msra.mxu0 %v2622
    %4992 = vmatprep.subr.bf16.mxu0 %v2625
    %4993 = vmatpush1.bf16.msra.mxu0 %v2624
    %4994 = vmatprep.subr.bf16.mxu0 %v2627
    %4995 = vmatpush1.bf16.msra.mxu0 %v2626
    %4996 = vmatprep.subr.bf16.mxu0 %v2629
    %4997 = vmatpush1.bf16.msra.mxu0 %v2628
    %4998 = vmatprep.subr.bf16.mxu0 %v2631
    %4999 = vmatpush1.bf16.msra.mxu0 %v2630
    %5000 = vmatprep.subr.bf16.mxu0 %v2633
    %5001 = vmatpush1.bf16.msra.mxu0 %v2632
    %5002 = vmatprep.subr.bf16.mxu0 %v2635
    %5003 = vmatpush1.bf16.msra.mxu0 %v2634
    %5004 = vmatprep.subr.bf16.mxu0 %v2637
    %5005 = vmatpush1.bf16.msra.mxu0 %v2636
    %5006 = vmatprep.mubr.bf16.mxu0 %v4599
    %5007 = vmatmul.mubr.bf16.gmra.mrb[0].mxu0 %v4598
    %v5008 = vpop.f32.mrb[0].mxu0
    %v5009 = vadd.f32 0.0, %v5008
    %v5010 = vpop.f32.mrb[0].mxu0
    %v5011 = vadd.f32 0.0, %v5010
    %v5012 = vpop.f32.mrb[0].mxu0
    %v5013 = vadd.f32 0.0, %v5012
    %v5014 = vpop.f32.mrb[0].mxu0
    %v5015 = vadd.f32 0.0, %v5014
    %5016 = vdwg.mxu0
    %5017 = vmatprep.subr.bf16.mxu0 %v2639
    %5018 = vmatpush1.bf16.msra.mxu0 %v2638
    %5019 = vmatprep.subr.bf16.mxu0 %v2641
    %5020 = vmatpush1.bf16.msra.mxu0 %v2640
    %5021 = vmatprep.subr.bf16.mxu0 %v2643
    %5022 = vmatpush1.bf16.msra.mxu0 %v2642
    %5023 = vmatprep.subr.bf16.mxu0 %v2645
    %5024 = vmatpush1.bf16.msra.mxu0 %v2644
    %5025 = vmatprep.subr.bf16.mxu0 %v2647
    %5026 = vmatpush1.bf16.msra.mxu0 %v2646
    %5027 = vmatprep.subr.bf16.mxu0 %v2649
    %5028 = vmatpush1.bf16.msra.mxu0 %v2648
    %5029 = vmatprep.subr.bf16.mxu0 %v2651
    %5030 = vmatpush1.bf16.msra.mxu0 %v2650
    %5031 = vmatprep.subr.bf16.mxu0 %v2653
    %5032 = vmatpush1.bf16.msra.mxu0 %v2652
    %5033 = vmatprep.subr.bf16.mxu0 %v2655
    %5034 = vmatpush1.bf16.msra.mxu0 %v2654
    %5035 = vmatprep.subr.bf16.mxu0 %v2657
    %5036 = vmatpush1.bf16.msra.mxu0 %v2656
    %5037 = vmatprep.subr.bf16.mxu0 %v2659
    %5038 = vmatpush1.bf16.msra.mxu0 %v2658
    %5039 = vmatprep.subr.bf16.mxu0 %v2661
    %5040 = vmatpush1.bf16.msra.mxu0 %v2660
    %5041 = vmatprep.subr.bf16.mxu0 %v2663
    %5042 = vmatpush1.bf16.msra.mxu0 %v2662
    %5043 = vmatprep.subr.bf16.mxu0 %v2665
    %5044 = vmatpush1.bf16.msra.mxu0 %v2664
    %5045 = vmatprep.subr.bf16.mxu0 %v2667
    %5046 = vmatpush1.bf16.msra.mxu0 %v2666
    %5047 = vmatprep.subr.bf16.mxu0 %v2669
    %5048 = vmatpush1.bf16.msra.mxu0 %v2668
    %5049 = vmatprep.mubr.bf16.mxu0 %v4601
    %5050 = vmatmul.mubr.bf16.gmra.mrb[0].mxu0 %v4600
    %v5051 = vpop.f32.mrb[0].mxu0
    %v5052 = vadd.f32 0.0, %v5051
    %v5053 = vpop.f32.mrb[0].mxu0
    %v5054 = vadd.f32 0.0, %v5053
    %v5055 = vpop.f32.mrb[0].mxu0
    %v5056 = vadd.f32 0.0, %v5055
    %v5057 = vpop.f32.mrb[0].mxu0
    %v5058 = vadd.f32 0.0, %v5057
    %5059 = vdwg.mxu0
    %5060 = vmatprep.subr.bf16.mxu0 %v2671
    %5061 = vmatpush1.bf16.msra.mxu0 %v2670
    %5062 = vmatprep.subr.bf16.mxu0 %v2673
    %5063 = vmatpush1.bf16.msra.mxu0 %v2672
    %5064 = vmatprep.subr.bf16.mxu0 %v2675
    %5065 = vmatpush1.bf16.msra.mxu0 %v2674
    %5066 = vmatprep.subr.bf16.mxu0 %v2677
    %5067 = vmatpush1.bf16.msra.mxu0 %v2676
    %5068 = vmatprep.subr.bf16.mxu0 %v2679
    %5069 = vmatpush1.bf16.msra.mxu0 %v2678
    %5070 = vmatprep.subr.bf16.mxu0 %v2681
    %5071 = vmatpush1.bf16.msra.mxu0 %v2680
    %5072 = vmatprep.subr.bf16.mxu0 %v2683
    %5073 = vmatpush1.bf16.msra.mxu0 %v2682
    %5074 = vmatprep.subr.bf16.mxu0 %v2685
    %5075 = vmatpush1.bf16.msra.mxu0 %v2684
    %5076 = vmatprep.subr.bf16.mxu0 %v2687
    %5077 = vmatpush1.bf16.msra.mxu0 %v2686
    %5078 = vmatprep.subr.bf16.mxu0 %v2689
    %5079 = vmatpush1.bf16.msra.mxu0 %v2688
    %5080 = vmatprep.subr.bf16.mxu0 %v2691
    %5081 = vmatpush1.bf16.msra.mxu0 %v2690
    %5082 = vmatprep.subr.bf16.mxu0 %v2693
    %5083 = vmatpush1.bf16.msra.mxu0 %v2692
    %5084 = vmatprep.subr.bf16.mxu0 %v2695
    %5085 = vmatpush1.bf16.msra.mxu0 %v2694
    %5086 = vmatprep.subr.bf16.mxu0 %v2697
    %5087 = vmatpush1.bf16.msra.mxu0 %v2696
    %5088 = vmatprep.subr.bf16.mxu0 %v2699
    %5089 = vmatpush1.bf16.msra.mxu0 %v2698
    %5090 = vmatprep.subr.bf16.mxu0 %v2701
    %5091 = vmatpush1.bf16.msra.mxu0 %v2700
    %5092 = vmatprep.mubr.bf16.mxu0 %v4603
    %5093 = vmatmul.mubr.bf16.gmra.mrb[0].mxu0 %v4602
    %v5094 = vpop.f32.mrb[0].mxu0
    %v5095 = vadd.f32 0.0, %v5094
    %v5096 = vpop.f32.mrb[0].mxu0
    %v5097 = vadd.f32 0.0, %v5096
    %v5098 = vpop.f32.mrb[0].mxu0
    %v5099 = vadd.f32 0.0, %v5098
    %v5100 = vpop.f32.mrb[0].mxu0
    %v5101 = vadd.f32 0.0, %v5100
    %5102 = vdwg.mxu0
    %5103 = vmatprep.subr.bf16.mxu0 %v2703
    %5104 = vmatpush1.bf16.msra.mxu0 %v2702
    %5105 = vmatprep.subr.bf16.mxu0 %v2705
    %5106 = vmatpush1.bf16.msra.mxu0 %v2704
    %5107 = vmatprep.subr.bf16.mxu0 %v2707
    %5108 = vmatpush1.bf16.msra.mxu0 %v2706
    %5109 = vmatprep.subr.bf16.mxu0 %v2709
    %5110 = vmatpush1.bf16.msra.mxu0 %v2708
    %5111 = vmatprep.subr.bf16.mxu0 %v2711
    %5112 = vmatpush1.bf16.msra.mxu0 %v2710
    %5113 = vmatprep.subr.bf16.mxu0 %v2713
    %5114 = vmatpush1.bf16.msra.mxu0 %v2712
    %5115 = vmatprep.subr.bf16.mxu0 %v2715
    %5116 = vmatpush1.bf16.msra.mxu0 %v2714
    %5117 = vmatprep.subr.bf16.mxu0 %v2717
    %5118 = vmatpush1.bf16.msra.mxu0 %v2716
    %5119 = vmatprep.subr.bf16.mxu0 %v2719
    %5120 = vmatpush1.bf16.msra.mxu0 %v2718
    %5121 = vmatprep.subr.bf16.mxu0 %v2721
    %5122 = vmatpush1.bf16.msra.mxu0 %v2720
    %5123 = vmatprep.subr.bf16.mxu0 %v2723
    %5124 = vmatpush1.bf16.msra.mxu0 %v2722
    %5125 = vmatprep.subr.bf16.mxu0 %v2725
    %5126 = vmatpush1.bf16.msra.mxu0 %v2724
    %5127 = vmatprep.subr.bf16.mxu0 %v2727
    %5128 = vmatpush1.bf16.msra.mxu0 %v2726
    %5129 = vmatprep.subr.bf16.mxu0 %v2729
    %5130 = vmatpush1.bf16.msra.mxu0 %v2728
    %5131 = vmatprep.subr.bf16.mxu0 %v2731
    %5132 = vmatpush1.bf16.msra.mxu0 %v2730
    %5133 = vmatprep.subr.bf16.mxu0 %v2733
    %5134 = vmatpush1.bf16.msra.mxu0 %v2732
    %5135 = vmatprep.mubr.bf16.mxu0 %v4605
    %5136 = vmatmul.mubr.bf16.gmra.mrb[0].mxu0 %v4604
    %v5137 = vpop.f32.mrb[0].mxu0
    %v5138 = vadd.f32 0.0, %v5137
    %v5139 = vpop.f32.mrb[0].mxu0
    %v5140 = vadd.f32 0.0, %v5139
    %v5141 = vpop.f32.mrb[0].mxu0
    %v5142 = vadd.f32 0.0, %v5141
    %v5143 = vpop.f32.mrb[0].mxu0
    %v5144 = vadd.f32 0.0, %v5143
    %5145 = vdwg.mxu0
    %5146 = vmatprep.subr.bf16.mxu0 %v2735
    %5147 = vmatpush1.bf16.msra.mxu0 %v2734
    %5148 = vmatprep.subr.bf16.mxu0 %v2737
    %5149 = vmatpush1.bf16.msra.mxu0 %v2736
    %5150 = vmatprep.subr.bf16.mxu0 %v2739
    %5151 = vmatpush1.bf16.msra.mxu0 %v2738
    %5152 = vmatprep.subr.bf16.mxu0 %v2741
    %5153 = vmatpush1.bf16.msra.mxu0 %v2740
    %5154 = vmatprep.subr.bf16.mxu0 %v2743
    %5155 = vmatpush1.bf16.msra.mxu0 %v2742
    %5156 = vmatprep.subr.bf16.mxu0 %v2745
    %5157 = vmatpush1.bf16.msra.mxu0 %v2744
    %5158 = vmatprep.subr.bf16.mxu0 %v2747
    %5159 = vmatpush1.bf16.msra.mxu0 %v2746
    %5160 = vmatprep.subr.bf16.mxu0 %v2749
    %5161 = vmatpush1.bf16.msra.mxu0 %v2748
    %5162 = vmatprep.subr.bf16.mxu0 %v2751
    %5163 = vmatpush1.bf16.msra.mxu0 %v2750
    %5164 = vmatprep.subr.bf16.mxu0 %v2753
    %5165 = vmatpush1.bf16.msra.mxu0 %v2752
    %5166 = vmatprep.subr.bf16.mxu0 %v2755
    %5167 = vmatpush1.bf16.msra.mxu0 %v2754
    %5168 = vmatprep.subr.bf16.mxu0 %v2757
    %5169 = vmatpush1.bf16.msra.mxu0 %v2756
    %5170 = vmatprep.subr.bf16.mxu0 %v2759
    %5171 = vmatpush1.bf16.msra.mxu0 %v2758
    %5172 = vmatprep.subr.bf16.mxu0 %v2761
    %5173 = vmatpush1.bf16.msra.mxu0 %v2760
    %5174 = vmatprep.subr.bf16.mxu0 %v2763
    %5175 = vmatpush1.bf16.msra.mxu0 %v2762
    %5176 = vmatprep.subr.bf16.mxu0 %v2765
    %5177 = vmatpush1.bf16.msra.mxu0 %v2764
    %5178 = vmatprep.mubr.bf16.mxu0 %v4607
    %5179 = vmatmul.mubr.bf16.gmra.mrb[0].mxu0 %v4606
    %v5180 = vpop.f32.mrb[0].mxu0
    %v5181 = vadd.f32 0.0, %v5180
    %v5182 = vpop.f32.mrb[0].mxu0
    %v5183 = vadd.f32 0.0, %v5182
    %v5184 = vpop.f32.mrb[0].mxu0
    %v5185 = vadd.f32 0.0, %v5184
    %v5186 = vpop.f32.mrb[0].mxu0
    %v5187 = vadd.f32 0.0, %v5186
    %5188 = vdwg.mxu0
    %5189 = vmatprep.subr.bf16.mxu0 %v2767
    %5190 = vmatpush1.bf16.msra.mxu0 %v2766
    %5191 = vmatprep.subr.bf16.mxu0 %v2769
    %5192 = vmatpush1.bf16.msra.mxu0 %v2768
    %5193 = vmatprep.subr.bf16.mxu0 %v2771
    %5194 = vmatpush1.bf16.msra.mxu0 %v2770
    %5195 = vmatprep.subr.bf16.mxu0 %v2773
    %5196 = vmatpush1.bf16.msra.mxu0 %v2772
    %5197 = vmatprep.subr.bf16.mxu0 %v2775
    %5198 = vmatpush1.bf16.msra.mxu0 %v2774
    %5199 = vmatprep.subr.bf16.mxu0 %v2777
    %5200 = vmatpush1.bf16.msra.mxu0 %v2776
    %5201 = vmatprep.subr.bf16.mxu0 %v2779
    %5202 = vmatpush1.bf16.msra.mxu0 %v2778
    %5203 = vmatprep.subr.bf16.mxu0 %v2781
    %5204 = vmatpush1.bf16.msra.mxu0 %v2780
    %5205 = vmatprep.subr.bf16.mxu0 %v2783
    %5206 = vmatpush1.bf16.msra.mxu0 %v2782
    %5207 = vmatprep.subr.bf16.mxu0 %v2785
    %5208 = vmatpush1.bf16.msra.mxu0 %v2784
    %5209 = vmatprep.subr.bf16.mxu0 %v2787
    %5210 = vmatpush1.bf16.msra.mxu0 %v2786
    %5211 = vmatprep.subr.bf16.mxu0 %v2789
    %5212 = vmatpush1.bf16.msra.mxu0 %v2788
    %5213 = vmatprep.subr.bf16.mxu0 %v2791
    %5214 = vmatpush1.bf16.msra.mxu0 %v2790
    %5215 = vmatprep.subr.bf16.mxu0 %v2793
    %5216 = vmatpush1.bf16.msra.mxu0 %v2792
    %5217 = vmatprep.subr.bf16.mxu0 %v2795
    %5218 = vmatpush1.bf16.msra.mxu0 %v2794
    %5219 = vmatprep.subr.bf16.mxu0 %v2797
    %5220 = vmatpush1.bf16.msra.mxu0 %v2796
    %5221 = vmatprep.mubr.bf16.mxu0 %v4609
    %5222 = vmatmul.mubr.bf16.gmra.mrb[0].mxu0 %v4608
    %v5223 = vpop.f32.mrb[0].mxu0
    %v5224 = vadd.f32 0.0, %v5223
    %v5225 = vpop.f32.mrb[0].mxu0
    %v5226 = vadd.f32 0.0, %v5225
    %v5227 = vpop.f32.mrb[0].mxu0
    %v5228 = vadd.f32 0.0, %v5227
    %v5229 = vpop.f32.mrb[0].mxu0
    %v5230 = vadd.f32 0.0, %v5229
    %5231 = vdwg.mxu0
    %5232 = vmatprep.subr.bf16.mxu0 %v2799
    %5233 = vmatpush1.bf16.msra.mxu0 %v2798
    %5234 = vmatprep.subr.bf16.mxu0 %v2801
    %5235 = vmatpush1.bf16.msra.mxu0 %v2800
    %5236 = vmatprep.subr.bf16.mxu0 %v2803
    %5237 = vmatpush1.bf16.msra.mxu0 %v2802
    %5238 = vmatprep.subr.bf16.mxu0 %v2805
    %5239 = vmatpush1.bf16.msra.mxu0 %v2804
    %5240 = vmatprep.subr.bf16.mxu0 %v2807
    %5241 = vmatpush1.bf16.msra.mxu0 %v2806
    %5242 = vmatprep.subr.bf16.mxu0 %v2809
    %5243 = vmatpush1.bf16.msra.mxu0 %v2808
    %5244 = vmatprep.subr.bf16.mxu0 %v2811
    %5245 = vmatpush1.bf16.msra.mxu0 %v2810
    %5246 = vmatprep.subr.bf16.mxu0 %v2813
    %5247 = vmatpush1.bf16.msra.mxu0 %v2812
    %5248 = vmatprep.subr.bf16.mxu0 %v2815
    %5249 = vmatpush1.bf16.msra.mxu0 %v2814
    %5250 = vmatprep.subr.bf16.mxu0 %v2817
    %5251 = vmatpush1.bf16.msra.mxu0 %v2816
    %5252 = vmatprep.subr.bf16.mxu0 %v2819
    %5253 = vmatpush1.bf16.msra.mxu0 %v2818
    %5254 = vmatprep.subr.bf16.mxu0 %v2821
    %5255 = vmatpush1.bf16.msra.mxu0 %v2820
    %5256 = vmatprep.subr.bf16.mxu0 %v2823
    %5257 = vmatpush1.bf16.msra.mxu0 %v2822
    %5258 = vmatprep.subr.bf16.mxu0 %v2825
    %5259 = vmatpush1.bf16.msra.mxu0 %v2824
    %5260 = vmatprep.subr.bf16.mxu0 %v2827
    %5261 = vmatpush1.bf16.msra.mxu0 %v2826
    %5262 = vmatprep.subr.bf16.mxu0 %v2829
    %5263 = vmatpush1.bf16.msra.mxu0 %v2828
    %5264 = vmatprep.mubr.bf16.mxu0 %v4611
    %5265 = vmatmul.mubr.bf16.gmra.mrb[0].mxu0 %v4610
    %v5266 = vpop.f32.mrb[0].mxu0
    %v5267 = vadd.f32 0.0, %v5266
    %v5268 = vpop.f32.mrb[0].mxu0
    %v5269 = vadd.f32 0.0, %v5268
    %v5270 = vpop.f32.mrb[0].mxu0
    %v5271 = vadd.f32 0.0, %v5270
    %v5272 = vpop.f32.mrb[0].mxu0
    %v5273 = vadd.f32 0.0, %v5272
    %5274 = vdwg.mxu0
    %5275 = vmatprep.subr.bf16.mxu0 %v2831
    %5276 = vmatpush1.bf16.msra.mxu0 %v2830
    %5277 = vmatprep.subr.bf16.mxu0 %v2833
    %5278 = vmatpush1.bf16.msra.mxu0 %v2832
    %5279 = vmatprep.subr.bf16.mxu0 %v2835
    %5280 = vmatpush1.bf16.msra.mxu0 %v2834
    %5281 = vmatprep.subr.bf16.mxu0 %v2837
    %5282 = vmatpush1.bf16.msra.mxu0 %v2836
    %5283 = vmatprep.subr.bf16.mxu0 %v2839
    %5284 = vmatpush1.bf16.msra.mxu0 %v2838
    %5285 = vmatprep.subr.bf16.mxu0 %v2841
    %5286 = vmatpush1.bf16.msra.mxu0 %v2840
    %5287 = vmatprep.subr.bf16.mxu0 %v2843
    %5288 = vmatpush1.bf16.msra.mxu0 %v2842
    %5289 = vmatprep.subr.bf16.mxu0 %v2845
    %5290 = vmatpush1.bf16.msra.mxu0 %v2844
    %5291 = vmatprep.subr.bf16.mxu0 %v2847
    %5292 = vmatpush1.bf16.msra.mxu0 %v2846
    %5293 = vmatprep.subr.bf16.mxu0 %v2849
    %5294 = vmatpush1.bf16.msra.mxu0 %v2848
    %5295 = vmatprep.subr.bf16.mxu0 %v2851
    %5296 = vmatpush1.bf16.msra.mxu0 %v2850
    %5297 = vmatprep.subr.bf16.mxu0 %v2853
    %5298 = vmatpush1.bf16.msra.mxu0 %v2852
    %5299 = vmatprep.subr.bf16.mxu0 %v2855
    %5300 = vmatpush1.bf16.msra.mxu0 %v2854
    %5301 = vmatprep.subr.bf16.mxu0 %v2857
    %5302 = vmatpush1.bf16.msra.mxu0 %v2856
    %5303 = vmatprep.subr.bf16.mxu0 %v2859
    %5304 = vmatpush1.bf16.msra.mxu0 %v2858
    %5305 = vmatprep.subr.bf16.mxu0 %v2861
    %5306 = vmatpush1.bf16.msra.mxu0 %v2860
    %5307 = vmatprep.mubr.bf16.mxu0 %v4613
    %5308 = vmatmul.mubr.bf16.gmra.mrb[0].mxu0 %v4612
    %v5309 = vpop.f32.mrb[0].mxu0
    %v5310 = vadd.f32 0.0, %v5309
    %v5311 = vpop.f32.mrb[0].mxu0
    %v5312 = vadd.f32 0.0, %v5311
    %v5313 = vpop.f32.mrb[0].mxu0
    %v5314 = vadd.f32 0.0, %v5313
    %v5315 = vpop.f32.mrb[0].mxu0
    %v5316 = vadd.f32 0.0, %v5315
    %5317 = vdwg.mxu0
    %5318 = vmatprep.subr.bf16.mxu0 %v2863
    %5319 = vmatpush1.bf16.msra.mxu0 %v2862
    %5320 = vmatprep.subr.bf16.mxu0 %v2865
    %5321 = vmatpush1.bf16.msra.mxu0 %v2864
    %5322 = vmatprep.subr.bf16.mxu0 %v2867
    %5323 = vmatpush1.bf16.msra.mxu0 %v2866
    %5324 = vmatprep.subr.bf16.mxu0 %v2869
    %5325 = vmatpush1.bf16.msra.mxu0 %v2868
    %5326 = vmatprep.subr.bf16.mxu0 %v2871
    %5327 = vmatpush1.bf16.msra.mxu0 %v2870
    %5328 = vmatprep.subr.bf16.mxu0 %v2873
    %5329 = vmatpush1.bf16.msra.mxu0 %v2872
    %5330 = vmatprep.subr.bf16.mxu0 %v2875
    %5331 = vmatpush1.bf16.msra.mxu0 %v2874
    %5332 = vmatprep.subr.bf16.mxu0 %v2877
    %5333 = vmatpush1.bf16.msra.mxu0 %v2876
    %5334 = vmatprep.subr.bf16.mxu0 %v2879
    %5335 = vmatpush1.bf16.msra.mxu0 %v2878
    %5336 = vmatprep.subr.bf16.mxu0 %v2881
    %5337 = vmatpush1.bf16.msra.mxu0 %v2880
    %5338 = vmatprep.subr.bf16.mxu0 %v2883
    %5339 = vmatpush1.bf16.msra.mxu0 %v2882
    %5340 = vmatprep.subr.bf16.mxu0 %v2885
    %5341 = vmatpush1.bf16.msra.mxu0 %v2884
    %5342 = vmatprep.subr.bf16.mxu0 %v2887
    %5343 = vmatpush1.bf16.msra.mxu0 %v2886
    %5344 = vmatprep.subr.bf16.mxu0 %v2889
    %5345 = vmatpush1.bf16.msra.mxu0 %v2888
    %5346 = vmatprep.subr.bf16.mxu0 %v2891
    %5347 = vmatpush1.bf16.msra.mxu0 %v2890
    %5348 = vmatprep.subr.bf16.mxu0 %v2893
    %5349 = vmatpush1.bf16.msra.mxu0 %v2892
    %5350 = vmatprep.mubr.bf16.mxu0 %v4615
    %5351 = vmatmul.mubr.bf16.gmra.mrb[0].mxu0 %v4614
    %v5352 = vpop.f32.mrb[0].mxu0
    %v5353 = vadd.f32 0.0, %v5352
    %v5354 = vpop.f32.mrb[0].mxu0
    %v5355 = vadd.f32 0.0, %v5354
    %v5356 = vpop.f32.mrb[0].mxu0
    %v5357 = vadd.f32 0.0, %v5356
    %v5358 = vpop.f32.mrb[0].mxu0
    %v5359 = vadd.f32 0.0, %v5358
    %5360 = vdwg.mxu0
    %5361 = vmatprep.subr.bf16.mxu0 %v2895
    %5362 = vmatpush1.bf16.msra.mxu0 %v2894
    %5363 = vmatprep.subr.bf16.mxu0 %v2897
    %5364 = vmatpush1.bf16.msra.mxu0 %v2896
    %5365 = vmatprep.subr.bf16.mxu0 %v2899
    %5366 = vmatpush1.bf16.msra.mxu0 %v2898
    %5367 = vmatprep.subr.bf16.mxu0 %v2901
    %5368 = vmatpush1.bf16.msra.mxu0 %v2900
    %5369 = vmatprep.subr.bf16.mxu0 %v2903
    %5370 = vmatpush1.bf16.msra.mxu0 %v2902
    %5371 = vmatprep.subr.bf16.mxu0 %v2905
    %5372 = vmatpush1.bf16.msra.mxu0 %v2904
    %5373 = vmatprep.subr.bf16.mxu0 %v2907
    %5374 = vmatpush1.bf16.msra.mxu0 %v2906
    %5375 = vmatprep.subr.bf16.mxu0 %v2909
    %5376 = vmatpush1.bf16.msra.mxu0 %v2908
    %5377 = vmatprep.subr.bf16.mxu0 %v2911
    %5378 = vmatpush1.bf16.msra.mxu0 %v2910
    %5379 = vmatprep.subr.bf16.mxu0 %v2913
    %5380 = vmatpush1.bf16.msra.mxu0 %v2912
    %5381 = vmatprep.subr.bf16.mxu0 %v2915
    %5382 = vmatpush1.bf16.msra.mxu0 %v2914
    %5383 = vmatprep.subr.bf16.mxu0 %v2917
    %5384 = vmatpush1.bf16.msra.mxu0 %v2916
    %5385 = vmatprep.subr.bf16.mxu0 %v2919
    %5386 = vmatpush1.bf16.msra.mxu0 %v2918
    %5387 = vmatprep.subr.bf16.mxu0 %v2921
    %5388 = vmatpush1.bf16.msra.mxu0 %v2920
    %5389 = vmatprep.subr.bf16.mxu0 %v2923
    %5390 = vmatpush1.bf16.msra.mxu0 %v2922
    %5391 = vmatprep.subr.bf16.mxu0 %v2925
    %5392 = vmatpush1.bf16.msra.mxu0 %v2924
    %5393 = vmatprep.mubr.bf16.mxu0 %v4617
    %5394 = vmatmul.mubr.bf16.gmra.mrb[0].mxu0 %v4616
    %v5395 = vpop.f32.mrb[0].mxu0
    %v5396 = vadd.f32 0.0, %v5395
    %v5397 = vpop.f32.mrb[0].mxu0
    %v5398 = vadd.f32 0.0, %v5397
    %v5399 = vpop.f32.mrb[0].mxu0
    %v5400 = vadd.f32 0.0, %v5399
    %v5401 = vpop.f32.mrb[0].mxu0
    %v5402 = vadd.f32 0.0, %v5401
    %5403 = vdwg.mxu0
    %5404 = vmatprep.subr.bf16.mxu0 %v2927
    %5405 = vmatpush1.bf16.msra.mxu0 %v2926
    %5406 = vmatprep.subr.bf16.mxu0 %v2929
    %5407 = vmatpush1.bf16.msra.mxu0 %v2928
    %5408 = vmatprep.subr.bf16.mxu0 %v2931
    %5409 = vmatpush1.bf16.msra.mxu0 %v2930
    %5410 = vmatprep.subr.bf16.mxu0 %v2933
    %5411 = vmatpush1.bf16.msra.mxu0 %v2932
    %5412 = vmatprep.subr.bf16.mxu0 %v2935
    %5413 = vmatpush1.bf16.msra.mxu0 %v2934
    %5414 = vmatprep.subr.bf16.mxu0 %v2937
    %5415 = vmatpush1.bf16.msra.mxu0 %v2936
    %5416 = vmatprep.subr.bf16.mxu0 %v2939
    %5417 = vmatpush1.bf16.msra.mxu0 %v2938
    %5418 = vmatprep.subr.bf16.mxu0 %v2941
    %5419 = vmatpush1.bf16.msra.mxu0 %v2940
    %5420 = vmatprep.subr.bf16.mxu0 %v2943
    %5421 = vmatpush1.bf16.msra.mxu0 %v2942
    %5422 = vmatprep.subr.bf16.mxu0 %v2945
    %5423 = vmatpush1.bf16.msra.mxu0 %v2944
    %5424 = vmatprep.subr.bf16.mxu0 %v2947
    %5425 = vmatpush1.bf16.msra.mxu0 %v2946
    %5426 = vmatprep.subr.bf16.mxu0 %v2949
    %5427 = vmatpush1.bf16.msra.mxu0 %v2948
    %5428 = vmatprep.subr.bf16.mxu0 %v2951
    %5429 = vmatpush1.bf16.msra.mxu0 %v2950
    %5430 = vmatprep.subr.bf16.mxu0 %v2953
    %5431 = vmatpush1.bf16.msra.mxu0 %v2952
    %5432 = vmatprep.subr.bf16.mxu0 %v2955
    %5433 = vmatpush1.bf16.msra.mxu0 %v2954
    %5434 = vmatprep.subr.bf16.mxu0 %v2957
    %5435 = vmatpush1.bf16.msra.mxu0 %v2956
    %5436 = vmatprep.mubr.bf16.mxu0 %v4619
    %5437 = vmatmul.mubr.bf16.gmra.mrb[0].mxu0 %v4618
    %v5438 = vpop.f32.mrb[0].mxu0
    %v5439 = vadd.f32 0.0, %v5438
    %v5440 = vpop.f32.mrb[0].mxu0
    %v5441 = vadd.f32 0.0, %v5440
    %v5442 = vpop.f32.mrb[0].mxu0
    %v5443 = vadd.f32 0.0, %v5442
    %v5444 = vpop.f32.mrb[0].mxu0
    %v5445 = vadd.f32 0.0, %v5444
    %5446 = vdwg.mxu0
    %5447 = vmatprep.subr.bf16.mxu0 %v2959
    %5448 = vmatpush1.bf16.msra.mxu0 %v2958
    %5449 = vmatprep.subr.bf16.mxu0 %v2961
    %5450 = vmatpush1.bf16.msra.mxu0 %v2960
    %5451 = vmatprep.subr.bf16.mxu0 %v2963
    %5452 = vmatpush1.bf16.msra.mxu0 %v2962
    %5453 = vmatprep.subr.bf16.mxu0 %v2965
    %5454 = vmatpush1.bf16.msra.mxu0 %v2964
    %5455 = vmatprep.subr.bf16.mxu0 %v2967
    %5456 = vmatpush1.bf16.msra.mxu0 %v2966
    %5457 = vmatprep.subr.bf16.mxu0 %v2969
    %5458 = vmatpush1.bf16.msra.mxu0 %v2968
    %5459 = vmatprep.subr.bf16.mxu0 %v2971
    %5460 = vmatpush1.bf16.msra.mxu0 %v2970
    %5461 = vmatprep.subr.bf16.mxu0 %v2973
    %5462 = vmatpush1.bf16.msra.mxu0 %v2972
    %5463 = vmatprep.subr.bf16.mxu0 %v2975
    %5464 = vmatpush1.bf16.msra.mxu0 %v2974
    %5465 = vmatprep.subr.bf16.mxu0 %v2977
    %5466 = vmatpush1.bf16.msra.mxu0 %v2976
    %5467 = vmatprep.subr.bf16.mxu0 %v2979
    %5468 = vmatpush1.bf16.msra.mxu0 %v2978
    %5469 = vmatprep.subr.bf16.mxu0 %v2981
    %5470 = vmatpush1.bf16.msra.mxu0 %v2980
    %5471 = vmatprep.subr.bf16.mxu0 %v2983
    %5472 = vmatpush1.bf16.msra.mxu0 %v2982
    %5473 = vmatprep.subr.bf16.mxu0 %v2985
    %5474 = vmatpush1.bf16.msra.mxu0 %v2984
    %5475 = vmatprep.subr.bf16.mxu0 %v2987
    %5476 = vmatpush1.bf16.msra.mxu0 %v2986
    %5477 = vmatprep.subr.bf16.mxu0 %v2989
    %5478 = vmatpush1.bf16.msra.mxu0 %v2988
    %5479 = vmatprep.mubr.bf16.mxu0 %v4621
    %5480 = vmatmul.mubr.bf16.gmra.mrb[0].mxu0 %v4620
    %v5481 = vpop.f32.mrb[0].mxu0
    %v5482 = vadd.f32 0.0, %v5481
    %v5483 = vpop.f32.mrb[0].mxu0
    %v5484 = vadd.f32 0.0, %v5483
    %v5485 = vpop.f32.mrb[0].mxu0
    %v5486 = vadd.f32 0.0, %v5485
    %v5487 = vpop.f32.mrb[0].mxu0
    %v5488 = vadd.f32 0.0, %v5487
    %5489 = vdwg.mxu0
    %5490 = vmatprep.subr.bf16.mxu0 %v2991
    %5491 = vmatpush1.bf16.msra.mxu0 %v2990
    %5492 = vmatprep.subr.bf16.mxu0 %v2993
    %5493 = vmatpush1.bf16.msra.mxu0 %v2992
    %5494 = vmatprep.subr.bf16.mxu0 %v2995
    %5495 = vmatpush1.bf16.msra.mxu0 %v2994
    %5496 = vmatprep.subr.bf16.mxu0 %v2997
    %5497 = vmatpush1.bf16.msra.mxu0 %v2996
    %5498 = vmatprep.subr.bf16.mxu0 %v2999
    %5499 = vmatpush1.bf16.msra.mxu0 %v2998
    %5500 = vmatprep.subr.bf16.mxu0 %v3001
    %5501 = vmatpush1.bf16.msra.mxu0 %v3000
    %5502 = vmatprep.subr.bf16.mxu0 %v3003
    %5503 = vmatpush1.bf16.msra.mxu0 %v3002
    %5504 = vmatprep.subr.bf16.mxu0 %v3005
    %5505 = vmatpush1.bf16.msra.mxu0 %v3004
    %5506 = vmatprep.subr.bf16.mxu0 %v3007
    %5507 = vmatpush1.bf16.msra.mxu0 %v3006
    %5508 = vmatprep.subr.bf16.mxu0 %v3009
    %5509 = vmatpush1.bf16.msra.mxu0 %v3008
    %5510 = vmatprep.subr.bf16.mxu0 %v3011
    %5511 = vmatpush1.bf16.msra.mxu0 %v3010
    %5512 = vmatprep.subr.bf16.mxu0 %v3013
    %5513 = vmatpush1.bf16.msra.mxu0 %v3012
    %5514 = vmatprep.subr.bf16.mxu0 %v3015
    %5515 = vmatpush1.bf16.msra.mxu0 %v3014
    %5516 = vmatprep.subr.bf16.mxu0 %v3017
    %5517 = vmatpush1.bf16.msra.mxu0 %v3016
    %5518 = vmatprep.subr.bf16.mxu0 %v3019
    %5519 = vmatpush1.bf16.msra.mxu0 %v3018
    %5520 = vmatprep.subr.bf16.mxu0 %v3021
    %5521 = vmatpush1.bf16.msra.mxu0 %v3020
    %5522 = vmatprep.mubr.bf16.mxu0 %v4623
    %5523 = vmatmul.mubr.bf16.gmra.mrb[0].mxu0 %v4622
    %v5524 = vpop.f32.mrb[0].mxu0
    %v5525 = vadd.f32 0.0, %v5524
    %v5526 = vpop.f32.mrb[0].mxu0
    %v5527 = vadd.f32 0.0, %v5526
    %v5528 = vpop.f32.mrb[0].mxu0
    %v5529 = vadd.f32 0.0, %v5528
    %v5530 = vpop.f32.mrb[0].mxu0
    %v5531 = vadd.f32 0.0, %v5530
    %5532 = vdwg.mxu0
    %5533 = vmatprep.subr.bf16.mxu0 %v3023
    %5534 = vmatpush1.bf16.msra.mxu0 %v3022
    %5535 = vmatprep.subr.bf16.mxu0 %v3025
    %5536 = vmatpush1.bf16.msra.mxu0 %v3024
    %5537 = vmatprep.subr.bf16.mxu0 %v3027
    %5538 = vmatpush1.bf16.msra.mxu0 %v3026
    %5539 = vmatprep.subr.bf16.mxu0 %v3029
    %5540 = vmatpush1.bf16.msra.mxu0 %v3028
    %5541 = vmatprep.subr.bf16.mxu0 %v3031
    %5542 = vmatpush1.bf16.msra.mxu0 %v3030
    %5543 = vmatprep.subr.bf16.mxu0 %v3033
    %5544 = vmatpush1.bf16.msra.mxu0 %v3032
    %5545 = vmatprep.subr.bf16.mxu0 %v3035
    %5546 = vmatpush1.bf16.msra.mxu0 %v3034
    %5547 = vmatprep.subr.bf16.mxu0 %v3037
    %5548 = vmatpush1.bf16.msra.mxu0 %v3036
    %5549 = vmatprep.subr.bf16.mxu0 %v3039
    %5550 = vmatpush1.bf16.msra.mxu0 %v3038
    %5551 = vmatprep.subr.bf16.mxu0 %v3041
    %5552 = vmatpush1.bf16.msra.mxu0 %v3040
    %5553 = vmatprep.subr.bf16.mxu0 %v3043
    %5554 = vmatpush1.bf16.msra.mxu0 %v3042
    %5555 = vmatprep.subr.bf16.mxu0 %v3045
    %5556 = vmatpush1.bf16.msra.mxu0 %v3044
    %5557 = vmatprep.subr.bf16.mxu0 %v3047
    %5558 = vmatpush1.bf16.msra.mxu0 %v3046
    %5559 = vmatprep.subr.bf16.mxu0 %v3049
    %5560 = vmatpush1.bf16.msra.mxu0 %v3048
    %5561 = vmatprep.subr.bf16.mxu0 %v3051
    %5562 = vmatpush1.bf16.msra.mxu0 %v3050
    %5563 = vmatprep.subr.bf16.mxu0 %v3053
    %5564 = vmatpush1.bf16.msra.mxu0 %v3052
    %5565 = vmatprep.mubr.bf16.mxu0 %v4625
    %5566 = vmatmul.mubr.bf16.gmra.mrb[0].mxu0 %v4624
    %v5567 = vpop.f32.mrb[0].mxu0
    %v5568 = vadd.f32 0.0, %v5567
    %v5569 = vpop.f32.mrb[0].mxu0
    %v5570 = vadd.f32 0.0, %v5569
    %v5571 = vpop.f32.mrb[0].mxu0
    %v5572 = vadd.f32 0.0, %v5571
    %v5573 = vpop.f32.mrb[0].mxu0
    %v5574 = vadd.f32 0.0, %v5573
    %5575 = vdwg.mxu0
    %5576 = vmatprep.subr.bf16.mxu0 %v3055
    %5577 = vmatpush1.bf16.msra.mxu0 %v3054
    %5578 = vmatprep.subr.bf16.mxu0 %v3057
    %5579 = vmatpush1.bf16.msra.mxu0 %v3056
    %5580 = vmatprep.subr.bf16.mxu0 %v3059
    %5581 = vmatpush1.bf16.msra.mxu0 %v3058
    %5582 = vmatprep.subr.bf16.mxu0 %v3061
    %5583 = vmatpush1.bf16.msra.mxu0 %v3060
    %5584 = vmatprep.subr.bf16.mxu0 %v3063
    %5585 = vmatpush1.bf16.msra.mxu0 %v3062
    %5586 = vmatprep.subr.bf16.mxu0 %v3065
    %5587 = vmatpush1.bf16.msra.mxu0 %v3064
    %5588 = vmatprep.subr.bf16.mxu0 %v3067
    %5589 = vmatpush1.bf16.msra.mxu0 %v3066
    %5590 = vmatprep.subr.bf16.mxu0 %v3069
    %5591 = vmatpush1.bf16.msra.mxu0 %v3068
    %5592 = vmatprep.subr.bf16.mxu0 %v3071
    %5593 = vmatpush1.bf16.msra.mxu0 %v3070
    %5594 = vmatprep.subr.bf16.mxu0 %v3073
    %5595 = vmatpush1.bf16.msra.mxu0 %v3072
    %5596 = vmatprep.subr.bf16.mxu0 %v3075
    %5597 = vmatpush1.bf16.msra.mxu0 %v3074
    %5598 = vmatprep.subr.bf16.mxu0 %v3077
    %5599 = vmatpush1.bf16.msra.mxu0 %v3076
    %5600 = vmatprep.subr.bf16.mxu0 %v3079
    %5601 = vmatpush1.bf16.msra.mxu0 %v3078
    %5602 = vmatprep.subr.bf16.mxu0 %v3081
    %5603 = vmatpush1.bf16.msra.mxu0 %v3080
    %5604 = vmatprep.subr.bf16.mxu0 %v3083
    %5605 = vmatpush1.bf16.msra.mxu0 %v3082
    %5606 = vmatprep.subr.bf16.mxu0 %v3085
    %5607 = vmatpush1.bf16.msra.mxu0 %v3084
    %5608 = vmatprep.mubr.bf16.mxu0 %v4627
    %5609 = vmatmul.mubr.bf16.gmra.mrb[0].mxu0 %v4626
    %v5610 = vpop.f32.mrb[0].mxu0
    %v5611 = vadd.f32 0.0, %v5610
    %v5612 = vpop.f32.mrb[0].mxu0
    %v5613 = vadd.f32 0.0, %v5612
    %v5614 = vpop.f32.mrb[0].mxu0
    %v5615 = vadd.f32 0.0, %v5614
    %v5616 = vpop.f32.mrb[0].mxu0
    %v5617 = vadd.f32 0.0, %v5616
    %5618 = vdwg.mxu0
    %5619 = vmatprep.subr.bf16.mxu0 %v3087
    %5620 = vmatpush1.bf16.msra.mxu0 %v3086
    %5621 = vmatprep.subr.bf16.mxu0 %v3089
    %5622 = vmatpush1.bf16.msra.mxu0 %v3088
    %5623 = vmatprep.subr.bf16.mxu0 %v3091
    %5624 = vmatpush1.bf16.msra.mxu0 %v3090
    %5625 = vmatprep.subr.bf16.mxu0 %v3093
    %5626 = vmatpush1.bf16.msra.mxu0 %v3092
    %5627 = vmatprep.subr.bf16.mxu0 %v3095
    %5628 = vmatpush1.bf16.msra.mxu0 %v3094
    %5629 = vmatprep.subr.bf16.mxu0 %v3097
    %5630 = vmatpush1.bf16.msra.mxu0 %v3096
    %5631 = vmatprep.subr.bf16.mxu0 %v3099
    %5632 = vmatpush1.bf16.msra.mxu0 %v3098
    %5633 = vmatprep.subr.bf16.mxu0 %v3101
    %5634 = vmatpush1.bf16.msra.mxu0 %v3100
    %5635 = vmatprep.subr.bf16.mxu0 %v3103
    %5636 = vmatpush1.bf16.msra.mxu0 %v3102
    %5637 = vmatprep.subr.bf16.mxu0 %v3105
    %5638 = vmatpush1.bf16.msra.mxu0 %v3104
    %5639 = vmatprep.subr.bf16.mxu0 %v3107
    %5640 = vmatpush1.bf16.msra.mxu0 %v3106
    %5641 = vmatprep.subr.bf16.mxu0 %v3109
    %5642 = vmatpush1.bf16.msra.mxu0 %v3108
    %5643 = vmatprep.subr.bf16.mxu0 %v3111
    %5644 = vmatpush1.bf16.msra.mxu0 %v3110
    %5645 = vmatprep.subr.bf16.mxu0 %v3113
    %5646 = vmatpush1.bf16.msra.mxu0 %v3112
    %5647 = vmatprep.subr.bf16.mxu0 %v3115
    %5648 = vmatpush1.bf16.msra.mxu0 %v3114
    %5649 = vmatprep.subr.bf16.mxu0 %v3117
    %5650 = vmatpush1.bf16.msra.mxu0 %v3116
    %5651 = vmatprep.mubr.bf16.mxu0 %v4629
    %5652 = vmatmul.mubr.bf16.gmra.mrb[0].mxu0 %v4628
    %v5653 = vpop.f32.mrb[0].mxu0
    %v5654 = vadd.f32 0.0, %v5653
    %v5655 = vpop.f32.mrb[0].mxu0
    %v5656 = vadd.f32 0.0, %v5655
    %v5657 = vpop.f32.mrb[0].mxu0
    %v5658 = vadd.f32 0.0, %v5657
    %v5659 = vpop.f32.mrb[0].mxu0
    %v5660 = vadd.f32 0.0, %v5659
    %5661 = vdwg.mxu0
    %5662 = vmatprep.subr.mxu0 %v1487
    %5663 = vmatpush1.msra.mxu0 %v1486
    %5664 = vmatprep.subr.mxu0 %v1489
    %5665 = vmatpush1.msra.mxu0 %v1488
    %5666 = vmatprep.subr.mxu0 %v1491
    %5667 = vmatpush1.msra.mxu0 %v1490
    %5668 = vmatprep.subr.mxu0 %v1493
    %5669 = vmatpush1.msra.mxu0 %v1492
    %5670 = vmatprep.subr.mxu0 %v1495
    %5671 = vmatpush1.msra.mxu0 %v1494
    %5672 = vmatprep.subr.mxu0 %v1497
    %5673 = vmatpush1.msra.mxu0 %v1496
    %5674 = vmatprep.subr.mxu0 %v1499
    %5675 = vmatpush1.msra.mxu0 %v1498
    %5676 = vmatprep.subr.mxu0 %v1501
    %5677 = vmatpush1.msra.mxu0 %v1500
    %5678 = vmatprep.subr.mxu0 %v1503
    %5679 = vmatpush1.msra.mxu0 %v1502
    %5680 = vmatprep.subr.mxu0 %v1505
    %5681 = vmatpush1.msra.mxu0 %v1504
    %5682 = vmatprep.subr.mxu0 %v1507
    %5683 = vmatpush1.msra.mxu0 %v1506
    %5684 = vmatprep.subr.mxu0 %v1509
    %5685 = vmatpush1.msra.mxu0 %v1508
    %5686 = vmatprep.subr.mxu0 %v1511
    %5687 = vmatpush1.msra.mxu0 %v1510
    %5688 = vmatprep.subr.mxu0 %v1513
    %5689 = vmatpush1.msra.mxu0 %v1512
    %5690 = vmatprep.subr.mxu0 %v1515
    %5691 = vmatpush1.msra.mxu0 %v1514
    %5692 = vmatprep.subr.mxu0 %v1517
    %5693 = vmatpush1.msra.mxu0 %v1516
    %5694 = vmatprep.subr.mxu0 %v1519
    %5695 = vmatpush1.msra.mxu0 %v1518
    %5696 = vmatprep.subr.mxu0 %v1521
    %5697 = vmatpush1.msra.mxu0 %v1520
    %5698 = vmatprep.subr.mxu0 %v1523
    %5699 = vmatpush1.msra.mxu0 %v1522
    %5700 = vmatprep.subr.mxu0 %v1525
    %5701 = vmatpush1.msra.mxu0 %v1524
    %5702 = vmatprep.subr.mxu0 %v1527
    %5703 = vmatpush1.msra.mxu0 %v1526
    %5704 = vmatprep.subr.mxu0 %v1529
    %5705 = vmatpush1.msra.mxu0 %v1528
    %5706 = vmatprep.subr.mxu0 %v1531
    %5707 = vmatpush1.msra.mxu0 %v1530
    %5708 = vmatprep.subr.mxu0 %v1533
    %5709 = vmatpush1.msra.mxu0 %v1532
    %5710 = vmatprep.subr.mxu0 %v1535
    %5711 = vmatpush1.msra.mxu0 %v1534
    %5712 = vmatprep.subr.mxu0 %v1537
    %5713 = vmatpush1.msra.mxu0 %v1536
    %5714 = vmatprep.subr.mxu0 %v1539
    %5715 = vmatpush1.msra.mxu0 %v1538
    %5716 = vmatprep.subr.mxu0 %v1541
    %5717 = vmatpush1.msra.mxu0 %v1540
    %5718 = vmatprep.subr.mxu0 %v1543
    %5719 = vmatpush1.msra.mxu0 %v1542
    %5720 = vmatprep.subr.mxu0 %v1545
    %5721 = vmatpush1.msra.mxu0 %v1544
    %5722 = vmatprep.subr.mxu0 %v1547
    %5723 = vmatpush1.msra.mxu0 %v1546
    %5724 = vmatprep.subr.mxu0 %v1549
    %5725 = vmatpush1.msra.mxu0 %v1548
    %5726 = vmatprep.mubr.f32.mxu0 %v4393
    %5727 = vmatmul.mubr.f32.gmra.mrb[0].mxu0 %v4391
    %v5728 = vpop.f32.mrb[0].mxu0
    %v5729 = vadd.f32 0.0, %v5728
    %v5730 = vpop.f32.mrb[0].mxu0
    %v5731 = vadd.f32 0.0, %v5730
    %5732 = vmatprep.mubr.f32.mxu0 %v4397
    %5733 = vmatmul.mubr.f32.gmra.mrb[0].mxu0 %v4395
    %v5734 = vpop.f32.mrb[0].mxu0
    %v5735 = vadd.f32 0.0, %v5734
    %v5736 = vpop.f32.mrb[0].mxu0
    %v5737 = vadd.f32 0.0, %v5736
    %5738 = vmatprep.mubr.f32.mxu0 %v4401
    %5739 = vmatmul.mubr.f32.gmra.mrb[0].mxu0 %v4399
    %v5740 = vpop.f32.mrb[0].mxu0
    %v5741 = vadd.f32 0.0, %v5740
    %v5742 = vpop.f32.mrb[0].mxu0
    %v5743 = vadd.f32 0.0, %v5742
    %5744 = vmatprep.mubr.f32.mxu0 %v4405
    %5745 = vmatmul.mubr.f32.gmra.mrb[0].mxu0 %v4403
    %v5746 = vpop.f32.mrb[0].mxu0
    %v5747 = vadd.f32 0.0, %v5746
    %v5748 = vpop.f32.mrb[0].mxu0
    %v5749 = vadd.f32 0.0, %v5748
    %5750 = vmatprep.mubr.f32.mxu0 %v4409
    %5751 = vmatmul.mubr.f32.gmra.mrb[0].mxu0 %v4407
    %v5752 = vpop.f32.mrb[0].mxu0
    %v5753 = vadd.f32 0.0, %v5752
    %v5754 = vpop.f32.mrb[0].mxu0
    %v5755 = vadd.f32 0.0, %v5754
    %5756 = vmatprep.mubr.f32.mxu0 %v4413
    %5757 = vmatmul.mubr.f32.gmra.mrb[0].mxu0 %v4411
    %v5758 = vpop.f32.mrb[0].mxu0
    %v5759 = vadd.f32 0.0, %v5758
    %v5760 = vpop.f32.mrb[0].mxu0
    %v5761 = vadd.f32 0.0, %v5760
    %5762 = vmatprep.mubr.f32.mxu0 %v4417
    %5763 = vmatmul.mubr.f32.gmra.mrb[0].mxu0 %v4415
    %v5764 = vpop.f32.mrb[0].mxu0
    %v5765 = vadd.f32 0.0, %v5764
    %v5766 = vpop.f32.mrb[0].mxu0
    %v5767 = vadd.f32 0.0, %v5766
    %5768 = vmatprep.mubr.f32.mxu0 %v4421
    %5769 = vmatmul.mubr.f32.gmra.mrb[0].mxu0 %v4419
    %v5770 = vpop.f32.mrb[0].mxu0
    %v5771 = vadd.f32 0.0, %v5770
    %v5772 = vpop.f32.mrb[0].mxu0
    %v5773 = vadd.f32 0.0, %v5772
    %5774 = vmatprep.mubr.f32.mxu0 %v4425
    %5775 = vmatmul.mubr.f32.gmra.mrb[0].mxu0 %v4423
    %v5776 = vpop.f32.mrb[0].mxu0
    %v5777 = vadd.f32 0.0, %v5776
    %v5778 = vpop.f32.mrb[0].mxu0
    %v5779 = vadd.f32 0.0, %v5778
    %5780 = vmatprep.mubr.f32.mxu0 %v4429
    %5781 = vmatmul.mubr.f32.gmra.mrb[0].mxu0 %v4427
    %v5782 = vpop.f32.mrb[0].mxu0
    %v5783 = vadd.f32 0.0, %v5782
    %v5784 = vpop.f32.mrb[0].mxu0
    %v5785 = vadd.f32 0.0, %v5784
    %5786 = vmatprep.mubr.f32.mxu0 %v4433
    %5787 = vmatmul.mubr.f32.gmra.mrb[0].mxu0 %v4431
    %v5788 = vpop.f32.mrb[0].mxu0
    %v5789 = vadd.f32 0.0, %v5788
    %v5790 = vpop.f32.mrb[0].mxu0
    %v5791 = vadd.f32 0.0, %v5790
    %5792 = vmatprep.mubr.f32.mxu0 %v4437
    %5793 = vmatmul.mubr.f32.gmra.mrb[0].mxu0 %v4435
    %v5794 = vpop.f32.mrb[0].mxu0
    %v5795 = vadd.f32 0.0, %v5794
    %v5796 = vpop.f32.mrb[0].mxu0
    %v5797 = vadd.f32 0.0, %v5796
    %5798 = vmatprep.mubr.f32.mxu0 %v4441
    %5799 = vmatmul.mubr.f32.gmra.mrb[0].mxu0 %v4439
    %v5800 = vpop.f32.mrb[0].mxu0
    %v5801 = vadd.f32 0.0, %v5800
    %v5802 = vpop.f32.mrb[0].mxu0
    %v5803 = vadd.f32 0.0, %v5802
    %5804 = vmatprep.mubr.f32.mxu0 %v4445
    %5805 = vmatmul.mubr.f32.gmra.mrb[0].mxu0 %v4443
    %v5806 = vpop.f32.mrb[0].mxu0
    %v5807 = vadd.f32 0.0, %v5806
    %v5808 = vpop.f32.mrb[0].mxu0
    %v5809 = vadd.f32 0.0, %v5808
    %5810 = vmatprep.mubr.f32.mxu0 %v4449
    %5811 = vmatmul.mubr.f32.gmra.mrb[0].mxu0 %v4447
    %v5812 = vpop.f32.mrb[0].mxu0
    %v5813 = vadd.f32 0.0, %v5812
    %v5814 = vpop.f32.mrb[0].mxu0
    %v5815 = vadd.f32 0.0, %v5814
    %5816 = vmatprep.mubr.f32.mxu0 %v4453
    %5817 = vmatmul.mubr.f32.gmra.mrb[0].mxu0 %v4451
    %v5818 = vpop.f32.mrb[0].mxu0
    %v5819 = vadd.f32 0.0, %v5818
    %v5820 = vpop.f32.mrb[0].mxu0
    %v5821 = vadd.f32 0.0, %v5820
    %5822 = vmatprep.mubr.f32.mxu0 %v4457
    %5823 = vmatmul.mubr.f32.gmra.mrb[0].mxu0 %v4455
    %v5824 = vpop.f32.mrb[0].mxu0
    %v5825 = vadd.f32 0.0, %v5824
    %v5826 = vpop.f32.mrb[0].mxu0
    %v5827 = vadd.f32 0.0, %v5826
    %5828 = vmatprep.mubr.f32.mxu0 %v4461
    %5829 = vmatmul.mubr.f32.gmra.mrb[0].mxu0 %v4459
    %v5830 = vpop.f32.mrb[0].mxu0
    %v5831 = vadd.f32 0.0, %v5830
    %v5832 = vpop.f32.mrb[0].mxu0
    %v5833 = vadd.f32 0.0, %v5832
    %5834 = vmatprep.mubr.f32.mxu0 %v4465
    %5835 = vmatmul.mubr.f32.gmra.mrb[0].mxu0 %v4463
    %v5836 = vpop.f32.mrb[0].mxu0
    %v5837 = vadd.f32 0.0, %v5836
    %v5838 = vpop.f32.mrb[0].mxu0
    %v5839 = vadd.f32 0.0, %v5838
    %5840 = vmatprep.mubr.f32.mxu0 %v4469
    %5841 = vmatmul.mubr.f32.gmra.mrb[0].mxu0 %v4467
    %v5842 = vpop.f32.mrb[0].mxu0
    %v5843 = vadd.f32 0.0, %v5842
    %v5844 = vpop.f32.mrb[0].mxu0
    %v5845 = vadd.f32 0.0, %v5844
    %5846 = vmatprep.mubr.f32.mxu0 %v4473
    %5847 = vmatmul.mubr.f32.gmra.mrb[0].mxu0 %v4471
    %v5848 = vpop.f32.mrb[0].mxu0
    %v5849 = vadd.f32 0.0, %v5848
    %v5850 = vpop.f32.mrb[0].mxu0
    %v5851 = vadd.f32 0.0, %v5850
    %5852 = vmatprep.mubr.f32.mxu0 %v4477
    %5853 = vmatmul.mubr.f32.gmra.mrb[0].mxu0 %v4475
    %v5854 = vpop.f32.mrb[0].mxu0
    %v5855 = vadd.f32 0.0, %v5854
    %v5856 = vpop.f32.mrb[0].mxu0
    %v5857 = vadd.f32 0.0, %v5856
    %5858 = vmatprep.mubr.f32.mxu0 %v4481
    %5859 = vmatmul.mubr.f32.gmra.mrb[0].mxu0 %v4479
    %v5860 = vpop.f32.mrb[0].mxu0
    %v5861 = vadd.f32 0.0, %v5860
    %v5862 = vpop.f32.mrb[0].mxu0
    %v5863 = vadd.f32 0.0, %v5862
    %5864 = vmatprep.mubr.f32.mxu0 %v4485
    %5865 = vmatmul.mubr.f32.gmra.mrb[0].mxu0 %v4483
    %v5866 = vpop.f32.mrb[0].mxu0
    %v5867 = vadd.f32 0.0, %v5866
    %v5868 = vpop.f32.mrb[0].mxu0
    %v5869 = vadd.f32 0.0, %v5868
    %5870 = vmatprep.mubr.f32.mxu0 %v4489
    %5871 = vmatmul.mubr.f32.gmra.mrb[0].mxu0 %v4487
    %v5872 = vpop.f32.mrb[0].mxu0
    %v5873 = vadd.f32 0.0, %v5872
    %v5874 = vpop.f32.mrb[0].mxu0
    %v5875 = vadd.f32 0.0, %v5874
    %5876 = vmatprep.mubr.f32.mxu0 %v4493
    %5877 = vmatmul.mubr.f32.gmra.mrb[0].mxu0 %v4491
    %v5878 = vpop.f32.mrb[0].mxu0
    %v5879 = vadd.f32 0.0, %v5878
    %v5880 = vpop.f32.mrb[0].mxu0
    %v5881 = vadd.f32 0.0, %v5880
    %5882 = vmatprep.mubr.f32.mxu0 %v4497
    %5883 = vmatmul.mubr.f32.gmra.mrb[0].mxu0 %v4495
    %v5884 = vpop.f32.mrb[0].mxu0
    %v5885 = vadd.f32 0.0, %v5884
    %v5886 = vpop.f32.mrb[0].mxu0
    %v5887 = vadd.f32 0.0, %v5886
    %5888 = vmatprep.mubr.f32.mxu0 %v4501
    %5889 = vmatmul.mubr.f32.gmra.mrb[0].mxu0 %v4499
    %v5890 = vpop.f32.mrb[0].mxu0
    %v5891 = vadd.f32 0.0, %v5890
    %v5892 = vpop.f32.mrb[0].mxu0
    %v5893 = vadd.f32 0.0, %v5892
    %5894 = vmatprep.mubr.f32.mxu0 %v4505
    %5895 = vmatmul.mubr.f32.gmra.mrb[0].mxu0 %v4503
    %v5896 = vpop.f32.mrb[0].mxu0
    %v5897 = vadd.f32 0.0, %v5896
    %v5898 = vpop.f32.mrb[0].mxu0
    %v5899 = vadd.f32 0.0, %v5898
    %5900 = vmatprep.mubr.f32.mxu0 %v4509
    %5901 = vmatmul.mubr.f32.gmra.mrb[0].mxu0 %v4507
    %v5902 = vpop.f32.mrb[0].mxu0
    %v5903 = vadd.f32 0.0, %v5902
    %v5904 = vpop.f32.mrb[0].mxu0
    %v5905 = vadd.f32 0.0, %v5904
    %5906 = vmatprep.mubr.f32.mxu0 %v4513
    %5907 = vmatmul.mubr.f32.gmra.mrb[0].mxu0 %v4511
    %v5908 = vpop.f32.mrb[0].mxu0
    %v5909 = vadd.f32 0.0, %v5908
    %v5910 = vpop.f32.mrb[0].mxu0
    %v5911 = vadd.f32 0.0, %v5910
    %5912 = vmatprep.mubr.f32.mxu0 %v4517
    %5913 = vmatmul.mubr.f32.gmra.mrb[0].mxu0 %v4515
    %v5914 = vpop.f32.mrb[0].mxu0
    %v5915 = vadd.f32 0.0, %v5914
    %v5916 = vpop.f32.mrb[0].mxu0
    %v5917 = vadd.f32 0.0, %v5916
    %5918 = vmatprep.mubr.f32.mxu0 %v4521
    %5919 = vmatmul.mubr.f32.gmra.mrb[0].mxu0 %v4519
    %v5920 = vpop.f32.mrb[0].mxu0
    %v5921 = vadd.f32 0.0, %v5920
    %v5922 = vpop.f32.mrb[0].mxu0
    %v5923 = vadd.f32 0.0, %v5922
    %5924 = vmatprep.mubr.f32.mxu0 %v4525
    %5925 = vmatmul.mubr.f32.gmra.mrb[0].mxu0 %v4523
    %v5926 = vpop.f32.mrb[0].mxu0
    %v5927 = vadd.f32 0.0, %v5926
    %v5928 = vpop.f32.mrb[0].mxu0
    %v5929 = vadd.f32 0.0, %v5928
    %5930 = vmatprep.mubr.f32.mxu0 %v4529
    %5931 = vmatmul.mubr.f32.gmra.mrb[0].mxu0 %v4527
    %v5932 = vpop.f32.mrb[0].mxu0
    %v5933 = vadd.f32 0.0, %v5932
    %v5934 = vpop.f32.mrb[0].mxu0
    %v5935 = vadd.f32 0.0, %v5934
    %5936 = vmatprep.mubr.f32.mxu0 %v4533
    %5937 = vmatmul.mubr.f32.gmra.mrb[0].mxu0 %v4531
    %v5938 = vpop.f32.mrb[0].mxu0
    %v5939 = vadd.f32 0.0, %v5938
    %v5940 = vpop.f32.mrb[0].mxu0
    %v5941 = vadd.f32 0.0, %v5940
    %5942 = vmatprep.mubr.f32.mxu0 %v4537
    %5943 = vmatmul.mubr.f32.gmra.mrb[0].mxu0 %v4535
    %v5944 = vpop.f32.mrb[0].mxu0
    %v5945 = vadd.f32 0.0, %v5944
    %v5946 = vpop.f32.mrb[0].mxu0
    %v5947 = vadd.f32 0.0, %v5946
    %5948 = vmatprep.mubr.f32.mxu0 %v4541
    %5949 = vmatmul.mubr.f32.gmra.mrb[0].mxu0 %v4539
    %v5950 = vpop.f32.mrb[0].mxu0
    %v5951 = vadd.f32 0.0, %v5950
    %v5952 = vpop.f32.mrb[0].mxu0
    %v5953 = vadd.f32 0.0, %v5952
    %5954 = vmatprep.mubr.f32.mxu0 %v4545
    %5955 = vmatmul.mubr.f32.gmra.mrb[0].mxu0 %v4543
    %v5956 = vpop.f32.mrb[0].mxu0
    %v5957 = vadd.f32 0.0, %v5956
    %v5958 = vpop.f32.mrb[0].mxu0
    %v5959 = vadd.f32 0.0, %v5958
    %5960 = vmatprep.mubr.f32.mxu0 %v4549
    %5961 = vmatmul.mubr.f32.gmra.mrb[0].mxu0 %v4547
    %v5962 = vpop.f32.mrb[0].mxu0
    %v5963 = vadd.f32 0.0, %v5962
    %v5964 = vpop.f32.mrb[0].mxu0
    %v5965 = vadd.f32 0.0, %v5964
    %5966 = vmatprep.mubr.f32.mxu0 %v4553
    %5967 = vmatmul.mubr.f32.gmra.mrb[0].mxu0 %v4551
    %v5968 = vpop.f32.mrb[0].mxu0
    %v5969 = vadd.f32 0.0, %v5968
    %v5970 = vpop.f32.mrb[0].mxu0
    %v5971 = vadd.f32 0.0, %v5970
    %5972 = vmatprep.mubr.f32.mxu0 %v4557
    %5973 = vmatmul.mubr.f32.gmra.mrb[0].mxu0 %v4555
    %v5974 = vpop.f32.mrb[0].mxu0
    %v5975 = vadd.f32 0.0, %v5974
    %v5976 = vpop.f32.mrb[0].mxu0
    %v5977 = vadd.f32 0.0, %v5976
    %5978 = vmatprep.mubr.f32.mxu0 %v4561
    %5979 = vmatmul.mubr.f32.gmra.mrb[0].mxu0 %v4559
    %v5980 = vpop.f32.mrb[0].mxu0
    %v5981 = vadd.f32 0.0, %v5980
    %v5982 = vpop.f32.mrb[0].mxu0
    %v5983 = vadd.f32 0.0, %v5982
    %5984 = vmatprep.mubr.f32.mxu0 %v4565
    %5985 = vmatmul.mubr.f32.gmra.mrb[0].mxu0 %v4563
    %v5986 = vpop.f32.mrb[0].mxu0
    %v5987 = vadd.f32 0.0, %v5986
    %v5988 = vpop.f32.mrb[0].mxu0
    %v5989 = vadd.f32 0.0, %v5988
    %5990 = vmatprep.mubr.f32.mxu0 %v4569
    %5991 = vmatmul.mubr.f32.gmra.mrb[0].mxu0 %v4567
    %v5992 = vpop.f32.mrb[0].mxu0
    %v5993 = vadd.f32 0.0, %v5992
    %v5994 = vpop.f32.mrb[0].mxu0
    %v5995 = vadd.f32 0.0, %v5994
    %5996 = vmatprep.mubr.f32.mxu0 %v4573
    %5997 = vmatmul.mubr.f32.gmra.mrb[0].mxu0 %v4571
    %v5998 = vpop.f32.mrb[0].mxu0
    %v5999 = vadd.f32 0.0, %v5998
    %v6000 = vpop.f32.mrb[0].mxu0
    %v6001 = vadd.f32 0.0, %v6000
    %6002 = vmatprep.mubr.f32.mxu0 %v4577
    %6003 = vmatmul.mubr.f32.gmra.mrb[0].mxu0 %v4575
    %v6004 = vpop.f32.mrb[0].mxu0
    %v6005 = vadd.f32 0.0, %v6004
    %v6006 = vpop.f32.mrb[0].mxu0
    %v6007 = vadd.f32 0.0, %v6006
    %6008 = vmatprep.mubr.f32.mxu0 %v4581
    %6009 = vmatmul.mubr.f32.gmra.mrb[0].mxu0 %v4579
    %v6010 = vpop.f32.mrb[0].mxu0
    %v6011 = vadd.f32 0.0, %v6010
    %v6012 = vpop.f32.mrb[0].mxu0
    %v6013 = vadd.f32 0.0, %v6012
    %6014 = vdwg.mxu0
    %v6015 = vrcp.pop %v5729
    %v6016 = vmul.f32 %v4665, %v6015
    %v6017 = vrcp.pop %v5731
    %v6018 = vmul.f32 %v4667, %v6017
    %v6019 = vrcp.pop %v5735
    %v6020 = vmul.f32 %v4669, %v6019
    %v6021 = vrcp.pop %v5737
    %v6022 = vmul.f32 %v4671, %v6021
    %v6023 = vrcp.pop %v5741
    %v6024 = vmul.f32 %v4708, %v6023
    %v6025 = vrcp.pop %v5743
    %v6026 = vmul.f32 %v4710, %v6025
    %v6027 = vrcp.pop %v5747
    %v6028 = vmul.f32 %v4712, %v6027
    %v6029 = vrcp.pop %v5749
    %v6030 = vmul.f32 %v4714, %v6029
    %v6031 = vrcp.pop %v5753
    %v6032 = vmul.f32 %v4751, %v6031
    %v6033 = vrcp.pop %v5755
    %v6034 = vmul.f32 %v4753, %v6033
    %v6035 = vrcp.pop %v5759
    %v6036 = vmul.f32 %v4755, %v6035
    %v6037 = vrcp.pop %v5761
    %v6038 = vmul.f32 %v4757, %v6037
    %v6039 = vrcp.pop %v5765
    %v6040 = vmul.f32 %v4794, %v6039
    %v6041 = vrcp.pop %v5767
    %v6042 = vmul.f32 %v4796, %v6041
    %v6043 = vrcp.pop %v5771
    %v6044 = vmul.f32 %v4798, %v6043
    %v6045 = vrcp.pop %v5773
    %v6046 = vmul.f32 %v4800, %v6045
    %v6047 = vrcp.pop %v5777
    %v6048 = vmul.f32 %v4837, %v6047
    %v6049 = vrcp.pop %v5779
    %v6050 = vmul.f32 %v4839, %v6049
    %v6051 = vrcp.pop %v5783
    %v6052 = vmul.f32 %v4841, %v6051
    %v6053 = vrcp.pop %v5785
    %v6054 = vmul.f32 %v4843, %v6053
    %v6055 = vrcp.pop %v5789
    %v6056 = vmul.f32 %v4880, %v6055
    %v6057 = vrcp.pop %v5791
    %v6058 = vmul.f32 %v4882, %v6057
    %v6059 = vrcp.pop %v5795
    %v6060 = vmul.f32 %v4884, %v6059
    %v6061 = vrcp.pop %v5797
    %v6062 = vmul.f32 %v4886, %v6061
    %v6063 = vrcp.pop %v5801
    %v6064 = vmul.f32 %v4923, %v6063
    %v6065 = vrcp.pop %v5803
    %v6066 = vmul.f32 %v4925, %v6065
    %v6067 = vrcp.pop %v5807
    %v6068 = vmul.f32 %v4927, %v6067
    %v6069 = vrcp.pop %v5809
    %v6070 = vmul.f32 %v4929, %v6069
    %v6071 = vrcp.pop %v5813
    %v6072 = vmul.f32 %v4966, %v6071
    %v6073 = vrcp.pop %v5815
    %v6074 = vmul.f32 %v4968, %v6073
    %v6075 = vrcp.pop %v5819
    %v6076 = vmul.f32 %v4970, %v6075
    %v6077 = vrcp.pop %v5821
    %v6078 = vmul.f32 %v4972, %v6077
    %v6079 = vrcp.pop %v5825
    %v6080 = vmul.f32 %v5009, %v6079
    %v6081 = vrcp.pop %v5827
    %v6082 = vmul.f32 %v5011, %v6081
    %v6083 = vrcp.pop %v5831
    %v6084 = vmul.f32 %v5013, %v6083
    %v6085 = vrcp.pop %v5833
    %v6086 = vmul.f32 %v5015, %v6085
    %v6087 = vrcp.pop %v5837
    %v6088 = vmul.f32 %v5052, %v6087
    %v6089 = vrcp.pop %v5839
    %v6090 = vmul.f32 %v5054, %v6089
    %v6091 = vrcp.pop %v5843
    %v6092 = vmul.f32 %v5056, %v6091
    %v6093 = vrcp.pop %v5845
    %v6094 = vmul.f32 %v5058, %v6093
    %v6095 = vrcp.pop %v5849
    %v6096 = vmul.f32 %v5095, %v6095
    %v6097 = vrcp.pop %v5851
    %v6098 = vmul.f32 %v5097, %v6097
    %v6099 = vrcp.pop %v5855
    %v6100 = vmul.f32 %v5099, %v6099
    %v6101 = vrcp.pop %v5857
    %v6102 = vmul.f32 %v5101, %v6101
    %v6103 = vrcp.pop %v5861
    %v6104 = vmul.f32 %v5138, %v6103
    %v6105 = vrcp.pop %v5863
    %v6106 = vmul.f32 %v5140, %v6105
    %v6107 = vrcp.pop %v5867
    %v6108 = vmul.f32 %v5142, %v6107
    %v6109 = vrcp.pop %v5869
    %v6110 = vmul.f32 %v5144, %v6109
    %v6111 = vrcp.pop %v5873
    %v6112 = vmul.f32 %v5181, %v6111
    %v6113 = vrcp.pop %v5875
    %v6114 = vmul.f32 %v5183, %v6113
    %v6115 = vrcp.pop %v5879
    %v6116 = vmul.f32 %v5185, %v6115
    %v6117 = vrcp.pop %v5881
    %v6118 = vmul.f32 %v5187, %v6117
    %v6119 = vrcp.pop %v5885
    %v6120 = vmul.f32 %v5224, %v6119
    %v6121 = vrcp.pop %v5887
    %v6122 = vmul.f32 %v5226, %v6121
    %v6123 = vrcp.pop %v5891
    %v6124 = vmul.f32 %v5228, %v6123
    %v6125 = vrcp.pop %v5893
    %v6126 = vmul.f32 %v5230, %v6125
    %v6127 = vrcp.pop %v5897
    %v6128 = vmul.f32 %v5267, %v6127
    %v6129 = vrcp.pop %v5899
    %v6130 = vmul.f32 %v5269, %v6129
    %v6131 = vrcp.pop %v5903
    %v6132 = vmul.f32 %v5271, %v6131
    %v6133 = vrcp.pop %v5905
    %v6134 = vmul.f32 %v5273, %v6133
    %v6135 = vrcp.pop %v5909
    %v6136 = vmul.f32 %v5310, %v6135
    %v6137 = vrcp.pop %v5911
    %v6138 = vmul.f32 %v5312, %v6137
    %v6139 = vrcp.pop %v5915
    %v6140 = vmul.f32 %v5314, %v6139
    %v6141 = vrcp.pop %v5917
    %v6142 = vmul.f32 %v5316, %v6141
    %v6143 = vrcp.pop %v5921
    %v6144 = vmul.f32 %v5353, %v6143
    %v6145 = vrcp.pop %v5923
    %v6146 = vmul.f32 %v5355, %v6145
    %v6147 = vrcp.pop %v5927
    %v6148 = vmul.f32 %v5357, %v6147
    %v6149 = vrcp.pop %v5929
    %v6150 = vmul.f32 %v5359, %v6149
    %v6151 = vrcp.pop %v5933
    %v6152 = vmul.f32 %v5396, %v6151
    %v6153 = vrcp.pop %v5935
    %v6154 = vmul.f32 %v5398, %v6153
    %v6155 = vrcp.pop %v5939
    %v6156 = vmul.f32 %v5400, %v6155
    %v6157 = vrcp.pop %v5941
    %v6158 = vmul.f32 %v5402, %v6157
    %v6159 = vrcp.pop %v5945
    %v6160 = vmul.f32 %v5439, %v6159
    %v6161 = vrcp.pop %v5947
    %v6162 = vmul.f32 %v5441, %v6161
    %v6163 = vrcp.pop %v5951
    %v6164 = vmul.f32 %v5443, %v6163
    %v6165 = vrcp.pop %v5953
    %v6166 = vmul.f32 %v5445, %v6165
    %v6167 = vrcp.pop %v5957
    %v6168 = vmul.f32 %v5482, %v6167
    %v6169 = vrcp.pop %v5959
    %v6170 = vmul.f32 %v5484, %v6169
    %v6171 = vrcp.pop %v5963
    %v6172 = vmul.f32 %v5486, %v6171
    %v6173 = vrcp.pop %v5965
    %v6174 = vmul.f32 %v5488, %v6173
    %v6175 = vrcp.pop %v5969
    %v6176 = vmul.f32 %v5525, %v6175
    %v6177 = vrcp.pop %v5971
    %v6178 = vmul.f32 %v5527, %v6177
    %v6179 = vrcp.pop %v5975
    %v6180 = vmul.f32 %v5529, %v6179
    %v6181 = vrcp.pop %v5977
    %v6182 = vmul.f32 %v5531, %v6181
    %v6183 = vrcp.pop %v5981
    %v6184 = vmul.f32 %v5568, %v6183
    %v6185 = vrcp.pop %v5983
    %v6186 = vmul.f32 %v5570, %v6185
    %v6187 = vrcp.pop %v5987
    %v6188 = vmul.f32 %v5572, %v6187
    %v6189 = vrcp.pop %v5989
    %v6190 = vmul.f32 %v5574, %v6189
    %v6191 = vrcp.pop %v5993
    %v6192 = vmul.f32 %v5611, %v6191
    %v6193 = vrcp.pop %v5995
    %v6194 = vmul.f32 %v5613, %v6193
    %v6195 = vrcp.pop %v5999
    %v6196 = vmul.f32 %v5615, %v6195
    %v6197 = vrcp.pop %v6001
    %v6198 = vmul.f32 %v5617, %v6197
    %v6199 = vrcp.pop %v6005
    %v6200 = vmul.f32 %v5654, %v6199
    %v6201 = vrcp.pop %v6007
    %v6202 = vmul.f32 %v5656, %v6201
    %v6203 = vrcp.pop %v6011
    %v6204 = vmul.f32 %v5658, %v6203
    %v6205 = vrcp.pop %v6013
    %v6206 = vmul.f32 %v5660, %v6205
    %v6207 = vpack.c.bf16 %v6020, %v6016
    %v6208 = vpack.c.bf16 %v6022, %v6018
    %v6209 = vpack.c.bf16 %v6028, %v6024
    %v6210 = vpack.c.bf16 %v6030, %v6026
    %v6211 = vpack.c.bf16 %v6036, %v6032
    %v6212 = vpack.c.bf16 %v6038, %v6034
    %v6213 = vpack.c.bf16 %v6044, %v6040
    %v6214 = vpack.c.bf16 %v6046, %v6042
    %v6215 = vpack.c.bf16 %v6052, %v6048
    %v6216 = vpack.c.bf16 %v6054, %v6050
    %v6217 = vpack.c.bf16 %v6060, %v6056
    %v6218 = vpack.c.bf16 %v6062, %v6058
    %v6219 = vpack.c.bf16 %v6068, %v6064
    %v6220 = vpack.c.bf16 %v6070, %v6066
    %v6221 = vpack.c.bf16 %v6076, %v6072
    %v6222 = vpack.c.bf16 %v6078, %v6074
    %v6223 = vpack.c.bf16 %v6084, %v6080
    %v6224 = vpack.c.bf16 %v6086, %v6082
    %v6225 = vpack.c.bf16 %v6092, %v6088
    %v6226 = vpack.c.bf16 %v6094, %v6090
    %v6227 = vpack.c.bf16 %v6100, %v6096
    %v6228 = vpack.c.bf16 %v6102, %v6098
    %v6229 = vpack.c.bf16 %v6108, %v6104
    %v6230 = vpack.c.bf16 %v6110, %v6106
    %v6231 = vpack.c.bf16 %v6116, %v6112
    %v6232 = vpack.c.bf16 %v6118, %v6114
    %v6233 = vpack.c.bf16 %v6124, %v6120
    %v6234 = vpack.c.bf16 %v6126, %v6122
    %v6235 = vpack.c.bf16 %v6132, %v6128
    %v6236 = vpack.c.bf16 %v6134, %v6130
    %v6237 = vpack.c.bf16 %v6140, %v6136
    %v6238 = vpack.c.bf16 %v6142, %v6138
    %v6239 = vpack.c.bf16 %v6148, %v6144
    %v6240 = vpack.c.bf16 %v6150, %v6146
    %v6241 = vpack.c.bf16 %v6156, %v6152
    %v6242 = vpack.c.bf16 %v6158, %v6154
    %v6243 = vpack.c.bf16 %v6164, %v6160
    %v6244 = vpack.c.bf16 %v6166, %v6162
    %v6245 = vpack.c.bf16 %v6172, %v6168
    %v6246 = vpack.c.bf16 %v6174, %v6170
    %v6247 = vpack.c.bf16 %v6180, %v6176
    %v6248 = vpack.c.bf16 %v6182, %v6178
    %v6249 = vpack.c.bf16 %v6188, %v6184
    %v6250 = vpack.c.bf16 %v6190, %v6186
    %v6251 = vpack.c.bf16 %v6196, %v6192
    %v6252 = vpack.c.bf16 %v6198, %v6194
    %v6253 = vpack.c.bf16 %v6204, %v6200
    %v6254 = vpack.c.bf16 %v6206, %v6202
    %v6255 = vld [vmem:[#allocation8] sm:$0xf]
    %v6256 = vld [vmem:[#allocation8 + $0x4] sm:$0xf]
    %v6257 = vld [vmem:[#allocation8 + $0x8] sm:$0xf]
    %v6258 = vld [vmem:[#allocation8 + $0xc] sm:$0xf]
    %v6259 = vld [vmem:[#allocation8 + $0x10] sm:$0xf]
    %v6260 = vld [vmem:[#allocation8 + $0x14] sm:$0xf]
    %v6261 = vld [vmem:[#allocation8 + $0x18] sm:$0xf]
    %v6262 = vld [vmem:[#allocation8 + $0x1c] sm:$0xf]
    %v6263 = vld [vmem:[#allocation8 + $0x20] sm:$0xf]
    %v6264 = vld [vmem:[#allocation8 + $0x24] sm:$0xf]
    %v6265 = vld [vmem:[#allocation8 + $0x28] sm:$0xf]
    %v6266 = vld [vmem:[#allocation8 + $0x2c] sm:$0xf]
    %v6267 = vld [vmem:[#allocation8 + $0x30] sm:$0xf]
    %v6268 = vld [vmem:[#allocation8 + $0x34] sm:$0xf]
    %v6269 = vld [vmem:[#allocation8 + $0x38] sm:$0xf]
    %v6270 = vld [vmem:[#allocation8 + $0x3c] sm:$0xf]
    %v6271 = vld [vmem:[#allocation8 + $0x40] sm:$0xf]
    %v6272 = vld [vmem:[#allocation8 + $0x44] sm:$0xf]
    %v6273 = vld [vmem:[#allocation8 + $0x48] sm:$0xf]
    %v6274 = vld [vmem:[#allocation8 + $0x4c] sm:$0xf]
    %v6275 = vld [vmem:[#allocation8 + $0x50] sm:$0xf]
    %v6276 = vld [vmem:[#allocation8 + $0x54] sm:$0xf]
    %v6277 = vld [vmem:[#allocation8 + $0x58] sm:$0xf]
    %v6278 = vld [vmem:[#allocation8 + $0x5c] sm:$0xf]
    %v6279 = vld [vmem:[#allocation8 + $0x60] sm:$0xf]
    %v6280 = vld [vmem:[#allocation8 + $0x64] sm:$0xf]
    %v6281 = vld [vmem:[#allocation8 + $0x68] sm:$0xf]
    %v6282 = vld [vmem:[#allocation8 + $0x6c] sm:$0xf]
    %v6283 = vld [vmem:[#allocation8 + $0x70] sm:$0xf]
    %v6284 = vld [vmem:[#allocation8 + $0x74] sm:$0xf]
    %v6285 = vld [vmem:[#allocation8 + $0x78] sm:$0xf]
    %v6286 = vld [vmem:[#allocation8 + $0x7c] sm:$0xf]
    %v6287 = vld [vmem:[%s5] sm:$0x1]
    %v6289 = vlaneseq
    %v6290 = vshrl.u32 %v6289, 7
    %v6291 = vsub.s32 0, %v6290
    %v6292 = vrot.slane %v6287, %v6291
    %v6326 = vunpack.c.l.b16 %v6255
    %v6327 = vunpack.c.l.b16 %v6256
    %v6328 = vunpack.c.l.b16 %v6257
    %v6329 = vunpack.c.l.b16 %v6258
    %v6330 = vunpack.c.l.b16 %v6259
    %v6331 = vunpack.c.l.b16 %v6260
    %v6332 = vunpack.c.l.b16 %v6261
    %v6333 = vunpack.c.l.b16 %v6262
    %v6334 = vunpack.c.l.b16 %v6263
    %v6335 = vunpack.c.l.b16 %v6264
    %v6336 = vunpack.c.l.b16 %v6265
    %v6337 = vunpack.c.l.b16 %v6266
    %v6338 = vunpack.c.l.b16 %v6267
    %v6339 = vunpack.c.l.b16 %v6268
    %v6340 = vunpack.c.l.b16 %v6269
    %v6341 = vunpack.c.l.b16 %v6270
    %v6342 = vunpack.c.l.b16 %v6271
    %v6343 = vunpack.c.l.b16 %v6272
    %v6344 = vunpack.c.l.b16 %v6273
    %v6345 = vunpack.c.l.b16 %v6274
    %v6346 = vunpack.c.l.b16 %v6275
    %v6347 = vunpack.c.l.b16 %v6276
    %v6348 = vunpack.c.l.b16 %v6277
    %v6349 = vunpack.c.l.b16 %v6278
    %v6350 = vunpack.c.l.b16 %v6279
    %v6351 = vunpack.c.l.b16 %v6280
    %v6352 = vunpack.c.l.b16 %v6281
    %v6353 = vunpack.c.l.b16 %v6282
    %v6354 = vunpack.c.l.b16 %v6283
    %v6355 = vunpack.c.l.b16 %v6284
    %v6356 = vunpack.c.l.b16 %v6285
    %v6357 = vunpack.c.l.b16 %v6286
    %v6358 = vpack.c.b16 %v6327, %v6326
    %v6359 = vpack.c.b16 %v6329, %v6328
    %v6360 = vpack.c.b16 %v6331, %v6330
    %v6361 = vpack.c.b16 %v6333, %v6332
    %v6362 = vpack.c.b16 %v6335, %v6334
    %v6363 = vpack.c.b16 %v6337, %v6336
    %v6364 = vpack.c.b16 %v6339, %v6338
    %v6365 = vpack.c.b16 %v6341, %v6340
    %v6366 = vpack.c.b16 %v6343, %v6342
    %v6367 = vpack.c.b16 %v6345, %v6344
    %v6368 = vpack.c.b16 %v6347, %v6346
    %v6369 = vpack.c.b16 %v6349, %v6348
    %v6370 = vpack.c.b16 %v6351, %v6350
    %v6371 = vpack.c.b16 %v6353, %v6352
    %v6372 = vpack.c.b16 %v6355, %v6354
    %v6373 = vpack.c.b16 %v6357, %v6356
    %6390 = vmatprep.subr.bf16.mxu0 0
    %6391 = vmatpush1.bf16.msra.mxu0 %v6358
    %6392 = vmatprep.subr.bf16.mxu0 0
    %6393 = vmatpush1.bf16.msra.mxu0 %v6359
    %6394 = vmatprep.subr.bf16.mxu0 0
    %6395 = vmatpush1.bf16.msra.mxu0 %v6360
    %6396 = vmatprep.subr.bf16.mxu0 0
    %6397 = vmatpush1.bf16.msra.mxu0 %v6361
    %6398 = vmatprep.subr.bf16.mxu0 0
    %6399 = vmatpush1.bf16.msra.mxu0 %v6362
    %6400 = vmatprep.subr.bf16.mxu0 0
    %6401 = vmatpush1.bf16.msra.mxu0 %v6363
    %6402 = vmatprep.subr.bf16.mxu0 0
    %6403 = vmatpush1.bf16.msra.mxu0 %v6364
    %6404 = vmatprep.subr.bf16.mxu0 0
    %6405 = vmatpush1.bf16.msra.mxu0 %v6365
    %6406 = vmatprep.subr.bf16.mxu0 0
    %6407 = vmatpush1.bf16.msra.mxu0 %v6366
    %6408 = vmatprep.subr.bf16.mxu0 0
    %6409 = vmatpush1.bf16.msra.mxu0 %v6367
    %6410 = vmatprep.subr.bf16.mxu0 0
    %6411 = vmatpush1.bf16.msra.mxu0 %v6368
    %6412 = vmatprep.subr.bf16.mxu0 0
    %6413 = vmatpush1.bf16.msra.mxu0 %v6369
    %6414 = vmatprep.subr.bf16.mxu0 0
    %6415 = vmatpush1.bf16.msra.mxu0 %v6370
    %6416 = vmatprep.subr.bf16.mxu0 0
    %6417 = vmatpush1.bf16.msra.mxu0 %v6371
    %6418 = vmatprep.subr.bf16.mxu0 0
    %6419 = vmatpush1.bf16.msra.mxu0 %v6372
    %6420 = vmatprep.subr.bf16.mxu0 0
    %6421 = vmatpush1.bf16.msra.mxu0 %v6373
    %6422 = vmatprep.mubr.bf16.mxu0 %v6208
    %6423 = vmatmul.mubr.bf16.gmra.mrb[0].mxu0 %v6207
    %v6424 = vpop.f32.mrb[0].mxu0
    %v6425 = vadd.f32 %v6292, %v6424
    %v6426 = vpop.f32.mrb[0].mxu0
    %v6427 = vpop.f32.mrb[0].mxu0
    %v6428 = vadd.f32 %v6292, %v6427
    %v6429 = vpop.f32.mrb[0].mxu0
    %6430 = vmatprep.mubr.bf16.mxu0 %v6210
    %6431 = vmatmul.mubr.bf16.gmra.mrb[0].mxu0 %v6209
    %v6432 = vpop.f32.mrb[0].mxu0
    %v6433 = vadd.f32 %v6292, %v6432
    %v6434 = vpop.f32.mrb[0].mxu0
    %v6435 = vpop.f32.mrb[0].mxu0
    %v6436 = vadd.f32 %v6292, %v6435
    %v6437 = vpop.f32.mrb[0].mxu0
    %6438 = vmatprep.mubr.bf16.mxu0 %v6212
    %6439 = vmatmul.mubr.bf16.gmra.mrb[0].mxu0 %v6211
    %v6440 = vpop.f32.mrb[0].mxu0
    %v6441 = vadd.f32 %v6292, %v6440
    %v6442 = vpop.f32.mrb[0].mxu0
    %v6443 = vpop.f32.mrb[0].mxu0
    %v6444 = vadd.f32 %v6292, %v6443
    %v6445 = vpop.f32.mrb[0].mxu0
    %6446 = vmatprep.mubr.bf16.mxu0 %v6214
    %6447 = vmatmul.mubr.bf16.gmra.mrb[0].mxu0 %v6213
    %v6448 = vpop.f32.mrb[0].mxu0
    %v6449 = vadd.f32 %v6292, %v6448
    %v6450 = vpop.f32.mrb[0].mxu0
    %v6451 = vpop.f32.mrb[0].mxu0
    %v6452 = vadd.f32 %v6292, %v6451
    %v6453 = vpop.f32.mrb[0].mxu0
    %6454 = vmatprep.mubr.bf16.mxu0 %v6216
    %6455 = vmatmul.mubr.bf16.gmra.mrb[0].mxu0 %v6215
    %v6456 = vpop.f32.mrb[0].mxu0
    %v6457 = vadd.f32 %v6292, %v6456
    %v6458 = vpop.f32.mrb[0].mxu0
    %v6459 = vpop.f32.mrb[0].mxu0
    %v6460 = vadd.f32 %v6292, %v6459
    %v6461 = vpop.f32.mrb[0].mxu0
    %6462 = vmatprep.mubr.bf16.mxu0 %v6218
    %6463 = vmatmul.mubr.bf16.gmra.mrb[0].mxu0 %v6217
    %v6464 = vpop.f32.mrb[0].mxu0
    %v6465 = vadd.f32 %v6292, %v6464
    %v6466 = vpop.f32.mrb[0].mxu0
    %v6467 = vpop.f32.mrb[0].mxu0
    %v6468 = vadd.f32 %v6292, %v6467
    %v6469 = vpop.f32.mrb[0].mxu0
    %6470 = vmatprep.mubr.bf16.mxu0 %v6220
    %6471 = vmatmul.mubr.bf16.gmra.mrb[0].mxu0 %v6219
    %v6472 = vpop.f32.mrb[0].mxu0
    %v6473 = vadd.f32 %v6292, %v6472
    %v6474 = vpop.f32.mrb[0].mxu0
    %v6475 = vpop.f32.mrb[0].mxu0
    %v6476 = vadd.f32 %v6292, %v6475
    %v6477 = vpop.f32.mrb[0].mxu0
    %6478 = vmatprep.mubr.bf16.mxu0 %v6222
    %6479 = vmatmul.mubr.bf16.gmra.mrb[0].mxu0 %v6221
    %v6480 = vpop.f32.mrb[0].mxu0
    %v6481 = vadd.f32 %v6292, %v6480
    %v6482 = vpop.f32.mrb[0].mxu0
    %v6483 = vpop.f32.mrb[0].mxu0
    %v6484 = vadd.f32 %v6292, %v6483
    %v6485 = vpop.f32.mrb[0].mxu0
    %6486 = vmatprep.mubr.bf16.mxu0 %v6224
    %6487 = vmatmul.mubr.bf16.gmra.mrb[0].mxu0 %v6223
    %v6488 = vpop.f32.mrb[0].mxu0
    %v6489 = vadd.f32 %v6292, %v6488
    %v6490 = vpop.f32.mrb[0].mxu0
    %v6491 = vpop.f32.mrb[0].mxu0
    %v6492 = vadd.f32 %v6292, %v6491
    %v6493 = vpop.f32.mrb[0].mxu0
    %6494 = vmatprep.mubr.bf16.mxu0 %v6226
    %6495 = vmatmul.mubr.bf16.gmra.mrb[0].mxu0 %v6225
    %v6496 = vpop.f32.mrb[0].mxu0
    %v6497 = vadd.f32 %v6292, %v6496
    %v6498 = vpop.f32.mrb[0].mxu0
    %v6499 = vpop.f32.mrb[0].mxu0
    %v6500 = vadd.f32 %v6292, %v6499
    %v6501 = vpop.f32.mrb[0].mxu0
    %6502 = vmatprep.mubr.bf16.mxu0 %v6228
    %6503 = vmatmul.mubr.bf16.gmra.mrb[0].mxu0 %v6227
    %v6504 = vpop.f32.mrb[0].mxu0
    %v6505 = vadd.f32 %v6292, %v6504
    %v6506 = vpop.f32.mrb[0].mxu0
    %v6507 = vpop.f32.mrb[0].mxu0
    %v6508 = vadd.f32 %v6292, %v6507
    %v6509 = vpop.f32.mrb[0].mxu0
    %6510 = vmatprep.mubr.bf16.mxu0 %v6230
    %6511 = vmatmul.mubr.bf16.gmra.mrb[0].mxu0 %v6229
    %v6512 = vpop.f32.mrb[0].mxu0
    %v6513 = vadd.f32 %v6292, %v6512
    %v6514 = vpop.f32.mrb[0].mxu0
    %v6515 = vpop.f32.mrb[0].mxu0
    %v6516 = vadd.f32 %v6292, %v6515
    %v6517 = vpop.f32.mrb[0].mxu0
    %6518 = vmatprep.mubr.bf16.mxu0 %v6232
    %6519 = vmatmul.mubr.bf16.gmra.mrb[0].mxu0 %v6231
    %v6520 = vpop.f32.mrb[0].mxu0
    %v6521 = vadd.f32 %v6292, %v6520
    %v6522 = vpop.f32.mrb[0].mxu0
    %v6523 = vpop.f32.mrb[0].mxu0
    %v6524 = vadd.f32 %v6292, %v6523
    %v6525 = vpop.f32.mrb[0].mxu0
    %6526 = vmatprep.mubr.bf16.mxu0 %v6234
    %6527 = vmatmul.mubr.bf16.gmra.mrb[0].mxu0 %v6233
    %v6528 = vpop.f32.mrb[0].mxu0
    %v6529 = vadd.f32 %v6292, %v6528
    %v6530 = vpop.f32.mrb[0].mxu0
    %v6531 = vpop.f32.mrb[0].mxu0
    %v6532 = vadd.f32 %v6292, %v6531
    %v6533 = vpop.f32.mrb[0].mxu0
    %6534 = vmatprep.mubr.bf16.mxu0 %v6236
    %6535 = vmatmul.mubr.bf16.gmra.mrb[0].mxu0 %v6235
    %v6536 = vpop.f32.mrb[0].mxu0
    %v6537 = vadd.f32 %v6292, %v6536
    %v6538 = vpop.f32.mrb[0].mxu0
    %v6539 = vpop.f32.mrb[0].mxu0
    %v6540 = vadd.f32 %v6292, %v6539
    %v6541 = vpop.f32.mrb[0].mxu0
    %6542 = vmatprep.mubr.bf16.mxu0 %v6238
    %6543 = vmatmul.mubr.bf16.gmra.mrb[0].mxu0 %v6237
    %v6544 = vpop.f32.mrb[0].mxu0
    %v6545 = vadd.f32 %v6292, %v6544
    %v6546 = vpop.f32.mrb[0].mxu0
    %v6547 = vpop.f32.mrb[0].mxu0
    %v6548 = vadd.f32 %v6292, %v6547
    %v6549 = vpop.f32.mrb[0].mxu0
    %6550 = vmatprep.mubr.bf16.mxu0 %v6240
    %6551 = vmatmul.mubr.bf16.gmra.mrb[0].mxu0 %v6239
    %v6552 = vpop.f32.mrb[0].mxu0
    %v6553 = vadd.f32 %v6292, %v6552
    %v6554 = vpop.f32.mrb[0].mxu0
    %v6555 = vpop.f32.mrb[0].mxu0
    %v6556 = vadd.f32 %v6292, %v6555
    %v6557 = vpop.f32.mrb[0].mxu0
    %6558 = vmatprep.mubr.bf16.mxu0 %v6242
    %6559 = vmatmul.mubr.bf16.gmra.mrb[0].mxu0 %v6241
    %v6560 = vpop.f32.mrb[0].mxu0
    %v6561 = vadd.f32 %v6292, %v6560
    %v6562 = vpop.f32.mrb[0].mxu0
    %v6563 = vpop.f32.mrb[0].mxu0
    %v6564 = vadd.f32 %v6292, %v6563
    %v6565 = vpop.f32.mrb[0].mxu0
    %6566 = vmatprep.mubr.bf16.mxu0 %v6244
    %6567 = vmatmul.mubr.bf16.gmra.mrb[0].mxu0 %v6243
    %v6568 = vpop.f32.mrb[0].mxu0
    %v6569 = vadd.f32 %v6292, %v6568
    %v6570 = vpop.f32.mrb[0].mxu0
    %v6571 = vpop.f32.mrb[0].mxu0
    %v6572 = vadd.f32 %v6292, %v6571
    %v6573 = vpop.f32.mrb[0].mxu0
    %6574 = vmatprep.mubr.bf16.mxu0 %v6246
    %6575 = vmatmul.mubr.bf16.gmra.mrb[0].mxu0 %v6245
    %v6576 = vpop.f32.mrb[0].mxu0
    %v6577 = vadd.f32 %v6292, %v6576
    %v6578 = vpop.f32.mrb[0].mxu0
    %v6579 = vpop.f32.mrb[0].mxu0
    %v6580 = vadd.f32 %v6292, %v6579
    %v6581 = vpop.f32.mrb[0].mxu0
    %6582 = vmatprep.mubr.bf16.mxu0 %v6248
    %6583 = vmatmul.mubr.bf16.gmra.mrb[0].mxu0 %v6247
    %v6584 = vpop.f32.mrb[0].mxu0
    %v6585 = vadd.f32 %v6292, %v6584
    %v6586 = vpop.f32.mrb[0].mxu0
    %v6587 = vpop.f32.mrb[0].mxu0
    %v6588 = vadd.f32 %v6292, %v6587
    %v6589 = vpop.f32.mrb[0].mxu0
    %6590 = vmatprep.mubr.bf16.mxu0 %v6250
    %6591 = vmatmul.mubr.bf16.gmra.mrb[0].mxu0 %v6249
    %v6592 = vpop.f32.mrb[0].mxu0
    %v6593 = vadd.f32 %v6292, %v6592
    %v6594 = vpop.f32.mrb[0].mxu0
    %v6595 = vpop.f32.mrb[0].mxu0
    %v6596 = vadd.f32 %v6292, %v6595
    %v6597 = vpop.f32.mrb[0].mxu0
    %6598 = vmatprep.mubr.bf16.mxu0 %v6252
    %6599 = vmatmul.mubr.bf16.gmra.mrb[0].mxu0 %v6251
    %v6600 = vpop.f32.mrb[0].mxu0
    %v6601 = vadd.f32 %v6292, %v6600
    %v6602 = vpop.f32.mrb[0].mxu0
    %v6603 = vpop.f32.mrb[0].mxu0
    %v6604 = vadd.f32 %v6292, %v6603
    %v6605 = vpop.f32.mrb[0].mxu0
    %6606 = vmatprep.mubr.bf16.mxu0 %v6254
    %6607 = vmatmul.mubr.bf16.gmra.mrb[0].mxu0 %v6253
    %v6608 = vpop.f32.mrb[0].mxu0
    %v6609 = vadd.f32 %v6292, %v6608
    %v6610 = vpop.f32.mrb[0].mxu0
    %v6611 = vpop.f32.mrb[0].mxu0
    %v6612 = vadd.f32 %v6292, %v6611
    %v6613 = vpop.f32.mrb[0].mxu0
    %6614 = vdwg.mxu0
    %v6615 = vadd.f32 %v131, %v6425
    %v6616 = vadd.f32 %v132, %v6428
    %v6617 = vadd.f32 %v133, %v6433
    %v6618 = vadd.f32 %v134, %v6436
    %v6619 = vadd.f32 %v135, %v6441
    %v6620 = vadd.f32 %v136, %v6444
    %v6621 = vadd.f32 %v137, %v6449
    %v6622 = vadd.f32 %v138, %v6452
    %v6623 = vadd.f32 %v139, %v6457
    %v6624 = vadd.f32 %v140, %v6460
    %v6625 = vadd.f32 %v141, %v6465
    %v6626 = vadd.f32 %v142, %v6468
    %v6627 = vadd.f32 %v143, %v6473
    %v6628 = vadd.f32 %v144, %v6476
    %v6629 = vadd.f32 %v145, %v6481
    %v6630 = vadd.f32 %v146, %v6484
    %v6631 = vadd.f32 %v147, %v6489
    %v6632 = vadd.f32 %v148, %v6492
    %v6633 = vadd.f32 %v149, %v6497
    %v6634 = vadd.f32 %v150, %v6500
    %v6635 = vadd.f32 %v151, %v6505
    %v6636 = vadd.f32 %v152, %v6508
    %v6637 = vadd.f32 %v153, %v6513
    %v6638 = vadd.f32 %v154, %v6516
    %v6639 = vadd.f32 %v155, %v6521
    %v6640 = vadd.f32 %v156, %v6524
    %v6641 = vadd.f32 %v157, %v6529
    %v6642 = vadd.f32 %v158, %v6532
    %v6643 = vadd.f32 %v159, %v6537
    %v6644 = vadd.f32 %v160, %v6540
    %v6645 = vadd.f32 %v161, %v6545
    %v6646 = vadd.f32 %v162, %v6548
    %v6647 = vadd.f32 %v163, %v6553
    %v6648 = vadd.f32 %v164, %v6556
    %v6649 = vadd.f32 %v165, %v6561
    %v6650 = vadd.f32 %v166, %v6564
    %v6651 = vadd.f32 %v167, %v6569
    %v6652 = vadd.f32 %v168, %v6572
    %v6653 = vadd.f32 %v169, %v6577
    %v6654 = vadd.f32 %v170, %v6580
    %v6655 = vadd.f32 %v171, %v6585
    %v6656 = vadd.f32 %v172, %v6588
    %v6657 = vadd.f32 %v173, %v6593
    %v6658 = vadd.f32 %v174, %v6596
    %v6659 = vadd.f32 %v175, %v6601
    %v6660 = vadd.f32 %v176, %v6604
    %v6661 = vadd.f32 %v177, %v6609
    %v6662 = vadd.f32 %v178, %v6612
    %v6663 = vld [vmem:[%s6] sm:$0x1]
    %v6664 = vld [vmem:[%s7] sm:$0x1]
    %6665 = vadd.xlane.f32.xlu0 %v6615
    %v6666 = vpop.xlane.xlu0 %6665
    %6667 = vadd.xlane.f32.xlu0 %v6616
    %v6668 = vpop.xlane.xlu0 %6667
    %6669 = vadd.xlane.f32.xlu0 %v6617
    %v6670 = vpop.xlane.xlu0 %6669
    %6671 = vadd.xlane.f32.xlu0 %v6618
    %v6672 = vpop.xlane.xlu0 %6671
    %6673 = vadd.xlane.f32.xlu0 %v6619
    %v6674 = vpop.xlane.xlu0 %6673
    %6675 = vadd.xlane.f32.xlu0 %v6620
    %v6676 = vpop.xlane.xlu0 %6675
    %6677 = vadd.xlane.f32.xlu0 %v6621
    %v6678 = vpop.xlane.xlu0 %6677
    %6679 = vadd.xlane.f32.xlu0 %v6622
    %v6680 = vpop.xlane.xlu0 %6679
    %6681 = vadd.xlane.f32.xlu0 %v6623
    %v6682 = vpop.xlane.xlu0 %6681
    %6683 = vadd.xlane.f32.xlu0 %v6624
    %v6684 = vpop.xlane.xlu0 %6683
    %6685 = vadd.xlane.f32.xlu0 %v6625
    %v6686 = vpop.xlane.xlu0 %6685
    %6687 = vadd.xlane.f32.xlu0 %v6626
    %v6688 = vpop.xlane.xlu0 %6687
    %6689 = vadd.xlane.f32.xlu0 %v6627
    %v6690 = vpop.xlane.xlu0 %6689
    %6691 = vadd.xlane.f32.xlu0 %v6628
    %v6692 = vpop.xlane.xlu0 %6691
    %6693 = vadd.xlane.f32.xlu0 %v6629
    %v6694 = vpop.xlane.xlu0 %6693
    %6695 = vadd.xlane.f32.xlu0 %v6630
    %v6696 = vpop.xlane.xlu0 %6695
    %6697 = vadd.xlane.f32.xlu0 %v6631
    %v6698 = vpop.xlane.xlu0 %6697
    %6699 = vadd.xlane.f32.xlu0 %v6632
    %v6700 = vpop.xlane.xlu0 %6699
    %6701 = vadd.xlane.f32.xlu0 %v6633
    %v6702 = vpop.xlane.xlu0 %6701
    %6703 = vadd.xlane.f32.xlu0 %v6634
    %v6704 = vpop.xlane.xlu0 %6703
    %6705 = vadd.xlane.f32.xlu0 %v6635
    %v6706 = vpop.xlane.xlu0 %6705
    %6707 = vadd.xlane.f32.xlu0 %v6636
    %v6708 = vpop.xlane.xlu0 %6707
    %6709 = vadd.xlane.f32.xlu0 %v6637
    %v6710 = vpop.xlane.xlu0 %6709
    %6711 = vadd.xlane.f32.xlu0 %v6638
    %v6712 = vpop.xlane.xlu0 %6711
    %6713 = vadd.xlane.f32.xlu0 %v6639
    %v6714 = vpop.xlane.xlu0 %6713
    %6715 = vadd.xlane.f32.xlu0 %v6640
    %v6716 = vpop.xlane.xlu0 %6715
    %6717 = vadd.xlane.f32.xlu0 %v6641
    %v6718 = vpop.xlane.xlu0 %6717
    %6719 = vadd.xlane.f32.xlu0 %v6642
    %v6720 = vpop.xlane.xlu0 %6719
    %6721 = vadd.xlane.f32.xlu0 %v6643
    %v6722 = vpop.xlane.xlu0 %6721
    %6723 = vadd.xlane.f32.xlu0 %v6644
    %v6724 = vpop.xlane.xlu0 %6723
    %6725 = vadd.xlane.f32.xlu0 %v6645
    %v6726 = vpop.xlane.xlu0 %6725
    %6727 = vadd.xlane.f32.xlu0 %v6646
    %v6728 = vpop.xlane.xlu0 %6727
    %6729 = vadd.xlane.f32.xlu0 %v6647
    %v6730 = vpop.xlane.xlu0 %6729
    %6731 = vadd.xlane.f32.xlu0 %v6648
    %v6732 = vpop.xlane.xlu0 %6731
    %6733 = vadd.xlane.f32.xlu0 %v6649
    %v6734 = vpop.xlane.xlu0 %6733
    %6735 = vadd.xlane.f32.xlu0 %v6650
    %v6736 = vpop.xlane.xlu0 %6735
    %6737 = vadd.xlane.f32.xlu0 %v6651
    %v6738 = vpop.xlane.xlu0 %6737
    %6739 = vadd.xlane.f32.xlu0 %v6652
    %v6740 = vpop.xlane.xlu0 %6739
    %6741 = vadd.xlane.f32.xlu0 %v6653
    %v6742 = vpop.xlane.xlu0 %6741
    %6743 = vadd.xlane.f32.xlu0 %v6654
    %v6744 = vpop.xlane.xlu0 %6743
    %6745 = vadd.xlane.f32.xlu0 %v6655
    %v6746 = vpop.xlane.xlu0 %6745
    %6747 = vadd.xlane.f32.xlu0 %v6656
    %v6748 = vpop.xlane.xlu0 %6747
    %6749 = vadd.xlane.f32.xlu0 %v6657
    %v6750 = vpop.xlane.xlu0 %6749
    %6751 = vadd.xlane.f32.xlu0 %v6658
    %v6752 = vpop.xlane.xlu0 %6751
    %6753 = vadd.xlane.f32.xlu0 %v6659
    %v6754 = vpop.xlane.xlu0 %6753
    %6755 = vadd.xlane.f32.xlu0 %v6660
    %v6756 = vpop.xlane.xlu0 %6755
    %6757 = vadd.xlane.f32.xlu0 %v6661
    %v6758 = vpop.xlane.xlu0 %6757
    %6759 = vadd.xlane.f32.xlu0 %v6662
    %v6760 = vpop.xlane.xlu0 %6759
    %v6761 = vrcp.pop 128.0
    %v6762 = vmul.f32 %v6666, %v6761
    %v6763 = vmul.f32 %v6668, %v6761
    %v6764 = vmul.f32 %v6670, %v6761
    %v6765 = vmul.f32 %v6672, %v6761
    %v6766 = vmul.f32 %v6674, %v6761
    %v6767 = vmul.f32 %v6676, %v6761
    %v6768 = vmul.f32 %v6678, %v6761
    %v6769 = vmul.f32 %v6680, %v6761
    %v6770 = vmul.f32 %v6682, %v6761
    %v6771 = vmul.f32 %v6684, %v6761
    %v6772 = vmul.f32 %v6686, %v6761
    %v6773 = vmul.f32 %v6688, %v6761
    %v6774 = vmul.f32 %v6690, %v6761
    %v6775 = vmul.f32 %v6692, %v6761
    %v6776 = vmul.f32 %v6694, %v6761
    %v6777 = vmul.f32 %v6696, %v6761
    %v6778 = vmul.f32 %v6698, %v6761
    %v6779 = vmul.f32 %v6700, %v6761
    %v6780 = vmul.f32 %v6702, %v6761
    %v6781 = vmul.f32 %v6704, %v6761
    %v6782 = vmul.f32 %v6706, %v6761
    %v6783 = vmul.f32 %v6708, %v6761
    %v6784 = vmul.f32 %v6710, %v6761
    %v6785 = vmul.f32 %v6712, %v6761
    %v6786 = vmul.f32 %v6714, %v6761
    %v6787 = vmul.f32 %v6716, %v6761
    %v6788 = vmul.f32 %v6718, %v6761
    %v6789 = vmul.f32 %v6720, %v6761
    %v6790 = vmul.f32 %v6722, %v6761
    %v6791 = vmul.f32 %v6724, %v6761
    %v6792 = vmul.f32 %v6726, %v6761
    %v6793 = vmul.f32 %v6728, %v6761
    %v6794 = vmul.f32 %v6730, %v6761
    %v6795 = vmul.f32 %v6732, %v6761
    %v6796 = vmul.f32 %v6734, %v6761
    %v6797 = vmul.f32 %v6736, %v6761
    %v6798 = vmul.f32 %v6738, %v6761
    %v6799 = vmul.f32 %v6740, %v6761
    %v6800 = vmul.f32 %v6742, %v6761
    %v6801 = vmul.f32 %v6744, %v6761
    %v6802 = vmul.f32 %v6746, %v6761
    %v6803 = vmul.f32 %v6748, %v6761
    %v6804 = vmul.f32 %v6750, %v6761
    %v6805 = vmul.f32 %v6752, %v6761
    %v6806 = vmul.f32 %v6754, %v6761
    %v6807 = vmul.f32 %v6756, %v6761
    %v6808 = vmul.f32 %v6758, %v6761
    %v6809 = vmul.f32 %v6760, %v6761
    %v6810 = vsub.f32 %v6615, %v6762
    %v6811 = vsub.f32 %v6616, %v6763
    %v6812 = vsub.f32 %v6617, %v6764
    %v6813 = vsub.f32 %v6618, %v6765
    %v6814 = vsub.f32 %v6619, %v6766
    %v6815 = vsub.f32 %v6620, %v6767
    %v6816 = vsub.f32 %v6621, %v6768
    %v6817 = vsub.f32 %v6622, %v6769
    %v6818 = vsub.f32 %v6623, %v6770
    %v6819 = vsub.f32 %v6624, %v6771
    %v6820 = vsub.f32 %v6625, %v6772
    %v6821 = vsub.f32 %v6626, %v6773
    %v6822 = vsub.f32 %v6627, %v6774
    %v6823 = vsub.f32 %v6628, %v6775
    %v6824 = vsub.f32 %v6629, %v6776
    %v6825 = vsub.f32 %v6630, %v6777
    %v6826 = vsub.f32 %v6631, %v6778
    %v6827 = vsub.f32 %v6632, %v6779
    %v6828 = vsub.f32 %v6633, %v6780
    %v6829 = vsub.f32 %v6634, %v6781
    %v6830 = vsub.f32 %v6635, %v6782
    %v6831 = vsub.f32 %v6636, %v6783
    %v6832 = vsub.f32 %v6637, %v6784
    %v6833 = vsub.f32 %v6638, %v6785
    %v6834 = vsub.f32 %v6639, %v6786
    %v6835 = vsub.f32 %v6640, %v6787
    %v6836 = vsub.f32 %v6641, %v6788
    %v6837 = vsub.f32 %v6642, %v6789
    %v6838 = vsub.f32 %v6643, %v6790
    %v6839 = vsub.f32 %v6644, %v6791
    %v6840 = vsub.f32 %v6645, %v6792
    %v6841 = vsub.f32 %v6646, %v6793
    %v6842 = vsub.f32 %v6647, %v6794
    %v6843 = vsub.f32 %v6648, %v6795
    %v6844 = vsub.f32 %v6649, %v6796
    %v6845 = vsub.f32 %v6650, %v6797
    %v6846 = vsub.f32 %v6651, %v6798
    %v6847 = vsub.f32 %v6652, %v6799
    %v6848 = vsub.f32 %v6653, %v6800
    %v6849 = vsub.f32 %v6654, %v6801
    %v6850 = vsub.f32 %v6655, %v6802
    %v6851 = vsub.f32 %v6656, %v6803
    %v6852 = vsub.f32 %v6657, %v6804
    %v6853 = vsub.f32 %v6658, %v6805
    %v6854 = vsub.f32 %v6659, %v6806
    %v6855 = vsub.f32 %v6660, %v6807
    %v6856 = vsub.f32 %v6661, %v6808
    %v6857 = vsub.f32 %v6662, %v6809
    %v6858 = vmul.f32 %v6810, %v6810
    %v6859 = vmul.f32 %v6811, %v6811
    %v6860 = vmul.f32 %v6812, %v6812
    %v6861 = vmul.f32 %v6813, %v6813
    %v6862 = vmul.f32 %v6814, %v6814
    %v6863 = vmul.f32 %v6815, %v6815
    %v6864 = vmul.f32 %v6816, %v6816
    %v6865 = vmul.f32 %v6817, %v6817
    %v6866 = vmul.f32 %v6818, %v6818
    %v6867 = vmul.f32 %v6819, %v6819
    %v6868 = vmul.f32 %v6820, %v6820
    %v6869 = vmul.f32 %v6821, %v6821
    %v6870 = vmul.f32 %v6822, %v6822
    %v6871 = vmul.f32 %v6823, %v6823
    %v6872 = vmul.f32 %v6824, %v6824
    %v6873 = vmul.f32 %v6825, %v6825
    %v6874 = vmul.f32 %v6826, %v6826
    %v6875 = vmul.f32 %v6827, %v6827
    %v6876 = vmul.f32 %v6828, %v6828
    %v6877 = vmul.f32 %v6829, %v6829
    %v6878 = vmul.f32 %v6830, %v6830
    %v6879 = vmul.f32 %v6831, %v6831
    %v6880 = vmul.f32 %v6832, %v6832
    %v6881 = vmul.f32 %v6833, %v6833
    %v6882 = vmul.f32 %v6834, %v6834
    %v6883 = vmul.f32 %v6835, %v6835
    %v6884 = vmul.f32 %v6836, %v6836
    %v6885 = vmul.f32 %v6837, %v6837
    %v6886 = vmul.f32 %v6838, %v6838
    %v6887 = vmul.f32 %v6839, %v6839
    %v6888 = vmul.f32 %v6840, %v6840
    %v6889 = vmul.f32 %v6841, %v6841
    %v6890 = vmul.f32 %v6842, %v6842
    %v6891 = vmul.f32 %v6843, %v6843
    %v6892 = vmul.f32 %v6844, %v6844
    %v6893 = vmul.f32 %v6845, %v6845
    %v6894 = vmul.f32 %v6846, %v6846
    %v6895 = vmul.f32 %v6847, %v6847
    %v6896 = vmul.f32 %v6848, %v6848
    %v6897 = vmul.f32 %v6849, %v6849
    %v6898 = vmul.f32 %v6850, %v6850
    %v6899 = vmul.f32 %v6851, %v6851
    %v6900 = vmul.f32 %v6852, %v6852
    %v6901 = vmul.f32 %v6853, %v6853
    %v6902 = vmul.f32 %v6854, %v6854
    %v6903 = vmul.f32 %v6855, %v6855
    %v6904 = vmul.f32 %v6856, %v6856
    %v6905 = vmul.f32 %v6857, %v6857
    %6906 = vadd.xlane.f32.xlu0 %v6858
    %v6907 = vpop.xlane.xlu0 %6906
    %6908 = vadd.xlane.f32.xlu0 %v6859
    %v6909 = vpop.xlane.xlu0 %6908
    %6910 = vadd.xlane.f32.xlu0 %v6860
    %v6911 = vpop.xlane.xlu0 %6910
    %6912 = vadd.xlane.f32.xlu0 %v6861
    %v6913 = vpop.xlane.xlu0 %6912
    %6914 = vadd.xlane.f32.xlu0 %v6862
    %v6915 = vpop.xlane.xlu0 %6914
    %6916 = vadd.xlane.f32.xlu0 %v6863
    %v6917 = vpop.xlane.xlu0 %6916
    %6918 = vadd.xlane.f32.xlu0 %v6864
    %v6919 = vpop.xlane.xlu0 %6918
    %6920 = vadd.xlane.f32.xlu0 %v6865
    %v6921 = vpop.xlane.xlu0 %6920
    %6922 = vadd.xlane.f32.xlu0 %v6866
    %v6923 = vpop.xlane.xlu0 %6922
    %6924 = vadd.xlane.f32.xlu0 %v6867
    %v6925 = vpop.xlane.xlu0 %6924
    %6926 = vadd.xlane.f32.xlu0 %v6868
    %v6927 = vpop.xlane.xlu0 %6926
    %6928 = vadd.xlane.f32.xlu0 %v6869
    %v6929 = vpop.xlane.xlu0 %6928
    %6930 = vadd.xlane.f32.xlu0 %v6870
    %v6931 = vpop.xlane.xlu0 %6930
    %6932 = vadd.xlane.f32.xlu0 %v6871
    %v6933 = vpop.xlane.xlu0 %6932
    %6934 = vadd.xlane.f32.xlu0 %v6872
    %v6935 = vpop.xlane.xlu0 %6934
    %6936 = vadd.xlane.f32.xlu0 %v6873
    %v6937 = vpop.xlane.xlu0 %6936
    %6938 = vadd.xlane.f32.xlu0 %v6874
    %v6939 = vpop.xlane.xlu0 %6938
    %6940 = vadd.xlane.f32.xlu0 %v6875
    %v6941 = vpop.xlane.xlu0 %6940
    %6942 = vadd.xlane.f32.xlu0 %v6876
    %v6943 = vpop.xlane.xlu0 %6942
    %6944 = vadd.xlane.f32.xlu0 %v6877
    %v6945 = vpop.xlane.xlu0 %6944
    %6946 = vadd.xlane.f32.xlu0 %v6878
    %v6947 = vpop.xlane.xlu0 %6946
    %6948 = vadd.xlane.f32.xlu0 %v6879
    %v6949 = vpop.xlane.xlu0 %6948
    %6950 = vadd.xlane.f32.xlu0 %v6880
    %v6951 = vpop.xlane.xlu0 %6950
    %6952 = vadd.xlane.f32.xlu0 %v6881
    %v6953 = vpop.xlane.xlu0 %6952
    %6954 = vadd.xlane.f32.xlu0 %v6882
    %v6955 = vpop.xlane.xlu0 %6954
    %6956 = vadd.xlane.f32.xlu0 %v6883
    %v6957 = vpop.xlane.xlu0 %6956
    %6958 = vadd.xlane.f32.xlu0 %v6884
    %v6959 = vpop.xlane.xlu0 %6958
    %6960 = vadd.xlane.f32.xlu0 %v6885
    %v6961 = vpop.xlane.xlu0 %6960
    %6962 = vadd.xlane.f32.xlu0 %v6886
    %v6963 = vpop.xlane.xlu0 %6962
    %6964 = vadd.xlane.f32.xlu0 %v6887
    %v6965 = vpop.xlane.xlu0 %6964
    %6966 = vadd.xlane.f32.xlu0 %v6888
    %v6967 = vpop.xlane.xlu0 %6966
    %6968 = vadd.xlane.f32.xlu0 %v6889
    %v6969 = vpop.xlane.xlu0 %6968
    %6970 = vadd.xlane.f32.xlu0 %v6890
    %v6971 = vpop.xlane.xlu0 %6970
    %6972 = vadd.xlane.f32.xlu0 %v6891
    %v6973 = vpop.xlane.xlu0 %6972
    %6974 = vadd.xlane.f32.xlu0 %v6892
    %v6975 = vpop.xlane.xlu0 %6974
    %6976 = vadd.xlane.f32.xlu0 %v6893
    %v6977 = vpop.xlane.xlu0 %6976
    %6978 = vadd.xlane.f32.xlu0 %v6894
    %v6979 = vpop.xlane.xlu0 %6978
    %6980 = vadd.xlane.f32.xlu0 %v6895
    %v6981 = vpop.xlane.xlu0 %6980
    %6982 = vadd.xlane.f32.xlu0 %v6896
    %v6983 = vpop.xlane.xlu0 %6982
    %6984 = vadd.xlane.f32.xlu0 %v6897
    %v6985 = vpop.xlane.xlu0 %6984
    %6986 = vadd.xlane.f32.xlu0 %v6898
    %v6987 = vpop.xlane.xlu0 %6986
    %6988 = vadd.xlane.f32.xlu0 %v6899
    %v6989 = vpop.xlane.xlu0 %6988
    %6990 = vadd.xlane.f32.xlu0 %v6900
    %v6991 = vpop.xlane.xlu0 %6990
    %6992 = vadd.xlane.f32.xlu0 %v6901
    %v6993 = vpop.xlane.xlu0 %6992
    %6994 = vadd.xlane.f32.xlu0 %v6902
    %v6995 = vpop.xlane.xlu0 %6994
    %6996 = vadd.xlane.f32.xlu0 %v6903
    %v6997 = vpop.xlane.xlu0 %6996
    %6998 = vadd.xlane.f32.xlu0 %v6904
    %v6999 = vpop.xlane.xlu0 %6998
    %7000 = vadd.xlane.f32.xlu0 %v6905
    %v7001 = vpop.xlane.xlu0 %7000
    %v7002 = vmul.f32 %v6907, %v6761
    %v7003 = vmul.f32 %v6909, %v6761
    %v7004 = vmul.f32 %v6911, %v6761
    %v7005 = vmul.f32 %v6913, %v6761
    %v7006 = vmul.f32 %v6915, %v6761
    %v7007 = vmul.f32 %v6917, %v6761
    %v7008 = vmul.f32 %v6919, %v6761
    %v7009 = vmul.f32 %v6921, %v6761
    %v7010 = vmul.f32 %v6923, %v6761
    %v7011 = vmul.f32 %v6925, %v6761
    %v7012 = vmul.f32 %v6927, %v6761
    %v7013 = vmul.f32 %v6929, %v6761
    %v7014 = vmul.f32 %v6931, %v6761
    %v7015 = vmul.f32 %v6933, %v6761
    %v7016 = vmul.f32 %v6935, %v6761
    %v7017 = vmul.f32 %v6937, %v6761
    %v7018 = vmul.f32 %v6939, %v6761
    %v7019 = vmul.f32 %v6941, %v6761
    %v7020 = vmul.f32 %v6943, %v6761
    %v7021 = vmul.f32 %v6945, %v6761
    %v7022 = vmul.f32 %v6947, %v6761
    %v7023 = vmul.f32 %v6949, %v6761
    %v7024 = vmul.f32 %v6951, %v6761
    %v7025 = vmul.f32 %v6953, %v6761
    %v7026 = vmul.f32 %v6955, %v6761
    %v7027 = vmul.f32 %v6957, %v6761
    %v7028 = vmul.f32 %v6959, %v6761
    %v7029 = vmul.f32 %v6961, %v6761
    %v7030 = vmul.f32 %v6963, %v6761
    %v7031 = vmul.f32 %v6965, %v6761
    %v7032 = vmul.f32 %v6967, %v6761
    %v7033 = vmul.f32 %v6969, %v6761
    %v7034 = vmul.f32 %v6971, %v6761
    %v7035 = vmul.f32 %v6973, %v6761
    %v7036 = vmul.f32 %v6975, %v6761
    %v7037 = vmul.f32 %v6977, %v6761
    %v7038 = vmul.f32 %v6979, %v6761
    %v7039 = vmul.f32 %v6981, %v6761
    %v7040 = vmul.f32 %v6983, %v6761
    %v7041 = vmul.f32 %v6985, %v6761
    %v7042 = vmul.f32 %v6987, %v6761
    %v7043 = vmul.f32 %v6989, %v6761
    %v7044 = vmul.f32 %v6991, %v6761
    %v7045 = vmul.f32 %v6993, %v6761
    %v7046 = vmul.f32 %v6995, %v6761
    %v7047 = vmul.f32 %v6997, %v6761
    %v7048 = vmul.f32 %v6999, %v6761
    %v7049 = vmul.f32 %v7001, %v6761
    %v7050 = vadd.f32 %v7002, 1e-05
    %v7051 = vadd.f32 %v7003, 1e-05
    %v7052 = vadd.f32 %v7004, 1e-05
    %v7053 = vadd.f32 %v7005, 1e-05
    %v7054 = vadd.f32 %v7006, 1e-05
    %v7055 = vadd.f32 %v7007, 1e-05
    %v7056 = vadd.f32 %v7008, 1e-05
    %v7057 = vadd.f32 %v7009, 1e-05
    %v7058 = vadd.f32 %v7010, 1e-05
    %v7059 = vadd.f32 %v7011, 1e-05
    %v7060 = vadd.f32 %v7012, 1e-05
    %v7061 = vadd.f32 %v7013, 1e-05
    %v7062 = vadd.f32 %v7014, 1e-05
    %v7063 = vadd.f32 %v7015, 1e-05
    %v7064 = vadd.f32 %v7016, 1e-05
    %v7065 = vadd.f32 %v7017, 1e-05
    %v7066 = vadd.f32 %v7018, 1e-05
    %v7067 = vadd.f32 %v7019, 1e-05
    %v7068 = vadd.f32 %v7020, 1e-05
    %v7069 = vadd.f32 %v7021, 1e-05
    %v7070 = vadd.f32 %v7022, 1e-05
    %v7071 = vadd.f32 %v7023, 1e-05
    %v7072 = vadd.f32 %v7024, 1e-05
    %v7073 = vadd.f32 %v7025, 1e-05
    %v7074 = vadd.f32 %v7026, 1e-05
    %v7075 = vadd.f32 %v7027, 1e-05
    %v7076 = vadd.f32 %v7028, 1e-05
    %v7077 = vadd.f32 %v7029, 1e-05
    %v7078 = vadd.f32 %v7030, 1e-05
    %v7079 = vadd.f32 %v7031, 1e-05
    %v7080 = vadd.f32 %v7032, 1e-05
    %v7081 = vadd.f32 %v7033, 1e-05
    %v7082 = vadd.f32 %v7034, 1e-05
    %v7083 = vadd.f32 %v7035, 1e-05
    %v7084 = vadd.f32 %v7036, 1e-05
    %v7085 = vadd.f32 %v7037, 1e-05
    %v7086 = vadd.f32 %v7038, 1e-05
    %v7087 = vadd.f32 %v7039, 1e-05
    %v7088 = vadd.f32 %v7040, 1e-05
    %v7089 = vadd.f32 %v7041, 1e-05
    %v7090 = vadd.f32 %v7042, 1e-05
    %v7091 = vadd.f32 %v7043, 1e-05
    %v7092 = vadd.f32 %v7044, 1e-05
    %v7093 = vadd.f32 %v7045, 1e-05
    %v7094 = vadd.f32 %v7046, 1e-05
    %v7095 = vadd.f32 %v7047, 1e-05
    %v7096 = vadd.f32 %v7048, 1e-05
    %v7097 = vadd.f32 %v7049, 1e-05
    %v7098 = vrsqrt.pop %v7050
    %v7099 = vrsqrt.pop %v7051
    %v7100 = vrsqrt.pop %v7052
    %v7101 = vrsqrt.pop %v7053
    %v7102 = vrsqrt.pop %v7054
    %v7103 = vrsqrt.pop %v7055
    %v7104 = vrsqrt.pop %v7056
    %v7105 = vrsqrt.pop %v7057
    %v7106 = vrsqrt.pop %v7058
    %v7107 = vrsqrt.pop %v7059
    %v7108 = vrsqrt.pop %v7060
    %v7109 = vrsqrt.pop %v7061
    %v7110 = vrsqrt.pop %v7062
    %v7111 = vrsqrt.pop %v7063
    %v7112 = vrsqrt.pop %v7064
    %v7113 = vrsqrt.pop %v7065
    %v7114 = vrsqrt.pop %v7066
    %v7115 = vrsqrt.pop %v7067
    %v7116 = vrsqrt.pop %v7068
    %v7117 = vrsqrt.pop %v7069
    %v7118 = vrsqrt.pop %v7070
    %v7119 = vrsqrt.pop %v7071
    %v7120 = vrsqrt.pop %v7072
    %v7121 = vrsqrt.pop %v7073
    %v7122 = vrsqrt.pop %v7074
    %v7123 = vrsqrt.pop %v7075
    %v7124 = vrsqrt.pop %v7076
    %v7125 = vrsqrt.pop %v7077
    %v7126 = vrsqrt.pop %v7078
    %v7127 = vrsqrt.pop %v7079
    %v7128 = vrsqrt.pop %v7080
    %v7129 = vrsqrt.pop %v7081
    %v7130 = vrsqrt.pop %v7082
    %v7131 = vrsqrt.pop %v7083
    %v7132 = vrsqrt.pop %v7084
    %v7133 = vrsqrt.pop %v7085
    %v7134 = vrsqrt.pop %v7086
    %v7135 = vrsqrt.pop %v7087
    %v7136 = vrsqrt.pop %v7088
    %v7137 = vrsqrt.pop %v7089
    %v7138 = vrsqrt.pop %v7090
    %v7139 = vrsqrt.pop %v7091
    %v7140 = vrsqrt.pop %v7092
    %v7141 = vrsqrt.pop %v7093
    %v7142 = vrsqrt.pop %v7094
    %v7143 = vrsqrt.pop %v7095
    %v7144 = vrsqrt.pop %v7096
    %v7145 = vrsqrt.pop %v7097
    %v7146 = vmul.f32 %v6810, %v7098
    %v7147 = vmul.f32 %v6811, %v7099
    %v7148 = vmul.f32 %v6812, %v7100
    %v7149 = vmul.f32 %v6813, %v7101
    %v7150 = vmul.f32 %v6814, %v7102
    %v7151 = vmul.f32 %v6815, %v7103
    %v7152 = vmul.f32 %v6816, %v7104
    %v7153 = vmul.f32 %v6817, %v7105
    %v7154 = vmul.f32 %v6818, %v7106
    %v7155 = vmul.f32 %v6819, %v7107
    %v7156 = vmul.f32 %v6820, %v7108
    %v7157 = vmul.f32 %v6821, %v7109
    %v7158 = vmul.f32 %v6822, %v7110
    %v7159 = vmul.f32 %v6823, %v7111
    %v7160 = vmul.f32 %v6824, %v7112
    %v7161 = vmul.f32 %v6825, %v7113
    %v7162 = vmul.f32 %v6826, %v7114
    %v7163 = vmul.f32 %v6827, %v7115
    %v7164 = vmul.f32 %v6828, %v7116
    %v7165 = vmul.f32 %v6829, %v7117
    %v7166 = vmul.f32 %v6830, %v7118
    %v7167 = vmul.f32 %v6831, %v7119
    %v7168 = vmul.f32 %v6832, %v7120
    %v7169 = vmul.f32 %v6833, %v7121
    %v7170 = vmul.f32 %v6834, %v7122
    %v7171 = vmul.f32 %v6835, %v7123
    %v7172 = vmul.f32 %v6836, %v7124
    %v7173 = vmul.f32 %v6837, %v7125
    %v7174 = vmul.f32 %v6838, %v7126
    %v7175 = vmul.f32 %v6839, %v7127
    %v7176 = vmul.f32 %v6840, %v7128
    %v7177 = vmul.f32 %v6841, %v7129
    %v7178 = vmul.f32 %v6842, %v7130
    %v7179 = vmul.f32 %v6843, %v7131
    %v7180 = vmul.f32 %v6844, %v7132
    %v7181 = vmul.f32 %v6845, %v7133
    %v7182 = vmul.f32 %v6846, %v7134
    %v7183 = vmul.f32 %v6847, %v7135
    %v7184 = vmul.f32 %v6848, %v7136
    %v7185 = vmul.f32 %v6849, %v7137
    %v7186 = vmul.f32 %v6850, %v7138
    %v7187 = vmul.f32 %v6851, %v7139
    %v7188 = vmul.f32 %v6852, %v7140
    %v7189 = vmul.f32 %v6853, %v7141
    %v7190 = vmul.f32 %v6854, %v7142
    %v7191 = vmul.f32 %v6855, %v7143
    %v7192 = vmul.f32 %v6856, %v7144
    %v7193 = vmul.f32 %v6857, %v7145
    %v7195 = vlaneseq
    %v7196 = vshrl.u32 %v7195, 7
    %v7197 = vsub.s32 0, %v7196
    %v7198 = vrot.slane %v6663, %v7197
    %v7200 = vmul.f32 %v7146, %v7198
    %v7201 = vmul.f32 %v7147, %v7198
    %v7202 = vmul.f32 %v7148, %v7198
    %v7203 = vmul.f32 %v7149, %v7198
    %v7204 = vmul.f32 %v7150, %v7198
    %v7205 = vmul.f32 %v7151, %v7198
    %v7206 = vmul.f32 %v7152, %v7198
    %v7207 = vmul.f32 %v7153, %v7198
    %v7208 = vmul.f32 %v7154, %v7198
    %v7209 = vmul.f32 %v7155, %v7198
    %v7210 = vmul.f32 %v7156, %v7198
    %v7211 = vmul.f32 %v7157, %v7198
    %v7212 = vmul.f32 %v7158, %v7198
    %v7213 = vmul.f32 %v7159, %v7198
    %v7214 = vmul.f32 %v7160, %v7198
    %v7215 = vmul.f32 %v7161, %v7198
    %v7216 = vmul.f32 %v7162, %v7198
    %v7217 = vmul.f32 %v7163, %v7198
    %v7218 = vmul.f32 %v7164, %v7198
    %v7219 = vmul.f32 %v7165, %v7198
    %v7220 = vmul.f32 %v7166, %v7198
    %v7221 = vmul.f32 %v7167, %v7198
    %v7222 = vmul.f32 %v7168, %v7198
    %v7223 = vmul.f32 %v7169, %v7198
    %v7224 = vmul.f32 %v7170, %v7198
    %v7225 = vmul.f32 %v7171, %v7198
    %v7226 = vmul.f32 %v7172, %v7198
    %v7227 = vmul.f32 %v7173, %v7198
    %v7228 = vmul.f32 %v7174, %v7198
    %v7229 = vmul.f32 %v7175, %v7198
    %v7230 = vmul.f32 %v7176, %v7198
    %v7231 = vmul.f32 %v7177, %v7198
    %v7232 = vmul.f32 %v7178, %v7198
    %v7233 = vmul.f32 %v7179, %v7198
    %v7234 = vmul.f32 %v7180, %v7198
    %v7235 = vmul.f32 %v7181, %v7198
    %v7236 = vmul.f32 %v7182, %v7198
    %v7237 = vmul.f32 %v7183, %v7198
    %v7238 = vmul.f32 %v7184, %v7198
    %v7239 = vmul.f32 %v7185, %v7198
    %v7240 = vmul.f32 %v7186, %v7198
    %v7241 = vmul.f32 %v7187, %v7198
    %v7242 = vmul.f32 %v7188, %v7198
    %v7243 = vmul.f32 %v7189, %v7198
    %v7244 = vmul.f32 %v7190, %v7198
    %v7245 = vmul.f32 %v7191, %v7198
    %v7246 = vmul.f32 %v7192, %v7198
    %v7247 = vmul.f32 %v7193, %v7198
    %v7249 = vlaneseq
    %v7250 = vshrl.u32 %v7249, 7
    %v7251 = vsub.s32 0, %v7250
    %v7252 = vrot.slane %v6664, %v7251
    %v7254 = vadd.f32 %v7200, %v7252
    %v7255 = vadd.f32 %v7201, %v7252
    %v7256 = vadd.f32 %v7202, %v7252
    %v7257 = vadd.f32 %v7203, %v7252
    %v7258 = vadd.f32 %v7204, %v7252
    %v7259 = vadd.f32 %v7205, %v7252
    %v7260 = vadd.f32 %v7206, %v7252
    %v7261 = vadd.f32 %v7207, %v7252
    %v7262 = vadd.f32 %v7208, %v7252
    %v7263 = vadd.f32 %v7209, %v7252
    %v7264 = vadd.f32 %v7210, %v7252
    %v7265 = vadd.f32 %v7211, %v7252
    %v7266 = vadd.f32 %v7212, %v7252
    %v7267 = vadd.f32 %v7213, %v7252
    %v7268 = vadd.f32 %v7214, %v7252
    %v7269 = vadd.f32 %v7215, %v7252
    %v7270 = vadd.f32 %v7216, %v7252
    %v7271 = vadd.f32 %v7217, %v7252
    %v7272 = vadd.f32 %v7218, %v7252
    %v7273 = vadd.f32 %v7219, %v7252
    %v7274 = vadd.f32 %v7220, %v7252
    %v7275 = vadd.f32 %v7221, %v7252
    %v7276 = vadd.f32 %v7222, %v7252
    %v7277 = vadd.f32 %v7223, %v7252
    %v7278 = vadd.f32 %v7224, %v7252
    %v7279 = vadd.f32 %v7225, %v7252
    %v7280 = vadd.f32 %v7226, %v7252
    %v7281 = vadd.f32 %v7227, %v7252
    %v7282 = vadd.f32 %v7228, %v7252
    %v7283 = vadd.f32 %v7229, %v7252
    %v7284 = vadd.f32 %v7230, %v7252
    %v7285 = vadd.f32 %v7231, %v7252
    %v7286 = vadd.f32 %v7232, %v7252
    %v7287 = vadd.f32 %v7233, %v7252
    %v7288 = vadd.f32 %v7234, %v7252
    %v7289 = vadd.f32 %v7235, %v7252
    %v7290 = vadd.f32 %v7236, %v7252
    %v7291 = vadd.f32 %v7237, %v7252
    %v7292 = vadd.f32 %v7238, %v7252
    %v7293 = vadd.f32 %v7239, %v7252
    %v7294 = vadd.f32 %v7240, %v7252
    %v7295 = vadd.f32 %v7241, %v7252
    %v7296 = vadd.f32 %v7242, %v7252
    %v7297 = vadd.f32 %v7243, %v7252
    %v7298 = vadd.f32 %v7244, %v7252
    %v7299 = vadd.f32 %v7245, %v7252
    %v7300 = vadd.f32 %v7246, %v7252
    %v7301 = vadd.f32 %v7247, %v7252
    %v7302 = vpack.c.bf16 %v7255, %v7254
    %v7303 = vpack.c.bf16 %v7257, %v7256
    %v7304 = vpack.c.bf16 %v7259, %v7258
    %v7305 = vpack.c.bf16 %v7261, %v7260
    %v7306 = vpack.c.bf16 %v7263, %v7262
    %v7307 = vpack.c.bf16 %v7265, %v7264
    %v7308 = vpack.c.bf16 %v7267, %v7266
    %v7309 = vpack.c.bf16 %v7269, %v7268
    %v7310 = vpack.c.bf16 %v7271, %v7270
    %v7311 = vpack.c.bf16 %v7273, %v7272
    %v7312 = vpack.c.bf16 %v7275, %v7274
    %v7313 = vpack.c.bf16 %v7277, %v7276
    %v7314 = vpack.c.bf16 %v7279, %v7278
    %v7315 = vpack.c.bf16 %v7281, %v7280
    %v7316 = vpack.c.bf16 %v7283, %v7282
    %v7317 = vpack.c.bf16 %v7285, %v7284
    %v7318 = vpack.c.bf16 %v7287, %v7286
    %v7319 = vpack.c.bf16 %v7289, %v7288
    %v7320 = vpack.c.bf16 %v7291, %v7290
    %v7321 = vpack.c.bf16 %v7293, %v7292
    %v7322 = vpack.c.bf16 %v7295, %v7294
    %v7323 = vpack.c.bf16 %v7297, %v7296
    %v7324 = vpack.c.bf16 %v7299, %v7298
    %v7325 = vpack.c.bf16 %v7301, %v7300
    %v7326 = vld [vmem:[#allocation10] sm:$0xff]
    %v7327 = vld [vmem:[#allocation10 + $0x8] sm:$0xff]
    %v7328 = vld [vmem:[#allocation10 + $0x10] sm:$0xff]
    %v7329 = vld [vmem:[#allocation10 + $0x18] sm:$0xff]
    %v7330 = vld [vmem:[#allocation10 + $0x20] sm:$0xff]
    %v7331 = vld [vmem:[#allocation10 + $0x28] sm:$0xff]
    %v7332 = vld [vmem:[#allocation10 + $0x30] sm:$0xff]
    %v7333 = vld [vmem:[#allocation10 + $0x38] sm:$0xff]
    %v7334 = vld [vmem:[#allocation10 + $0x40] sm:$0xff]
    %v7335 = vld [vmem:[#allocation10 + $0x48] sm:$0xff]
    %v7336 = vld [vmem:[#allocation10 + $0x50] sm:$0xff]
    %v7337 = vld [vmem:[#allocation10 + $0x58] sm:$0xff]
    %v7338 = vld [vmem:[#allocation10 + $0x60] sm:$0xff]
    %v7339 = vld [vmem:[#allocation10 + $0x68] sm:$0xff]
    %v7340 = vld [vmem:[#allocation10 + $0x70] sm:$0xff]
    %v7341 = vld [vmem:[#allocation10 + $0x78] sm:$0xff]
    %v7342 = vld [vmem:[%s9] sm:$0x3]
    %v7344 = vlaneseq
    %v7345 = vshrl.u32 %v7344, 7
    %v7346 = vsub.s32 0, %v7345
    %v7347 = vrot.slane %v7342, %v7346
    %v7348 = vlaneseq
    %v7349 = vshrl.u32 %v7348, 7
    %v7350 = vsub.s32 1, %v7349
    %v7351 = vrot.slane %v7342, %v7350
    %v7370 = vunpack.c.l.b16 %v7326
    %v7371 = vunpack.c.h.b16 %v7326
    %v7372 = vunpack.c.l.b16 %v7327
    %v7373 = vunpack.c.h.b16 %v7327
    %v7374 = vunpack.c.l.b16 %v7328
    %v7375 = vunpack.c.h.b16 %v7328
    %v7376 = vunpack.c.l.b16 %v7329
    %v7377 = vunpack.c.h.b16 %v7329
    %v7378 = vunpack.c.l.b16 %v7330
    %v7379 = vunpack.c.h.b16 %v7330
    %v7380 = vunpack.c.l.b16 %v7331
    %v7381 = vunpack.c.h.b16 %v7331
    %v7382 = vunpack.c.l.b16 %v7332
    %v7383 = vunpack.c.h.b16 %v7332
    %v7384 = vunpack.c.l.b16 %v7333
    %v7385 = vunpack.c.h.b16 %v7333
    %v7386 = vunpack.c.l.b16 %v7334
    %v7387 = vunpack.c.h.b16 %v7334
    %v7388 = vunpack.c.l.b16 %v7335
    %v7389 = vunpack.c.h.b16 %v7335
    %v7390 = vunpack.c.l.b16 %v7336
    %v7391 = vunpack.c.h.b16 %v7336
    %v7392 = vunpack.c.l.b16 %v7337
    %v7393 = vunpack.c.h.b16 %v7337
    %v7394 = vunpack.c.l.b16 %v7338
    %v7395 = vunpack.c.h.b16 %v7338
    %v7396 = vunpack.c.l.b16 %v7339
    %v7397 = vunpack.c.h.b16 %v7339
    %v7398 = vunpack.c.l.b16 %v7340
    %v7399 = vunpack.c.h.b16 %v7340
    %v7400 = vunpack.c.l.b16 %v7341
    %v7401 = vunpack.c.h.b16 %v7341
    %v7402 = vpack.c.b16 %v7372, %v7370
    %v7403 = vpack.c.b16 %v7373, %v7371
    %v7404 = vpack.c.b16 %v7376, %v7374
    %v7405 = vpack.c.b16 %v7377, %v7375
    %v7406 = vpack.c.b16 %v7380, %v7378
    %v7407 = vpack.c.b16 %v7381, %v7379
    %v7408 = vpack.c.b16 %v7384, %v7382
    %v7409 = vpack.c.b16 %v7385, %v7383
    %v7410 = vpack.c.b16 %v7388, %v7386
    %v7411 = vpack.c.b16 %v7389, %v7387
    %v7412 = vpack.c.b16 %v7392, %v7390
    %v7413 = vpack.c.b16 %v7393, %v7391
    %v7414 = vpack.c.b16 %v7396, %v7394
    %v7415 = vpack.c.b16 %v7397, %v7395
    %v7416 = vpack.c.b16 %v7400, %v7398
    %v7417 = vpack.c.b16 %v7401, %v7399
    %7434 = vmatprep.subr.bf16.mxu0 %v7403
    %7435 = vmatpush1.bf16.msra.mxu0 %v7402
    %7436 = vmatprep.subr.bf16.mxu0 %v7405
    %7437 = vmatpush1.bf16.msra.mxu0 %v7404
    %7438 = vmatprep.subr.bf16.mxu0 %v7407
    %7439 = vmatpush1.bf16.msra.mxu0 %v7406
    %7440 = vmatprep.subr.bf16.mxu0 %v7409
    %7441 = vmatpush1.bf16.msra.mxu0 %v7408
    %7442 = vmatprep.subr.bf16.mxu0 %v7411
    %7443 = vmatpush1.bf16.msra.mxu0 %v7410
    %7444 = vmatprep.subr.bf16.mxu0 %v7413
    %7445 = vmatpush1.bf16.msra.mxu0 %v7412
    %7446 = vmatprep.subr.bf16.mxu0 %v7415
    %7447 = vmatpush1.bf16.msra.mxu0 %v7414
    %7448 = vmatprep.subr.bf16.mxu0 %v7417
    %7449 = vmatpush1.bf16.msra.mxu0 %v7416
    %7450 = vmatprep.subr.bf16.mxu0 0
    %7451 = vmatpush1.bf16.msra.mxu0 0
    %7452 = vmatprep.subr.bf16.mxu0 0
    %7453 = vmatpush1.bf16.msra.mxu0 0
    %7454 = vmatprep.subr.bf16.mxu0 0
    %7455 = vmatpush1.bf16.msra.mxu0 0
    %7456 = vmatprep.subr.bf16.mxu0 0
    %7457 = vmatpush1.bf16.msra.mxu0 0
    %7458 = vmatprep.subr.bf16.mxu0 0
    %7459 = vmatpush1.bf16.msra.mxu0 0
    %7460 = vmatprep.subr.bf16.mxu0 0
    %7461 = vmatpush1.bf16.msra.mxu0 0
    %7462 = vmatprep.subr.bf16.mxu0 0
    %7463 = vmatpush1.bf16.msra.mxu0 0
    %7464 = vmatprep.subr.bf16.mxu0 0
    %7465 = vmatpush1.bf16.msra.mxu0 0
    %7466 = vmatprep.mubr.bf16.mxu0 0
    %7467 = vmatmul.mubr.bf16.gmra.mrb[0].mxu0 %v7302
    %v7468 = vpop.f32.mrb[0].mxu0
    %v7469 = vadd.f32 %v7347, %v7468
    %v7470 = vpop.f32.mrb[0].mxu0
    %v7471 = vadd.f32 %v7351, %v7470
    %v7472 = vpop.f32.mrb[0].mxu0
    %v7473 = vadd.f32 %v7347, %v7472
    %v7474 = vpop.f32.mrb[0].mxu0
    %v7475 = vadd.f32 %v7351, %v7474
    %7476 = vmatprep.mubr.bf16.mxu0 0
    %7477 = vmatmul.mubr.bf16.gmra.mrb[0].mxu0 %v7303
    %v7478 = vpop.f32.mrb[0].mxu0
    %v7479 = vadd.f32 %v7347, %v7478
    %v7480 = vpop.f32.mrb[0].mxu0
    %v7481 = vadd.f32 %v7351, %v7480
    %v7482 = vpop.f32.mrb[0].mxu0
    %v7483 = vadd.f32 %v7347, %v7482
    %v7484 = vpop.f32.mrb[0].mxu0
    %v7485 = vadd.f32 %v7351, %v7484
    %7486 = vmatprep.mubr.bf16.mxu0 0
    %7487 = vmatmul.mubr.bf16.gmra.mrb[0].mxu0 %v7304
    %v7488 = vpop.f32.mrb[0].mxu0
    %v7489 = vadd.f32 %v7347, %v7488
    %v7490 = vpop.f32.mrb[0].mxu0
    %v7491 = vadd.f32 %v7351, %v7490
    %v7492 = vpop.f32.mrb[0].mxu0
    %v7493 = vadd.f32 %v7347, %v7492
    %v7494 = vpop.f32.mrb[0].mxu0
    %v7495 = vadd.f32 %v7351, %v7494
    %7496 = vmatprep.mubr.bf16.mxu0 0
    %7497 = vmatmul.mubr.bf16.gmra.mrb[0].mxu0 %v7305
    %v7498 = vpop.f32.mrb[0].mxu0
    %v7499 = vadd.f32 %v7347, %v7498
    %v7500 = vpop.f32.mrb[0].mxu0
    %v7501 = vadd.f32 %v7351, %v7500
    %v7502 = vpop.f32.mrb[0].mxu0
    %v7503 = vadd.f32 %v7347, %v7502
    %v7504 = vpop.f32.mrb[0].mxu0
    %v7505 = vadd.f32 %v7351, %v7504
    %7506 = vmatprep.mubr.bf16.mxu0 0
    %7507 = vmatmul.mubr.bf16.gmra.mrb[0].mxu0 %v7306
    %v7508 = vpop.f32.mrb[0].mxu0
    %v7509 = vadd.f32 %v7347, %v7508
    %v7510 = vpop.f32.mrb[0].mxu0
    %v7511 = vadd.f32 %v7351, %v7510
    %v7512 = vpop.f32.mrb[0].mxu0
    %v7513 = vadd.f32 %v7347, %v7512
    %v7514 = vpop.f32.mrb[0].mxu0
    %v7515 = vadd.f32 %v7351, %v7514
    %7516 = vmatprep.mubr.bf16.mxu0 0
    %7517 = vmatmul.mubr.bf16.gmra.mrb[0].mxu0 %v7307
    %v7518 = vpop.f32.mrb[0].mxu0
    %v7519 = vadd.f32 %v7347, %v7518
    %v7520 = vpop.f32.mrb[0].mxu0
    %v7521 = vadd.f32 %v7351, %v7520
    %v7522 = vpop.f32.mrb[0].mxu0
    %v7523 = vadd.f32 %v7347, %v7522
    %v7524 = vpop.f32.mrb[0].mxu0
    %v7525 = vadd.f32 %v7351, %v7524
    %7526 = vmatprep.mubr.bf16.mxu0 0
    %7527 = vmatmul.mubr.bf16.gmra.mrb[0].mxu0 %v7308
    %v7528 = vpop.f32.mrb[0].mxu0
    %v7529 = vadd.f32 %v7347, %v7528
    %v7530 = vpop.f32.mrb[0].mxu0
    %v7531 = vadd.f32 %v7351, %v7530
    %v7532 = vpop.f32.mrb[0].mxu0
    %v7533 = vadd.f32 %v7347, %v7532
    %v7534 = vpop.f32.mrb[0].mxu0
    %v7535 = vadd.f32 %v7351, %v7534
    %7536 = vmatprep.mubr.bf16.mxu0 0
    %7537 = vmatmul.mubr.bf16.gmra.mrb[0].mxu0 %v7309
    %v7538 = vpop.f32.mrb[0].mxu0
    %v7539 = vadd.f32 %v7347, %v7538
    %v7540 = vpop.f32.mrb[0].mxu0
    %v7541 = vadd.f32 %v7351, %v7540
    %v7542 = vpop.f32.mrb[0].mxu0
    %v7543 = vadd.f32 %v7347, %v7542
    %v7544 = vpop.f32.mrb[0].mxu0
    %v7545 = vadd.f32 %v7351, %v7544
    %7546 = vmatprep.mubr.bf16.mxu0 0
    %7547 = vmatmul.mubr.bf16.gmra.mrb[0].mxu0 %v7310
    %v7548 = vpop.f32.mrb[0].mxu0
    %v7549 = vadd.f32 %v7347, %v7548
    %v7550 = vpop.f32.mrb[0].mxu0
    %v7551 = vadd.f32 %v7351, %v7550
    %v7552 = vpop.f32.mrb[0].mxu0
    %v7553 = vadd.f32 %v7347, %v7552
    %v7554 = vpop.f32.mrb[0].mxu0
    %v7555 = vadd.f32 %v7351, %v7554
    %7556 = vmatprep.mubr.bf16.mxu0 0
    %7557 = vmatmul.mubr.bf16.gmra.mrb[0].mxu0 %v7311
    %v7558 = vpop.f32.mrb[0].mxu0
    %v7559 = vadd.f32 %v7347, %v7558
    %v7560 = vpop.f32.mrb[0].mxu0
    %v7561 = vadd.f32 %v7351, %v7560
    %v7562 = vpop.f32.mrb[0].mxu0
    %v7563 = vadd.f32 %v7347, %v7562
    %v7564 = vpop.f32.mrb[0].mxu0
    %v7565 = vadd.f32 %v7351, %v7564
    %7566 = vmatprep.mubr.bf16.mxu0 0
    %7567 = vmatmul.mubr.bf16.gmra.mrb[0].mxu0 %v7312
    %v7568 = vpop.f32.mrb[0].mxu0
    %v7569 = vadd.f32 %v7347, %v7568
    %v7570 = vpop.f32.mrb[0].mxu0
    %v7571 = vadd.f32 %v7351, %v7570
    %v7572 = vpop.f32.mrb[0].mxu0
    %v7573 = vadd.f32 %v7347, %v7572
    %v7574 = vpop.f32.mrb[0].mxu0
    %v7575 = vadd.f32 %v7351, %v7574
    %7576 = vmatprep.mubr.bf16.mxu0 0
    %7577 = vmatmul.mubr.bf16.gmra.mrb[0].mxu0 %v7313
    %v7578 = vpop.f32.mrb[0].mxu0
    %v7579 = vadd.f32 %v7347, %v7578
    %v7580 = vpop.f32.mrb[0].mxu0
    %v7581 = vadd.f32 %v7351, %v7580
    %v7582 = vpop.f32.mrb[0].mxu0
    %v7583 = vadd.f32 %v7347, %v7582
    %v7584 = vpop.f32.mrb[0].mxu0
    %v7585 = vadd.f32 %v7351, %v7584
    %7586 = vmatprep.mubr.bf16.mxu0 0
    %7587 = vmatmul.mubr.bf16.gmra.mrb[0].mxu0 %v7314
    %v7588 = vpop.f32.mrb[0].mxu0
    %v7589 = vadd.f32 %v7347, %v7588
    %v7590 = vpop.f32.mrb[0].mxu0
    %v7591 = vadd.f32 %v7351, %v7590
    %v7592 = vpop.f32.mrb[0].mxu0
    %v7593 = vadd.f32 %v7347, %v7592
    %v7594 = vpop.f32.mrb[0].mxu0
    %v7595 = vadd.f32 %v7351, %v7594
    %7596 = vmatprep.mubr.bf16.mxu0 0
    %7597 = vmatmul.mubr.bf16.gmra.mrb[0].mxu0 %v7315
    %v7598 = vpop.f32.mrb[0].mxu0
    %v7599 = vadd.f32 %v7347, %v7598
    %v7600 = vpop.f32.mrb[0].mxu0
    %v7601 = vadd.f32 %v7351, %v7600
    %v7602 = vpop.f32.mrb[0].mxu0
    %v7603 = vadd.f32 %v7347, %v7602
    %v7604 = vpop.f32.mrb[0].mxu0
    %v7605 = vadd.f32 %v7351, %v7604
    %7606 = vmatprep.mubr.bf16.mxu0 0
    %7607 = vmatmul.mubr.bf16.gmra.mrb[0].mxu0 %v7316
    %v7608 = vpop.f32.mrb[0].mxu0
    %v7609 = vadd.f32 %v7347, %v7608
    %v7610 = vpop.f32.mrb[0].mxu0
    %v7611 = vadd.f32 %v7351, %v7610
    %v7612 = vpop.f32.mrb[0].mxu0
    %v7613 = vadd.f32 %v7347, %v7612
    %v7614 = vpop.f32.mrb[0].mxu0
    %v7615 = vadd.f32 %v7351, %v7614
    %7616 = vmatprep.mubr.bf16.mxu0 0
    %7617 = vmatmul.mubr.bf16.gmra.mrb[0].mxu0 %v7317
    %v7618 = vpop.f32.mrb[0].mxu0
    %v7619 = vadd.f32 %v7347, %v7618
    %v7620 = vpop.f32.mrb[0].mxu0
    %v7621 = vadd.f32 %v7351, %v7620
    %v7622 = vpop.f32.mrb[0].mxu0
    %v7623 = vadd.f32 %v7347, %v7622
    %v7624 = vpop.f32.mrb[0].mxu0
    %v7625 = vadd.f32 %v7351, %v7624
    %7626 = vmatprep.mubr.bf16.mxu0 0
    %7627 = vmatmul.mubr.bf16.gmra.mrb[0].mxu0 %v7318
    %v7628 = vpop.f32.mrb[0].mxu0
    %v7629 = vadd.f32 %v7347, %v7628
    %v7630 = vpop.f32.mrb[0].mxu0
    %v7631 = vadd.f32 %v7351, %v7630
    %v7632 = vpop.f32.mrb[0].mxu0
    %v7633 = vadd.f32 %v7347, %v7632
    %v7634 = vpop.f32.mrb[0].mxu0
    %v7635 = vadd.f32 %v7351, %v7634
    %7636 = vmatprep.mubr.bf16.mxu0 0
    %7637 = vmatmul.mubr.bf16.gmra.mrb[0].mxu0 %v7319
    %v7638 = vpop.f32.mrb[0].mxu0
    %v7639 = vadd.f32 %v7347, %v7638
    %v7640 = vpop.f32.mrb[0].mxu0
    %v7641 = vadd.f32 %v7351, %v7640
    %v7642 = vpop.f32.mrb[0].mxu0
    %v7643 = vadd.f32 %v7347, %v7642
    %v7644 = vpop.f32.mrb[0].mxu0
    %v7645 = vadd.f32 %v7351, %v7644
    %7646 = vmatprep.mubr.bf16.mxu0 0
    %7647 = vmatmul.mubr.bf16.gmra.mrb[0].mxu0 %v7320
    %v7648 = vpop.f32.mrb[0].mxu0
    %v7649 = vadd.f32 %v7347, %v7648
    %v7650 = vpop.f32.mrb[0].mxu0
    %v7651 = vadd.f32 %v7351, %v7650
    %v7652 = vpop.f32.mrb[0].mxu0
    %v7653 = vadd.f32 %v7347, %v7652
    %v7654 = vpop.f32.mrb[0].mxu0
    %v7655 = vadd.f32 %v7351, %v7654
    %7656 = vmatprep.mubr.bf16.mxu0 0
    %7657 = vmatmul.mubr.bf16.gmra.mrb[0].mxu0 %v7321
    %v7658 = vpop.f32.mrb[0].mxu0
    %v7659 = vadd.f32 %v7347, %v7658
    %v7660 = vpop.f32.mrb[0].mxu0
    %v7661 = vadd.f32 %v7351, %v7660
    %v7662 = vpop.f32.mrb[0].mxu0
    %v7663 = vadd.f32 %v7347, %v7662
    %v7664 = vpop.f32.mrb[0].mxu0
    %v7665 = vadd.f32 %v7351, %v7664
    %7666 = vmatprep.mubr.bf16.mxu0 0
    %7667 = vmatmul.mubr.bf16.gmra.mrb[0].mxu0 %v7322
    %v7668 = vpop.f32.mrb[0].mxu0
    %v7669 = vadd.f32 %v7347, %v7668
    %v7670 = vpop.f32.mrb[0].mxu0
    %v7671 = vadd.f32 %v7351, %v7670
    %v7672 = vpop.f32.mrb[0].mxu0
    %v7673 = vadd.f32 %v7347, %v7672
    %v7674 = vpop.f32.mrb[0].mxu0
    %v7675 = vadd.f32 %v7351, %v7674
    %7676 = vmatprep.mubr.bf16.mxu0 0
    %7677 = vmatmul.mubr.bf16.gmra.mrb[0].mxu0 %v7323
    %v7678 = vpop.f32.mrb[0].mxu0
    %v7679 = vadd.f32 %v7347, %v7678
    %v7680 = vpop.f32.mrb[0].mxu0
    %v7681 = vadd.f32 %v7351, %v7680
    %v7682 = vpop.f32.mrb[0].mxu0
    %v7683 = vadd.f32 %v7347, %v7682
    %v7684 = vpop.f32.mrb[0].mxu0
    %v7685 = vadd.f32 %v7351, %v7684
    %7686 = vmatprep.mubr.bf16.mxu0 0
    %7687 = vmatmul.mubr.bf16.gmra.mrb[0].mxu0 %v7324
    %v7688 = vpop.f32.mrb[0].mxu0
    %v7689 = vadd.f32 %v7347, %v7688
    %v7690 = vpop.f32.mrb[0].mxu0
    %v7691 = vadd.f32 %v7351, %v7690
    %v7692 = vpop.f32.mrb[0].mxu0
    %v7693 = vadd.f32 %v7347, %v7692
    %v7694 = vpop.f32.mrb[0].mxu0
    %v7695 = vadd.f32 %v7351, %v7694
    %7696 = vmatprep.mubr.bf16.mxu0 0
    %7697 = vmatmul.mubr.bf16.gmra.mrb[0].mxu0 %v7325
    %v7698 = vpop.f32.mrb[0].mxu0
    %v7699 = vadd.f32 %v7347, %v7698
    %v7700 = vpop.f32.mrb[0].mxu0
    %v7701 = vadd.f32 %v7351, %v7700
    %v7702 = vpop.f32.mrb[0].mxu0
    %v7703 = vadd.f32 %v7347, %v7702
    %v7704 = vpop.f32.mrb[0].mxu0
    %v7705 = vadd.f32 %v7351, %v7704
    %7706 = vdwg.mxu0
    %v7707 = vmax.f32 %v7469, 0.0
    %v7708 = vmax.f32 %v7471, 0.0
    %v7709 = vmax.f32 %v7473, 0.0
    %v7710 = vmax.f32 %v7475, 0.0
    %v7711 = vmax.f32 %v7479, 0.0
    %v7712 = vmax.f32 %v7481, 0.0
    %v7713 = vmax.f32 %v7483, 0.0
    %v7714 = vmax.f32 %v7485, 0.0
    %v7715 = vmax.f32 %v7489, 0.0
    %v7716 = vmax.f32 %v7491, 0.0
    %v7717 = vmax.f32 %v7493, 0.0
    %v7718 = vmax.f32 %v7495, 0.0
    %v7719 = vmax.f32 %v7499, 0.0
    %v7720 = vmax.f32 %v7501, 0.0
    %v7721 = vmax.f32 %v7503, 0.0
    %v7722 = vmax.f32 %v7505, 0.0
    %v7723 = vmax.f32 %v7509, 0.0
    %v7724 = vmax.f32 %v7511, 0.0
    %v7725 = vmax.f32 %v7513, 0.0
    %v7726 = vmax.f32 %v7515, 0.0
    %v7727 = vmax.f32 %v7519, 0.0
    %v7728 = vmax.f32 %v7521, 0.0
    %v7729 = vmax.f32 %v7523, 0.0
    %v7730 = vmax.f32 %v7525, 0.0
    %v7731 = vmax.f32 %v7529, 0.0
    %v7732 = vmax.f32 %v7531, 0.0
    %v7733 = vmax.f32 %v7533, 0.0
    %v7734 = vmax.f32 %v7535, 0.0
    %v7735 = vmax.f32 %v7539, 0.0
    %v7736 = vmax.f32 %v7541, 0.0
    %v7737 = vmax.f32 %v7543, 0.0
    %v7738 = vmax.f32 %v7545, 0.0
    %v7739 = vmax.f32 %v7549, 0.0
    %v7740 = vmax.f32 %v7551, 0.0
    %v7741 = vmax.f32 %v7553, 0.0
    %v7742 = vmax.f32 %v7555, 0.0
    %v7743 = vmax.f32 %v7559, 0.0
    %v7744 = vmax.f32 %v7561, 0.0
    %v7745 = vmax.f32 %v7563, 0.0
    %v7746 = vmax.f32 %v7565, 0.0
    %v7747 = vmax.f32 %v7569, 0.0
    %v7748 = vmax.f32 %v7571, 0.0
    %v7749 = vmax.f32 %v7573, 0.0
    %v7750 = vmax.f32 %v7575, 0.0
    %v7751 = vmax.f32 %v7579, 0.0
    %v7752 = vmax.f32 %v7581, 0.0
    %v7753 = vmax.f32 %v7583, 0.0
    %v7754 = vmax.f32 %v7585, 0.0
    %v7755 = vmax.f32 %v7589, 0.0
    %v7756 = vmax.f32 %v7591, 0.0
    %v7757 = vmax.f32 %v7593, 0.0
    %v7758 = vmax.f32 %v7595, 0.0
    %v7759 = vmax.f32 %v7599, 0.0
    %v7760 = vmax.f32 %v7601, 0.0
    %v7761 = vmax.f32 %v7603, 0.0
    %v7762 = vmax.f32 %v7605, 0.0
    %v7763 = vmax.f32 %v7609, 0.0
    %v7764 = vmax.f32 %v7611, 0.0
    %v7765 = vmax.f32 %v7613, 0.0
    %v7766 = vmax.f32 %v7615, 0.0
    %v7767 = vmax.f32 %v7619, 0.0
    %v7768 = vmax.f32 %v7621, 0.0
    %v7769 = vmax.f32 %v7623, 0.0
    %v7770 = vmax.f32 %v7625, 0.0
    %v7771 = vmax.f32 %v7629, 0.0
    %v7772 = vmax.f32 %v7631, 0.0
    %v7773 = vmax.f32 %v7633, 0.0
    %v7774 = vmax.f32 %v7635, 0.0
    %v7775 = vmax.f32 %v7639, 0.0
    %v7776 = vmax.f32 %v7641, 0.0
    %v7777 = vmax.f32 %v7643, 0.0
    %v7778 = vmax.f32 %v7645, 0.0
    %v7779 = vmax.f32 %v7649, 0.0
    %v7780 = vmax.f32 %v7651, 0.0
    %v7781 = vmax.f32 %v7653, 0.0
    %v7782 = vmax.f32 %v7655, 0.0
    %v7783 = vmax.f32 %v7659, 0.0
    %v7784 = vmax.f32 %v7661, 0.0
    %v7785 = vmax.f32 %v7663, 0.0
    %v7786 = vmax.f32 %v7665, 0.0
    %v7787 = vmax.f32 %v7669, 0.0
    %v7788 = vmax.f32 %v7671, 0.0
    %v7789 = vmax.f32 %v7673, 0.0
    %v7790 = vmax.f32 %v7675, 0.0
    %v7791 = vmax.f32 %v7679, 0.0
    %v7792 = vmax.f32 %v7681, 0.0
    %v7793 = vmax.f32 %v7683, 0.0
    %v7794 = vmax.f32 %v7685, 0.0
    %v7795 = vmax.f32 %v7689, 0.0
    %v7796 = vmax.f32 %v7691, 0.0
    %v7797 = vmax.f32 %v7693, 0.0
    %v7798 = vmax.f32 %v7695, 0.0
    %v7799 = vmax.f32 %v7699, 0.0
    %v7800 = vmax.f32 %v7701, 0.0
    %v7801 = vmax.f32 %v7703, 0.0
    %v7802 = vmax.f32 %v7705, 0.0
    %v7803 = vpack.c.bf16 %v7709, %v7707
    %v7804 = vpack.c.bf16 %v7710, %v7708
    %v7805 = vpack.c.bf16 %v7713, %v7711
    %v7806 = vpack.c.bf16 %v7714, %v7712
    %v7807 = vpack.c.bf16 %v7717, %v7715
    %v7808 = vpack.c.bf16 %v7718, %v7716
    %v7809 = vpack.c.bf16 %v7721, %v7719
    %v7810 = vpack.c.bf16 %v7722, %v7720
    %v7811 = vpack.c.bf16 %v7725, %v7723
    %v7812 = vpack.c.bf16 %v7726, %v7724
    %v7813 = vpack.c.bf16 %v7729, %v7727
    %v7814 = vpack.c.bf16 %v7730, %v7728
    %v7815 = vpack.c.bf16 %v7733, %v7731
    %v7816 = vpack.c.bf16 %v7734, %v7732
    %v7817 = vpack.c.bf16 %v7737, %v7735
    %v7818 = vpack.c.bf16 %v7738, %v7736
    %v7819 = vpack.c.bf16 %v7741, %v7739
    %v7820 = vpack.c.bf16 %v7742, %v7740
    %v7821 = vpack.c.bf16 %v7745, %v7743
    %v7822 = vpack.c.bf16 %v7746, %v7744
    %v7823 = vpack.c.bf16 %v7749, %v7747
    %v7824 = vpack.c.bf16 %v7750, %v7748
    %v7825 = vpack.c.bf16 %v7753, %v7751
    %v7826 = vpack.c.bf16 %v7754, %v7752
    %v7827 = vpack.c.bf16 %v7757, %v7755
    %v7828 = vpack.c.bf16 %v7758, %v7756
    %v7829 = vpack.c.bf16 %v7761, %v7759
    %v7830 = vpack.c.bf16 %v7762, %v7760
    %v7831 = vpack.c.bf16 %v7765, %v7763
    %v7832 = vpack.c.bf16 %v7766, %v7764
    %v7833 = vpack.c.bf16 %v7769, %v7767
    %v7834 = vpack.c.bf16 %v7770, %v7768
    %v7835 = vpack.c.bf16 %v7773, %v7771
    %v7836 = vpack.c.bf16 %v7774, %v7772
    %v7837 = vpack.c.bf16 %v7777, %v7775
    %v7838 = vpack.c.bf16 %v7778, %v7776
    %v7839 = vpack.c.bf16 %v7781, %v7779
    %v7840 = vpack.c.bf16 %v7782, %v7780
    %v7841 = vpack.c.bf16 %v7785, %v7783
    %v7842 = vpack.c.bf16 %v7786, %v7784
    %v7843 = vpack.c.bf16 %v7789, %v7787
    %v7844 = vpack.c.bf16 %v7790, %v7788
    %v7845 = vpack.c.bf16 %v7793, %v7791
    %v7846 = vpack.c.bf16 %v7794, %v7792
    %v7847 = vpack.c.bf16 %v7797, %v7795
    %v7848 = vpack.c.bf16 %v7798, %v7796
    %v7849 = vpack.c.bf16 %v7801, %v7799
    %v7850 = vpack.c.bf16 %v7802, %v7800
    %v7851 = vld [vmem:[#allocation11] sm:$0xf]
    %v7852 = vld [vmem:[#allocation11 + $0x4] sm:$0xf]
    %v7853 = vld [vmem:[#allocation11 + $0x8] sm:$0xf]
    %v7854 = vld [vmem:[#allocation11 + $0xc] sm:$0xf]
    %v7855 = vld [vmem:[#allocation11 + $0x10] sm:$0xf]
    %v7856 = vld [vmem:[#allocation11 + $0x14] sm:$0xf]
    %v7857 = vld [vmem:[#allocation11 + $0x18] sm:$0xf]
    %v7858 = vld [vmem:[#allocation11 + $0x1c] sm:$0xf]
    %v7859 = vld [vmem:[#allocation11 + $0x20] sm:$0xf]
    %v7860 = vld [vmem:[#allocation11 + $0x24] sm:$0xf]
    %v7861 = vld [vmem:[#allocation11 + $0x28] sm:$0xf]
    %v7862 = vld [vmem:[#allocation11 + $0x2c] sm:$0xf]
    %v7863 = vld [vmem:[#allocation11 + $0x30] sm:$0xf]
    %v7864 = vld [vmem:[#allocation11 + $0x34] sm:$0xf]
    %v7865 = vld [vmem:[#allocation11 + $0x38] sm:$0xf]
    %v7866 = vld [vmem:[#allocation11 + $0x3c] sm:$0xf]
    %v7867 = vld [vmem:[#allocation11 + $0x40] sm:$0xf]
    %v7868 = vld [vmem:[#allocation11 + $0x44] sm:$0xf]
    %v7869 = vld [vmem:[#allocation11 + $0x48] sm:$0xf]
    %v7870 = vld [vmem:[#allocation11 + $0x4c] sm:$0xf]
    %v7871 = vld [vmem:[#allocation11 + $0x50] sm:$0xf]
    %v7872 = vld [vmem:[#allocation11 + $0x54] sm:$0xf]
    %v7873 = vld [vmem:[#allocation11 + $0x58] sm:$0xf]
    %v7874 = vld [vmem:[#allocation11 + $0x5c] sm:$0xf]
    %v7875 = vld [vmem:[#allocation11 + $0x60] sm:$0xf]
    %v7876 = vld [vmem:[#allocation11 + $0x64] sm:$0xf]
    %v7877 = vld [vmem:[#allocation11 + $0x68] sm:$0xf]
    %v7878 = vld [vmem:[#allocation11 + $0x6c] sm:$0xf]
    %v7879 = vld [vmem:[#allocation11 + $0x70] sm:$0xf]
    %v7880 = vld [vmem:[#allocation11 + $0x74] sm:$0xf]
    %v7881 = vld [vmem:[#allocation11 + $0x78] sm:$0xf]
    %v7882 = vld [vmem:[#allocation11 + $0x7c] sm:$0xf]
    %v7883 = vld [vmem:[%s11] sm:$0x1]
    %v7885 = vlaneseq
    %v7886 = vshrl.u32 %v7885, 7
    %v7887 = vsub.s32 0, %v7886
    %v7888 = vrot.slane %v7883, %v7887
    %v7922 = vunpack.c.l.b16 %v7851
    %v7923 = vunpack.c.l.b16 %v7852
    %v7924 = vunpack.c.l.b16 %v7853
    %v7925 = vunpack.c.l.b16 %v7854
    %v7926 = vunpack.c.l.b16 %v7855
    %v7927 = vunpack.c.l.b16 %v7856
    %v7928 = vunpack.c.l.b16 %v7857
    %v7929 = vunpack.c.l.b16 %v7858
    %v7930 = vunpack.c.l.b16 %v7859
    %v7931 = vunpack.c.l.b16 %v7860
    %v7932 = vunpack.c.l.b16 %v7861
    %v7933 = vunpack.c.l.b16 %v7862
    %v7934 = vunpack.c.l.b16 %v7863
    %v7935 = vunpack.c.l.b16 %v7864
    %v7936 = vunpack.c.l.b16 %v7865
    %v7937 = vunpack.c.l.b16 %v7866
    %v7938 = vunpack.c.l.b16 %v7867
    %v7939 = vunpack.c.l.b16 %v7868
    %v7940 = vunpack.c.l.b16 %v7869
    %v7941 = vunpack.c.l.b16 %v7870
    %v7942 = vunpack.c.l.b16 %v7871
    %v7943 = vunpack.c.l.b16 %v7872
    %v7944 = vunpack.c.l.b16 %v7873
    %v7945 = vunpack.c.l.b16 %v7874
    %v7946 = vunpack.c.l.b16 %v7875
    %v7947 = vunpack.c.l.b16 %v7876
    %v7948 = vunpack.c.l.b16 %v7877
    %v7949 = vunpack.c.l.b16 %v7878
    %v7950 = vunpack.c.l.b16 %v7879
    %v7951 = vunpack.c.l.b16 %v7880
    %v7952 = vunpack.c.l.b16 %v7881
    %v7953 = vunpack.c.l.b16 %v7882
    %v7954 = vpack.c.b16 %v7923, %v7922
    %v7955 = vpack.c.b16 %v7925, %v7924
    %v7956 = vpack.c.b16 %v7927, %v7926
    %v7957 = vpack.c.b16 %v7929, %v7928
    %v7958 = vpack.c.b16 %v7931, %v7930
    %v7959 = vpack.c.b16 %v7933, %v7932
    %v7960 = vpack.c.b16 %v7935, %v7934
    %v7961 = vpack.c.b16 %v7937, %v7936
    %v7962 = vpack.c.b16 %v7939, %v7938
    %v7963 = vpack.c.b16 %v7941, %v7940
    %v7964 = vpack.c.b16 %v7943, %v7942
    %v7965 = vpack.c.b16 %v7945, %v7944
    %v7966 = vpack.c.b16 %v7947, %v7946
    %v7967 = vpack.c.b16 %v7949, %v7948
    %v7968 = vpack.c.b16 %v7951, %v7950
    %v7969 = vpack.c.b16 %v7953, %v7952
    %7986 = vmatprep.subr.bf16.mxu0 0
    %7987 = vmatpush1.bf16.msra.mxu0 %v7954
    %7988 = vmatprep.subr.bf16.mxu0 0
    %7989 = vmatpush1.bf16.msra.mxu0 %v7955
    %7990 = vmatprep.subr.bf16.mxu0 0
    %7991 = vmatpush1.bf16.msra.mxu0 %v7956
    %7992 = vmatprep.subr.bf16.mxu0 0
    %7993 = vmatpush1.bf16.msra.mxu0 %v7957
    %7994 = vmatprep.subr.bf16.mxu0 0
    %7995 = vmatpush1.bf16.msra.mxu0 %v7958
    %7996 = vmatprep.subr.bf16.mxu0 0
    %7997 = vmatpush1.bf16.msra.mxu0 %v7959
    %7998 = vmatprep.subr.bf16.mxu0 0
    %7999 = vmatpush1.bf16.msra.mxu0 %v7960
    %8000 = vmatprep.subr.bf16.mxu0 0
    %8001 = vmatpush1.bf16.msra.mxu0 %v7961
    %8002 = vmatprep.subr.bf16.mxu0 0
    %8003 = vmatpush1.bf16.msra.mxu0 %v7962
    %8004 = vmatprep.subr.bf16.mxu0 0
    %8005 = vmatpush1.bf16.msra.mxu0 %v7963
    %8006 = vmatprep.subr.bf16.mxu0 0
    %8007 = vmatpush1.bf16.msra.mxu0 %v7964
    %8008 = vmatprep.subr.bf16.mxu0 0
    %8009 = vmatpush1.bf16.msra.mxu0 %v7965
    %8010 = vmatprep.subr.bf16.mxu0 0
    %8011 = vmatpush1.bf16.msra.mxu0 %v7966
    %8012 = vmatprep.subr.bf16.mxu0 0
    %8013 = vmatpush1.bf16.msra.mxu0 %v7967
    %8014 = vmatprep.subr.bf16.mxu0 0
    %8015 = vmatpush1.bf16.msra.mxu0 %v7968
    %8016 = vmatprep.subr.bf16.mxu0 0
    %8017 = vmatpush1.bf16.msra.mxu0 %v7969
    %8018 = vmatprep.mubr.bf16.mxu0 %v7804
    %8019 = vmatmul.mubr.bf16.gmra.mrb[0].mxu0 %v7803
    %v8020 = vpop.f32.mrb[0].mxu0
    %v8021 = vadd.f32 %v7888, %v8020
    %v8022 = vpop.f32.mrb[0].mxu0
    %v8023 = vpop.f32.mrb[0].mxu0
    %v8024 = vadd.f32 %v7888, %v8023
    %v8025 = vpop.f32.mrb[0].mxu0
    %8026 = vmatprep.mubr.bf16.mxu0 %v7806
    %8027 = vmatmul.mubr.bf16.gmra.mrb[0].mxu0 %v7805
    %v8028 = vpop.f32.mrb[0].mxu0
    %v8029 = vadd.f32 %v7888, %v8028
    %v8030 = vpop.f32.mrb[0].mxu0
    %v8031 = vpop.f32.mrb[0].mxu0
    %v8032 = vadd.f32 %v7888, %v8031
    %v8033 = vpop.f32.mrb[0].mxu0
    %8034 = vmatprep.mubr.bf16.mxu0 %v7808
    %8035 = vmatmul.mubr.bf16.gmra.mrb[0].mxu0 %v7807
    %v8036 = vpop.f32.mrb[0].mxu0
    %v8037 = vadd.f32 %v7888, %v8036
    %v8038 = vpop.f32.mrb[0].mxu0
    %v8039 = vpop.f32.mrb[0].mxu0
    %v8040 = vadd.f32 %v7888, %v8039
    %v8041 = vpop.f32.mrb[0].mxu0
    %8042 = vmatprep.mubr.bf16.mxu0 %v7810
    %8043 = vmatmul.mubr.bf16.gmra.mrb[0].mxu0 %v7809
    %v8044 = vpop.f32.mrb[0].mxu0
    %v8045 = vadd.f32 %v7888, %v8044
    %v8046 = vpop.f32.mrb[0].mxu0
    %v8047 = vpop.f32.mrb[0].mxu0
    %v8048 = vadd.f32 %v7888, %v8047
    %v8049 = vpop.f32.mrb[0].mxu0
    %8050 = vmatprep.mubr.bf16.mxu0 %v7812
    %8051 = vmatmul.mubr.bf16.gmra.mrb[0].mxu0 %v7811
    %v8052 = vpop.f32.mrb[0].mxu0
    %v8053 = vadd.f32 %v7888, %v8052
    %v8054 = vpop.f32.mrb[0].mxu0
    %v8055 = vpop.f32.mrb[0].mxu0
    %v8056 = vadd.f32 %v7888, %v8055
    %v8057 = vpop.f32.mrb[0].mxu0
    %8058 = vmatprep.mubr.bf16.mxu0 %v7814
    %8059 = vmatmul.mubr.bf16.gmra.mrb[0].mxu0 %v7813
    %v8060 = vpop.f32.mrb[0].mxu0
    %v8061 = vadd.f32 %v7888, %v8060
    %v8062 = vpop.f32.mrb[0].mxu0
    %v8063 = vpop.f32.mrb[0].mxu0
    %v8064 = vadd.f32 %v7888, %v8063
    %v8065 = vpop.f32.mrb[0].mxu0
    %8066 = vmatprep.mubr.bf16.mxu0 %v7816
    %8067 = vmatmul.mubr.bf16.gmra.mrb[0].mxu0 %v7815
    %v8068 = vpop.f32.mrb[0].mxu0
    %v8069 = vadd.f32 %v7888, %v8068
    %v8070 = vpop.f32.mrb[0].mxu0
    %v8071 = vpop.f32.mrb[0].mxu0
    %v8072 = vadd.f32 %v7888, %v8071
    %v8073 = vpop.f32.mrb[0].mxu0
    %8074 = vmatprep.mubr.bf16.mxu0 %v7818
    %8075 = vmatmul.mubr.bf16.gmra.mrb[0].mxu0 %v7817
    %v8076 = vpop.f32.mrb[0].mxu0
    %v8077 = vadd.f32 %v7888, %v8076
    %v8078 = vpop.f32.mrb[0].mxu0
    %v8079 = vpop.f32.mrb[0].mxu0
    %v8080 = vadd.f32 %v7888, %v8079
    %v8081 = vpop.f32.mrb[0].mxu0
    %8082 = vmatprep.mubr.bf16.mxu0 %v7820
    %8083 = vmatmul.mubr.bf16.gmra.mrb[0].mxu0 %v7819
    %v8084 = vpop.f32.mrb[0].mxu0
    %v8085 = vadd.f32 %v7888, %v8084
    %v8086 = vpop.f32.mrb[0].mxu0
    %v8087 = vpop.f32.mrb[0].mxu0
    %v8088 = vadd.f32 %v7888, %v8087
    %v8089 = vpop.f32.mrb[0].mxu0
    %8090 = vmatprep.mubr.bf16.mxu0 %v7822
    %8091 = vmatmul.mubr.bf16.gmra.mrb[0].mxu0 %v7821
    %v8092 = vpop.f32.mrb[0].mxu0
    %v8093 = vadd.f32 %v7888, %v8092
    %v8094 = vpop.f32.mrb[0].mxu0
    %v8095 = vpop.f32.mrb[0].mxu0
    %v8096 = vadd.f32 %v7888, %v8095
    %v8097 = vpop.f32.mrb[0].mxu0
    %8098 = vmatprep.mubr.bf16.mxu0 %v7824
    %8099 = vmatmul.mubr.bf16.gmra.mrb[0].mxu0 %v7823
    %v8100 = vpop.f32.mrb[0].mxu0
    %v8101 = vadd.f32 %v7888, %v8100
    %v8102 = vpop.f32.mrb[0].mxu0
    %v8103 = vpop.f32.mrb[0].mxu0
    %v8104 = vadd.f32 %v7888, %v8103
    %v8105 = vpop.f32.mrb[0].mxu0
    %8106 = vmatprep.mubr.bf16.mxu0 %v7826
    %8107 = vmatmul.mubr.bf16.gmra.mrb[0].mxu0 %v7825
    %v8108 = vpop.f32.mrb[0].mxu0
    %v8109 = vadd.f32 %v7888, %v8108
    %v8110 = vpop.f32.mrb[0].mxu0
    %v8111 = vpop.f32.mrb[0].mxu0
    %v8112 = vadd.f32 %v7888, %v8111
    %v8113 = vpop.f32.mrb[0].mxu0
    %8114 = vmatprep.mubr.bf16.mxu0 %v7828
    %8115 = vmatmul.mubr.bf16.gmra.mrb[0].mxu0 %v7827
    %v8116 = vpop.f32.mrb[0].mxu0
    %v8117 = vadd.f32 %v7888, %v8116
    %v8118 = vpop.f32.mrb[0].mxu0
    %v8119 = vpop.f32.mrb[0].mxu0
    %v8120 = vadd.f32 %v7888, %v8119
    %v8121 = vpop.f32.mrb[0].mxu0
    %8122 = vmatprep.mubr.bf16.mxu0 %v7830
    %8123 = vmatmul.mubr.bf16.gmra.mrb[0].mxu0 %v7829
    %v8124 = vpop.f32.mrb[0].mxu0
    %v8125 = vadd.f32 %v7888, %v8124
    %v8126 = vpop.f32.mrb[0].mxu0
    %v8127 = vpop.f32.mrb[0].mxu0
    %v8128 = vadd.f32 %v7888, %v8127
    %v8129 = vpop.f32.mrb[0].mxu0
    %8130 = vmatprep.mubr.bf16.mxu0 %v7832
    %8131 = vmatmul.mubr.bf16.gmra.mrb[0].mxu0 %v7831
    %v8132 = vpop.f32.mrb[0].mxu0
    %v8133 = vadd.f32 %v7888, %v8132
    %v8134 = vpop.f32.mrb[0].mxu0
    %v8135 = vpop.f32.mrb[0].mxu0
    %v8136 = vadd.f32 %v7888, %v8135
    %v8137 = vpop.f32.mrb[0].mxu0
    %8138 = vmatprep.mubr.bf16.mxu0 %v7834
    %8139 = vmatmul.mubr.bf16.gmra.mrb[0].mxu0 %v7833
    %v8140 = vpop.f32.mrb[0].mxu0
    %v8141 = vadd.f32 %v7888, %v8140
    %v8142 = vpop.f32.mrb[0].mxu0
    %v8143 = vpop.f32.mrb[0].mxu0
    %v8144 = vadd.f32 %v7888, %v8143
    %v8145 = vpop.f32.mrb[0].mxu0
    %8146 = vmatprep.mubr.bf16.mxu0 %v7836
    %8147 = vmatmul.mubr.bf16.gmra.mrb[0].mxu0 %v7835
    %v8148 = vpop.f32.mrb[0].mxu0
    %v8149 = vadd.f32 %v7888, %v8148
    %v8150 = vpop.f32.mrb[0].mxu0
    %v8151 = vpop.f32.mrb[0].mxu0
    %v8152 = vadd.f32 %v7888, %v8151
    %v8153 = vpop.f32.mrb[0].mxu0
    %8154 = vmatprep.mubr.bf16.mxu0 %v7838
    %8155 = vmatmul.mubr.bf16.gmra.mrb[0].mxu0 %v7837
    %v8156 = vpop.f32.mrb[0].mxu0
    %v8157 = vadd.f32 %v7888, %v8156
    %v8158 = vpop.f32.mrb[0].mxu0
    %v8159 = vpop.f32.mrb[0].mxu0
    %v8160 = vadd.f32 %v7888, %v8159
    %v8161 = vpop.f32.mrb[0].mxu0
    %8162 = vmatprep.mubr.bf16.mxu0 %v7840
    %8163 = vmatmul.mubr.bf16.gmra.mrb[0].mxu0 %v7839
    %v8164 = vpop.f32.mrb[0].mxu0
    %v8165 = vadd.f32 %v7888, %v8164
    %v8166 = vpop.f32.mrb[0].mxu0
    %v8167 = vpop.f32.mrb[0].mxu0
    %v8168 = vadd.f32 %v7888, %v8167
    %v8169 = vpop.f32.mrb[0].mxu0
    %8170 = vmatprep.mubr.bf16.mxu0 %v7842
    %8171 = vmatmul.mubr.bf16.gmra.mrb[0].mxu0 %v7841
    %v8172 = vpop.f32.mrb[0].mxu0
    %v8173 = vadd.f32 %v7888, %v8172
    %v8174 = vpop.f32.mrb[0].mxu0
    %v8175 = vpop.f32.mrb[0].mxu0
    %v8176 = vadd.f32 %v7888, %v8175
    %v8177 = vpop.f32.mrb[0].mxu0
    %8178 = vmatprep.mubr.bf16.mxu0 %v7844
    %8179 = vmatmul.mubr.bf16.gmra.mrb[0].mxu0 %v7843
    %v8180 = vpop.f32.mrb[0].mxu0
    %v8181 = vadd.f32 %v7888, %v8180
    %v8182 = vpop.f32.mrb[0].mxu0
    %v8183 = vpop.f32.mrb[0].mxu0
    %v8184 = vadd.f32 %v7888, %v8183
    %v8185 = vpop.f32.mrb[0].mxu0
    %8186 = vmatprep.mubr.bf16.mxu0 %v7846
    %8187 = vmatmul.mubr.bf16.gmra.mrb[0].mxu0 %v7845
    %v8188 = vpop.f32.mrb[0].mxu0
    %v8189 = vadd.f32 %v7888, %v8188
    %v8190 = vpop.f32.mrb[0].mxu0
    %v8191 = vpop.f32.mrb[0].mxu0
    %v8192 = vadd.f32 %v7888, %v8191
    %v8193 = vpop.f32.mrb[0].mxu0
    %8194 = vmatprep.mubr.bf16.mxu0 %v7848
    %8195 = vmatmul.mubr.bf16.gmra.mrb[0].mxu0 %v7847
    %v8196 = vpop.f32.mrb[0].mxu0
    %v8197 = vadd.f32 %v7888, %v8196
    %v8198 = vpop.f32.mrb[0].mxu0
    %v8199 = vpop.f32.mrb[0].mxu0
    %v8200 = vadd.f32 %v7888, %v8199
    %v8201 = vpop.f32.mrb[0].mxu0
    %8202 = vmatprep.mubr.bf16.mxu0 %v7850
    %8203 = vmatmul.mubr.bf16.gmra.mrb[0].mxu0 %v7849
    %v8204 = vpop.f32.mrb[0].mxu0
    %v8205 = vadd.f32 %v7888, %v8204
    %v8206 = vpop.f32.mrb[0].mxu0
    %v8207 = vpop.f32.mrb[0].mxu0
    %v8208 = vadd.f32 %v7888, %v8207
    %v8209 = vpop.f32.mrb[0].mxu0
    %8210 = vdwg.mxu0
    %v8211 = vadd.f32 %v7254, %v8021
    %v8212 = vadd.f32 %v7255, %v8024
    %v8213 = vadd.f32 %v7256, %v8029
    %v8214 = vadd.f32 %v7257, %v8032
    %v8215 = vadd.f32 %v7258, %v8037
    %v8216 = vadd.f32 %v7259, %v8040
    %v8217 = vadd.f32 %v7260, %v8045
    %v8218 = vadd.f32 %v7261, %v8048
    %v8219 = vadd.f32 %v7262, %v8053
    %v8220 = vadd.f32 %v7263, %v8056
    %v8221 = vadd.f32 %v7264, %v8061
    %v8222 = vadd.f32 %v7265, %v8064
    %v8223 = vadd.f32 %v7266, %v8069
    %v8224 = vadd.f32 %v7267, %v8072
    %v8225 = vadd.f32 %v7268, %v8077
    %v8226 = vadd.f32 %v7269, %v8080
    %v8227 = vadd.f32 %v7270, %v8085
    %v8228 = vadd.f32 %v7271, %v8088
    %v8229 = vadd.f32 %v7272, %v8093
    %v8230 = vadd.f32 %v7273, %v8096
    %v8231 = vadd.f32 %v7274, %v8101
    %v8232 = vadd.f32 %v7275, %v8104
    %v8233 = vadd.f32 %v7276, %v8109
    %v8234 = vadd.f32 %v7277, %v8112
    %v8235 = vadd.f32 %v7278, %v8117
    %v8236 = vadd.f32 %v7279, %v8120
    %v8237 = vadd.f32 %v7280, %v8125
    %v8238 = vadd.f32 %v7281, %v8128
    %v8239 = vadd.f32 %v7282, %v8133
    %v8240 = vadd.f32 %v7283, %v8136
    %v8241 = vadd.f32 %v7284, %v8141
    %v8242 = vadd.f32 %v7285, %v8144
    %v8243 = vadd.f32 %v7286, %v8149
    %v8244 = vadd.f32 %v7287, %v8152
    %v8245 = vadd.f32 %v7288, %v8157
    %v8246 = vadd.f32 %v7289, %v8160
    %v8247 = vadd.f32 %v7290, %v8165
    %v8248 = vadd.f32 %v7291, %v8168
    %v8249 = vadd.f32 %v7292, %v8173
    %v8250 = vadd.f32 %v7293, %v8176
    %v8251 = vadd.f32 %v7294, %v8181
    %v8252 = vadd.f32 %v7295, %v8184
    %v8253 = vadd.f32 %v7296, %v8189
    %v8254 = vadd.f32 %v7297, %v8192
    %v8255 = vadd.f32 %v7298, %v8197
    %v8256 = vadd.f32 %v7299, %v8200
    %v8257 = vadd.f32 %v7300, %v8205
    %v8258 = vadd.f32 %v7301, %v8208
    %v8259 = vld [vmem:[%s12] sm:$0x1]
    %v8260 = vld [vmem:[%s13] sm:$0x1]
    %8261 = vadd.xlane.f32.xlu0 %v8211
    %v8262 = vpop.xlane.xlu0 %8261
    %8263 = vadd.xlane.f32.xlu0 %v8212
    %v8264 = vpop.xlane.xlu0 %8263
    %8265 = vadd.xlane.f32.xlu0 %v8213
    %v8266 = vpop.xlane.xlu0 %8265
    %8267 = vadd.xlane.f32.xlu0 %v8214
    %v8268 = vpop.xlane.xlu0 %8267
    %8269 = vadd.xlane.f32.xlu0 %v8215
    %v8270 = vpop.xlane.xlu0 %8269
    %8271 = vadd.xlane.f32.xlu0 %v8216
    %v8272 = vpop.xlane.xlu0 %8271
    %8273 = vadd.xlane.f32.xlu0 %v8217
    %v8274 = vpop.xlane.xlu0 %8273
    %8275 = vadd.xlane.f32.xlu0 %v8218
    %v8276 = vpop.xlane.xlu0 %8275
    %8277 = vadd.xlane.f32.xlu0 %v8219
    %v8278 = vpop.xlane.xlu0 %8277
    %8279 = vadd.xlane.f32.xlu0 %v8220
    %v8280 = vpop.xlane.xlu0 %8279
    %8281 = vadd.xlane.f32.xlu0 %v8221
    %v8282 = vpop.xlane.xlu0 %8281
    %8283 = vadd.xlane.f32.xlu0 %v8222
    %v8284 = vpop.xlane.xlu0 %8283
    %8285 = vadd.xlane.f32.xlu0 %v8223
    %v8286 = vpop.xlane.xlu0 %8285
    %8287 = vadd.xlane.f32.xlu0 %v8224
    %v8288 = vpop.xlane.xlu0 %8287
    %8289 = vadd.xlane.f32.xlu0 %v8225
    %v8290 = vpop.xlane.xlu0 %8289
    %8291 = vadd.xlane.f32.xlu0 %v8226
    %v8292 = vpop.xlane.xlu0 %8291
    %8293 = vadd.xlane.f32.xlu0 %v8227
    %v8294 = vpop.xlane.xlu0 %8293
    %8295 = vadd.xlane.f32.xlu0 %v8228
    %v8296 = vpop.xlane.xlu0 %8295
    %8297 = vadd.xlane.f32.xlu0 %v8229
    %v8298 = vpop.xlane.xlu0 %8297
    %8299 = vadd.xlane.f32.xlu0 %v8230
    %v8300 = vpop.xlane.xlu0 %8299
    %8301 = vadd.xlane.f32.xlu0 %v8231
    %v8302 = vpop.xlane.xlu0 %8301
    %8303 = vadd.xlane.f32.xlu0 %v8232
    %v8304 = vpop.xlane.xlu0 %8303
    %8305 = vadd.xlane.f32.xlu0 %v8233
    %v8306 = vpop.xlane.xlu0 %8305
    %8307 = vadd.xlane.f32.xlu0 %v8234
    %v8308 = vpop.xlane.xlu0 %8307
    %8309 = vadd.xlane.f32.xlu0 %v8235
    %v8310 = vpop.xlane.xlu0 %8309
    %8311 = vadd.xlane.f32.xlu0 %v8236
    %v8312 = vpop.xlane.xlu0 %8311
    %8313 = vadd.xlane.f32.xlu0 %v8237
    %v8314 = vpop.xlane.xlu0 %8313
    %8315 = vadd.xlane.f32.xlu0 %v8238
    %v8316 = vpop.xlane.xlu0 %8315
    %8317 = vadd.xlane.f32.xlu0 %v8239
    %v8318 = vpop.xlane.xlu0 %8317
    %8319 = vadd.xlane.f32.xlu0 %v8240
    %v8320 = vpop.xlane.xlu0 %8319
    %8321 = vadd.xlane.f32.xlu0 %v8241
    %v8322 = vpop.xlane.xlu0 %8321
    %8323 = vadd.xlane.f32.xlu0 %v8242
    %v8324 = vpop.xlane.xlu0 %8323
    %8325 = vadd.xlane.f32.xlu0 %v8243
    %v8326 = vpop.xlane.xlu0 %8325
    %8327 = vadd.xlane.f32.xlu0 %v8244
    %v8328 = vpop.xlane.xlu0 %8327
    %8329 = vadd.xlane.f32.xlu0 %v8245
    %v8330 = vpop.xlane.xlu0 %8329
    %8331 = vadd.xlane.f32.xlu0 %v8246
    %v8332 = vpop.xlane.xlu0 %8331
    %8333 = vadd.xlane.f32.xlu0 %v8247
    %v8334 = vpop.xlane.xlu0 %8333
    %8335 = vadd.xlane.f32.xlu0 %v8248
    %v8336 = vpop.xlane.xlu0 %8335
    %8337 = vadd.xlane.f32.xlu0 %v8249
    %v8338 = vpop.xlane.xlu0 %8337
    %8339 = vadd.xlane.f32.xlu0 %v8250
    %v8340 = vpop.xlane.xlu0 %8339
    %8341 = vadd.xlane.f32.xlu0 %v8251
    %v8342 = vpop.xlane.xlu0 %8341
    %8343 = vadd.xlane.f32.xlu0 %v8252
    %v8344 = vpop.xlane.xlu0 %8343
    %8345 = vadd.xlane.f32.xlu0 %v8253
    %v8346 = vpop.xlane.xlu0 %8345
    %8347 = vadd.xlane.f32.xlu0 %v8254
    %v8348 = vpop.xlane.xlu0 %8347
    %8349 = vadd.xlane.f32.xlu0 %v8255
    %v8350 = vpop.xlane.xlu0 %8349
    %8351 = vadd.xlane.f32.xlu0 %v8256
    %v8352 = vpop.xlane.xlu0 %8351
    %8353 = vadd.xlane.f32.xlu0 %v8257
    %v8354 = vpop.xlane.xlu0 %8353
    %8355 = vadd.xlane.f32.xlu0 %v8258
    %v8356 = vpop.xlane.xlu0 %8355
    %v8357 = vmul.f32 %v8262, %v6761
    %v8358 = vmul.f32 %v8264, %v6761
    %v8359 = vmul.f32 %v8266, %v6761
    %v8360 = vmul.f32 %v8268, %v6761
    %v8361 = vmul.f32 %v8270, %v6761
    %v8362 = vmul.f32 %v8272, %v6761
    %v8363 = vmul.f32 %v8274, %v6761
    %v8364 = vmul.f32 %v8276, %v6761
    %v8365 = vmul.f32 %v8278, %v6761
    %v8366 = vmul.f32 %v8280, %v6761
    %v8367 = vmul.f32 %v8282, %v6761
    %v8368 = vmul.f32 %v8284, %v6761
    %v8369 = vmul.f32 %v8286, %v6761
    %v8370 = vmul.f32 %v8288, %v6761
    %v8371 = vmul.f32 %v8290, %v6761
    %v8372 = vmul.f32 %v8292, %v6761
    %v8373 = vmul.f32 %v8294, %v6761
    %v8374 = vmul.f32 %v8296, %v6761
    %v8375 = vmul.f32 %v8298, %v6761
    %v8376 = vmul.f32 %v8300, %v6761
    %v8377 = vmul.f32 %v8302, %v6761
    %v8378 = vmul.f32 %v8304, %v6761
    %v8379 = vmul.f32 %v8306, %v6761
    %v8380 = vmul.f32 %v8308, %v6761
    %v8381 = vmul.f32 %v8310, %v6761
    %v8382 = vmul.f32 %v8312, %v6761
    %v8383 = vmul.f32 %v8314, %v6761
    %v8384 = vmul.f32 %v8316, %v6761
    %v8385 = vmul.f32 %v8318, %v6761
    %v8386 = vmul.f32 %v8320, %v6761
    %v8387 = vmul.f32 %v8322, %v6761
    %v8388 = vmul.f32 %v8324, %v6761
    %v8389 = vmul.f32 %v8326, %v6761
    %v8390 = vmul.f32 %v8328, %v6761
    %v8391 = vmul.f32 %v8330, %v6761
    %v8392 = vmul.f32 %v8332, %v6761
    %v8393 = vmul.f32 %v8334, %v6761
    %v8394 = vmul.f32 %v8336, %v6761
    %v8395 = vmul.f32 %v8338, %v6761
    %v8396 = vmul.f32 %v8340, %v6761
    %v8397 = vmul.f32 %v8342, %v6761
    %v8398 = vmul.f32 %v8344, %v6761
    %v8399 = vmul.f32 %v8346, %v6761
    %v8400 = vmul.f32 %v8348, %v6761
    %v8401 = vmul.f32 %v8350, %v6761
    %v8402 = vmul.f32 %v8352, %v6761
    %v8403 = vmul.f32 %v8354, %v6761
    %v8404 = vmul.f32 %v8356, %v6761
    %v8405 = vsub.f32 %v8211, %v8357
    %v8406 = vsub.f32 %v8212, %v8358
    %v8407 = vsub.f32 %v8213, %v8359
    %v8408 = vsub.f32 %v8214, %v8360
    %v8409 = vsub.f32 %v8215, %v8361
    %v8410 = vsub.f32 %v8216, %v8362
    %v8411 = vsub.f32 %v8217, %v8363
    %v8412 = vsub.f32 %v8218, %v8364
    %v8413 = vsub.f32 %v8219, %v8365
    %v8414 = vsub.f32 %v8220, %v8366
    %v8415 = vsub.f32 %v8221, %v8367
    %v8416 = vsub.f32 %v8222, %v8368
    %v8417 = vsub.f32 %v8223, %v8369
    %v8418 = vsub.f32 %v8224, %v8370
    %v8419 = vsub.f32 %v8225, %v8371
    %v8420 = vsub.f32 %v8226, %v8372
    %v8421 = vsub.f32 %v8227, %v8373
    %v8422 = vsub.f32 %v8228, %v8374
    %v8423 = vsub.f32 %v8229, %v8375
    %v8424 = vsub.f32 %v8230, %v8376
    %v8425 = vsub.f32 %v8231, %v8377
    %v8426 = vsub.f32 %v8232, %v8378
    %v8427 = vsub.f32 %v8233, %v8379
    %v8428 = vsub.f32 %v8234, %v8380
    %v8429 = vsub.f32 %v8235, %v8381
    %v8430 = vsub.f32 %v8236, %v8382
    %v8431 = vsub.f32 %v8237, %v8383
    %v8432 = vsub.f32 %v8238, %v8384
    %v8433 = vsub.f32 %v8239, %v8385
    %v8434 = vsub.f32 %v8240, %v8386
    %v8435 = vsub.f32 %v8241, %v8387
    %v8436 = vsub.f32 %v8242, %v8388
    %v8437 = vsub.f32 %v8243, %v8389
    %v8438 = vsub.f32 %v8244, %v8390
    %v8439 = vsub.f32 %v8245, %v8391
    %v8440 = vsub.f32 %v8246, %v8392
    %v8441 = vsub.f32 %v8247, %v8393
    %v8442 = vsub.f32 %v8248, %v8394
    %v8443 = vsub.f32 %v8249, %v8395
    %v8444 = vsub.f32 %v8250, %v8396
    %v8445 = vsub.f32 %v8251, %v8397
    %v8446 = vsub.f32 %v8252, %v8398
    %v8447 = vsub.f32 %v8253, %v8399
    %v8448 = vsub.f32 %v8254, %v8400
    %v8449 = vsub.f32 %v8255, %v8401
    %v8450 = vsub.f32 %v8256, %v8402
    %v8451 = vsub.f32 %v8257, %v8403
    %v8452 = vsub.f32 %v8258, %v8404
    %v8453 = vmul.f32 %v8405, %v8405
    %v8454 = vmul.f32 %v8406, %v8406
    %v8455 = vmul.f32 %v8407, %v8407
    %v8456 = vmul.f32 %v8408, %v8408
    %v8457 = vmul.f32 %v8409, %v8409
    %v8458 = vmul.f32 %v8410, %v8410
    %v8459 = vmul.f32 %v8411, %v8411
    %v8460 = vmul.f32 %v8412, %v8412
    %v8461 = vmul.f32 %v8413, %v8413
    %v8462 = vmul.f32 %v8414, %v8414
    %v8463 = vmul.f32 %v8415, %v8415
    %v8464 = vmul.f32 %v8416, %v8416
    %v8465 = vmul.f32 %v8417, %v8417
    %v8466 = vmul.f32 %v8418, %v8418
    %v8467 = vmul.f32 %v8419, %v8419
    %v8468 = vmul.f32 %v8420, %v8420
    %v8469 = vmul.f32 %v8421, %v8421
    %v8470 = vmul.f32 %v8422, %v8422
    %v8471 = vmul.f32 %v8423, %v8423
    %v8472 = vmul.f32 %v8424, %v8424
    %v8473 = vmul.f32 %v8425, %v8425
    %v8474 = vmul.f32 %v8426, %v8426
    %v8475 = vmul.f32 %v8427, %v8427
    %v8476 = vmul.f32 %v8428, %v8428
    %v8477 = vmul.f32 %v8429, %v8429
    %v8478 = vmul.f32 %v8430, %v8430
    %v8479 = vmul.f32 %v8431, %v8431
    %v8480 = vmul.f32 %v8432, %v8432
    %v8481 = vmul.f32 %v8433, %v8433
    %v8482 = vmul.f32 %v8434, %v8434
    %v8483 = vmul.f32 %v8435, %v8435
    %v8484 = vmul.f32 %v8436, %v8436
    %v8485 = vmul.f32 %v8437, %v8437
    %v8486 = vmul.f32 %v8438, %v8438
    %v8487 = vmul.f32 %v8439, %v8439
    %v8488 = vmul.f32 %v8440, %v8440
    %v8489 = vmul.f32 %v8441, %v8441
    %v8490 = vmul.f32 %v8442, %v8442
    %v8491 = vmul.f32 %v8443, %v8443
    %v8492 = vmul.f32 %v8444, %v8444
    %v8493 = vmul.f32 %v8445, %v8445
    %v8494 = vmul.f32 %v8446, %v8446
    %v8495 = vmul.f32 %v8447, %v8447
    %v8496 = vmul.f32 %v8448, %v8448
    %v8497 = vmul.f32 %v8449, %v8449
    %v8498 = vmul.f32 %v8450, %v8450
    %v8499 = vmul.f32 %v8451, %v8451
    %v8500 = vmul.f32 %v8452, %v8452
    %8501 = vadd.xlane.f32.xlu0 %v8453
    %v8502 = vpop.xlane.xlu0 %8501
    %8503 = vadd.xlane.f32.xlu0 %v8454
    %v8504 = vpop.xlane.xlu0 %8503
    %8505 = vadd.xlane.f32.xlu0 %v8455
    %v8506 = vpop.xlane.xlu0 %8505
    %8507 = vadd.xlane.f32.xlu0 %v8456
    %v8508 = vpop.xlane.xlu0 %8507
    %8509 = vadd.xlane.f32.xlu0 %v8457
    %v8510 = vpop.xlane.xlu0 %8509
    %8511 = vadd.xlane.f32.xlu0 %v8458
    %v8512 = vpop.xlane.xlu0 %8511
    %8513 = vadd.xlane.f32.xlu0 %v8459
    %v8514 = vpop.xlane.xlu0 %8513
    %8515 = vadd.xlane.f32.xlu0 %v8460
    %v8516 = vpop.xlane.xlu0 %8515
    %8517 = vadd.xlane.f32.xlu0 %v8461
    %v8518 = vpop.xlane.xlu0 %8517
    %8519 = vadd.xlane.f32.xlu0 %v8462
    %v8520 = vpop.xlane.xlu0 %8519
    %8521 = vadd.xlane.f32.xlu0 %v8463
    %v8522 = vpop.xlane.xlu0 %8521
    %8523 = vadd.xlane.f32.xlu0 %v8464
    %v8524 = vpop.xlane.xlu0 %8523
    %8525 = vadd.xlane.f32.xlu0 %v8465
    %v8526 = vpop.xlane.xlu0 %8525
    %8527 = vadd.xlane.f32.xlu0 %v8466
    %v8528 = vpop.xlane.xlu0 %8527
    %8529 = vadd.xlane.f32.xlu0 %v8467
    %v8530 = vpop.xlane.xlu0 %8529
    %8531 = vadd.xlane.f32.xlu0 %v8468
    %v8532 = vpop.xlane.xlu0 %8531
    %8533 = vadd.xlane.f32.xlu0 %v8469
    %v8534 = vpop.xlane.xlu0 %8533
    %8535 = vadd.xlane.f32.xlu0 %v8470
    %v8536 = vpop.xlane.xlu0 %8535
    %8537 = vadd.xlane.f32.xlu0 %v8471
    %v8538 = vpop.xlane.xlu0 %8537
    %8539 = vadd.xlane.f32.xlu0 %v8472
    %v8540 = vpop.xlane.xlu0 %8539
    %8541 = vadd.xlane.f32.xlu0 %v8473
    %v8542 = vpop.xlane.xlu0 %8541
    %8543 = vadd.xlane.f32.xlu0 %v8474
    %v8544 = vpop.xlane.xlu0 %8543
    %8545 = vadd.xlane.f32.xlu0 %v8475
    %v8546 = vpop.xlane.xlu0 %8545
    %8547 = vadd.xlane.f32.xlu0 %v8476
    %v8548 = vpop.xlane.xlu0 %8547
    %8549 = vadd.xlane.f32.xlu0 %v8477
    %v8550 = vpop.xlane.xlu0 %8549
    %8551 = vadd.xlane.f32.xlu0 %v8478
    %v8552 = vpop.xlane.xlu0 %8551
    %8553 = vadd.xlane.f32.xlu0 %v8479
    %v8554 = vpop.xlane.xlu0 %8553
    %8555 = vadd.xlane.f32.xlu0 %v8480
    %v8556 = vpop.xlane.xlu0 %8555
    %8557 = vadd.xlane.f32.xlu0 %v8481
    %v8558 = vpop.xlane.xlu0 %8557
    %8559 = vadd.xlane.f32.xlu0 %v8482
    %v8560 = vpop.xlane.xlu0 %8559
    %8561 = vadd.xlane.f32.xlu0 %v8483
    %v8562 = vpop.xlane.xlu0 %8561
    %8563 = vadd.xlane.f32.xlu0 %v8484
    %v8564 = vpop.xlane.xlu0 %8563
    %8565 = vadd.xlane.f32.xlu0 %v8485
    %v8566 = vpop.xlane.xlu0 %8565
    %8567 = vadd.xlane.f32.xlu0 %v8486
    %v8568 = vpop.xlane.xlu0 %8567
    %8569 = vadd.xlane.f32.xlu0 %v8487
    %v8570 = vpop.xlane.xlu0 %8569
    %8571 = vadd.xlane.f32.xlu0 %v8488
    %v8572 = vpop.xlane.xlu0 %8571
    %8573 = vadd.xlane.f32.xlu0 %v8489
    %v8574 = vpop.xlane.xlu0 %8573
    %8575 = vadd.xlane.f32.xlu0 %v8490
    %v8576 = vpop.xlane.xlu0 %8575
    %8577 = vadd.xlane.f32.xlu0 %v8491
    %v8578 = vpop.xlane.xlu0 %8577
    %8579 = vadd.xlane.f32.xlu0 %v8492
    %v8580 = vpop.xlane.xlu0 %8579
    %8581 = vadd.xlane.f32.xlu0 %v8493
    %v8582 = vpop.xlane.xlu0 %8581
    %8583 = vadd.xlane.f32.xlu0 %v8494
    %v8584 = vpop.xlane.xlu0 %8583
    %8585 = vadd.xlane.f32.xlu0 %v8495
    %v8586 = vpop.xlane.xlu0 %8585
    %8587 = vadd.xlane.f32.xlu0 %v8496
    %v8588 = vpop.xlane.xlu0 %8587
    %8589 = vadd.xlane.f32.xlu0 %v8497
    %v8590 = vpop.xlane.xlu0 %8589
    %8591 = vadd.xlane.f32.xlu0 %v8498
    %v8592 = vpop.xlane.xlu0 %8591
    %8593 = vadd.xlane.f32.xlu0 %v8499
    %v8594 = vpop.xlane.xlu0 %8593
    %8595 = vadd.xlane.f32.xlu0 %v8500
    %v8596 = vpop.xlane.xlu0 %8595
    %v8597 = vmul.f32 %v8502, %v6761
    %v8598 = vmul.f32 %v8504, %v6761
    %v8599 = vmul.f32 %v8506, %v6761
    %v8600 = vmul.f32 %v8508, %v6761
    %v8601 = vmul.f32 %v8510, %v6761
    %v8602 = vmul.f32 %v8512, %v6761
    %v8603 = vmul.f32 %v8514, %v6761
    %v8604 = vmul.f32 %v8516, %v6761
    %v8605 = vmul.f32 %v8518, %v6761
    %v8606 = vmul.f32 %v8520, %v6761
    %v8607 = vmul.f32 %v8522, %v6761
    %v8608 = vmul.f32 %v8524, %v6761
    %v8609 = vmul.f32 %v8526, %v6761
    %v8610 = vmul.f32 %v8528, %v6761
    %v8611 = vmul.f32 %v8530, %v6761
    %v8612 = vmul.f32 %v8532, %v6761
    %v8613 = vmul.f32 %v8534, %v6761
    %v8614 = vmul.f32 %v8536, %v6761
    %v8615 = vmul.f32 %v8538, %v6761
    %v8616 = vmul.f32 %v8540, %v6761
    %v8617 = vmul.f32 %v8542, %v6761
    %v8618 = vmul.f32 %v8544, %v6761
    %v8619 = vmul.f32 %v8546, %v6761
    %v8620 = vmul.f32 %v8548, %v6761
    %v8621 = vmul.f32 %v8550, %v6761
    %v8622 = vmul.f32 %v8552, %v6761
    %v8623 = vmul.f32 %v8554, %v6761
    %v8624 = vmul.f32 %v8556, %v6761
    %v8625 = vmul.f32 %v8558, %v6761
    %v8626 = vmul.f32 %v8560, %v6761
    %v8627 = vmul.f32 %v8562, %v6761
    %v8628 = vmul.f32 %v8564, %v6761
    %v8629 = vmul.f32 %v8566, %v6761
    %v8630 = vmul.f32 %v8568, %v6761
    %v8631 = vmul.f32 %v8570, %v6761
    %v8632 = vmul.f32 %v8572, %v6761
    %v8633 = vmul.f32 %v8574, %v6761
    %v8634 = vmul.f32 %v8576, %v6761
    %v8635 = vmul.f32 %v8578, %v6761
    %v8636 = vmul.f32 %v8580, %v6761
    %v8637 = vmul.f32 %v8582, %v6761
    %v8638 = vmul.f32 %v8584, %v6761
    %v8639 = vmul.f32 %v8586, %v6761
    %v8640 = vmul.f32 %v8588, %v6761
    %v8641 = vmul.f32 %v8590, %v6761
    %v8642 = vmul.f32 %v8592, %v6761
    %v8643 = vmul.f32 %v8594, %v6761
    %v8644 = vmul.f32 %v8596, %v6761
    %v8645 = vadd.f32 %v8597, 1e-05
    %v8646 = vadd.f32 %v8598, 1e-05
    %v8647 = vadd.f32 %v8599, 1e-05
    %v8648 = vadd.f32 %v8600, 1e-05
    %v8649 = vadd.f32 %v8601, 1e-05
    %v8650 = vadd.f32 %v8602, 1e-05
    %v8651 = vadd.f32 %v8603, 1e-05
    %v8652 = vadd.f32 %v8604, 1e-05
    %v8653 = vadd.f32 %v8605, 1e-05
    %v8654 = vadd.f32 %v8606, 1e-05
    %v8655 = vadd.f32 %v8607, 1e-05
    %v8656 = vadd.f32 %v8608, 1e-05
    %v8657 = vadd.f32 %v8609, 1e-05
    %v8658 = vadd.f32 %v8610, 1e-05
    %v8659 = vadd.f32 %v8611, 1e-05
    %v8660 = vadd.f32 %v8612, 1e-05
    %v8661 = vadd.f32 %v8613, 1e-05
    %v8662 = vadd.f32 %v8614, 1e-05
    %v8663 = vadd.f32 %v8615, 1e-05
    %v8664 = vadd.f32 %v8616, 1e-05
    %v8665 = vadd.f32 %v8617, 1e-05
    %v8666 = vadd.f32 %v8618, 1e-05
    %v8667 = vadd.f32 %v8619, 1e-05
    %v8668 = vadd.f32 %v8620, 1e-05
    %v8669 = vadd.f32 %v8621, 1e-05
    %v8670 = vadd.f32 %v8622, 1e-05
    %v8671 = vadd.f32 %v8623, 1e-05
    %v8672 = vadd.f32 %v8624, 1e-05
    %v8673 = vadd.f32 %v8625, 1e-05
    %v8674 = vadd.f32 %v8626, 1e-05
    %v8675 = vadd.f32 %v8627, 1e-05
    %v8676 = vadd.f32 %v8628, 1e-05
    %v8677 = vadd.f32 %v8629, 1e-05
    %v8678 = vadd.f32 %v8630, 1e-05
    %v8679 = vadd.f32 %v8631, 1e-05
    %v8680 = vadd.f32 %v8632, 1e-05
    %v8681 = vadd.f32 %v8633, 1e-05
    %v8682 = vadd.f32 %v8634, 1e-05
    %v8683 = vadd.f32 %v8635, 1e-05
    %v8684 = vadd.f32 %v8636, 1e-05
    %v8685 = vadd.f32 %v8637, 1e-05
    %v8686 = vadd.f32 %v8638, 1e-05
    %v8687 = vadd.f32 %v8639, 1e-05
    %v8688 = vadd.f32 %v8640, 1e-05
    %v8689 = vadd.f32 %v8641, 1e-05
    %v8690 = vadd.f32 %v8642, 1e-05
    %v8691 = vadd.f32 %v8643, 1e-05
    %v8692 = vadd.f32 %v8644, 1e-05
    %v8693 = vrsqrt.pop %v8645
    %v8694 = vrsqrt.pop %v8646
    %v8695 = vrsqrt.pop %v8647
    %v8696 = vrsqrt.pop %v8648
    %v8697 = vrsqrt.pop %v8649
    %v8698 = vrsqrt.pop %v8650
    %v8699 = vrsqrt.pop %v8651
    %v8700 = vrsqrt.pop %v8652
    %v8701 = vrsqrt.pop %v8653
    %v8702 = vrsqrt.pop %v8654
    %v8703 = vrsqrt.pop %v8655
    %v8704 = vrsqrt.pop %v8656
    %v8705 = vrsqrt.pop %v8657
    %v8706 = vrsqrt.pop %v8658
    %v8707 = vrsqrt.pop %v8659
    %v8708 = vrsqrt.pop %v8660
    %v8709 = vrsqrt.pop %v8661
    %v8710 = vrsqrt.pop %v8662
    %v8711 = vrsqrt.pop %v8663
    %v8712 = vrsqrt.pop %v8664
    %v8713 = vrsqrt.pop %v8665
    %v8714 = vrsqrt.pop %v8666
    %v8715 = vrsqrt.pop %v8667
    %v8716 = vrsqrt.pop %v8668
    %v8717 = vrsqrt.pop %v8669
    %v8718 = vrsqrt.pop %v8670
    %v8719 = vrsqrt.pop %v8671
    %v8720 = vrsqrt.pop %v8672
    %v8721 = vrsqrt.pop %v8673
    %v8722 = vrsqrt.pop %v8674
    %v8723 = vrsqrt.pop %v8675
    %v8724 = vrsqrt.pop %v8676
    %v8725 = vrsqrt.pop %v8677
    %v8726 = vrsqrt.pop %v8678
    %v8727 = vrsqrt.pop %v8679
    %v8728 = vrsqrt.pop %v8680
    %v8729 = vrsqrt.pop %v8681
    %v8730 = vrsqrt.pop %v8682
    %v8731 = vrsqrt.pop %v8683
    %v8732 = vrsqrt.pop %v8684
    %v8733 = vrsqrt.pop %v8685
    %v8734 = vrsqrt.pop %v8686
    %v8735 = vrsqrt.pop %v8687
    %v8736 = vrsqrt.pop %v8688
    %v8737 = vrsqrt.pop %v8689
    %v8738 = vrsqrt.pop %v8690
    %v8739 = vrsqrt.pop %v8691
    %v8740 = vrsqrt.pop %v8692
    %v8741 = vmul.f32 %v8405, %v8693
    %v8742 = vmul.f32 %v8406, %v8694
    %v8743 = vmul.f32 %v8407, %v8695
    %v8744 = vmul.f32 %v8408, %v8696
    %v8745 = vmul.f32 %v8409, %v8697
    %v8746 = vmul.f32 %v8410, %v8698
    %v8747 = vmul.f32 %v8411, %v8699
    %v8748 = vmul.f32 %v8412, %v8700
    %v8749 = vmul.f32 %v8413, %v8701
    %v8750 = vmul.f32 %v8414, %v8702
    %v8751 = vmul.f32 %v8415, %v8703
    %v8752 = vmul.f32 %v8416, %v8704
    %v8753 = vmul.f32 %v8417, %v8705
    %v8754 = vmul.f32 %v8418, %v8706
    %v8755 = vmul.f32 %v8419, %v8707
    %v8756 = vmul.f32 %v8420, %v8708
    %v8757 = vmul.f32 %v8421, %v8709
    %v8758 = vmul.f32 %v8422, %v8710
    %v8759 = vmul.f32 %v8423, %v8711
    %v8760 = vmul.f32 %v8424, %v8712
    %v8761 = vmul.f32 %v8425, %v8713
    %v8762 = vmul.f32 %v8426, %v8714
    %v8763 = vmul.f32 %v8427, %v8715
    %v8764 = vmul.f32 %v8428, %v8716
    %v8765 = vmul.f32 %v8429, %v8717
    %v8766 = vmul.f32 %v8430, %v8718
    %v8767 = vmul.f32 %v8431, %v8719
    %v8768 = vmul.f32 %v8432, %v8720
    %v8769 = vmul.f32 %v8433, %v8721
    %v8770 = vmul.f32 %v8434, %v8722
    %v8771 = vmul.f32 %v8435, %v8723
    %v8772 = vmul.f32 %v8436, %v8724
    %v8773 = vmul.f32 %v8437, %v8725
    %v8774 = vmul.f32 %v8438, %v8726
    %v8775 = vmul.f32 %v8439, %v8727
    %v8776 = vmul.f32 %v8440, %v8728
    %v8777 = vmul.f32 %v8441, %v8729
    %v8778 = vmul.f32 %v8442, %v8730
    %v8779 = vmul.f32 %v8443, %v8731
    %v8780 = vmul.f32 %v8444, %v8732
    %v8781 = vmul.f32 %v8445, %v8733
    %v8782 = vmul.f32 %v8446, %v8734
    %v8783 = vmul.f32 %v8447, %v8735
    %v8784 = vmul.f32 %v8448, %v8736
    %v8785 = vmul.f32 %v8449, %v8737
    %v8786 = vmul.f32 %v8450, %v8738
    %v8787 = vmul.f32 %v8451, %v8739
    %v8788 = vmul.f32 %v8452, %v8740
    %v8790 = vlaneseq
    %v8791 = vshrl.u32 %v8790, 7
    %v8792 = vsub.s32 0, %v8791
    %v8793 = vrot.slane %v8259, %v8792
    %v8795 = vmul.f32 %v8741, %v8793
    %v8796 = vmul.f32 %v8742, %v8793
    %v8797 = vmul.f32 %v8743, %v8793
    %v8798 = vmul.f32 %v8744, %v8793
    %v8799 = vmul.f32 %v8745, %v8793
    %v8800 = vmul.f32 %v8746, %v8793
    %v8801 = vmul.f32 %v8747, %v8793
    %v8802 = vmul.f32 %v8748, %v8793
    %v8803 = vmul.f32 %v8749, %v8793
    %v8804 = vmul.f32 %v8750, %v8793
    %v8805 = vmul.f32 %v8751, %v8793
    %v8806 = vmul.f32 %v8752, %v8793
    %v8807 = vmul.f32 %v8753, %v8793
    %v8808 = vmul.f32 %v8754, %v8793
    %v8809 = vmul.f32 %v8755, %v8793
    %v8810 = vmul.f32 %v8756, %v8793
    %v8811 = vmul.f32 %v8757, %v8793
    %v8812 = vmul.f32 %v8758, %v8793
    %v8813 = vmul.f32 %v8759, %v8793
    %v8814 = vmul.f32 %v8760, %v8793
    %v8815 = vmul.f32 %v8761, %v8793
    %v8816 = vmul.f32 %v8762, %v8793
    %v8817 = vmul.f32 %v8763, %v8793
    %v8818 = vmul.f32 %v8764, %v8793
    %v8819 = vmul.f32 %v8765, %v8793
    %v8820 = vmul.f32 %v8766, %v8793
    %v8821 = vmul.f32 %v8767, %v8793
    %v8822 = vmul.f32 %v8768, %v8793
    %v8823 = vmul.f32 %v8769, %v8793
    %v8824 = vmul.f32 %v8770, %v8793
    %v8825 = vmul.f32 %v8771, %v8793
    %v8826 = vmul.f32 %v8772, %v8793
    %v8827 = vmul.f32 %v8773, %v8793
    %v8828 = vmul.f32 %v8774, %v8793
    %v8829 = vmul.f32 %v8775, %v8793
    %v8830 = vmul.f32 %v8776, %v8793
    %v8831 = vmul.f32 %v8777, %v8793
    %v8832 = vmul.f32 %v8778, %v8793
    %v8833 = vmul.f32 %v8779, %v8793
    %v8834 = vmul.f32 %v8780, %v8793
    %v8835 = vmul.f32 %v8781, %v8793
    %v8836 = vmul.f32 %v8782, %v8793
    %v8837 = vmul.f32 %v8783, %v8793
    %v8838 = vmul.f32 %v8784, %v8793
    %v8839 = vmul.f32 %v8785, %v8793
    %v8840 = vmul.f32 %v8786, %v8793
    %v8841 = vmul.f32 %v8787, %v8793
    %v8842 = vmul.f32 %v8788, %v8793
    %v8844 = vlaneseq
    %v8845 = vshrl.u32 %v8844, 7
    %v8846 = vsub.s32 0, %v8845
    %v8847 = vrot.slane %v8260, %v8846
    %v8849 = vadd.f32 %v8795, %v8847
    %v8850 = vadd.f32 %v8796, %v8847
    %v8851 = vadd.f32 %v8797, %v8847
    %v8852 = vadd.f32 %v8798, %v8847
    %v8853 = vadd.f32 %v8799, %v8847
    %v8854 = vadd.f32 %v8800, %v8847
    %v8855 = vadd.f32 %v8801, %v8847
    %v8856 = vadd.f32 %v8802, %v8847
    %v8857 = vadd.f32 %v8803, %v8847
    %v8858 = vadd.f32 %v8804, %v8847
    %v8859 = vadd.f32 %v8805, %v8847
    %v8860 = vadd.f32 %v8806, %v8847
    %v8861 = vadd.f32 %v8807, %v8847
    %v8862 = vadd.f32 %v8808, %v8847
    %v8863 = vadd.f32 %v8809, %v8847
    %v8864 = vadd.f32 %v8810, %v8847
    %v8865 = vadd.f32 %v8811, %v8847
    %v8866 = vadd.f32 %v8812, %v8847
    %v8867 = vadd.f32 %v8813, %v8847
    %v8868 = vadd.f32 %v8814, %v8847
    %v8869 = vadd.f32 %v8815, %v8847
    %v8870 = vadd.f32 %v8816, %v8847
    %v8871 = vadd.f32 %v8817, %v8847
    %v8872 = vadd.f32 %v8818, %v8847
    %v8873 = vadd.f32 %v8819, %v8847
    %v8874 = vadd.f32 %v8820, %v8847
    %v8875 = vadd.f32 %v8821, %v8847
    %v8876 = vadd.f32 %v8822, %v8847
    %v8877 = vadd.f32 %v8823, %v8847
    %v8878 = vadd.f32 %v8824, %v8847
    %v8879 = vadd.f32 %v8825, %v8847
    %v8880 = vadd.f32 %v8826, %v8847
    %v8881 = vadd.f32 %v8827, %v8847
    %v8882 = vadd.f32 %v8828, %v8847
    %v8883 = vadd.f32 %v8829, %v8847
    %v8884 = vadd.f32 %v8830, %v8847
    %v8885 = vadd.f32 %v8831, %v8847
    %v8886 = vadd.f32 %v8832, %v8847
    %v8887 = vadd.f32 %v8833, %v8847
    %v8888 = vadd.f32 %v8834, %v8847
    %v8889 = vadd.f32 %v8835, %v8847
    %v8890 = vadd.f32 %v8836, %v8847
    %v8891 = vadd.f32 %v8837, %v8847
    %v8892 = vadd.f32 %v8838, %v8847
    %v8893 = vadd.f32 %v8839, %v8847
    %v8894 = vadd.f32 %v8840, %v8847
    %v8895 = vadd.f32 %v8841, %v8847
    %v8896 = vadd.f32 %v8842, %v8847
    %8897 = vst [vmem:[#allocation13] sm:$0xff] %v8849
    %8898 = vst [vmem:[#allocation13 + $0x8] sm:$0xff] %v8850
    %8899 = vst [vmem:[#allocation13 + $0x10] sm:$0xff] %v8851
    %8900 = vst [vmem:[#allocation13 + $0x18] sm:$0xff] %v8852
    %8901 = vst [vmem:[#allocation13 + $0x20] sm:$0xff] %v8853
    %8902 = vst [vmem:[#allocation13 + $0x28] sm:$0xff] %v8854
    %8903 = vst [vmem:[#allocation13 + $0x30] sm:$0xff] %v8855
    %8904 = vst [vmem:[#allocation13 + $0x38] sm:$0xff] %v8856
    %8905 = vst [vmem:[#allocation13 + $0x40] sm:$0xff] %v8857
    %8906 = vst [vmem:[#allocation13 + $0x48] sm:$0xff] %v8858
    %8907 = vst [vmem:[#allocation13 + $0x50] sm:$0xff] %v8859
    %8908 = vst [vmem:[#allocation13 + $0x58] sm:$0xff] %v8860
    %8909 = vst [vmem:[#allocation13 + $0x60] sm:$0xff] %v8861
    %8910 = vst [vmem:[#allocation13 + $0x68] sm:$0xff] %v8862
    %8911 = vst [vmem:[#allocation13 + $0x70] sm:$0xff] %v8863
    %8912 = vst [vmem:[#allocation13 + $0x78] sm:$0xff] %v8864
    %8913 = vst [vmem:[#allocation13 + $0x80] sm:$0xff] %v8865
    %8914 = vst [vmem:[#allocation13 + $0x88] sm:$0xff] %v8866
    %8915 = vst [vmem:[#allocation13 + $0x90] sm:$0xff] %v8867
    %8916 = vst [vmem:[#allocation13 + $0x98] sm:$0xff] %v8868
    %8917 = vst [vmem:[#allocation13 + $0xa0] sm:$0xff] %v8869
    %8918 = vst [vmem:[#allocation13 + $0xa8] sm:$0xff] %v8870
    %8919 = vst [vmem:[#allocation13 + $0xb0] sm:$0xff] %v8871
    %8920 = vst [vmem:[#allocation13 + $0xb8] sm:$0xff] %v8872
    %8921 = vst [vmem:[#allocation13 + $0xc0] sm:$0xff] %v8873
    %8922 = vst [vmem:[#allocation13 + $0xc8] sm:$0xff] %v8874
    %8923 = vst [vmem:[#allocation13 + $0xd0] sm:$0xff] %v8875
    %8924 = vst [vmem:[#allocation13 + $0xd8] sm:$0xff] %v8876
    %8925 = vst [vmem:[#allocation13 + $0xe0] sm:$0xff] %v8877
    %8926 = vst [vmem:[#allocation13 + $0xe8] sm:$0xff] %v8878
    %8927 = vst [vmem:[#allocation13 + $0xf0] sm:$0xff] %v8879
    %8928 = vst [vmem:[#allocation13 + $0xf8] sm:$0xff] %v8880
    %8929 = vst [vmem:[#allocation13 + $0x100] sm:$0xff] %v8881
    %8930 = vst [vmem:[#allocation13 + $0x108] sm:$0xff] %v8882
    %8931 = vst [vmem:[#allocation13 + $0x110] sm:$0xff] %v8883
    %8932 = vst [vmem:[#allocation13 + $0x118] sm:$0xff] %v8884
    %8933 = vst [vmem:[#allocation13 + $0x120] sm:$0xff] %v8885
    %8934 = vst [vmem:[#allocation13 + $0x128] sm:$0xff] %v8886
    %8935 = vst [vmem:[#allocation13 + $0x130] sm:$0xff] %v8887
    %8936 = vst [vmem:[#allocation13 + $0x138] sm:$0xff] %v8888
    %8937 = vst [vmem:[#allocation13 + $0x140] sm:$0xff] %v8889
    %8938 = vst [vmem:[#allocation13 + $0x148] sm:$0xff] %v8890
    %8939 = vst [vmem:[#allocation13 + $0x150] sm:$0xff] %v8891
    %8940 = vst [vmem:[#allocation13 + $0x158] sm:$0xff] %v8892
    %8941 = vst [vmem:[#allocation13 + $0x160] sm:$0xff] %v8893
    %8942 = vst [vmem:[#allocation13 + $0x168] sm:$0xff] %v8894
    %8943 = vst [vmem:[#allocation13 + $0x170] sm:$0xff] %v8895
    %8944 = vst [vmem:[#allocation13 + $0x178] sm:$0xff] %v8896
    // Predicated region
    $region82: #{tpu_custom_call.1} parent=1 // pred_check
      _
    $region83: #{tpu_custom_call.1} parent=1 // pred_check_branch
      %8946 = sbr.rel (0) target = $region85
    $region84: #{tpu_custom_call.1} parent=1 // pred_region
      %s8948 = ssub.s32 6144, 6144
      %8949 = vsyncadd [#allocation4], %s8948
      %s8950 = sshll.u32 [#allocation13], 4
      %s8951 = int_to_ptr.vmem [resolvable:$true] %s8950
      %8956 = dma.vmem_to_hbm [thread:$0]  %s8951, 6144, %s14, [#allocation4], 128, 128, 8
    $region85: #{tpu_custom_call.1} parent=1 // pred_fallthru
      _
    // Predicated region
    $region86: #{tpu_custom_call.1} parent=1 // pred_check
      _
    $region87: #{tpu_custom_call.1} parent=1 // pred_check_branch
      %8958 = sbr.rel (0) target = $region89
    $region88: #{tpu_custom_call.1} parent=1 // pred_region
      %8959 = dma.done [#allocation4], 6144
    $region89: #{tpu_custom_call.1} parent=1 // pred_fallthru
      _
    %8960 = vsyncpa [#allocation3], 1
    %8961 = vsyncpa [#allocation6], 1
    %8962 = vsyncpa [#allocation9], 1
    %8963 = vsyncpa [#allocation12], 1
    %8964 = vsyncpa [#allocation4], 1

</llo_original>
